<compile_context>
chip_gen: v5e
topology: v5e:2x2
jax: 0.10.0
libtpu: 0.0.40
codegen_flags: <defaults>
</compile_context>

<pallas_src>
import math
import functools

import jax
import jax.numpy as jnp
import numpy as np
from jax import lax
from jax.experimental import pallas as pl
from jax.experimental.pallas import tpu as pltpu

# Safe on every generation (v7x has 64 MiB physical VMEM); raise toward ~96 MiB on v5e/v6e.
_VMEM_LIMIT = 56 * 1024 * 1024
_NEG_INF = -1.0e30          # finite "masked" score: avoids exp(-inf - -inf) = NaN


# ------------------------------ tiling helpers ------------------------------ #

def _pick_tile(dim, cap, align):
    """Largest divisor of `dim` that is <= cap AND a multiple of `align`.
    Falls back to the full dim (block == full array dim is always legal)."""
    if dim <= cap:
        return dim
    for t in range(cap - cap % align, 0, -align):
        if dim % t == 0:
            return t
    return dim


# -------------------------- fused / tiled projection ------------------------ #

def _matmul_kernel(x_ref, w_ref, o_ref, acc_ref):
    @pl.when(pl.program_id(2) == 0)
    def _():
        acc_ref[...] = jnp.zeros_like(acc_ref)

    # native-dtype operands -> MXU, accumulate in f32 scratch
    acc_ref[...] += jnp.dot(x_ref[...], w_ref[...],
                            preferred_element_type=jnp.float32)

    @pl.when(pl.program_id(2) == pl.num_programs(2) - 1)
    def _():
        o_ref[...] = acc_ref[...].astype(o_ref.dtype)


def matmul(x, w, *, tm_cap=512, tn_cap=512, tk_cap=1024, vmem_limit_bytes=_VMEM_LIMIT):
    """Tiled x @ w, x:(M,K), w:(K,N).  Reduction axis last, f32 accumulator scratch."""
    M, K = x.shape
    Kw, N = w.shape
    assert K == Kw
    tm = _pick_tile(M, tm_cap, 8)
    tn = _pick_tile(N, tn_cap, 128)
    tk = _pick_tile(K, tk_cap, 128)
    grid = (M // tm, N // tn, K // tk)
    return pl.pallas_call(
        _matmul_kernel,
        out_shape=jax.ShapeDtypeStruct((M, N), x.dtype),
        grid=grid,
        in_specs=[
            pl.BlockSpec((tm, tk), lambda i, j, k: (i, k)),
            pl.BlockSpec((tk, tn), lambda i, j, k: (k, j)),
        ],
        out_specs=pl.BlockSpec((tm, tn), lambda i, j, k: (i, j)),
        scratch_shapes=[pltpu.VMEM((tm, tn), jnp.float32)],
        compiler_params=pltpu.CompilerParams(
            dimension_semantics=("parallel", "parallel", "arbitrary"),
            vmem_limit_bytes=vmem_limit_bytes),
    )(x, w)


# --------------------------- RoPE pre-pass kernel ---------------------------- #

def _rope_kernel(qkv_ref, cos_ref, sin_ref, out_ref, *, num_rot_heads, head_dim):
    cos = cos_ref[...]                        # (tm, D) full-width cos
    sin = sin_ref[...]                        # (tm, D) signed sin: [-sin_h, +sin_h]
    half = head_dim // 2
    for h in range(num_rot_heads):            # Q heads then K heads (static unroll)
        lo = h * head_dim
        x = qkv_ref[:, lo:lo + head_dim]      # (tm, D) Ref-sliced load
        # rotate_half(x) == roll(x, half) with the sign folded into the sin table.
        out_ref[:, lo:lo + head_dim] = (
            x * cos + pltpu.roll(x, shift=half, axis=1) * sin
        ).astype(out_ref.dtype)


def apply_rope(qkv, cos_full, sin_signed, *, num_rot_heads, head_dim, tm_cap=512,
               vmem_limit_bytes=_VMEM_LIMIT):
    """Rotate the Q/K columns (a prefix) of the fused QKV activation exactly once.
    qkv:(M, (nH+2*nKV)*D), cos_full/sin_signed:(M, D) -> (M, (nH+nKV)*D)."""
    M = qkv.shape[0]
    rot_width = num_rot_heads * head_dim
    assert rot_width % 128 == 0, "RoPE pre-pass assumes a 128-aligned rotated-column width"
    tm = _pick_tile(M, tm_cap, 8)
    return pl.pallas_call(
        functools.partial(_rope_kernel, num_rot_heads=num_rot_heads, head_dim=head_dim),
        out_shape=jax.ShapeDtypeStruct((M, rot_width), qkv.dtype),
        grid=(M // tm,),
        in_specs=[
            pl.BlockSpec((tm, rot_width), lambda i: (i, 0)),   # QK prefix of fused QKV
            pl.BlockSpec((tm, head_dim), lambda i: (i, 0)),
            pl.BlockSpec((tm, head_dim), lambda i: (i, 0)),
        ],
        out_specs=pl.BlockSpec((tm, rot_width), lambda i: (i, 0)),
        compiler_params=pltpu.CompilerParams(
            dimension_semantics=("parallel",),
            vmem_limit_bytes=vmem_limit_bytes),
    )(qkv, cos_full, sin_signed)


# ----------------------- causal flash attention (GQA) ----------------------- #

def _flash_attn_kernel(q_ref, k_ref, v_ref, o_ref, m_sc, l_sc, acc_sc, *,
                       num_heads, num_kv_heads, head_dim, n_rep, scale, tq, tk):
    D = head_dim
    qi = pl.program_id(1)
    ki = pl.program_id(2)

    @pl.when(ki == 0)
    def _init():
        m_sc[...] = jnp.full_like(m_sc, _NEG_INF)
        l_sc[...] = jnp.zeros_like(l_sc)
        acc_sc[...] = jnp.zeros_like(acc_sc)

    # Skip kv tiles that are entirely above the causal diagonal (their DMAs are also
    # deduped away by the clamped k/v index_maps).
    @pl.when(ki * tk < (qi + 1) * tq)
    def _compute():
        # Causal additive bias for this (qi, ki) tile, built in-kernel (no HBM mask stream).
        rows = qi * tq + lax.broadcasted_iota(jnp.int32, (tq, tk), 0)
        cols = ki * tk + lax.broadcasted_iota(jnp.int32, (tq, tk), 1)
        bias = jnp.where(cols <= rows, 0.0, _NEG_INF).astype(jnp.float32)

        for g in range(num_kv_heads):
            k_g = k_ref[0, :, g * D:(g + 1) * D]            # (tk, D), native dtype
            v_g = v_ref[0, :, g * D:(g + 1) * D]            # (tk, D)
            # TODO(synk): batch the n_rep QK^T / PV dots of this group into a single
            # (n_rep*tq, D) x (D, tk) matmul to fill the 256-deep MXU on v6e/v7x; per-head
            # 2-D dots are kept here for robust lowering.
            for r in range(n_rep):
                h = g * n_rep + r                           # GQA: query head -> kv group
                q_h = q_ref[0, :, h * D:(h + 1) * D]        # (tq, D) Ref-sliced load
                s = jnp.einsum('qd,kd->qk', q_h, k_g,
                               preferred_element_type=jnp.float32) * scale + bias
                m_prev = m_sc[:, h:h + 1]                   # (tq, 1)
                m_new = jnp.maximum(m_prev, jnp.max(s, axis=-1, keepdims=True))
                alpha = jnp.exp(m_prev - m_new)             # (tq, 1)
                p = jnp.exp(s - m_new)                      # (tq, tk) f32
                l_sc[:, h:h + 1] = alpha * l_sc[:, h:h + 1] + jnp.sum(p, axis=-1,
                                                                      keepdims=True)
                pv = jnp.dot(p.astype(v_g.dtype), v_g,
                             preferred_element_type=jnp.float32)        # (tq, D)
                acc_sc[h] = alpha * acc_sc[h] + pv
                m_sc[:, h:h + 1] = m_new

    @pl.when(ki == pl.num_programs(2) - 1)
    def _finalize():
        for h in range(num_heads):
            inv = pl.reciprocal(l_sc[:, h:h + 1], approx=True)           # (tq, 1), EUP
            o_ref[0, :, h * D:(h + 1) * D] = (acc_sc[h] * inv).astype(o_ref.dtype)


def flash_attention(qk_rot, qkv, *, num_heads, num_kv_heads, head_dim, scale,
                    tq_cap=256, tk_cap=256, vmem_limit_bytes=_VMEM_LIMIT):
    """Causal GQA flash attention over lane-dense activations.

    qk_rot: (B, S, (nH+nKV)*D)   RoPE'd Q columns followed by RoPE'd K columns.
    qkv:    (B, S, (nH+2nKV)*D)  fused QKV projection output (V columns are the suffix).
    Returns (B, S, nH*D)."""
    B, S, _ = qk_rot.shape
    D = head_dim
    n_rep = num_heads // num_kv_heads
    q_width = num_heads * D
    kv_width = num_kv_heads * D
    assert q_width % 128 == 0 and kv_width % 128 == 0, (
        "flash_attention assumes lane-aligned head blocks: num_heads*head_dim and "
        "num_kv_heads*head_dim must be multiples of 128")
    tq = _pick_tile(S, tq_cap, 8)
    tk = _pick_tile(S, tk_cap, 128)
    grid = (B, S // tq, S // tk)                 # kv axis last ("arbitrary")

    def q_index(b, qi, ki):
        return (b, qi, 0)

    def _last_valid(qi):                         # last kv block with any unmasked column
        return ((qi + 1) * tq - 1) // tk

    def k_index(b, qi, ki):                      # K = last column-block of qk_rot
        return (b, jnp.minimum(ki, _last_valid(qi)), n_rep)

    def v_index(b, qi, ki):                      # V = last column-block of fused qkv
        return (b, jnp.minimum(ki, _last_valid(qi)), n_rep + 1)

    kern = functools.partial(
        _flash_attn_kernel,
        num_heads=num_heads, num_kv_heads=num_kv_heads, head_dim=D,
        n_rep=n_rep, scale=scale, tq=tq, tk=tk)

    return pl.pallas_call(
        kern,
        out_shape=jax.ShapeDtypeStruct((B, S, q_width), qk_rot.dtype),
        grid=grid,
        in_specs=[
            pl.BlockSpec((1, tq, q_width), q_index),      # Q  (prefix of qk_rot)
            pl.BlockSpec((1, tk, kv_width), k_index),     # K  (suffix of qk_rot)
            pl.BlockSpec((1, tk, kv_width), v_index),     # V  (suffix of qkv)
        ],
        out_specs=pl.BlockSpec((1, tq, q_width), q_index),
        scratch_shapes=[
            pltpu.VMEM((tq, num_heads), jnp.float32),     # running max (lane-dense stats)
            pltpu.VMEM((tq, num_heads), jnp.float32),     # running sum (lane-dense stats)
            pltpu.VMEM((num_heads, tq, D), jnp.float32),  # per-head f32 output accumulator
        ],
        compiler_params=pltpu.CompilerParams(
            dimension_semantics=("parallel", "parallel", "arbitrary"),
            vmem_limit_bytes=vmem_limit_bytes),
    )(qk_rot, qk_rot, qkv)


# --------------------------------- forward ---------------------------------- #

def rotary_half_cache(seq_len, dim, base):
    """Half-width cos/sin tables (seq_len, dim//2)."""
    inv_freq = 1.0 / (base ** (jnp.arange(0, dim, 2, dtype=jnp.float32) / dim))
    t = jnp.arange(seq_len, dtype=jnp.float32)
    freqs = jnp.outer(t, inv_freq)
    return jnp.cos(freqs), jnp.sin(freqs)


def prepare_params(params):
    """One-time parameter prep: pre-transpose torch (out,in) weights and fuse Q/K/V."""
    return {
        'w_qkv': jnp.concatenate([params['wq'].T, params['wk'].T, params['wv'].T], axis=1),
        'wo_t': params['wo'].T,
    }


def adapter_attention_forward(prepped, hidden_states, attention_mask, position_ids, config,
                              *, tq_cap=256, tk_cap=256):
    B, S, H = hidden_states.shape
    nH = config['num_attention_heads']
    nKV = config['num_key_value_heads']
    D = H // nH
    dtype = hidden_states.dtype

    # The module adds `attention_mask` to the scores; this implementation generates the
    # standard causal mask in-kernel (is_causal=True), so no mask tensor is streamed.
    # TODO(synk): arbitrary (non-causal / padding) additive masks would need a mask-streaming
    #             or per-row-length (scalar-prefetch) variant.
    del attention_mask

    # Fused QKV projection: hidden_states read from HBM once.
    x2d = hidden_states.reshape(B * S, H)
    qkv = matmul(x2d, prepped['w_qkv'])                 # (B*S, (nH + 2*nKV) * D)

    # RoPE tables: full-width cos and signed sin, gathered by position_ids.
    max_pos = max(S, config['max_position_embeddings'])
    cos_h, sin_h = rotary_half_cache(max_pos, D, config['rope_theta'])
    cos_full = jnp.concatenate([cos_h, cos_h], axis=-1)       # (max_pos, D)
    sin_signed = jnp.concatenate([-sin_h, sin_h], axis=-1)    # (max_pos, D)
    cos_rows = cos_full[position_ids].reshape(B * S, D).astype(dtype)
    sin_rows = sin_signed[position_ids].reshape(B * S, D).astype(dtype)

    # RoPE pre-pass: rotate Q and K columns of the fused activation exactly once.
    qk_rot = apply_rope(qkv, cos_rows, sin_rows, num_rot_heads=nH + nKV, head_dim=D)

    scale = 1.0 / math.sqrt(D)
    attn = flash_attention(qk_rot.reshape(B, S, (nH + nKV) * D),
                           qkv.reshape(B, S, (nH + 2 * nKV) * D),
                           num_heads=nH, num_kv_heads=nKV, head_dim=D, scale=scale,
                           tq_cap=tq_cap, tk_cap=tk_cap)     # (B, S, nH*D) lane-dense

    out = matmul(attn.reshape(B * S, nH * D), prepped['wo_t']).reshape(B, S, H)
    return out


# ------------------------ pure-JAX reference (checking) --------------------- #

def reference_forward(params, hidden_states, attention_mask, position_ids, config):
    B, S, H = hidden_states.shape
    nH = config['num_attention_heads']
    nKV = config['num_key_value_heads']
    D = H // nH
    n_rep = nH // nKV

    q = (hidden_states @ params['wq'].T).reshape(B, S, nH, D).transpose(0, 2, 1, 3)
    k = (hidden_states @ params['wk'].T).reshape(B, S, nKV, D).transpose(0, 2, 1, 3)
    v = (hidden_states @ params['wv'].T).reshape(B, S, nKV, D).transpose(0, 2, 1, 3)

    cos_h, sin_h = rotary_half_cache(max(S, config['max_position_embeddings']),
                                     D, config['rope_theta'])
    cos = jnp.concatenate([cos_h, cos_h], axis=-1)[position_ids][:, None]  # (B,1,S,D)
    sin = jnp.concatenate([sin_h, sin_h], axis=-1)[position_ids][:, None]

    def rot_half(x):
        x1, x2 = x[..., :D // 2], x[..., D // 2:]
        return jnp.concatenate([-x2, x1], axis=-1)

    q = q * cos + rot_half(q) * sin
    k = k * cos + rot_half(k) * sin

    k = jnp.repeat(k, n_rep, axis=1)
    v = jnp.repeat(v, n_rep, axis=1)

    w = jnp.einsum('bhqd,bhkd->bhqk', q, k) / math.sqrt(D)
    w = w + attention_mask
    w = jax.nn.softmax(w.astype(jnp.float32), axis=-1).astype(q.dtype)
    o = jnp.einsum('bhqk,bhkd->bhqd', w, v)
    o = o.transpose(0, 2, 1, 3).reshape(B, S, H)
    return o @ params['wo'].T


# ----------------------------------- main ------------------------------------ #

if __name__ == "__main__":
    config = dict(
        hidden_size=512,
        num_attention_heads=4,
        num_key_value_heads=2,
        max_position_embeddings=512,
        rope_theta=10000.0,
        attention_dropout=0.0,          # eval mode
    )
    B, S = 2, 256
    H = config['hidden_size']
    nH = config['num_attention_heads']
    nKV = config['num_key_value_heads']
    D = H // nH                          # 128: realistic lane-aligned head_dim

    key = jax.random.PRNGKey(0)
    kx, kq, kk, kv, ko = jax.random.split(key, 5)

    x = jax.random.normal(kx, (B, S, H), dtype=jnp.float32)
    params = {
        # torch nn.Linear weight shape: (out_features, in_features)
        'wq': 0.05 * jax.random.normal(kq, (nH * D, H), dtype=jnp.float32),
        'wk': 0.05 * jax.random.normal(kk, (nKV * D, H), dtype=jnp.float32),
        'wv': 0.05 * jax.random.normal(kv, (nKV * D, H), dtype=jnp.float32),
        'wo': 0.05 * jax.random.normal(ko, (H, nH * D), dtype=jnp.float32),
    }
    prepped = prepare_params(params)

    position_ids = jnp.broadcast_to(jnp.arange(S, dtype=jnp.int32), (B, S))
    neg = jnp.finfo(jnp.float32).min
    causal = jnp.where(jnp.tril(jnp.ones((S, S), dtype=bool)), 0.0, neg).astype(jnp.float32)
    attention_mask = jnp.broadcast_to(causal[None, None], (B, 1, S, S))

    # tq_cap/tk_cap=128 so the demo exercises the multi-kv-tile online softmax and the
    # causal tile skipping (grid (B, 2, 2)).
    out = adapter_attention_forward(prepped, x, attention_mask, position_ids, config,
                                    tq_cap=128, tk_cap=128)
    out = jax.block_until_ready(out)

    ref = reference_forward(params, x, attention_mask, position_ids, config)
    assert out.shape == (B, S, H)
    np.testing.assert_allclose(np.asarray(out), np.asarray(ref), rtol=2e-2, atol=2e-2)

    print("KERNEL_OK")
</pallas_src>

<mosaic_0001>
module attributes {stable_mosaic.version = 11 : i64} {
  func.func @_matmul_kernel(%arg0: i32, %arg1: i32, %arg2: i32, %arg3: memref<512x512xf32, #tpu.memory_space<vmem>>, %arg4: memref<512x512xf32, #tpu.memory_space<vmem>>, %arg5: memref<512x512xf32, #tpu.memory_space<vmem>>, %arg6: memref<512x512xf32, #tpu.memory_space<vmem>>) attributes {dimension_semantics = [#tpu.dimension_semantics<parallel>, #tpu.dimension_semantics<parallel>, #tpu.dimension_semantics<arbitrary>], iteration_bounds = array<i64: 1, 2, 1>, scalar_prefetch = 0 : i64, scratch_operands = 1 : i64, tpu.core_type = #tpu.core_type<tc>, window_params = [{transform_indices = @transform_0, window_bounds = array<i64: 512, 512>}, {transform_indices = @transform_1, window_bounds = array<i64: 512, 512>}, {transform_indices = @transform_2, window_bounds = array<i64: 512, 512>}]} {
    %c0_i32 = arith.constant 0 : i32
    %0 = arith.cmpi eq, %arg2, %c0_i32 : i32
    %1 = arith.extui %0 : i1 to i32
    %c0_i32_0 = arith.constant 0 : i32
    %2 = arith.cmpi ne, %1, %c0_i32_0 : i32
    scf.if %2 {
      %cst_10 = arith.constant 0.000000e+00 : f32
      %12 = vector.broadcast %cst_10 : f32 to vector<512x512xf32>
      %c0_11 = arith.constant 0 : index
      %c0_12 = arith.constant 0 : index
      %13 = vector.load %arg6[%c0_11, %c0_12] : memref<512x512xf32, #tpu.memory_space<vmem>>, vector<512x512xf32>
      tpu.vector_store %arg6[%c0_11, %c0_12], %12 {strides = array<i32>} : memref<512x512xf32, #tpu.memory_space<vmem>>, vector<512x512xf32>,
    } else {
    }
    %c0 = arith.constant 0 : index
    %c0_1 = arith.constant 0 : index
    %3 = vector.load %arg6[%c0, %c0_1] : memref<512x512xf32, #tpu.memory_space<vmem>>, vector<512x512xf32>
    %c0_2 = arith.constant 0 : index
    %c0_3 = arith.constant 0 : index
    %4 = vector.load %arg3[%c0_2, %c0_3] : memref<512x512xf32, #tpu.memory_space<vmem>>, vector<512x512xf32>
    %c0_4 = arith.constant 0 : index
    %c0_5 = arith.constant 0 : index
    %5 = vector.load %arg4[%c0_4, %c0_5] : memref<512x512xf32, #tpu.memory_space<vmem>>, vector<512x512xf32>
    %cst = arith.constant dense<0.000000e+00> : vector<512x512xf32>
    %6 = tpu.matmul %4, %5, %cst {dimension_numbers = #tpu.dot_dimension_numbers<[1], [0], [0], [1], [0, 0, 1, 1], [], []>} : vector<512x512xf32>, vector<512x512xf32>, vector<512x512xf32> -> vector<512x512xf32>
    %7 = arith.addf %3, %6 : vector<512x512xf32>
    %c0_6 = arith.constant 0 : index
    %c0_7 = arith.constant 0 : index
    %8 = vector.load %arg6[%c0_6, %c0_7] : memref<512x512xf32, #tpu.memory_space<vmem>>, vector<512x512xf32>
    tpu.vector_store %arg6[%c0_6, %c0_7], %7 {strides = array<i32>} : memref<512x512xf32, #tpu.memory_space<vmem>>, vector<512x512xf32>,
    %c0_i32_8 = arith.constant 0 : i32
    %9 = arith.cmpi eq, %arg2, %c0_i32_8 : i32
    %10 = arith.extui %9 : i1 to i32
    %c0_i32_9 = arith.constant 0 : i32
    %11 = arith.cmpi ne, %10, %c0_i32_9 : i32
    scf.if %11 {
      %c0_10 = arith.constant 0 : index
      %c0_11 = arith.constant 0 : index
      %12 = vector.load %arg6[%c0_10, %c0_11] : memref<512x512xf32, #tpu.memory_space<vmem>>, vector<512x512xf32>
      %c0_12 = arith.constant 0 : index
      %c0_13 = arith.constant 0 : index
      %13 = vector.load %arg5[%c0_12, %c0_13] : memref<512x512xf32, #tpu.memory_space<vmem>>, vector<512x512xf32>
      tpu.vector_store %arg5[%c0_12, %c0_13], %12 {strides = array<i32>} : memref<512x512xf32, #tpu.memory_space<vmem>>, vector<512x512xf32>,
    } else {
    }
    return
  }
  func.func @transform_0(%arg0: i32, %arg1: i32, %arg2: i32) -> (i32, i32) {
    %c0_i32 = arith.constant 0 : i32
    return %arg0, %arg2 : i32, i32
  }
  func.func @transform_1(%arg0: i32, %arg1: i32, %arg2: i32) -> (i32, i32) {
    %c0_i32 = arith.constant 0 : i32
    return %arg2, %arg1 : i32, i32
  }
  func.func @transform_2(%arg0: i32, %arg1: i32, %arg2: i32) -> (i32, i32) {
    %c0_i32 = arith.constant 0 : i32
    return %arg0, %arg1 : i32, i32
  }
}

</mosaic_0001>

<llo_original>
// kernel: tpu_custom_call.1
$region0: #{tpu_custom_call.1}
  #allocation0 [shape = 'u32[]', space=smem, size = 0x4, offset = 0x4, fixed_abs, tag = 'smem constant byte address 0x4 - core index']
  #allocation1 [shape = 'u32[72,128]{1,0:T(1,128)}', space=vmem, size = 0x9000, scoped, tag = 'internal scratch']
  #allocation2 [shape = 'f32[512,512]{1,0:T(8,128)}', space=vmem, size = 0x100000, scoped, tag = 'scratch operand']
  %s0 = inlined_call_operand.hbm [shape: f32[512,512], index: 0, kind: input, shape index: {}]
  %s1 = inlined_call_operand.hbm [shape: f32[512,1024], index: 1, kind: input, shape index: {}]
  %s2 = inlined_call_operand.hbm [shape: f32[512,1024], index: 2, kind: output, shape index: {}]
  %s3 = sld [smem:[#allocation0]]
  $region57: #{tpu_custom_call.1} parent=0
    _
  %s5 = ssub.s32 1, %s3
  %s6 = scalar_select 0, %s5, %s3
  $region1: #{tpu_custom_call.1} parent=0
    #allocation3 [shape = 'u8[1048576]{0}', space=vmem, size = 0x100000, scoped, tag = 'input window, operand 0, single buffered']
    #allocation4 [shape = 's32[2]{0}', space=sflag, size = 0x8, scoped, tag = 'scoped memory for tpu_custom_call.1']
    #allocation5 [shape = 's32[2]{0}', space=sflag, size = 0x8, scoped, tag = 'scoped memory for tpu_custom_call.1']
    #allocation6 [shape = 'u8[2097152]{0}', space=vmem, size = 0x200000, scoped, tag = 'input window, operand 1']
    #allocation7 [shape = 's32[2]{0}', space=sflag, size = 0x8, scoped, tag = 'scoped memory for tpu_custom_call.1']
    #allocation8 [shape = 'u8[2097152]{0}', space=vmem, size = 0x200000, scoped, tag = 'output window, operand 0']
    %7 = vsyncpa [#allocation4], 0
    %8 = vsyncpa [#allocation7], 0
    %s9 = scalar_lea.sflag [#allocation7], 1
    %10 = vsyncpa %s9, 0
    %11 = vsyncpa [#allocation5], 0
    %s12 = scalar_lea.sflag [#allocation5], 1
    %13 = vsyncpa %s12, 0
    loop: start=0, step=1, limit=4
    $region2: #{tpu_custom_call.1} parent=1 // loop_pre_header
      _
    $region3: #{tpu_custom_call.1} parent=1 // loop_header
      %s15 = sphi 0, %s19
      %p16 = scmp.ge.s32.totalorder %s15, 4
      %s22 = sphi 0, %s41
      %s23 = sphi 0, %s37
      %s24 = sphi 0, %s33
      %s25 = sphi 0, %s22
      %s26 = sphi 0, %s23
      %s27 = sphi 0, %s24
      %s28 = sphi 0, %s25
      %s29 = sphi 0, %s26
      %s30 = sphi 0, %s27
      %s46 = sphi 0, %s48
      %s49 = sphi 0, %s46
      %s50 = sphi 0, %s49
      %s66 = sphi 0, %s50
      %s74 = sphi 0, %s76
      %s77 = sphi 0, %s74
      %s78 = sphi 0, %s77
      %s94 = sphi 0, %s78
      %s102 = sphi 0, %s104
      %s105 = sphi 0, %s102
      %s106 = sphi 0, %s105
      %s122 = sphi 0, %s106
    $region4: #{tpu_custom_call.1} parent=1 // loop_header_branch
      %18 = sbr.rel (%p16) target = $region8
    $region5: #{tpu_custom_call.1} parent=1 // loop_body
      %s20 = ssub.s32 %s15, 1
      %s21 = ssub.s32 %s15, 2
      %s31 = sadd.s32 1, %s24
      %p32 = scmp.ge.s32.totalorder %s31, 1
      %s33 = scalar_select %p32, 0, %s31
      %s34 = sadd.s32 1, %s23
      %s35 = scalar_select %p32, %s34, %s23
      %p36 = scmp.ge.s32.totalorder %s35, 2
      %s37 = scalar_select %p36, 0, %s35
      %s38 = sadd.s32 1, %s22
      %s39 = scalar_select %p36, %s38, %s22
      %p40 = scmp.ge.s32.totalorder %s39, 1
      %s41 = scalar_select %p40, 0, %s39
      %s42 = ssub.s32 %s22, %s41
      %s43 = ssub.s32 %s24, %s33
      %s44 = sor.u32 %s42, %s43
      %p45 = scmp.eq.s32.totalorder %s44, 0
      %s47 = sadd.s32 %s46, 1
      %s48 = scalar_select %p45, %s46, %s47
      %p51 = pneg %p45
      %p52 = scmp.eq.s32.totalorder %s15, 1
      %p53 = por %p51, %p52
      %p54 = scmp.ne.s32.totalorder %s46, %s49
      %p55 = scmp.eq.s32.totalorder %s15, 0
      %p56 = por %p54, %p55
      %p57 = scmp.ne.s32.totalorder %s46, %s49
      %p58 = scmp.eq.s32.totalorder %s20, 1
      %p59 = por %p57, %p58
      %p60 = scmp.ne.s32.totalorder %s49, %s50
      %p61 = scmp.eq.s32.totalorder %s20, 0
      %p62 = por %p60, %p61
      %p63 = scmp.ne.s32.totalorder %s49, %s50
      %p64 = scmp.eq.s32.totalorder %s21, 1
      %p65 = por %p63, %p64
      %p67 = scmp.ne.s32.totalorder %s50, %s66
      %p68 = scmp.eq.s32.totalorder %s21, 0
      %p69 = por %p67, %p68
      %s70 = ssub.s32 %s24, %s33
      %s71 = ssub.s32 %s23, %s37
      %s72 = sor.u32 %s70, %s71
      %p73 = scmp.eq.s32.totalorder %s72, 0
      %s75 = sadd.s32 %s74, 1
      %s76 = scalar_select %p73, %s74, %s75
      %p79 = pneg %p73
      %p80 = scmp.eq.s32.totalorder %s15, 1
      %p81 = por %p79, %p80
      %p82 = scmp.ne.s32.totalorder %s74, %s77
      %p83 = scmp.eq.s32.totalorder %s15, 0
      %p84 = por %p82, %p83
      %p85 = scmp.ne.s32.totalorder %s74, %s77
      %p86 = scmp.eq.s32.totalorder %s20, 1
      %p87 = por %p85, %p86
      %p88 = scmp.ne.s32.totalorder %s77, %s78
      %p89 = scmp.eq.s32.totalorder %s20, 0
      %p90 = por %p88, %p89
      %p91 = scmp.ne.s32.totalorder %s77, %s78
      %p92 = scmp.eq.s32.totalorder %s21, 1
      %p93 = por %p91, %p92
      %p95 = scmp.ne.s32.totalorder %s78, %s94
      %p96 = scmp.eq.s32.totalorder %s21, 0
      %p97 = por %p95, %p96
      %s98 = ssub.s32 %s22, %s41
      %s99 = ssub.s32 %s23, %s37
      %s100 = sor.u32 %s98, %s99
      %p101 = scmp.eq.s32.totalorder %s100, 0
      %s103 = sadd.s32 %s102, 1
      %s104 = scalar_select %p101, %s102, %s103
      %p107 = pneg %p101
      %p108 = scmp.eq.s32.totalorder %s15, 1
      %p109 = por %p107, %p108
      %p110 = scmp.ne.s32.totalorder %s102, %s105
      %p111 = scmp.eq.s32.totalorder %s15, 0
      %p112 = por %p110, %p111
      %p113 = scmp.ne.s32.totalorder %s102, %s105
      %p114 = scmp.eq.s32.totalorder %s20, 1
      %p115 = por %p113, %p114
      %p116 = scmp.ne.s32.totalorder %s105, %s106
      %p117 = scmp.eq.s32.totalorder %s20, 0
      %p118 = por %p116, %p117
      %p119 = scmp.ne.s32.totalorder %s105, %s106
      %p120 = scmp.eq.s32.totalorder %s21, 1
      %p121 = por %p119, %p120
      %p123 = scmp.ne.s32.totalorder %s106, %s122
      %p124 = scmp.eq.s32.totalorder %s21, 0
      %p125 = por %p123, %p124
      %p126 = scmp.le.s32.totalorder 1, %s15
      %p127 = scmp.lt.s32.totalorder %s15, 3
      %p128 = pnand %p126, %p127
      %p129 = pneg %p128
      // Predicated region
      $region9: #{tpu_custom_call.1} parent=5 // pred_check
        _
      $region10: #{tpu_custom_call.1} parent=5 // pred_check_branch
        %131 = sbr.rel (%p128) target = $region12
      $region11: #{tpu_custom_call.1} parent=5 // pred_region
        %s132 = ssub.s32 %s15, 1
        // Predicated region
        $region13: #{tpu_custom_call.1} parent=11 // pred_check
          %p133 = pneg %p62
        $region14: #{tpu_custom_call.1} parent=11 // pred_check_branch
          %135 = sbr.rel (%p133) target = $region16
        $region15: #{tpu_custom_call.1} parent=11 // pred_region
          %s136 = smul.u32 64, %s25
          %s137 = smul.u32 4, %s27
          %139 = vsyncadd [#allocation4], 0
          %s140 = smul.addr %s136, 4
          %s141 = sadd.s32 %s137, %s140
          %s142 = smul.addr %s141, 8
          %s143 = scalar_lea.hbm %s0, %s142
          %s144 = sshll.u32 %s143, 4
          %s145 = int_to_ptr.hbm [resolvable:$true] %s144
          %s146 = sshll.u32 [#allocation3], 4
          %s147 = int_to_ptr.vmem [resolvable:$true] %s146
          %152 = dma.hbm_to_vmem [thread:$0]  %s145, 32768, %s147, [#allocation4], 512, 512, 32
        $region16: #{tpu_custom_call.1} parent=11 // pred_fallthru
          _
      $region12: #{tpu_custom_call.1} parent=5 // pred_fallthru
        _
      %p153 = scmp.lt.s32.totalorder %s15, 2
      // Predicated region
      $region17: #{tpu_custom_call.1} parent=5 // pred_check
        %p154 = pneg %p153
      $region18: #{tpu_custom_call.1} parent=5 // pred_check_branch
        %156 = sbr.rel (%p154) target = $region20
      $region19: #{tpu_custom_call.1} parent=5 // pred_region
        // Predicated region
        $region21: #{tpu_custom_call.1} parent=19 // pred_check
          %p157 = pneg %p84
        $region22: #{tpu_custom_call.1} parent=19 // pred_check_branch
          %159 = sbr.rel (%p157) target = $region24
        $region23: #{tpu_custom_call.1} parent=19 // pred_region
          %s160 = sand.u32 %s74, 1
          %s161 = scalar_lea.sflag [#allocation7], %s160
          %s162 = sand.u32 %s74, 1
          %s163 = smul.addr %s162, 2048
          %s164 = scalar_lea.vmem [#allocation6], %s163
          %s165 = smul.u32 64, %s24
          %s166 = smul.u32 4, %s23
          %168 = vsyncadd %s161, 0
          %s169 = smul.addr %s165, 8
          %s170 = sadd.s32 %s166, %s169
          %s171 = smul.addr %s170, 8
          %s172 = scalar_lea.hbm %s1, %s171
          %s173 = sshll.u32 %s172, 4
          %s174 = int_to_ptr.hbm [resolvable:$true] %s173
          %s175 = sshll.u32 %s164, 4
          %s176 = int_to_ptr.vmem [resolvable:$true] %s175
          %181 = dma.hbm_to_vmem [thread:$0]  %s174, 32768, %s176, %s161, 1024, 512, 32
        $region24: #{tpu_custom_call.1} parent=19 // pred_fallthru
          _
      $region20: #{tpu_custom_call.1} parent=5 // pred_fallthru
        _
      %p182 = scmp.le.s32.totalorder 1, %s15
      %p183 = scmp.lt.s32.totalorder %s15, 3
      %p184 = pnand %p182, %p183
      %p185 = pneg %p184
      // Predicated region
      $region25: #{tpu_custom_call.1} parent=5 // pred_check
        _
      $region26: #{tpu_custom_call.1} parent=5 // pred_check_branch
        %187 = sbr.rel (%p184) target = $region28
      $region27: #{tpu_custom_call.1} parent=5 // pred_region
        %s188 = ssub.s32 %s15, 1
        // Predicated region
        $region29: #{tpu_custom_call.1} parent=27 // pred_check
          %p189 = pneg %p62
        $region30: #{tpu_custom_call.1} parent=27 // pred_check_branch
          %191 = sbr.rel (%p189) target = $region32
        $region31: #{tpu_custom_call.1} parent=27 // pred_region
          %193 = dma.done [#allocation4], 32768
        $region32: #{tpu_custom_call.1} parent=27 // pred_fallthru
          _
        %s194 = sand.u32 %s77, 1
        %s195 = scalar_lea.sflag [#allocation7], %s194
        %s196 = sand.u32 %s77, 1
        %s197 = smul.addr %s196, 2048
        %s198 = scalar_lea.vmem [#allocation6], %s197
        // Predicated region
        $region33: #{tpu_custom_call.1} parent=27 // pred_check
          %p199 = pneg %p90
        $region34: #{tpu_custom_call.1} parent=27 // pred_check_branch
          %201 = sbr.rel (%p199) target = $region36
        $region35: #{tpu_custom_call.1} parent=27 // pred_region
          %203 = dma.done %s195, 32768
        $region36: #{tpu_custom_call.1} parent=27 // pred_fallthru
          _
        %p204 = pneg %p62
        %p205 = pneg %p59
        %s206 = sand.u32 %s77, 1
        %s207 = scalar_lea.sflag [#allocation7], %s206
        %s208 = sand.u32 %s77, 1
        %s209 = smul.addr %s208, 2048
        %s210 = scalar_lea.vmem [#allocation6], %s209
        %p211 = pneg %p90
        %p212 = pneg %p87
        %p213 = pneg %p118
        %p214 = pneg %p115
        %s215 = sand.u32 %s105, 1
        %s216 = scalar_lea.sflag [#allocation5], %s215
        %s217 = sand.u32 %s105, 1
        %s218 = smul.addr %s217, 2048
        %s219 = scalar_lea.vmem [#allocation8], %s218
        %s220 = smul.u32 64, %s25
        %s221 = smul.u32 4, %s27
        %s222 = smul.u32 64, %s27
        %s223 = smul.u32 4, %s26
        %s224 = smul.u32 64, %s25
        %s225 = smul.u32 4, %s26
        %p226 = scmp.eq.s32.totalorder %s27, 0
        // Predicated region
        $region37: #{tpu_custom_call.1} parent=27 // pred_check
          %p227 = pneg %p226
        $region38: #{tpu_custom_call.1} parent=27 // pred_check_branch
          %229 = sbr.rel (%p227) target = $region40
        $region39: #{tpu_custom_call.1} parent=27 // pred_region
          %230 = vst [vmem:[#allocation2] sm:$0xff] 0.0
          %231 = vst [vmem:[#allocation2 + $0x8] sm:$0xff] 0.0
          %232 = vst [vmem:[#allocation2 + $0x10] sm:$0xff] 0.0
          %233 = vst [vmem:[#allocation2 + $0x18] sm:$0xff] 0.0
          %234 = vst [vmem:[#allocation2 + $0x20] sm:$0xff] 0.0
          %235 = vst [vmem:[#allocation2 + $0x28] sm:$0xff] 0.0
          %236 = vst [vmem:[#allocation2 + $0x30] sm:$0xff] 0.0
          %237 = vst [vmem:[#allocation2 + $0x38] sm:$0xff] 0.0
          %238 = vst [vmem:[#allocation2 + $0x40] sm:$0xff] 0.0
          %239 = vst [vmem:[#allocation2 + $0x48] sm:$0xff] 0.0
          %240 = vst [vmem:[#allocation2 + $0x50] sm:$0xff] 0.0
          %241 = vst [vmem:[#allocation2 + $0x58] sm:$0xff] 0.0
          %242 = vst [vmem:[#allocation2 + $0x60] sm:$0xff] 0.0
          %243 = vst [vmem:[#allocation2 + $0x68] sm:$0xff] 0.0
          %244 = vst [vmem:[#allocation2 + $0x70] sm:$0xff] 0.0
          %245 = vst [vmem:[#allocation2 + $0x78] sm:$0xff] 0.0
          %246 = vst [vmem:[#allocation2 + $0x80] sm:$0xff] 0.0
          %247 = vst [vmem:[#allocation2 + $0x88] sm:$0xff] 0.0
          %248 = vst [vmem:[#allocation2 + $0x90] sm:$0xff] 0.0
          %249 = vst [vmem:[#allocation2 + $0x98] sm:$0xff] 0.0
          %250 = vst [vmem:[#allocation2 + $0xa0] sm:$0xff] 0.0
          %251 = vst [vmem:[#allocation2 + $0xa8] sm:$0xff] 0.0
          %252 = vst [vmem:[#allocation2 + $0xb0] sm:$0xff] 0.0
          %253 = vst [vmem:[#allocation2 + $0xb8] sm:$0xff] 0.0
          %254 = vst [vmem:[#allocation2 + $0xc0] sm:$0xff] 0.0
          %255 = vst [vmem:[#allocation2 + $0xc8] sm:$0xff] 0.0
          %256 = vst [vmem:[#allocation2 + $0xd0] sm:$0xff] 0.0
          %257 = vst [vmem:[#allocation2 + $0xd8] sm:$0xff] 0.0
          %258 = vst [vmem:[#allocation2 + $0xe0] sm:$0xff] 0.0
          %259 = vst [vmem:[#allocation2 + $0xe8] sm:$0xff] 0.0
          %260 = vst [vmem:[#allocation2 + $0xf0] sm:$0xff] 0.0
          %261 = vst [vmem:[#allocation2 + $0xf8] sm:$0xff] 0.0
          %262 = vst [vmem:[#allocation2 + $0x100] sm:$0xff] 0.0
          %263 = vst [vmem:[#allocation2 + $0x108] sm:$0xff] 0.0
          %264 = vst [vmem:[#allocation2 + $0x110] sm:$0xff] 0.0
          %265 = vst [vmem:[#allocation2 + $0x118] sm:$0xff] 0.0
          %266 = vst [vmem:[#allocation2 + $0x120] sm:$0xff] 0.0
          %267 = vst [vmem:[#allocation2 + $0x128] sm:$0xff] 0.0
          %268 = vst [vmem:[#allocation2 + $0x130] sm:$0xff] 0.0
          %269 = vst [vmem:[#allocation2 + $0x138] sm:$0xff] 0.0
          %270 = vst [vmem:[#allocation2 + $0x140] sm:$0xff] 0.0
          %271 = vst [vmem:[#allocation2 + $0x148] sm:$0xff] 0.0
          %272 = vst [vmem:[#allocation2 + $0x150] sm:$0xff] 0.0
          %273 = vst [vmem:[#allocation2 + $0x158] sm:$0xff] 0.0
          %274 = vst [vmem:[#allocation2 + $0x160] sm:$0xff] 0.0
          %275 = vst [vmem:[#allocation2 + $0x168] sm:$0xff] 0.0
          %276 = vst [vmem:[#allocation2 + $0x170] sm:$0xff] 0.0
          %277 = vst [vmem:[#allocation2 + $0x178] sm:$0xff] 0.0
          %278 = vst [vmem:[#allocation2 + $0x180] sm:$0xff] 0.0
          %279 = vst [vmem:[#allocation2 + $0x188] sm:$0xff] 0.0
          %280 = vst [vmem:[#allocation2 + $0x190] sm:$0xff] 0.0
          %281 = vst [vmem:[#allocation2 + $0x198] sm:$0xff] 0.0
          %282 = vst [vmem:[#allocation2 + $0x1a0] sm:$0xff] 0.0
          %283 = vst [vmem:[#allocation2 + $0x1a8] sm:$0xff] 0.0
          %284 = vst [vmem:[#allocation2 + $0x1b0] sm:$0xff] 0.0
          %285 = vst [vmem:[#allocation2 + $0x1b8] sm:$0xff] 0.0
          %286 = vst [vmem:[#allocation2 + $0x1c0] sm:$0xff] 0.0
          %287 = vst [vmem:[#allocation2 + $0x1c8] sm:$0xff] 0.0
          %288 = vst [vmem:[#allocation2 + $0x1d0] sm:$0xff] 0.0
          %289 = vst [vmem:[#allocation2 + $0x1d8] sm:$0xff] 0.0
          %290 = vst [vmem:[#allocation2 + $0x1e0] sm:$0xff] 0.0
          %291 = vst [vmem:[#allocation2 + $0x1e8] sm:$0xff] 0.0
          %292 = vst [vmem:[#allocation2 + $0x1f0] sm:$0xff] 0.0
          %293 = vst [vmem:[#allocation2 + $0x1f8] sm:$0xff] 0.0
          %294 = vst [vmem:[#allocation2 + $0x200] sm:$0xff] 0.0
          %295 = vst [vmem:[#allocation2 + $0x208] sm:$0xff] 0.0
          %296 = vst [vmem:[#allocation2 + $0x210] sm:$0xff] 0.0
          %297 = vst [vmem:[#allocation2 + $0x218] sm:$0xff] 0.0
          %298 = vst [vmem:[#allocation2 + $0x220] sm:$0xff] 0.0
          %299 = vst [vmem:[#allocation2 + $0x228] sm:$0xff] 0.0
          %300 = vst [vmem:[#allocation2 + $0x230] sm:$0xff] 0.0
          %301 = vst [vmem:[#allocation2 + $0x238] sm:$0xff] 0.0
          %302 = vst [vmem:[#allocation2 + $0x240] sm:$0xff] 0.0
          %303 = vst [vmem:[#allocation2 + $0x248] sm:$0xff] 0.0
          %304 = vst [vmem:[#allocation2 + $0x250] sm:$0xff] 0.0
          %305 = vst [vmem:[#allocation2 + $0x258] sm:$0xff] 0.0
          %306 = vst [vmem:[#allocation2 + $0x260] sm:$0xff] 0.0
          %307 = vst [vmem:[#allocation2 + $0x268] sm:$0xff] 0.0
          %308 = vst [vmem:[#allocation2 + $0x270] sm:$0xff] 0.0
          %309 = vst [vmem:[#allocation2 + $0x278] sm:$0xff] 0.0
          %310 = vst [vmem:[#allocation2 + $0x280] sm:$0xff] 0.0
          %311 = vst [vmem:[#allocation2 + $0x288] sm:$0xff] 0.0
          %312 = vst [vmem:[#allocation2 + $0x290] sm:$0xff] 0.0
          %313 = vst [vmem:[#allocation2 + $0x298] sm:$0xff] 0.0
          %314 = vst [vmem:[#allocation2 + $0x2a0] sm:$0xff] 0.0
          %315 = vst [vmem:[#allocation2 + $0x2a8] sm:$0xff] 0.0
          %316 = vst [vmem:[#allocation2 + $0x2b0] sm:$0xff] 0.0
          %317 = vst [vmem:[#allocation2 + $0x2b8] sm:$0xff] 0.0
          %318 = vst [vmem:[#allocation2 + $0x2c0] sm:$0xff] 0.0
          %319 = vst [vmem:[#allocation2 + $0x2c8] sm:$0xff] 0.0
          %320 = vst [vmem:[#allocation2 + $0x2d0] sm:$0xff] 0.0
          %321 = vst [vmem:[#allocation2 + $0x2d8] sm:$0xff] 0.0
          %322 = vst [vmem:[#allocation2 + $0x2e0] sm:$0xff] 0.0
          %323 = vst [vmem:[#allocation2 + $0x2e8] sm:$0xff] 0.0
          %324 = vst [vmem:[#allocation2 + $0x2f0] sm:$0xff] 0.0
          %325 = vst [vmem:[#allocation2 + $0x2f8] sm:$0xff] 0.0
          %326 = vst [vmem:[#allocation2 + $0x300] sm:$0xff] 0.0
          %327 = vst [vmem:[#allocation2 + $0x308] sm:$0xff] 0.0
          %328 = vst [vmem:[#allocation2 + $0x310] sm:$0xff] 0.0
          %329 = vst [vmem:[#allocation2 + $0x318] sm:$0xff] 0.0
          %330 = vst [vmem:[#allocation2 + $0x320] sm:$0xff] 0.0
          %331 = vst [vmem:[#allocation2 + $0x328] sm:$0xff] 0.0
          %332 = vst [vmem:[#allocation2 + $0x330] sm:$0xff] 0.0
          %333 = vst [vmem:[#allocation2 + $0x338] sm:$0xff] 0.0
          %334 = vst [vmem:[#allocation2 + $0x340] sm:$0xff] 0.0
          %335 = vst [vmem:[#allocation2 + $0x348] sm:$0xff] 0.0
          %336 = vst [vmem:[#allocation2 + $0x350] sm:$0xff] 0.0
          %337 = vst [vmem:[#allocation2 + $0x358] sm:$0xff] 0.0
          %338 = vst [vmem:[#allocation2 + $0x360] sm:$0xff] 0.0
          %339 = vst [vmem:[#allocation2 + $0x368] sm:$0xff] 0.0
          %340 = vst [vmem:[#allocation2 + $0x370] sm:$0xff] 0.0
          %341 = vst [vmem:[#allocation2 + $0x378] sm:$0xff] 0.0
          %342 = vst [vmem:[#allocation2 + $0x380] sm:$0xff] 0.0
          %343 = vst [vmem:[#allocation2 + $0x388] sm:$0xff] 0.0
          %344 = vst [vmem:[#allocation2 + $0x390] sm:$0xff] 0.0
          %345 = vst [vmem:[#allocation2 + $0x398] sm:$0xff] 0.0
          %346 = vst [vmem:[#allocation2 + $0x3a0] sm:$0xff] 0.0
          %347 = vst [vmem:[#allocation2 + $0x3a8] sm:$0xff] 0.0
          %348 = vst [vmem:[#allocation2 + $0x3b0] sm:$0xff] 0.0
          %349 = vst [vmem:[#allocation2 + $0x3b8] sm:$0xff] 0.0
          %350 = vst [vmem:[#allocation2 + $0x3c0] sm:$0xff] 0.0
          %351 = vst [vmem:[#allocation2 + $0x3c8] sm:$0xff] 0.0
          %352 = vst [vmem:[#allocation2 + $0x3d0] sm:$0xff] 0.0
          %353 = vst [vmem:[#allocation2 + $0x3d8] sm:$0xff] 0.0
          %354 = vst [vmem:[#allocation2 + $0x3e0] sm:$0xff] 0.0
          %355 = vst [vmem:[#allocation2 + $0x3e8] sm:$0xff] 0.0
          %356 = vst [vmem:[#allocation2 + $0x3f0] sm:$0xff] 0.0
          %357 = vst [vmem:[#allocation2 + $0x3f8] sm:$0xff] 0.0
          %358 = vst [vmem:[#allocation2 + $0x400] sm:$0xff] 0.0
          %359 = vst [vmem:[#allocation2 + $0x408] sm:$0xff] 0.0
          %360 = vst [vmem:[#allocation2 + $0x410] sm:$0xff] 0.0
          %361 = vst [vmem:[#allocation2 + $0x418] sm:$0xff] 0.0
          %362 = vst [vmem:[#allocation2 + $0x420] sm:$0xff] 0.0
          %363 = vst [vmem:[#allocation2 + $0x428] sm:$0xff] 0.0
          %364 = vst [vmem:[#allocation2 + $0x430] sm:$0xff] 0.0
          %365 = vst [vmem:[#allocation2 + $0x438] sm:$0xff] 0.0
          %366 = vst [vmem:[#allocation2 + $0x440] sm:$0xff] 0.0
          %367 = vst [vmem:[#allocation2 + $0x448] sm:$0xff] 0.0
          %368 = vst [vmem:[#allocation2 + $0x450] sm:$0xff] 0.0
          %369 = vst [vmem:[#allocation2 + $0x458] sm:$0xff] 0.0
          %370 = vst [vmem:[#allocation2 + $0x460] sm:$0xff] 0.0
          %371 = vst [vmem:[#allocation2 + $0x468] sm:$0xff] 0.0
          %372 = vst [vmem:[#allocation2 + $0x470] sm:$0xff] 0.0
          %373 = vst [vmem:[#allocation2 + $0x478] sm:$0xff] 0.0
          %374 = vst [vmem:[#allocation2 + $0x480] sm:$0xff] 0.0
          %375 = vst [vmem:[#allocation2 + $0x488] sm:$0xff] 0.0
          %376 = vst [vmem:[#allocation2 + $0x490] sm:$0xff] 0.0
          %377 = vst [vmem:[#allocation2 + $0x498] sm:$0xff] 0.0
          %378 = vst [vmem:[#allocation2 + $0x4a0] sm:$0xff] 0.0
          %379 = vst [vmem:[#allocation2 + $0x4a8] sm:$0xff] 0.0
          %380 = vst [vmem:[#allocation2 + $0x4b0] sm:$0xff] 0.0
          %381 = vst [vmem:[#allocation2 + $0x4b8] sm:$0xff] 0.0
          %382 = vst [vmem:[#allocation2 + $0x4c0] sm:$0xff] 0.0
          %383 = vst [vmem:[#allocation2 + $0x4c8] sm:$0xff] 0.0
          %384 = vst [vmem:[#allocation2 + $0x4d0] sm:$0xff] 0.0
          %385 = vst [vmem:[#allocation2 + $0x4d8] sm:$0xff] 0.0
          %386 = vst [vmem:[#allocation2 + $0x4e0] sm:$0xff] 0.0
          %387 = vst [vmem:[#allocation2 + $0x4e8] sm:$0xff] 0.0
          %388 = vst [vmem:[#allocation2 + $0x4f0] sm:$0xff] 0.0
          %389 = vst [vmem:[#allocation2 + $0x4f8] sm:$0xff] 0.0
          %390 = vst [vmem:[#allocation2 + $0x500] sm:$0xff] 0.0
          %391 = vst [vmem:[#allocation2 + $0x508] sm:$0xff] 0.0
          %392 = vst [vmem:[#allocation2 + $0x510] sm:$0xff] 0.0
          %393 = vst [vmem:[#allocation2 + $0x518] sm:$0xff] 0.0
          %394 = vst [vmem:[#allocation2 + $0x520] sm:$0xff] 0.0
          %395 = vst [vmem:[#allocation2 + $0x528] sm:$0xff] 0.0
          %396 = vst [vmem:[#allocation2 + $0x530] sm:$0xff] 0.0
          %397 = vst [vmem:[#allocation2 + $0x538] sm:$0xff] 0.0
          %398 = vst [vmem:[#allocation2 + $0x540] sm:$0xff] 0.0
          %399 = vst [vmem:[#allocation2 + $0x548] sm:$0xff] 0.0
          %400 = vst [vmem:[#allocation2 + $0x550] sm:$0xff] 0.0
          %401 = vst [vmem:[#allocation2 + $0x558] sm:$0xff] 0.0
          %402 = vst [vmem:[#allocation2 + $0x560] sm:$0xff] 0.0
          %403 = vst [vmem:[#allocation2 + $0x568] sm:$0xff] 0.0
          %404 = vst [vmem:[#allocation2 + $0x570] sm:$0xff] 0.0
          %405 = vst [vmem:[#allocation2 + $0x578] sm:$0xff] 0.0
          %406 = vst [vmem:[#allocation2 + $0x580] sm:$0xff] 0.0
          %407 = vst [vmem:[#allocation2 + $0x588] sm:$0xff] 0.0
          %408 = vst [vmem:[#allocation2 + $0x590] sm:$0xff] 0.0
          %409 = vst [vmem:[#allocation2 + $0x598] sm:$0xff] 0.0
          %410 = vst [vmem:[#allocation2 + $0x5a0] sm:$0xff] 0.0
          %411 = vst [vmem:[#allocation2 + $0x5a8] sm:$0xff] 0.0
          %412 = vst [vmem:[#allocation2 + $0x5b0] sm:$0xff] 0.0
          %413 = vst [vmem:[#allocation2 + $0x5b8] sm:$0xff] 0.0
          %414 = vst [vmem:[#allocation2 + $0x5c0] sm:$0xff] 0.0
          %415 = vst [vmem:[#allocation2 + $0x5c8] sm:$0xff] 0.0
          %416 = vst [vmem:[#allocation2 + $0x5d0] sm:$0xff] 0.0
          %417 = vst [vmem:[#allocation2 + $0x5d8] sm:$0xff] 0.0
          %418 = vst [vmem:[#allocation2 + $0x5e0] sm:$0xff] 0.0
          %419 = vst [vmem:[#allocation2 + $0x5e8] sm:$0xff] 0.0
          %420 = vst [vmem:[#allocation2 + $0x5f0] sm:$0xff] 0.0
          %421 = vst [vmem:[#allocation2 + $0x5f8] sm:$0xff] 0.0
          %422 = vst [vmem:[#allocation2 + $0x600] sm:$0xff] 0.0
          %423 = vst [vmem:[#allocation2 + $0x608] sm:$0xff] 0.0
          %424 = vst [vmem:[#allocation2 + $0x610] sm:$0xff] 0.0
          %425 = vst [vmem:[#allocation2 + $0x618] sm:$0xff] 0.0
          %426 = vst [vmem:[#allocation2 + $0x620] sm:$0xff] 0.0
          %427 = vst [vmem:[#allocation2 + $0x628] sm:$0xff] 0.0
          %428 = vst [vmem:[#allocation2 + $0x630] sm:$0xff] 0.0
          %429 = vst [vmem:[#allocation2 + $0x638] sm:$0xff] 0.0
          %430 = vst [vmem:[#allocation2 + $0x640] sm:$0xff] 0.0
          %431 = vst [vmem:[#allocation2 + $0x648] sm:$0xff] 0.0
          %432 = vst [vmem:[#allocation2 + $0x650] sm:$0xff] 0.0
          %433 = vst [vmem:[#allocation2 + $0x658] sm:$0xff] 0.0
          %434 = vst [vmem:[#allocation2 + $0x660] sm:$0xff] 0.0
          %435 = vst [vmem:[#allocation2 + $0x668] sm:$0xff] 0.0
          %436 = vst [vmem:[#allocation2 + $0x670] sm:$0xff] 0.0
          %437 = vst [vmem:[#allocation2 + $0x678] sm:$0xff] 0.0
          %438 = vst [vmem:[#allocation2 + $0x680] sm:$0xff] 0.0
          %439 = vst [vmem:[#allocation2 + $0x688] sm:$0xff] 0.0
          %440 = vst [vmem:[#allocation2 + $0x690] sm:$0xff] 0.0
          %441 = vst [vmem:[#allocation2 + $0x698] sm:$0xff] 0.0
          %442 = vst [vmem:[#allocation2 + $0x6a0] sm:$0xff] 0.0
          %443 = vst [vmem:[#allocation2 + $0x6a8] sm:$0xff] 0.0
          %444 = vst [vmem:[#allocation2 + $0x6b0] sm:$0xff] 0.0
          %445 = vst [vmem:[#allocation2 + $0x6b8] sm:$0xff] 0.0
          %446 = vst [vmem:[#allocation2 + $0x6c0] sm:$0xff] 0.0
          %447 = vst [vmem:[#allocation2 + $0x6c8] sm:$0xff] 0.0
          %448 = vst [vmem:[#allocation2 + $0x6d0] sm:$0xff] 0.0
          %449 = vst [vmem:[#allocation2 + $0x6d8] sm:$0xff] 0.0
          %450 = vst [vmem:[#allocation2 + $0x6e0] sm:$0xff] 0.0
          %451 = vst [vmem:[#allocation2 + $0x6e8] sm:$0xff] 0.0
          %452 = vst [vmem:[#allocation2 + $0x6f0] sm:$0xff] 0.0
          %453 = vst [vmem:[#allocation2 + $0x6f8] sm:$0xff] 0.0
          %454 = vst [vmem:[#allocation2 + $0x700] sm:$0xff] 0.0
          %455 = vst [vmem:[#allocation2 + $0x708] sm:$0xff] 0.0
          %456 = vst [vmem:[#allocation2 + $0x710] sm:$0xff] 0.0
          %457 = vst [vmem:[#allocation2 + $0x718] sm:$0xff] 0.0
          %458 = vst [vmem:[#allocation2 + $0x720] sm:$0xff] 0.0
          %459 = vst [vmem:[#allocation2 + $0x728] sm:$0xff] 0.0
          %460 = vst [vmem:[#allocation2 + $0x730] sm:$0xff] 0.0
          %461 = vst [vmem:[#allocation2 + $0x738] sm:$0xff] 0.0
          %462 = vst [vmem:[#allocation2 + $0x740] sm:$0xff] 0.0
          %463 = vst [vmem:[#allocation2 + $0x748] sm:$0xff] 0.0
          %464 = vst [vmem:[#allocation2 + $0x750] sm:$0xff] 0.0
          %465 = vst [vmem:[#allocation2 + $0x758] sm:$0xff] 0.0
          %466 = vst [vmem:[#allocation2 + $0x760] sm:$0xff] 0.0
          %467 = vst [vmem:[#allocation2 + $0x768] sm:$0xff] 0.0
          %468 = vst [vmem:[#allocation2 + $0x770] sm:$0xff] 0.0
          %469 = vst [vmem:[#allocation2 + $0x778] sm:$0xff] 0.0
          %470 = vst [vmem:[#allocation2 + $0x780] sm:$0xff] 0.0
          %471 = vst [vmem:[#allocation2 + $0x788] sm:$0xff] 0.0
          %472 = vst [vmem:[#allocation2 + $0x790] sm:$0xff] 0.0
          %473 = vst [vmem:[#allocation2 + $0x798] sm:$0xff] 0.0
          %474 = vst [vmem:[#allocation2 + $0x7a0] sm:$0xff] 0.0
          %475 = vst [vmem:[#allocation2 + $0x7a8] sm:$0xff] 0.0
          %476 = vst [vmem:[#allocation2 + $0x7b0] sm:$0xff] 0.0
          %477 = vst [vmem:[#allocation2 + $0x7b8] sm:$0xff] 0.0
          %478 = vst [vmem:[#allocation2 + $0x7c0] sm:$0xff] 0.0
          %479 = vst [vmem:[#allocation2 + $0x7c8] sm:$0xff] 0.0
          %480 = vst [vmem:[#allocation2 + $0x7d0] sm:$0xff] 0.0
          %481 = vst [vmem:[#allocation2 + $0x7d8] sm:$0xff] 0.0
          %482 = vst [vmem:[#allocation2 + $0x7e0] sm:$0xff] 0.0
          %483 = vst [vmem:[#allocation2 + $0x7e8] sm:$0xff] 0.0
          %484 = vst [vmem:[#allocation2 + $0x7f0] sm:$0xff] 0.0
          %485 = vst [vmem:[#allocation2 + $0x7f8] sm:$0xff] 0.0
        $region40: #{tpu_custom_call.1} parent=27 // pred_fallthru
          _
        %v486 = vld [vmem:[#allocation2] sm:$0xff]
        %v487 = vld [vmem:[#allocation2 + $0x8] sm:$0xff]
        %v488 = vld [vmem:[#allocation2 + $0x10] sm:$0xff]
        %v489 = vld [vmem:[#allocation2 + $0x18] sm:$0xff]
        %v490 = vld [vmem:[#allocation2 + $0x20] sm:$0xff]
        %v491 = vld [vmem:[#allocation2 + $0x28] sm:$0xff]
        %v492 = vld [vmem:[#allocation2 + $0x30] sm:$0xff]
        %v493 = vld [vmem:[#allocation2 + $0x38] sm:$0xff]
        %v494 = vld [vmem:[#allocation2 + $0x40] sm:$0xff]
        %v495 = vld [vmem:[#allocation2 + $0x48] sm:$0xff]
        %v496 = vld [vmem:[#allocation2 + $0x50] sm:$0xff]
        %v497 = vld [vmem:[#allocation2 + $0x58] sm:$0xff]
        %v498 = vld [vmem:[#allocation2 + $0x60] sm:$0xff]
        %v499 = vld [vmem:[#allocation2 + $0x68] sm:$0xff]
        %v500 = vld [vmem:[#allocation2 + $0x70] sm:$0xff]
        %v501 = vld [vmem:[#allocation2 + $0x78] sm:$0xff]
        %v502 = vld [vmem:[#allocation2 + $0x80] sm:$0xff]
        %v503 = vld [vmem:[#allocation2 + $0x88] sm:$0xff]
        %v504 = vld [vmem:[#allocation2 + $0x90] sm:$0xff]
        %v505 = vld [vmem:[#allocation2 + $0x98] sm:$0xff]
        %v506 = vld [vmem:[#allocation2 + $0xa0] sm:$0xff]
        %v507 = vld [vmem:[#allocation2 + $0xa8] sm:$0xff]
        %v508 = vld [vmem:[#allocation2 + $0xb0] sm:$0xff]
        %v509 = vld [vmem:[#allocation2 + $0xb8] sm:$0xff]
        %v510 = vld [vmem:[#allocation2 + $0xc0] sm:$0xff]
        %v511 = vld [vmem:[#allocation2 + $0xc8] sm:$0xff]
        %v512 = vld [vmem:[#allocation2 + $0xd0] sm:$0xff]
        %v513 = vld [vmem:[#allocation2 + $0xd8] sm:$0xff]
        %v514 = vld [vmem:[#allocation2 + $0xe0] sm:$0xff]
        %v515 = vld [vmem:[#allocation2 + $0xe8] sm:$0xff]
        %v516 = vld [vmem:[#allocation2 + $0xf0] sm:$0xff]
        %v517 = vld [vmem:[#allocation2 + $0xf8] sm:$0xff]
        %v518 = vld [vmem:[#allocation2 + $0x100] sm:$0xff]
        %v519 = vld [vmem:[#allocation2 + $0x108] sm:$0xff]
        %v520 = vld [vmem:[#allocation2 + $0x110] sm:$0xff]
        %v521 = vld [vmem:[#allocation2 + $0x118] sm:$0xff]
        %v522 = vld [vmem:[#allocation2 + $0x120] sm:$0xff]
        %v523 = vld [vmem:[#allocation2 + $0x128] sm:$0xff]
        %v524 = vld [vmem:[#allocation2 + $0x130] sm:$0xff]
        %v525 = vld [vmem:[#allocation2 + $0x138] sm:$0xff]
        %v526 = vld [vmem:[#allocation2 + $0x140] sm:$0xff]
        %v527 = vld [vmem:[#allocation2 + $0x148] sm:$0xff]
        %v528 = vld [vmem:[#allocation2 + $0x150] sm:$0xff]
        %v529 = vld [vmem:[#allocation2 + $0x158] sm:$0xff]
        %v530 = vld [vmem:[#allocation2 + $0x160] sm:$0xff]
        %v531 = vld [vmem:[#allocation2 + $0x168] sm:$0xff]
        %v532 = vld [vmem:[#allocation2 + $0x170] sm:$0xff]
        %v533 = vld [vmem:[#allocation2 + $0x178] sm:$0xff]
        %v534 = vld [vmem:[#allocation2 + $0x180] sm:$0xff]
        %v535 = vld [vmem:[#allocation2 + $0x188] sm:$0xff]
        %v536 = vld [vmem:[#allocation2 + $0x190] sm:$0xff]
        %v537 = vld [vmem:[#allocation2 + $0x198] sm:$0xff]
        %v538 = vld [vmem:[#allocation2 + $0x1a0] sm:$0xff]
        %v539 = vld [vmem:[#allocation2 + $0x1a8] sm:$0xff]
        %v540 = vld [vmem:[#allocation2 + $0x1b0] sm:$0xff]
        %v541 = vld [vmem:[#allocation2 + $0x1b8] sm:$0xff]
        %v542 = vld [vmem:[#allocation2 + $0x1c0] sm:$0xff]
        %v543 = vld [vmem:[#allocation2 + $0x1c8] sm:$0xff]
        %v544 = vld [vmem:[#allocation2 + $0x1d0] sm:$0xff]
        %v545 = vld [vmem:[#allocation2 + $0x1d8] sm:$0xff]
        %v546 = vld [vmem:[#allocation2 + $0x1e0] sm:$0xff]
        %v547 = vld [vmem:[#allocation2 + $0x1e8] sm:$0xff]
        %v548 = vld [vmem:[#allocation2 + $0x1f0] sm:$0xff]
        %v549 = vld [vmem:[#allocation2 + $0x1f8] sm:$0xff]
        %v550 = vld [vmem:[#allocation2 + $0x200] sm:$0xff]
        %v551 = vld [vmem:[#allocation2 + $0x208] sm:$0xff]
        %v552 = vld [vmem:[#allocation2 + $0x210] sm:$0xff]
        %v553 = vld [vmem:[#allocation2 + $0x218] sm:$0xff]
        %v554 = vld [vmem:[#allocation2 + $0x220] sm:$0xff]
        %v555 = vld [vmem:[#allocation2 + $0x228] sm:$0xff]
        %v556 = vld [vmem:[#allocation2 + $0x230] sm:$0xff]
        %v557 = vld [vmem:[#allocation2 + $0x238] sm:$0xff]
        %v558 = vld [vmem:[#allocation2 + $0x240] sm:$0xff]
        %v559 = vld [vmem:[#allocation2 + $0x248] sm:$0xff]
        %v560 = vld [vmem:[#allocation2 + $0x250] sm:$0xff]
        %v561 = vld [vmem:[#allocation2 + $0x258] sm:$0xff]
        %v562 = vld [vmem:[#allocation2 + $0x260] sm:$0xff]
        %v563 = vld [vmem:[#allocation2 + $0x268] sm:$0xff]
        %v564 = vld [vmem:[#allocation2 + $0x270] sm:$0xff]
        %v565 = vld [vmem:[#allocation2 + $0x278] sm:$0xff]
        %v566 = vld [vmem:[#allocation2 + $0x280] sm:$0xff]
        %v567 = vld [vmem:[#allocation2 + $0x288] sm:$0xff]
        %v568 = vld [vmem:[#allocation2 + $0x290] sm:$0xff]
        %v569 = vld [vmem:[#allocation2 + $0x298] sm:$0xff]
        %v570 = vld [vmem:[#allocation2 + $0x2a0] sm:$0xff]
        %v571 = vld [vmem:[#allocation2 + $0x2a8] sm:$0xff]
        %v572 = vld [vmem:[#allocation2 + $0x2b0] sm:$0xff]
        %v573 = vld [vmem:[#allocation2 + $0x2b8] sm:$0xff]
        %v574 = vld [vmem:[#allocation2 + $0x2c0] sm:$0xff]
        %v575 = vld [vmem:[#allocation2 + $0x2c8] sm:$0xff]
        %v576 = vld [vmem:[#allocation2 + $0x2d0] sm:$0xff]
        %v577 = vld [vmem:[#allocation2 + $0x2d8] sm:$0xff]
        %v578 = vld [vmem:[#allocation2 + $0x2e0] sm:$0xff]
        %v579 = vld [vmem:[#allocation2 + $0x2e8] sm:$0xff]
        %v580 = vld [vmem:[#allocation2 + $0x2f0] sm:$0xff]
        %v581 = vld [vmem:[#allocation2 + $0x2f8] sm:$0xff]
        %v582 = vld [vmem:[#allocation2 + $0x300] sm:$0xff]
        %v583 = vld [vmem:[#allocation2 + $0x308] sm:$0xff]
        %v584 = vld [vmem:[#allocation2 + $0x310] sm:$0xff]
        %v585 = vld [vmem:[#allocation2 + $0x318] sm:$0xff]
        %v586 = vld [vmem:[#allocation2 + $0x320] sm:$0xff]
        %v587 = vld [vmem:[#allocation2 + $0x328] sm:$0xff]
        %v588 = vld [vmem:[#allocation2 + $0x330] sm:$0xff]
        %v589 = vld [vmem:[#allocation2 + $0x338] sm:$0xff]
        %v590 = vld [vmem:[#allocation2 + $0x340] sm:$0xff]
        %v591 = vld [vmem:[#allocation2 + $0x348] sm:$0xff]
        %v592 = vld [vmem:[#allocation2 + $0x350] sm:$0xff]
        %v593 = vld [vmem:[#allocation2 + $0x358] sm:$0xff]
        %v594 = vld [vmem:[#allocation2 + $0x360] sm:$0xff]
        %v595 = vld [vmem:[#allocation2 + $0x368] sm:$0xff]
        %v596 = vld [vmem:[#allocation2 + $0x370] sm:$0xff]
        %v597 = vld [vmem:[#allocation2 + $0x378] sm:$0xff]
        %v598 = vld [vmem:[#allocation2 + $0x380] sm:$0xff]
        %v599 = vld [vmem:[#allocation2 + $0x388] sm:$0xff]
        %v600 = vld [vmem:[#allocation2 + $0x390] sm:$0xff]
        %v601 = vld [vmem:[#allocation2 + $0x398] sm:$0xff]
        %v602 = vld [vmem:[#allocation2 + $0x3a0] sm:$0xff]
        %v603 = vld [vmem:[#allocation2 + $0x3a8] sm:$0xff]
        %v604 = vld [vmem:[#allocation2 + $0x3b0] sm:$0xff]
        %v605 = vld [vmem:[#allocation2 + $0x3b8] sm:$0xff]
        %v606 = vld [vmem:[#allocation2 + $0x3c0] sm:$0xff]
        %v607 = vld [vmem:[#allocation2 + $0x3c8] sm:$0xff]
        %v608 = vld [vmem:[#allocation2 + $0x3d0] sm:$0xff]
        %v609 = vld [vmem:[#allocation2 + $0x3d8] sm:$0xff]
        %v610 = vld [vmem:[#allocation2 + $0x3e0] sm:$0xff]
        %v611 = vld [vmem:[#allocation2 + $0x3e8] sm:$0xff]
        %v612 = vld [vmem:[#allocation2 + $0x3f0] sm:$0xff]
        %v613 = vld [vmem:[#allocation2 + $0x3f8] sm:$0xff]
        %v614 = vld [vmem:[#allocation2 + $0x400] sm:$0xff]
        %v615 = vld [vmem:[#allocation2 + $0x408] sm:$0xff]
        %v616 = vld [vmem:[#allocation2 + $0x410] sm:$0xff]
        %v617 = vld [vmem:[#allocation2 + $0x418] sm:$0xff]
        %v618 = vld [vmem:[#allocation2 + $0x420] sm:$0xff]
        %v619 = vld [vmem:[#allocation2 + $0x428] sm:$0xff]
        %v620 = vld [vmem:[#allocation2 + $0x430] sm:$0xff]
        %v621 = vld [vmem:[#allocation2 + $0x438] sm:$0xff]
        %v622 = vld [vmem:[#allocation2 + $0x440] sm:$0xff]
        %v623 = vld [vmem:[#allocation2 + $0x448] sm:$0xff]
        %v624 = vld [vmem:[#allocation2 + $0x450] sm:$0xff]
        %v625 = vld [vmem:[#allocation2 + $0x458] sm:$0xff]
        %v626 = vld [vmem:[#allocation2 + $0x460] sm:$0xff]
        %v627 = vld [vmem:[#allocation2 + $0x468] sm:$0xff]
        %v628 = vld [vmem:[#allocation2 + $0x470] sm:$0xff]
        %v629 = vld [vmem:[#allocation2 + $0x478] sm:$0xff]
        %v630 = vld [vmem:[#allocation2 + $0x480] sm:$0xff]
        %v631 = vld [vmem:[#allocation2 + $0x488] sm:$0xff]
        %v632 = vld [vmem:[#allocation2 + $0x490] sm:$0xff]
        %v633 = vld [vmem:[#allocation2 + $0x498] sm:$0xff]
        %v634 = vld [vmem:[#allocation2 + $0x4a0] sm:$0xff]
        %v635 = vld [vmem:[#allocation2 + $0x4a8] sm:$0xff]
        %v636 = vld [vmem:[#allocation2 + $0x4b0] sm:$0xff]
        %v637 = vld [vmem:[#allocation2 + $0x4b8] sm:$0xff]
        %v638 = vld [vmem:[#allocation2 + $0x4c0] sm:$0xff]
        %v639 = vld [vmem:[#allocation2 + $0x4c8] sm:$0xff]
        %v640 = vld [vmem:[#allocation2 + $0x4d0] sm:$0xff]
        %v641 = vld [vmem:[#allocation2 + $0x4d8] sm:$0xff]
        %v642 = vld [vmem:[#allocation2 + $0x4e0] sm:$0xff]
        %v643 = vld [vmem:[#allocation2 + $0x4e8] sm:$0xff]
        %v644 = vld [vmem:[#allocation2 + $0x4f0] sm:$0xff]
        %v645 = vld [vmem:[#allocation2 + $0x4f8] sm:$0xff]
        %v646 = vld [vmem:[#allocation2 + $0x500] sm:$0xff]
        %v647 = vld [vmem:[#allocation2 + $0x508] sm:$0xff]
        %v648 = vld [vmem:[#allocation2 + $0x510] sm:$0xff]
        %v649 = vld [vmem:[#allocation2 + $0x518] sm:$0xff]
        %v650 = vld [vmem:[#allocation2 + $0x520] sm:$0xff]
        %v651 = vld [vmem:[#allocation2 + $0x528] sm:$0xff]
        %v652 = vld [vmem:[#allocation2 + $0x530] sm:$0xff]
        %v653 = vld [vmem:[#allocation2 + $0x538] sm:$0xff]
        %v654 = vld [vmem:[#allocation2 + $0x540] sm:$0xff]
        %v655 = vld [vmem:[#allocation2 + $0x548] sm:$0xff]
        %v656 = vld [vmem:[#allocation2 + $0x550] sm:$0xff]
        %v657 = vld [vmem:[#allocation2 + $0x558] sm:$0xff]
        %v658 = vld [vmem:[#allocation2 + $0x560] sm:$0xff]
        %v659 = vld [vmem:[#allocation2 + $0x568] sm:$0xff]
        %v660 = vld [vmem:[#allocation2 + $0x570] sm:$0xff]
        %v661 = vld [vmem:[#allocation2 + $0x578] sm:$0xff]
        %v662 = vld [vmem:[#allocation2 + $0x580] sm:$0xff]
        %v663 = vld [vmem:[#allocation2 + $0x588] sm:$0xff]
        %v664 = vld [vmem:[#allocation2 + $0x590] sm:$0xff]
        %v665 = vld [vmem:[#allocation2 + $0x598] sm:$0xff]
        %v666 = vld [vmem:[#allocation2 + $0x5a0] sm:$0xff]
        %v667 = vld [vmem:[#allocation2 + $0x5a8] sm:$0xff]
        %v668 = vld [vmem:[#allocation2 + $0x5b0] sm:$0xff]
        %v669 = vld [vmem:[#allocation2 + $0x5b8] sm:$0xff]
        %v670 = vld [vmem:[#allocation2 + $0x5c0] sm:$0xff]
        %v671 = vld [vmem:[#allocation2 + $0x5c8] sm:$0xff]
        %v672 = vld [vmem:[#allocation2 + $0x5d0] sm:$0xff]
        %v673 = vld [vmem:[#allocation2 + $0x5d8] sm:$0xff]
        %v674 = vld [vmem:[#allocation2 + $0x5e0] sm:$0xff]
        %v675 = vld [vmem:[#allocation2 + $0x5e8] sm:$0xff]
        %v676 = vld [vmem:[#allocation2 + $0x5f0] sm:$0xff]
        %v677 = vld [vmem:[#allocation2 + $0x5f8] sm:$0xff]
        %v678 = vld [vmem:[#allocation2 + $0x600] sm:$0xff]
        %v679 = vld [vmem:[#allocation2 + $0x608] sm:$0xff]
        %v680 = vld [vmem:[#allocation2 + $0x610] sm:$0xff]
        %v681 = vld [vmem:[#allocation2 + $0x618] sm:$0xff]
        %v682 = vld [vmem:[#allocation2 + $0x620] sm:$0xff]
        %v683 = vld [vmem:[#allocation2 + $0x628] sm:$0xff]
        %v684 = vld [vmem:[#allocation2 + $0x630] sm:$0xff]
        %v685 = vld [vmem:[#allocation2 + $0x638] sm:$0xff]
        %v686 = vld [vmem:[#allocation2 + $0x640] sm:$0xff]
        %v687 = vld [vmem:[#allocation2 + $0x648] sm:$0xff]
        %v688 = vld [vmem:[#allocation2 + $0x650] sm:$0xff]
        %v689 = vld [vmem:[#allocation2 + $0x658] sm:$0xff]
        %v690 = vld [vmem:[#allocation2 + $0x660] sm:$0xff]
        %v691 = vld [vmem:[#allocation2 + $0x668] sm:$0xff]
        %v692 = vld [vmem:[#allocation2 + $0x670] sm:$0xff]
        %v693 = vld [vmem:[#allocation2 + $0x678] sm:$0xff]
        %v694 = vld [vmem:[#allocation2 + $0x680] sm:$0xff]
        %v695 = vld [vmem:[#allocation2 + $0x688] sm:$0xff]
        %v696 = vld [vmem:[#allocation2 + $0x690] sm:$0xff]
        %v697 = vld [vmem:[#allocation2 + $0x698] sm:$0xff]
        %v698 = vld [vmem:[#allocation2 + $0x6a0] sm:$0xff]
        %v699 = vld [vmem:[#allocation2 + $0x6a8] sm:$0xff]
        %v700 = vld [vmem:[#allocation2 + $0x6b0] sm:$0xff]
        %v701 = vld [vmem:[#allocation2 + $0x6b8] sm:$0xff]
        %v702 = vld [vmem:[#allocation2 + $0x6c0] sm:$0xff]
        %v703 = vld [vmem:[#allocation2 + $0x6c8] sm:$0xff]
        %v704 = vld [vmem:[#allocation2 + $0x6d0] sm:$0xff]
        %v705 = vld [vmem:[#allocation2 + $0x6d8] sm:$0xff]
        %v706 = vld [vmem:[#allocation2 + $0x6e0] sm:$0xff]
        %v707 = vld [vmem:[#allocation2 + $0x6e8] sm:$0xff]
        %v708 = vld [vmem:[#allocation2 + $0x6f0] sm:$0xff]
        %v709 = vld [vmem:[#allocation2 + $0x6f8] sm:$0xff]
        %v710 = vld [vmem:[#allocation2 + $0x700] sm:$0xff]
        %v711 = vld [vmem:[#allocation2 + $0x708] sm:$0xff]
        %v712 = vld [vmem:[#allocation2 + $0x710] sm:$0xff]
        %v713 = vld [vmem:[#allocation2 + $0x718] sm:$0xff]
        %v714 = vld [vmem:[#allocation2 + $0x720] sm:$0xff]
        %v715 = vld [vmem:[#allocation2 + $0x728] sm:$0xff]
        %v716 = vld [vmem:[#allocation2 + $0x730] sm:$0xff]
        %v717 = vld [vmem:[#allocation2 + $0x738] sm:$0xff]
        %v718 = vld [vmem:[#allocation2 + $0x740] sm:$0xff]
        %v719 = vld [vmem:[#allocation2 + $0x748] sm:$0xff]
        %v720 = vld [vmem:[#allocation2 + $0x750] sm:$0xff]
        %v721 = vld [vmem:[#allocation2 + $0x758] sm:$0xff]
        %v722 = vld [vmem:[#allocation2 + $0x760] sm:$0xff]
        %v723 = vld [vmem:[#allocation2 + $0x768] sm:$0xff]
        %v724 = vld [vmem:[#allocation2 + $0x770] sm:$0xff]
        %v725 = vld [vmem:[#allocation2 + $0x778] sm:$0xff]
        %v726 = vld [vmem:[#allocation2 + $0x780] sm:$0xff]
        %v727 = vld [vmem:[#allocation2 + $0x788] sm:$0xff]
        %v728 = vld [vmem:[#allocation2 + $0x790] sm:$0xff]
        %v729 = vld [vmem:[#allocation2 + $0x798] sm:$0xff]
        %v730 = vld [vmem:[#allocation2 + $0x7a0] sm:$0xff]
        %v731 = vld [vmem:[#allocation2 + $0x7a8] sm:$0xff]
        %v732 = vld [vmem:[#allocation2 + $0x7b0] sm:$0xff]
        %v733 = vld [vmem:[#allocation2 + $0x7b8] sm:$0xff]
        %v734 = vld [vmem:[#allocation2 + $0x7c0] sm:$0xff]
        %v735 = vld [vmem:[#allocation2 + $0x7c8] sm:$0xff]
        %v736 = vld [vmem:[#allocation2 + $0x7d0] sm:$0xff]
        %v737 = vld [vmem:[#allocation2 + $0x7d8] sm:$0xff]
        %v738 = vld [vmem:[#allocation2 + $0x7e0] sm:$0xff]
        %v739 = vld [vmem:[#allocation2 + $0x7e8] sm:$0xff]
        %v740 = vld [vmem:[#allocation2 + $0x7f0] sm:$0xff]
        %v741 = vld [vmem:[#allocation2 + $0x7f8] sm:$0xff]
        %v742 = vld [vmem:[#allocation3] sm:$0xff]
        %v743 = vld [vmem:[#allocation3 + $0x8] sm:$0xff]
        %v744 = vld [vmem:[#allocation3 + $0x10] sm:$0xff]
        %v745 = vld [vmem:[#allocation3 + $0x18] sm:$0xff]
        %v746 = vld [vmem:[#allocation3 + $0x20] sm:$0xff]
        %v747 = vld [vmem:[#allocation3 + $0x28] sm:$0xff]
        %v748 = vld [vmem:[#allocation3 + $0x30] sm:$0xff]
        %v749 = vld [vmem:[#allocation3 + $0x38] sm:$0xff]
        %v750 = vld [vmem:[#allocation3 + $0x40] sm:$0xff]
        %v751 = vld [vmem:[#allocation3 + $0x48] sm:$0xff]
        %v752 = vld [vmem:[#allocation3 + $0x50] sm:$0xff]
        %v753 = vld [vmem:[#allocation3 + $0x58] sm:$0xff]
        %v754 = vld [vmem:[#allocation3 + $0x60] sm:$0xff]
        %v755 = vld [vmem:[#allocation3 + $0x68] sm:$0xff]
        %v756 = vld [vmem:[#allocation3 + $0x70] sm:$0xff]
        %v757 = vld [vmem:[#allocation3 + $0x78] sm:$0xff]
        %v758 = vld [vmem:[#allocation3 + $0x80] sm:$0xff]
        %v759 = vld [vmem:[#allocation3 + $0x88] sm:$0xff]
        %v760 = vld [vmem:[#allocation3 + $0x90] sm:$0xff]
        %v761 = vld [vmem:[#allocation3 + $0x98] sm:$0xff]
        %v762 = vld [vmem:[#allocation3 + $0xa0] sm:$0xff]
        %v763 = vld [vmem:[#allocation3 + $0xa8] sm:$0xff]
        %v764 = vld [vmem:[#allocation3 + $0xb0] sm:$0xff]
        %v765 = vld [vmem:[#allocation3 + $0xb8] sm:$0xff]
        %v766 = vld [vmem:[#allocation3 + $0xc0] sm:$0xff]
        %v767 = vld [vmem:[#allocation3 + $0xc8] sm:$0xff]
        %v768 = vld [vmem:[#allocation3 + $0xd0] sm:$0xff]
        %v769 = vld [vmem:[#allocation3 + $0xd8] sm:$0xff]
        %v770 = vld [vmem:[#allocation3 + $0xe0] sm:$0xff]
        %v771 = vld [vmem:[#allocation3 + $0xe8] sm:$0xff]
        %v772 = vld [vmem:[#allocation3 + $0xf0] sm:$0xff]
        %v773 = vld [vmem:[#allocation3 + $0xf8] sm:$0xff]
        %v774 = vld [vmem:[#allocation3 + $0x100] sm:$0xff]
        %v775 = vld [vmem:[#allocation3 + $0x108] sm:$0xff]
        %v776 = vld [vmem:[#allocation3 + $0x110] sm:$0xff]
        %v777 = vld [vmem:[#allocation3 + $0x118] sm:$0xff]
        %v778 = vld [vmem:[#allocation3 + $0x120] sm:$0xff]
        %v779 = vld [vmem:[#allocation3 + $0x128] sm:$0xff]
        %v780 = vld [vmem:[#allocation3 + $0x130] sm:$0xff]
        %v781 = vld [vmem:[#allocation3 + $0x138] sm:$0xff]
        %v782 = vld [vmem:[#allocation3 + $0x140] sm:$0xff]
        %v783 = vld [vmem:[#allocation3 + $0x148] sm:$0xff]
        %v784 = vld [vmem:[#allocation3 + $0x150] sm:$0xff]
        %v785 = vld [vmem:[#allocation3 + $0x158] sm:$0xff]
        %v786 = vld [vmem:[#allocation3 + $0x160] sm:$0xff]
        %v787 = vld [vmem:[#allocation3 + $0x168] sm:$0xff]
        %v788 = vld [vmem:[#allocation3 + $0x170] sm:$0xff]
        %v789 = vld [vmem:[#allocation3 + $0x178] sm:$0xff]
        %v790 = vld [vmem:[#allocation3 + $0x180] sm:$0xff]
        %v791 = vld [vmem:[#allocation3 + $0x188] sm:$0xff]
        %v792 = vld [vmem:[#allocation3 + $0x190] sm:$0xff]
        %v793 = vld [vmem:[#allocation3 + $0x198] sm:$0xff]
        %v794 = vld [vmem:[#allocation3 + $0x1a0] sm:$0xff]
        %v795 = vld [vmem:[#allocation3 + $0x1a8] sm:$0xff]
        %v796 = vld [vmem:[#allocation3 + $0x1b0] sm:$0xff]
        %v797 = vld [vmem:[#allocation3 + $0x1b8] sm:$0xff]
        %v798 = vld [vmem:[#allocation3 + $0x1c0] sm:$0xff]
        %v799 = vld [vmem:[#allocation3 + $0x1c8] sm:$0xff]
        %v800 = vld [vmem:[#allocation3 + $0x1d0] sm:$0xff]
        %v801 = vld [vmem:[#allocation3 + $0x1d8] sm:$0xff]
        %v802 = vld [vmem:[#allocation3 + $0x1e0] sm:$0xff]
        %v803 = vld [vmem:[#allocation3 + $0x1e8] sm:$0xff]
        %v804 = vld [vmem:[#allocation3 + $0x1f0] sm:$0xff]
        %v805 = vld [vmem:[#allocation3 + $0x1f8] sm:$0xff]
        %v806 = vld [vmem:[#allocation3 + $0x200] sm:$0xff]
        %v807 = vld [vmem:[#allocation3 + $0x208] sm:$0xff]
        %v808 = vld [vmem:[#allocation3 + $0x210] sm:$0xff]
        %v809 = vld [vmem:[#allocation3 + $0x218] sm:$0xff]
        %v810 = vld [vmem:[#allocation3 + $0x220] sm:$0xff]
        %v811 = vld [vmem:[#allocation3 + $0x228] sm:$0xff]
        %v812 = vld [vmem:[#allocation3 + $0x230] sm:$0xff]
        %v813 = vld [vmem:[#allocation3 + $0x238] sm:$0xff]
        %v814 = vld [vmem:[#allocation3 + $0x240] sm:$0xff]
        %v815 = vld [vmem:[#allocation3 + $0x248] sm:$0xff]
        %v816 = vld [vmem:[#allocation3 + $0x250] sm:$0xff]
        %v817 = vld [vmem:[#allocation3 + $0x258] sm:$0xff]
        %v818 = vld [vmem:[#allocation3 + $0x260] sm:$0xff]
        %v819 = vld [vmem:[#allocation3 + $0x268] sm:$0xff]
        %v820 = vld [vmem:[#allocation3 + $0x270] sm:$0xff]
        %v821 = vld [vmem:[#allocation3 + $0x278] sm:$0xff]
        %v822 = vld [vmem:[#allocation3 + $0x280] sm:$0xff]
        %v823 = vld [vmem:[#allocation3 + $0x288] sm:$0xff]
        %v824 = vld [vmem:[#allocation3 + $0x290] sm:$0xff]
        %v825 = vld [vmem:[#allocation3 + $0x298] sm:$0xff]
        %v826 = vld [vmem:[#allocation3 + $0x2a0] sm:$0xff]
        %v827 = vld [vmem:[#allocation3 + $0x2a8] sm:$0xff]
        %v828 = vld [vmem:[#allocation3 + $0x2b0] sm:$0xff]
        %v829 = vld [vmem:[#allocation3 + $0x2b8] sm:$0xff]
        %v830 = vld [vmem:[#allocation3 + $0x2c0] sm:$0xff]
        %v831 = vld [vmem:[#allocation3 + $0x2c8] sm:$0xff]
        %v832 = vld [vmem:[#allocation3 + $0x2d0] sm:$0xff]
        %v833 = vld [vmem:[#allocation3 + $0x2d8] sm:$0xff]
        %v834 = vld [vmem:[#allocation3 + $0x2e0] sm:$0xff]
        %v835 = vld [vmem:[#allocation3 + $0x2e8] sm:$0xff]
        %v836 = vld [vmem:[#allocation3 + $0x2f0] sm:$0xff]
        %v837 = vld [vmem:[#allocation3 + $0x2f8] sm:$0xff]
        %v838 = vld [vmem:[#allocation3 + $0x300] sm:$0xff]
        %v839 = vld [vmem:[#allocation3 + $0x308] sm:$0xff]
        %v840 = vld [vmem:[#allocation3 + $0x310] sm:$0xff]
        %v841 = vld [vmem:[#allocation3 + $0x318] sm:$0xff]
        %v842 = vld [vmem:[#allocation3 + $0x320] sm:$0xff]
        %v843 = vld [vmem:[#allocation3 + $0x328] sm:$0xff]
        %v844 = vld [vmem:[#allocation3 + $0x330] sm:$0xff]
        %v845 = vld [vmem:[#allocation3 + $0x338] sm:$0xff]
        %v846 = vld [vmem:[#allocation3 + $0x340] sm:$0xff]
        %v847 = vld [vmem:[#allocation3 + $0x348] sm:$0xff]
        %v848 = vld [vmem:[#allocation3 + $0x350] sm:$0xff]
        %v849 = vld [vmem:[#allocation3 + $0x358] sm:$0xff]
        %v850 = vld [vmem:[#allocation3 + $0x360] sm:$0xff]
        %v851 = vld [vmem:[#allocation3 + $0x368] sm:$0xff]
        %v852 = vld [vmem:[#allocation3 + $0x370] sm:$0xff]
        %v853 = vld [vmem:[#allocation3 + $0x378] sm:$0xff]
        %v854 = vld [vmem:[#allocation3 + $0x380] sm:$0xff]
        %v855 = vld [vmem:[#allocation3 + $0x388] sm:$0xff]
        %v856 = vld [vmem:[#allocation3 + $0x390] sm:$0xff]
        %v857 = vld [vmem:[#allocation3 + $0x398] sm:$0xff]
        %v858 = vld [vmem:[#allocation3 + $0x3a0] sm:$0xff]
        %v859 = vld [vmem:[#allocation3 + $0x3a8] sm:$0xff]
        %v860 = vld [vmem:[#allocation3 + $0x3b0] sm:$0xff]
        %v861 = vld [vmem:[#allocation3 + $0x3b8] sm:$0xff]
        %v862 = vld [vmem:[#allocation3 + $0x3c0] sm:$0xff]
        %v863 = vld [vmem:[#allocation3 + $0x3c8] sm:$0xff]
        %v864 = vld [vmem:[#allocation3 + $0x3d0] sm:$0xff]
        %v865 = vld [vmem:[#allocation3 + $0x3d8] sm:$0xff]
        %v866 = vld [vmem:[#allocation3 + $0x3e0] sm:$0xff]
        %v867 = vld [vmem:[#allocation3 + $0x3e8] sm:$0xff]
        %v868 = vld [vmem:[#allocation3 + $0x3f0] sm:$0xff]
        %v869 = vld [vmem:[#allocation3 + $0x3f8] sm:$0xff]
        %v870 = vld [vmem:[#allocation3 + $0x400] sm:$0xff]
        %v871 = vld [vmem:[#allocation3 + $0x408] sm:$0xff]
        %v872 = vld [vmem:[#allocation3 + $0x410] sm:$0xff]
        %v873 = vld [vmem:[#allocation3 + $0x418] sm:$0xff]
        %v874 = vld [vmem:[#allocation3 + $0x420] sm:$0xff]
        %v875 = vld [vmem:[#allocation3 + $0x428] sm:$0xff]
        %v876 = vld [vmem:[#allocation3 + $0x430] sm:$0xff]
        %v877 = vld [vmem:[#allocation3 + $0x438] sm:$0xff]
        %v878 = vld [vmem:[#allocation3 + $0x440] sm:$0xff]
        %v879 = vld [vmem:[#allocation3 + $0x448] sm:$0xff]
        %v880 = vld [vmem:[#allocation3 + $0x450] sm:$0xff]
        %v881 = vld [vmem:[#allocation3 + $0x458] sm:$0xff]
        %v882 = vld [vmem:[#allocation3 + $0x460] sm:$0xff]
        %v883 = vld [vmem:[#allocation3 + $0x468] sm:$0xff]
        %v884 = vld [vmem:[#allocation3 + $0x470] sm:$0xff]
        %v885 = vld [vmem:[#allocation3 + $0x478] sm:$0xff]
        %v886 = vld [vmem:[#allocation3 + $0x480] sm:$0xff]
        %v887 = vld [vmem:[#allocation3 + $0x488] sm:$0xff]
        %v888 = vld [vmem:[#allocation3 + $0x490] sm:$0xff]
        %v889 = vld [vmem:[#allocation3 + $0x498] sm:$0xff]
        %v890 = vld [vmem:[#allocation3 + $0x4a0] sm:$0xff]
        %v891 = vld [vmem:[#allocation3 + $0x4a8] sm:$0xff]
        %v892 = vld [vmem:[#allocation3 + $0x4b0] sm:$0xff]
        %v893 = vld [vmem:[#allocation3 + $0x4b8] sm:$0xff]
        %v894 = vld [vmem:[#allocation3 + $0x4c0] sm:$0xff]
        %v895 = vld [vmem:[#allocation3 + $0x4c8] sm:$0xff]
        %v896 = vld [vmem:[#allocation3 + $0x4d0] sm:$0xff]
        %v897 = vld [vmem:[#allocation3 + $0x4d8] sm:$0xff]
        %v898 = vld [vmem:[#allocation3 + $0x4e0] sm:$0xff]
        %v899 = vld [vmem:[#allocation3 + $0x4e8] sm:$0xff]
        %v900 = vld [vmem:[#allocation3 + $0x4f0] sm:$0xff]
        %v901 = vld [vmem:[#allocation3 + $0x4f8] sm:$0xff]
        %v902 = vld [vmem:[#allocation3 + $0x500] sm:$0xff]
        %v903 = vld [vmem:[#allocation3 + $0x508] sm:$0xff]
        %v904 = vld [vmem:[#allocation3 + $0x510] sm:$0xff]
        %v905 = vld [vmem:[#allocation3 + $0x518] sm:$0xff]
        %v906 = vld [vmem:[#allocation3 + $0x520] sm:$0xff]
        %v907 = vld [vmem:[#allocation3 + $0x528] sm:$0xff]
        %v908 = vld [vmem:[#allocation3 + $0x530] sm:$0xff]
        %v909 = vld [vmem:[#allocation3 + $0x538] sm:$0xff]
        %v910 = vld [vmem:[#allocation3 + $0x540] sm:$0xff]
        %v911 = vld [vmem:[#allocation3 + $0x548] sm:$0xff]
        %v912 = vld [vmem:[#allocation3 + $0x550] sm:$0xff]
        %v913 = vld [vmem:[#allocation3 + $0x558] sm:$0xff]
        %v914 = vld [vmem:[#allocation3 + $0x560] sm:$0xff]
        %v915 = vld [vmem:[#allocation3 + $0x568] sm:$0xff]
        %v916 = vld [vmem:[#allocation3 + $0x570] sm:$0xff]
        %v917 = vld [vmem:[#allocation3 + $0x578] sm:$0xff]
        %v918 = vld [vmem:[#allocation3 + $0x580] sm:$0xff]
        %v919 = vld [vmem:[#allocation3 + $0x588] sm:$0xff]
        %v920 = vld [vmem:[#allocation3 + $0x590] sm:$0xff]
        %v921 = vld [vmem:[#allocation3 + $0x598] sm:$0xff]
        %v922 = vld [vmem:[#allocation3 + $0x5a0] sm:$0xff]
        %v923 = vld [vmem:[#allocation3 + $0x5a8] sm:$0xff]
        %v924 = vld [vmem:[#allocation3 + $0x5b0] sm:$0xff]
        %v925 = vld [vmem:[#allocation3 + $0x5b8] sm:$0xff]
        %v926 = vld [vmem:[#allocation3 + $0x5c0] sm:$0xff]
        %v927 = vld [vmem:[#allocation3 + $0x5c8] sm:$0xff]
        %v928 = vld [vmem:[#allocation3 + $0x5d0] sm:$0xff]
        %v929 = vld [vmem:[#allocation3 + $0x5d8] sm:$0xff]
        %v930 = vld [vmem:[#allocation3 + $0x5e0] sm:$0xff]
        %v931 = vld [vmem:[#allocation3 + $0x5e8] sm:$0xff]
        %v932 = vld [vmem:[#allocation3 + $0x5f0] sm:$0xff]
        %v933 = vld [vmem:[#allocation3 + $0x5f8] sm:$0xff]
        %v934 = vld [vmem:[#allocation3 + $0x600] sm:$0xff]
        %v935 = vld [vmem:[#allocation3 + $0x608] sm:$0xff]
        %v936 = vld [vmem:[#allocation3 + $0x610] sm:$0xff]
        %v937 = vld [vmem:[#allocation3 + $0x618] sm:$0xff]
        %v938 = vld [vmem:[#allocation3 + $0x620] sm:$0xff]
        %v939 = vld [vmem:[#allocation3 + $0x628] sm:$0xff]
        %v940 = vld [vmem:[#allocation3 + $0x630] sm:$0xff]
        %v941 = vld [vmem:[#allocation3 + $0x638] sm:$0xff]
        %v942 = vld [vmem:[#allocation3 + $0x640] sm:$0xff]
        %v943 = vld [vmem:[#allocation3 + $0x648] sm:$0xff]
        %v944 = vld [vmem:[#allocation3 + $0x650] sm:$0xff]
        %v945 = vld [vmem:[#allocation3 + $0x658] sm:$0xff]
        %v946 = vld [vmem:[#allocation3 + $0x660] sm:$0xff]
        %v947 = vld [vmem:[#allocation3 + $0x668] sm:$0xff]
        %v948 = vld [vmem:[#allocation3 + $0x670] sm:$0xff]
        %v949 = vld [vmem:[#allocation3 + $0x678] sm:$0xff]
        %v950 = vld [vmem:[#allocation3 + $0x680] sm:$0xff]
        %v951 = vld [vmem:[#allocation3 + $0x688] sm:$0xff]
        %v952 = vld [vmem:[#allocation3 + $0x690] sm:$0xff]
        %v953 = vld [vmem:[#allocation3 + $0x698] sm:$0xff]
        %v954 = vld [vmem:[#allocation3 + $0x6a0] sm:$0xff]
        %v955 = vld [vmem:[#allocation3 + $0x6a8] sm:$0xff]
        %v956 = vld [vmem:[#allocation3 + $0x6b0] sm:$0xff]
        %v957 = vld [vmem:[#allocation3 + $0x6b8] sm:$0xff]
        %v958 = vld [vmem:[#allocation3 + $0x6c0] sm:$0xff]
        %v959 = vld [vmem:[#allocation3 + $0x6c8] sm:$0xff]
        %v960 = vld [vmem:[#allocation3 + $0x6d0] sm:$0xff]
        %v961 = vld [vmem:[#allocation3 + $0x6d8] sm:$0xff]
        %v962 = vld [vmem:[#allocation3 + $0x6e0] sm:$0xff]
        %v963 = vld [vmem:[#allocation3 + $0x6e8] sm:$0xff]
        %v964 = vld [vmem:[#allocation3 + $0x6f0] sm:$0xff]
        %v965 = vld [vmem:[#allocation3 + $0x6f8] sm:$0xff]
        %v966 = vld [vmem:[#allocation3 + $0x700] sm:$0xff]
        %v967 = vld [vmem:[#allocation3 + $0x708] sm:$0xff]
        %v968 = vld [vmem:[#allocation3 + $0x710] sm:$0xff]
        %v969 = vld [vmem:[#allocation3 + $0x718] sm:$0xff]
        %v970 = vld [vmem:[#allocation3 + $0x720] sm:$0xff]
        %v971 = vld [vmem:[#allocation3 + $0x728] sm:$0xff]
        %v972 = vld [vmem:[#allocation3 + $0x730] sm:$0xff]
        %v973 = vld [vmem:[#allocation3 + $0x738] sm:$0xff]
        %v974 = vld [vmem:[#allocation3 + $0x740] sm:$0xff]
        %v975 = vld [vmem:[#allocation3 + $0x748] sm:$0xff]
        %v976 = vld [vmem:[#allocation3 + $0x750] sm:$0xff]
        %v977 = vld [vmem:[#allocation3 + $0x758] sm:$0xff]
        %v978 = vld [vmem:[#allocation3 + $0x760] sm:$0xff]
        %v979 = vld [vmem:[#allocation3 + $0x768] sm:$0xff]
        %v980 = vld [vmem:[#allocation3 + $0x770] sm:$0xff]
        %v981 = vld [vmem:[#allocation3 + $0x778] sm:$0xff]
        %v982 = vld [vmem:[#allocation3 + $0x780] sm:$0xff]
        %v983 = vld [vmem:[#allocation3 + $0x788] sm:$0xff]
        %v984 = vld [vmem:[#allocation3 + $0x790] sm:$0xff]
        %v985 = vld [vmem:[#allocation3 + $0x798] sm:$0xff]
        %v986 = vld [vmem:[#allocation3 + $0x7a0] sm:$0xff]
        %v987 = vld [vmem:[#allocation3 + $0x7a8] sm:$0xff]
        %v988 = vld [vmem:[#allocation3 + $0x7b0] sm:$0xff]
        %v989 = vld [vmem:[#allocation3 + $0x7b8] sm:$0xff]
        %v990 = vld [vmem:[#allocation3 + $0x7c0] sm:$0xff]
        %v991 = vld [vmem:[#allocation3 + $0x7c8] sm:$0xff]
        %v992 = vld [vmem:[#allocation3 + $0x7d0] sm:$0xff]
        %v993 = vld [vmem:[#allocation3 + $0x7d8] sm:$0xff]
        %v994 = vld [vmem:[#allocation3 + $0x7e0] sm:$0xff]
        %v995 = vld [vmem:[#allocation3 + $0x7e8] sm:$0xff]
        %v996 = vld [vmem:[#allocation3 + $0x7f0] sm:$0xff]
        %v997 = vld [vmem:[#allocation3 + $0x7f8] sm:$0xff]
        %v998 = vld [vmem:[%s198] sm:$0xff]
        %v999 = vld [vmem:[%s198 + $0x8] sm:$0xff]
        %v1000 = vld [vmem:[%s198 + $0x10] sm:$0xff]
        %v1001 = vld [vmem:[%s198 + $0x18] sm:$0xff]
        %v1002 = vld [vmem:[%s198 + $0x20] sm:$0xff]
        %v1003 = vld [vmem:[%s198 + $0x28] sm:$0xff]
        %v1004 = vld [vmem:[%s198 + $0x30] sm:$0xff]
        %v1005 = vld [vmem:[%s198 + $0x38] sm:$0xff]
        %v1006 = vld [vmem:[%s198 + $0x40] sm:$0xff]
        %v1007 = vld [vmem:[%s198 + $0x48] sm:$0xff]
        %v1008 = vld [vmem:[%s198 + $0x50] sm:$0xff]
        %v1009 = vld [vmem:[%s198 + $0x58] sm:$0xff]
        %v1010 = vld [vmem:[%s198 + $0x60] sm:$0xff]
        %v1011 = vld [vmem:[%s198 + $0x68] sm:$0xff]
        %v1012 = vld [vmem:[%s198 + $0x70] sm:$0xff]
        %v1013 = vld [vmem:[%s198 + $0x78] sm:$0xff]
        %v1014 = vld [vmem:[%s198 + $0x80] sm:$0xff]
        %v1015 = vld [vmem:[%s198 + $0x88] sm:$0xff]
        %v1016 = vld [vmem:[%s198 + $0x90] sm:$0xff]
        %v1017 = vld [vmem:[%s198 + $0x98] sm:$0xff]
        %v1018 = vld [vmem:[%s198 + $0xa0] sm:$0xff]
        %v1019 = vld [vmem:[%s198 + $0xa8] sm:$0xff]
        %v1020 = vld [vmem:[%s198 + $0xb0] sm:$0xff]
        %v1021 = vld [vmem:[%s198 + $0xb8] sm:$0xff]
        %v1022 = vld [vmem:[%s198 + $0xc0] sm:$0xff]
        %v1023 = vld [vmem:[%s198 + $0xc8] sm:$0xff]
        %v1024 = vld [vmem:[%s198 + $0xd0] sm:$0xff]
        %v1025 = vld [vmem:[%s198 + $0xd8] sm:$0xff]
        %v1026 = vld [vmem:[%s198 + $0xe0] sm:$0xff]
        %v1027 = vld [vmem:[%s198 + $0xe8] sm:$0xff]
        %v1028 = vld [vmem:[%s198 + $0xf0] sm:$0xff]
        %v1029 = vld [vmem:[%s198 + $0xf8] sm:$0xff]
        %v1030 = vld [vmem:[%s198 + $0x100] sm:$0xff]
        %v1031 = vld [vmem:[%s198 + $0x108] sm:$0xff]
        %v1032 = vld [vmem:[%s198 + $0x110] sm:$0xff]
        %v1033 = vld [vmem:[%s198 + $0x118] sm:$0xff]
        %v1034 = vld [vmem:[%s198 + $0x120] sm:$0xff]
        %v1035 = vld [vmem:[%s198 + $0x128] sm:$0xff]
        %v1036 = vld [vmem:[%s198 + $0x130] sm:$0xff]
        %v1037 = vld [vmem:[%s198 + $0x138] sm:$0xff]
        %v1038 = vld [vmem:[%s198 + $0x140] sm:$0xff]
        %v1039 = vld [vmem:[%s198 + $0x148] sm:$0xff]
        %v1040 = vld [vmem:[%s198 + $0x150] sm:$0xff]
        %v1041 = vld [vmem:[%s198 + $0x158] sm:$0xff]
        %v1042 = vld [vmem:[%s198 + $0x160] sm:$0xff]
        %v1043 = vld [vmem:[%s198 + $0x168] sm:$0xff]
        %v1044 = vld [vmem:[%s198 + $0x170] sm:$0xff]
        %v1045 = vld [vmem:[%s198 + $0x178] sm:$0xff]
        %v1046 = vld [vmem:[%s198 + $0x180] sm:$0xff]
        %v1047 = vld [vmem:[%s198 + $0x188] sm:$0xff]
        %v1048 = vld [vmem:[%s198 + $0x190] sm:$0xff]
        %v1049 = vld [vmem:[%s198 + $0x198] sm:$0xff]
        %v1050 = vld [vmem:[%s198 + $0x1a0] sm:$0xff]
        %v1051 = vld [vmem:[%s198 + $0x1a8] sm:$0xff]
        %v1052 = vld [vmem:[%s198 + $0x1b0] sm:$0xff]
        %v1053 = vld [vmem:[%s198 + $0x1b8] sm:$0xff]
        %v1054 = vld [vmem:[%s198 + $0x1c0] sm:$0xff]
        %v1055 = vld [vmem:[%s198 + $0x1c8] sm:$0xff]
        %v1056 = vld [vmem:[%s198 + $0x1d0] sm:$0xff]
        %v1057 = vld [vmem:[%s198 + $0x1d8] sm:$0xff]
        %v1058 = vld [vmem:[%s198 + $0x1e0] sm:$0xff]
        %v1059 = vld [vmem:[%s198 + $0x1e8] sm:$0xff]
        %v1060 = vld [vmem:[%s198 + $0x1f0] sm:$0xff]
        %v1061 = vld [vmem:[%s198 + $0x1f8] sm:$0xff]
        %v1062 = vld [vmem:[%s198 + $0x200] sm:$0xff]
        %v1063 = vld [vmem:[%s198 + $0x208] sm:$0xff]
        %v1064 = vld [vmem:[%s198 + $0x210] sm:$0xff]
        %v1065 = vld [vmem:[%s198 + $0x218] sm:$0xff]
        %v1066 = vld [vmem:[%s198 + $0x220] sm:$0xff]
        %v1067 = vld [vmem:[%s198 + $0x228] sm:$0xff]
        %v1068 = vld [vmem:[%s198 + $0x230] sm:$0xff]
        %v1069 = vld [vmem:[%s198 + $0x238] sm:$0xff]
        %v1070 = vld [vmem:[%s198 + $0x240] sm:$0xff]
        %v1071 = vld [vmem:[%s198 + $0x248] sm:$0xff]
        %v1072 = vld [vmem:[%s198 + $0x250] sm:$0xff]
        %v1073 = vld [vmem:[%s198 + $0x258] sm:$0xff]
        %v1074 = vld [vmem:[%s198 + $0x260] sm:$0xff]
        %v1075 = vld [vmem:[%s198 + $0x268] sm:$0xff]
        %v1076 = vld [vmem:[%s198 + $0x270] sm:$0xff]
        %v1077 = vld [vmem:[%s198 + $0x278] sm:$0xff]
        %v1078 = vld [vmem:[%s198 + $0x280] sm:$0xff]
        %v1079 = vld [vmem:[%s198 + $0x288] sm:$0xff]
        %v1080 = vld [vmem:[%s198 + $0x290] sm:$0xff]
        %v1081 = vld [vmem:[%s198 + $0x298] sm:$0xff]
        %v1082 = vld [vmem:[%s198 + $0x2a0] sm:$0xff]
        %v1083 = vld [vmem:[%s198 + $0x2a8] sm:$0xff]
        %v1084 = vld [vmem:[%s198 + $0x2b0] sm:$0xff]
        %v1085 = vld [vmem:[%s198 + $0x2b8] sm:$0xff]
        %v1086 = vld [vmem:[%s198 + $0x2c0] sm:$0xff]
        %v1087 = vld [vmem:[%s198 + $0x2c8] sm:$0xff]
        %v1088 = vld [vmem:[%s198 + $0x2d0] sm:$0xff]
        %v1089 = vld [vmem:[%s198 + $0x2d8] sm:$0xff]
        %v1090 = vld [vmem:[%s198 + $0x2e0] sm:$0xff]
        %v1091 = vld [vmem:[%s198 + $0x2e8] sm:$0xff]
        %v1092 = vld [vmem:[%s198 + $0x2f0] sm:$0xff]
        %v1093 = vld [vmem:[%s198 + $0x2f8] sm:$0xff]
        %v1094 = vld [vmem:[%s198 + $0x300] sm:$0xff]
        %v1095 = vld [vmem:[%s198 + $0x308] sm:$0xff]
        %v1096 = vld [vmem:[%s198 + $0x310] sm:$0xff]
        %v1097 = vld [vmem:[%s198 + $0x318] sm:$0xff]
        %v1098 = vld [vmem:[%s198 + $0x320] sm:$0xff]
        %v1099 = vld [vmem:[%s198 + $0x328] sm:$0xff]
        %v1100 = vld [vmem:[%s198 + $0x330] sm:$0xff]
        %v1101 = vld [vmem:[%s198 + $0x338] sm:$0xff]
        %v1102 = vld [vmem:[%s198 + $0x340] sm:$0xff]
        %v1103 = vld [vmem:[%s198 + $0x348] sm:$0xff]
        %v1104 = vld [vmem:[%s198 + $0x350] sm:$0xff]
        %v1105 = vld [vmem:[%s198 + $0x358] sm:$0xff]
        %v1106 = vld [vmem:[%s198 + $0x360] sm:$0xff]
        %v1107 = vld [vmem:[%s198 + $0x368] sm:$0xff]
        %v1108 = vld [vmem:[%s198 + $0x370] sm:$0xff]
        %v1109 = vld [vmem:[%s198 + $0x378] sm:$0xff]
        %v1110 = vld [vmem:[%s198 + $0x380] sm:$0xff]
        %v1111 = vld [vmem:[%s198 + $0x388] sm:$0xff]
        %v1112 = vld [vmem:[%s198 + $0x390] sm:$0xff]
        %v1113 = vld [vmem:[%s198 + $0x398] sm:$0xff]
        %v1114 = vld [vmem:[%s198 + $0x3a0] sm:$0xff]
        %v1115 = vld [vmem:[%s198 + $0x3a8] sm:$0xff]
        %v1116 = vld [vmem:[%s198 + $0x3b0] sm:$0xff]
        %v1117 = vld [vmem:[%s198 + $0x3b8] sm:$0xff]
        %v1118 = vld [vmem:[%s198 + $0x3c0] sm:$0xff]
        %v1119 = vld [vmem:[%s198 + $0x3c8] sm:$0xff]
        %v1120 = vld [vmem:[%s198 + $0x3d0] sm:$0xff]
        %v1121 = vld [vmem:[%s198 + $0x3d8] sm:$0xff]
        %v1122 = vld [vmem:[%s198 + $0x3e0] sm:$0xff]
        %v1123 = vld [vmem:[%s198 + $0x3e8] sm:$0xff]
        %v1124 = vld [vmem:[%s198 + $0x3f0] sm:$0xff]
        %v1125 = vld [vmem:[%s198 + $0x3f8] sm:$0xff]
        %v1126 = vld [vmem:[%s198 + $0x400] sm:$0xff]
        %v1127 = vld [vmem:[%s198 + $0x408] sm:$0xff]
        %v1128 = vld [vmem:[%s198 + $0x410] sm:$0xff]
        %v1129 = vld [vmem:[%s198 + $0x418] sm:$0xff]
        %v1130 = vld [vmem:[%s198 + $0x420] sm:$0xff]
        %v1131 = vld [vmem:[%s198 + $0x428] sm:$0xff]
        %v1132 = vld [vmem:[%s198 + $0x430] sm:$0xff]
        %v1133 = vld [vmem:[%s198 + $0x438] sm:$0xff]
        %v1134 = vld [vmem:[%s198 + $0x440] sm:$0xff]
        %v1135 = vld [vmem:[%s198 + $0x448] sm:$0xff]
        %v1136 = vld [vmem:[%s198 + $0x450] sm:$0xff]
        %v1137 = vld [vmem:[%s198 + $0x458] sm:$0xff]
        %v1138 = vld [vmem:[%s198 + $0x460] sm:$0xff]
        %v1139 = vld [vmem:[%s198 + $0x468] sm:$0xff]
        %v1140 = vld [vmem:[%s198 + $0x470] sm:$0xff]
        %v1141 = vld [vmem:[%s198 + $0x478] sm:$0xff]
        %v1142 = vld [vmem:[%s198 + $0x480] sm:$0xff]
        %v1143 = vld [vmem:[%s198 + $0x488] sm:$0xff]
        %v1144 = vld [vmem:[%s198 + $0x490] sm:$0xff]
        %v1145 = vld [vmem:[%s198 + $0x498] sm:$0xff]
        %v1146 = vld [vmem:[%s198 + $0x4a0] sm:$0xff]
        %v1147 = vld [vmem:[%s198 + $0x4a8] sm:$0xff]
        %v1148 = vld [vmem:[%s198 + $0x4b0] sm:$0xff]
        %v1149 = vld [vmem:[%s198 + $0x4b8] sm:$0xff]
        %v1150 = vld [vmem:[%s198 + $0x4c0] sm:$0xff]
        %v1151 = vld [vmem:[%s198 + $0x4c8] sm:$0xff]
        %v1152 = vld [vmem:[%s198 + $0x4d0] sm:$0xff]
        %v1153 = vld [vmem:[%s198 + $0x4d8] sm:$0xff]
        %v1154 = vld [vmem:[%s198 + $0x4e0] sm:$0xff]
        %v1155 = vld [vmem:[%s198 + $0x4e8] sm:$0xff]
        %v1156 = vld [vmem:[%s198 + $0x4f0] sm:$0xff]
        %v1157 = vld [vmem:[%s198 + $0x4f8] sm:$0xff]
        %v1158 = vld [vmem:[%s198 + $0x500] sm:$0xff]
        %v1159 = vld [vmem:[%s198 + $0x508] sm:$0xff]
        %v1160 = vld [vmem:[%s198 + $0x510] sm:$0xff]
        %v1161 = vld [vmem:[%s198 + $0x518] sm:$0xff]
        %v1162 = vld [vmem:[%s198 + $0x520] sm:$0xff]
        %v1163 = vld [vmem:[%s198 + $0x528] sm:$0xff]
        %v1164 = vld [vmem:[%s198 + $0x530] sm:$0xff]
        %v1165 = vld [vmem:[%s198 + $0x538] sm:$0xff]
        %v1166 = vld [vmem:[%s198 + $0x540] sm:$0xff]
        %v1167 = vld [vmem:[%s198 + $0x548] sm:$0xff]
        %v1168 = vld [vmem:[%s198 + $0x550] sm:$0xff]
        %v1169 = vld [vmem:[%s198 + $0x558] sm:$0xff]
        %v1170 = vld [vmem:[%s198 + $0x560] sm:$0xff]
        %v1171 = vld [vmem:[%s198 + $0x568] sm:$0xff]
        %v1172 = vld [vmem:[%s198 + $0x570] sm:$0xff]
        %v1173 = vld [vmem:[%s198 + $0x578] sm:$0xff]
        %v1174 = vld [vmem:[%s198 + $0x580] sm:$0xff]
        %v1175 = vld [vmem:[%s198 + $0x588] sm:$0xff]
        %v1176 = vld [vmem:[%s198 + $0x590] sm:$0xff]
        %v1177 = vld [vmem:[%s198 + $0x598] sm:$0xff]
        %v1178 = vld [vmem:[%s198 + $0x5a0] sm:$0xff]
        %v1179 = vld [vmem:[%s198 + $0x5a8] sm:$0xff]
        %v1180 = vld [vmem:[%s198 + $0x5b0] sm:$0xff]
        %v1181 = vld [vmem:[%s198 + $0x5b8] sm:$0xff]
        %v1182 = vld [vmem:[%s198 + $0x5c0] sm:$0xff]
        %v1183 = vld [vmem:[%s198 + $0x5c8] sm:$0xff]
        %v1184 = vld [vmem:[%s198 + $0x5d0] sm:$0xff]
        %v1185 = vld [vmem:[%s198 + $0x5d8] sm:$0xff]
        %v1186 = vld [vmem:[%s198 + $0x5e0] sm:$0xff]
        %v1187 = vld [vmem:[%s198 + $0x5e8] sm:$0xff]
        %v1188 = vld [vmem:[%s198 + $0x5f0] sm:$0xff]
        %v1189 = vld [vmem:[%s198 + $0x5f8] sm:$0xff]
        %v1190 = vld [vmem:[%s198 + $0x600] sm:$0xff]
        %v1191 = vld [vmem:[%s198 + $0x608] sm:$0xff]
        %v1192 = vld [vmem:[%s198 + $0x610] sm:$0xff]
        %v1193 = vld [vmem:[%s198 + $0x618] sm:$0xff]
        %v1194 = vld [vmem:[%s198 + $0x620] sm:$0xff]
        %v1195 = vld [vmem:[%s198 + $0x628] sm:$0xff]
        %v1196 = vld [vmem:[%s198 + $0x630] sm:$0xff]
        %v1197 = vld [vmem:[%s198 + $0x638] sm:$0xff]
        %v1198 = vld [vmem:[%s198 + $0x640] sm:$0xff]
        %v1199 = vld [vmem:[%s198 + $0x648] sm:$0xff]
        %v1200 = vld [vmem:[%s198 + $0x650] sm:$0xff]
        %v1201 = vld [vmem:[%s198 + $0x658] sm:$0xff]
        %v1202 = vld [vmem:[%s198 + $0x660] sm:$0xff]
        %v1203 = vld [vmem:[%s198 + $0x668] sm:$0xff]
        %v1204 = vld [vmem:[%s198 + $0x670] sm:$0xff]
        %v1205 = vld [vmem:[%s198 + $0x678] sm:$0xff]
        %v1206 = vld [vmem:[%s198 + $0x680] sm:$0xff]
        %v1207 = vld [vmem:[%s198 + $0x688] sm:$0xff]
        %v1208 = vld [vmem:[%s198 + $0x690] sm:$0xff]
        %v1209 = vld [vmem:[%s198 + $0x698] sm:$0xff]
        %v1210 = vld [vmem:[%s198 + $0x6a0] sm:$0xff]
        %v1211 = vld [vmem:[%s198 + $0x6a8] sm:$0xff]
        %v1212 = vld [vmem:[%s198 + $0x6b0] sm:$0xff]
        %v1213 = vld [vmem:[%s198 + $0x6b8] sm:$0xff]
        %v1214 = vld [vmem:[%s198 + $0x6c0] sm:$0xff]
        %v1215 = vld [vmem:[%s198 + $0x6c8] sm:$0xff]
        %v1216 = vld [vmem:[%s198 + $0x6d0] sm:$0xff]
        %v1217 = vld [vmem:[%s198 + $0x6d8] sm:$0xff]
        %v1218 = vld [vmem:[%s198 + $0x6e0] sm:$0xff]
        %v1219 = vld [vmem:[%s198 + $0x6e8] sm:$0xff]
        %v1220 = vld [vmem:[%s198 + $0x6f0] sm:$0xff]
        %v1221 = vld [vmem:[%s198 + $0x6f8] sm:$0xff]
        %v1222 = vld [vmem:[%s198 + $0x700] sm:$0xff]
        %v1223 = vld [vmem:[%s198 + $0x708] sm:$0xff]
        %v1224 = vld [vmem:[%s198 + $0x710] sm:$0xff]
        %v1225 = vld [vmem:[%s198 + $0x718] sm:$0xff]
        %v1226 = vld [vmem:[%s198 + $0x720] sm:$0xff]
        %v1227 = vld [vmem:[%s198 + $0x728] sm:$0xff]
        %v1228 = vld [vmem:[%s198 + $0x730] sm:$0xff]
        %v1229 = vld [vmem:[%s198 + $0x738] sm:$0xff]
        %v1230 = vld [vmem:[%s198 + $0x740] sm:$0xff]
        %v1231 = vld [vmem:[%s198 + $0x748] sm:$0xff]
        %v1232 = vld [vmem:[%s198 + $0x750] sm:$0xff]
        %v1233 = vld [vmem:[%s198 + $0x758] sm:$0xff]
        %v1234 = vld [vmem:[%s198 + $0x760] sm:$0xff]
        %v1235 = vld [vmem:[%s198 + $0x768] sm:$0xff]
        %v1236 = vld [vmem:[%s198 + $0x770] sm:$0xff]
        %v1237 = vld [vmem:[%s198 + $0x778] sm:$0xff]
        %v1238 = vld [vmem:[%s198 + $0x780] sm:$0xff]
        %v1239 = vld [vmem:[%s198 + $0x788] sm:$0xff]
        %v1240 = vld [vmem:[%s198 + $0x790] sm:$0xff]
        %v1241 = vld [vmem:[%s198 + $0x798] sm:$0xff]
        %v1242 = vld [vmem:[%s198 + $0x7a0] sm:$0xff]
        %v1243 = vld [vmem:[%s198 + $0x7a8] sm:$0xff]
        %v1244 = vld [vmem:[%s198 + $0x7b0] sm:$0xff]
        %v1245 = vld [vmem:[%s198 + $0x7b8] sm:$0xff]
        %v1246 = vld [vmem:[%s198 + $0x7c0] sm:$0xff]
        %v1247 = vld [vmem:[%s198 + $0x7c8] sm:$0xff]
        %v1248 = vld [vmem:[%s198 + $0x7d0] sm:$0xff]
        %v1249 = vld [vmem:[%s198 + $0x7d8] sm:$0xff]
        %v1250 = vld [vmem:[%s198 + $0x7e0] sm:$0xff]
        %v1251 = vld [vmem:[%s198 + $0x7e8] sm:$0xff]
        %v1252 = vld [vmem:[%s198 + $0x7f0] sm:$0xff]
        %v1253 = vld [vmem:[%s198 + $0x7f8] sm:$0xff]
        %1254 = vmatpush.msra.mxu0 %v1058
        %1255 = vmatpush.msra.mxu0 %v1054
        %1256 = vmatpush.msra.mxu0 %v1050
        %1257 = vmatpush.msra.mxu0 %v1046
        %1258 = vmatpush.msra.mxu0 %v1042
        %1259 = vmatpush.msra.mxu0 %v1038
        %1260 = vmatpush.msra.mxu0 %v1034
        %1261 = vmatpush.msra.mxu0 %v1030
        %1262 = vmatpush.msra.mxu0 %v1026
        %1263 = vmatpush.msra.mxu0 %v1022
        %1264 = vmatpush.msra.mxu0 %v1018
        %1265 = vmatpush.msra.mxu0 %v1014
        %1266 = vmatpush.msra.mxu0 %v1010
        %1267 = vmatpush.msra.mxu0 %v1006
        %1268 = vmatpush.msra.mxu0 %v1002
        %1269 = vmatpush.msra.mxu0 %v998
        %1270 = vmatmul.f32.gmra.mxu0 %v742
        %v1271 = vpop.f32.mrf.mxu0
        %v1272 = vadd.f32 0.0, %v1271
        %1273 = vmatmul.f32.gmra.mxu0 %v746
        %v1274 = vpop.f32.mrf.mxu0
        %v1275 = vadd.f32 0.0, %v1274
        %1276 = vmatmul.f32.gmra.mxu0 %v750
        %v1277 = vpop.f32.mrf.mxu0
        %v1278 = vadd.f32 0.0, %v1277
        %1279 = vmatmul.f32.gmra.mxu0 %v754
        %v1280 = vpop.f32.mrf.mxu0
        %v1281 = vadd.f32 0.0, %v1280
        %1282 = vmatmul.f32.gmra.mxu0 %v758
        %v1283 = vpop.f32.mrf.mxu0
        %v1284 = vadd.f32 0.0, %v1283
        %1285 = vmatmul.f32.gmra.mxu0 %v762
        %v1286 = vpop.f32.mrf.mxu0
        %v1287 = vadd.f32 0.0, %v1286
        %1288 = vmatmul.f32.gmra.mxu0 %v766
        %v1289 = vpop.f32.mrf.mxu0
        %v1290 = vadd.f32 0.0, %v1289
        %1291 = vmatmul.f32.gmra.mxu0 %v770
        %v1292 = vpop.f32.mrf.mxu0
        %v1293 = vadd.f32 0.0, %v1292
        %1294 = vmatmul.f32.gmra.mxu0 %v774
        %v1295 = vpop.f32.mrf.mxu0
        %v1296 = vadd.f32 0.0, %v1295
        %1297 = vmatmul.f32.gmra.mxu0 %v778
        %v1298 = vpop.f32.mrf.mxu0
        %v1299 = vadd.f32 0.0, %v1298
        %1300 = vmatmul.f32.gmra.mxu0 %v782
        %v1301 = vpop.f32.mrf.mxu0
        %v1302 = vadd.f32 0.0, %v1301
        %1303 = vmatmul.f32.gmra.mxu0 %v786
        %v1304 = vpop.f32.mrf.mxu0
        %v1305 = vadd.f32 0.0, %v1304
        %1306 = vmatmul.f32.gmra.mxu0 %v790
        %v1307 = vpop.f32.mrf.mxu0
        %v1308 = vadd.f32 0.0, %v1307
        %1309 = vmatmul.f32.gmra.mxu0 %v794
        %v1310 = vpop.f32.mrf.mxu0
        %v1311 = vadd.f32 0.0, %v1310
        %1312 = vmatmul.f32.gmra.mxu0 %v798
        %v1313 = vpop.f32.mrf.mxu0
        %v1314 = vadd.f32 0.0, %v1313
        %1315 = vmatmul.f32.gmra.mxu0 %v802
        %v1316 = vpop.f32.mrf.mxu0
        %v1317 = vadd.f32 0.0, %v1316
        %1318 = vmatmul.f32.gmra.mxu0 %v806
        %v1319 = vpop.f32.mrf.mxu0
        %v1320 = vadd.f32 0.0, %v1319
        %1321 = vmatmul.f32.gmra.mxu0 %v810
        %v1322 = vpop.f32.mrf.mxu0
        %v1323 = vadd.f32 0.0, %v1322
        %1324 = vmatmul.f32.gmra.mxu0 %v814
        %v1325 = vpop.f32.mrf.mxu0
        %v1326 = vadd.f32 0.0, %v1325
        %1327 = vmatmul.f32.gmra.mxu0 %v818
        %v1328 = vpop.f32.mrf.mxu0
        %v1329 = vadd.f32 0.0, %v1328
        %1330 = vmatmul.f32.gmra.mxu0 %v822
        %v1331 = vpop.f32.mrf.mxu0
        %v1332 = vadd.f32 0.0, %v1331
        %1333 = vmatmul.f32.gmra.mxu0 %v826
        %v1334 = vpop.f32.mrf.mxu0
        %v1335 = vadd.f32 0.0, %v1334
        %1336 = vmatmul.f32.gmra.mxu0 %v830
        %v1337 = vpop.f32.mrf.mxu0
        %v1338 = vadd.f32 0.0, %v1337
        %1339 = vmatmul.f32.gmra.mxu0 %v834
        %v1340 = vpop.f32.mrf.mxu0
        %v1341 = vadd.f32 0.0, %v1340
        %1342 = vmatmul.f32.gmra.mxu0 %v838
        %v1343 = vpop.f32.mrf.mxu0
        %v1344 = vadd.f32 0.0, %v1343
        %1345 = vmatmul.f32.gmra.mxu0 %v842
        %v1346 = vpop.f32.mrf.mxu0
        %v1347 = vadd.f32 0.0, %v1346
        %1348 = vmatmul.f32.gmra.mxu0 %v846
        %v1349 = vpop.f32.mrf.mxu0
        %v1350 = vadd.f32 0.0, %v1349
        %1351 = vmatmul.f32.gmra.mxu0 %v850
        %v1352 = vpop.f32.mrf.mxu0
        %v1353 = vadd.f32 0.0, %v1352
        %1354 = vmatmul.f32.gmra.mxu0 %v854
        %v1355 = vpop.f32.mrf.mxu0
        %v1356 = vadd.f32 0.0, %v1355
        %1357 = vmatmul.f32.gmra.mxu0 %v858
        %v1358 = vpop.f32.mrf.mxu0
        %v1359 = vadd.f32 0.0, %v1358
        %1360 = vmatmul.f32.gmra.mxu0 %v862
        %v1361 = vpop.f32.mrf.mxu0
        %v1362 = vadd.f32 0.0, %v1361
        %1363 = vmatmul.f32.gmra.mxu0 %v866
        %v1364 = vpop.f32.mrf.mxu0
        %v1365 = vadd.f32 0.0, %v1364
        %1366 = vmatmul.f32.gmra.mxu0 %v870
        %v1367 = vpop.f32.mrf.mxu0
        %v1368 = vadd.f32 0.0, %v1367
        %1369 = vmatmul.f32.gmra.mxu0 %v874
        %v1370 = vpop.f32.mrf.mxu0
        %v1371 = vadd.f32 0.0, %v1370
        %1372 = vmatmul.f32.gmra.mxu0 %v878
        %v1373 = vpop.f32.mrf.mxu0
        %v1374 = vadd.f32 0.0, %v1373
        %1375 = vmatmul.f32.gmra.mxu0 %v882
        %v1376 = vpop.f32.mrf.mxu0
        %v1377 = vadd.f32 0.0, %v1376
        %1378 = vmatmul.f32.gmra.mxu0 %v886
        %v1379 = vpop.f32.mrf.mxu0
        %v1380 = vadd.f32 0.0, %v1379
        %1381 = vmatmul.f32.gmra.mxu0 %v890
        %v1382 = vpop.f32.mrf.mxu0
        %v1383 = vadd.f32 0.0, %v1382
        %1384 = vmatmul.f32.gmra.mxu0 %v894
        %v1385 = vpop.f32.mrf.mxu0
        %v1386 = vadd.f32 0.0, %v1385
        %1387 = vmatmul.f32.gmra.mxu0 %v898
        %v1388 = vpop.f32.mrf.mxu0
        %v1389 = vadd.f32 0.0, %v1388
        %1390 = vmatmul.f32.gmra.mxu0 %v902
        %v1391 = vpop.f32.mrf.mxu0
        %v1392 = vadd.f32 0.0, %v1391
        %1393 = vmatmul.f32.gmra.mxu0 %v906
        %v1394 = vpop.f32.mrf.mxu0
        %v1395 = vadd.f32 0.0, %v1394
        %1396 = vmatmul.f32.gmra.mxu0 %v910
        %v1397 = vpop.f32.mrf.mxu0
        %v1398 = vadd.f32 0.0, %v1397
        %1399 = vmatmul.f32.gmra.mxu0 %v914
        %v1400 = vpop.f32.mrf.mxu0
        %v1401 = vadd.f32 0.0, %v1400
        %1402 = vmatmul.f32.gmra.mxu0 %v918
        %v1403 = vpop.f32.mrf.mxu0
        %v1404 = vadd.f32 0.0, %v1403
        %1405 = vmatmul.f32.gmra.mxu0 %v922
        %v1406 = vpop.f32.mrf.mxu0
        %v1407 = vadd.f32 0.0, %v1406
        %1408 = vmatmul.f32.gmra.mxu0 %v926
        %v1409 = vpop.f32.mrf.mxu0
        %v1410 = vadd.f32 0.0, %v1409
        %1411 = vmatmul.f32.gmra.mxu0 %v930
        %v1412 = vpop.f32.mrf.mxu0
        %v1413 = vadd.f32 0.0, %v1412
        %1414 = vmatmul.f32.gmra.mxu0 %v934
        %v1415 = vpop.f32.mrf.mxu0
        %v1416 = vadd.f32 0.0, %v1415
        %1417 = vmatmul.f32.gmra.mxu0 %v938
        %v1418 = vpop.f32.mrf.mxu0
        %v1419 = vadd.f32 0.0, %v1418
        %1420 = vmatmul.f32.gmra.mxu0 %v942
        %v1421 = vpop.f32.mrf.mxu0
        %v1422 = vadd.f32 0.0, %v1421
        %1423 = vmatmul.f32.gmra.mxu0 %v946
        %v1424 = vpop.f32.mrf.mxu0
        %v1425 = vadd.f32 0.0, %v1424
        %1426 = vmatmul.f32.gmra.mxu0 %v950
        %v1427 = vpop.f32.mrf.mxu0
        %v1428 = vadd.f32 0.0, %v1427
        %1429 = vmatmul.f32.gmra.mxu0 %v954
        %v1430 = vpop.f32.mrf.mxu0
        %v1431 = vadd.f32 0.0, %v1430
        %1432 = vmatmul.f32.gmra.mxu0 %v958
        %v1433 = vpop.f32.mrf.mxu0
        %v1434 = vadd.f32 0.0, %v1433
        %1435 = vmatmul.f32.gmra.mxu0 %v962
        %v1436 = vpop.f32.mrf.mxu0
        %v1437 = vadd.f32 0.0, %v1436
        %1438 = vmatmul.f32.gmra.mxu0 %v966
        %v1439 = vpop.f32.mrf.mxu0
        %v1440 = vadd.f32 0.0, %v1439
        %1441 = vmatmul.f32.gmra.mxu0 %v970
        %v1442 = vpop.f32.mrf.mxu0
        %v1443 = vadd.f32 0.0, %v1442
        %1444 = vmatmul.f32.gmra.mxu0 %v974
        %v1445 = vpop.f32.mrf.mxu0
        %v1446 = vadd.f32 0.0, %v1445
        %1447 = vmatmul.f32.gmra.mxu0 %v978
        %v1448 = vpop.f32.mrf.mxu0
        %v1449 = vadd.f32 0.0, %v1448
        %1450 = vmatmul.f32.gmra.mxu0 %v982
        %v1451 = vpop.f32.mrf.mxu0
        %v1452 = vadd.f32 0.0, %v1451
        %1453 = vmatmul.f32.gmra.mxu0 %v986
        %v1454 = vpop.f32.mrf.mxu0
        %v1455 = vadd.f32 0.0, %v1454
        %1456 = vmatmul.f32.gmra.mxu0 %v990
        %v1457 = vpop.f32.mrf.mxu0
        %v1458 = vadd.f32 0.0, %v1457
        %1459 = vmatmul.f32.gmra.mxu0 %v994
        %v1460 = vpop.f32.mrf.mxu0
        %v1461 = vadd.f32 0.0, %v1460
        %1462 = vdwg.mxu0
        %1463 = vmatpush.msra.mxu0 %v1122
        %1464 = vmatpush.msra.mxu0 %v1118
        %1465 = vmatpush.msra.mxu0 %v1114
        %1466 = vmatpush.msra.mxu0 %v1110
        %1467 = vmatpush.msra.mxu0 %v1106
        %1468 = vmatpush.msra.mxu0 %v1102
        %1469 = vmatpush.msra.mxu0 %v1098
        %1470 = vmatpush.msra.mxu0 %v1094
        %1471 = vmatpush.msra.mxu0 %v1090
        %1472 = vmatpush.msra.mxu0 %v1086
        %1473 = vmatpush.msra.mxu0 %v1082
        %1474 = vmatpush.msra.mxu0 %v1078
        %1475 = vmatpush.msra.mxu0 %v1074
        %1476 = vmatpush.msra.mxu0 %v1070
        %1477 = vmatpush.msra.mxu0 %v1066
        %1478 = vmatpush.msra.mxu0 %v1062
        %1479 = vmatmul.f32.gmra.mxu0 %v743
        %v1480 = vpop.f32.mrf.mxu0
        %v1481 = vadd.f32 %v1272, %v1480
        %1482 = vmatmul.f32.gmra.mxu0 %v747
        %v1483 = vpop.f32.mrf.mxu0
        %v1484 = vadd.f32 %v1275, %v1483
        %1485 = vmatmul.f32.gmra.mxu0 %v751
        %v1486 = vpop.f32.mrf.mxu0
        %v1487 = vadd.f32 %v1278, %v1486
        %1488 = vmatmul.f32.gmra.mxu0 %v755
        %v1489 = vpop.f32.mrf.mxu0
        %v1490 = vadd.f32 %v1281, %v1489
        %1491 = vmatmul.f32.gmra.mxu0 %v759
        %v1492 = vpop.f32.mrf.mxu0
        %v1493 = vadd.f32 %v1284, %v1492
        %1494 = vmatmul.f32.gmra.mxu0 %v763
        %v1495 = vpop.f32.mrf.mxu0
        %v1496 = vadd.f32 %v1287, %v1495
        %1497 = vmatmul.f32.gmra.mxu0 %v767
        %v1498 = vpop.f32.mrf.mxu0
        %v1499 = vadd.f32 %v1290, %v1498
        %1500 = vmatmul.f32.gmra.mxu0 %v771
        %v1501 = vpop.f32.mrf.mxu0
        %v1502 = vadd.f32 %v1293, %v1501
        %1503 = vmatmul.f32.gmra.mxu0 %v775
        %v1504 = vpop.f32.mrf.mxu0
        %v1505 = vadd.f32 %v1296, %v1504
        %1506 = vmatmul.f32.gmra.mxu0 %v779
        %v1507 = vpop.f32.mrf.mxu0
        %v1508 = vadd.f32 %v1299, %v1507
        %1509 = vmatmul.f32.gmra.mxu0 %v783
        %v1510 = vpop.f32.mrf.mxu0
        %v1511 = vadd.f32 %v1302, %v1510
        %1512 = vmatmul.f32.gmra.mxu0 %v787
        %v1513 = vpop.f32.mrf.mxu0
        %v1514 = vadd.f32 %v1305, %v1513
        %1515 = vmatmul.f32.gmra.mxu0 %v791
        %v1516 = vpop.f32.mrf.mxu0
        %v1517 = vadd.f32 %v1308, %v1516
        %1518 = vmatmul.f32.gmra.mxu0 %v795
        %v1519 = vpop.f32.mrf.mxu0
        %v1520 = vadd.f32 %v1311, %v1519
        %1521 = vmatmul.f32.gmra.mxu0 %v799
        %v1522 = vpop.f32.mrf.mxu0
        %v1523 = vadd.f32 %v1314, %v1522
        %1524 = vmatmul.f32.gmra.mxu0 %v803
        %v1525 = vpop.f32.mrf.mxu0
        %v1526 = vadd.f32 %v1317, %v1525
        %1527 = vmatmul.f32.gmra.mxu0 %v807
        %v1528 = vpop.f32.mrf.mxu0
        %v1529 = vadd.f32 %v1320, %v1528
        %1530 = vmatmul.f32.gmra.mxu0 %v811
        %v1531 = vpop.f32.mrf.mxu0
        %v1532 = vadd.f32 %v1323, %v1531
        %1533 = vmatmul.f32.gmra.mxu0 %v815
        %v1534 = vpop.f32.mrf.mxu0
        %v1535 = vadd.f32 %v1326, %v1534
        %1536 = vmatmul.f32.gmra.mxu0 %v819
        %v1537 = vpop.f32.mrf.mxu0
        %v1538 = vadd.f32 %v1329, %v1537
        %1539 = vmatmul.f32.gmra.mxu0 %v823
        %v1540 = vpop.f32.mrf.mxu0
        %v1541 = vadd.f32 %v1332, %v1540
        %1542 = vmatmul.f32.gmra.mxu0 %v827
        %v1543 = vpop.f32.mrf.mxu0
        %v1544 = vadd.f32 %v1335, %v1543
        %1545 = vmatmul.f32.gmra.mxu0 %v831
        %v1546 = vpop.f32.mrf.mxu0
        %v1547 = vadd.f32 %v1338, %v1546
        %1548 = vmatmul.f32.gmra.mxu0 %v835
        %v1549 = vpop.f32.mrf.mxu0
        %v1550 = vadd.f32 %v1341, %v1549
        %1551 = vmatmul.f32.gmra.mxu0 %v839
        %v1552 = vpop.f32.mrf.mxu0
        %v1553 = vadd.f32 %v1344, %v1552
        %1554 = vmatmul.f32.gmra.mxu0 %v843
        %v1555 = vpop.f32.mrf.mxu0
        %v1556 = vadd.f32 %v1347, %v1555
        %1557 = vmatmul.f32.gmra.mxu0 %v847
        %v1558 = vpop.f32.mrf.mxu0
        %v1559 = vadd.f32 %v1350, %v1558
        %1560 = vmatmul.f32.gmra.mxu0 %v851
        %v1561 = vpop.f32.mrf.mxu0
        %v1562 = vadd.f32 %v1353, %v1561
        %1563 = vmatmul.f32.gmra.mxu0 %v855
        %v1564 = vpop.f32.mrf.mxu0
        %v1565 = vadd.f32 %v1356, %v1564
        %1566 = vmatmul.f32.gmra.mxu0 %v859
        %v1567 = vpop.f32.mrf.mxu0
        %v1568 = vadd.f32 %v1359, %v1567
        %1569 = vmatmul.f32.gmra.mxu0 %v863
        %v1570 = vpop.f32.mrf.mxu0
        %v1571 = vadd.f32 %v1362, %v1570
        %1572 = vmatmul.f32.gmra.mxu0 %v867
        %v1573 = vpop.f32.mrf.mxu0
        %v1574 = vadd.f32 %v1365, %v1573
        %1575 = vmatmul.f32.gmra.mxu0 %v871
        %v1576 = vpop.f32.mrf.mxu0
        %v1577 = vadd.f32 %v1368, %v1576
        %1578 = vmatmul.f32.gmra.mxu0 %v875
        %v1579 = vpop.f32.mrf.mxu0
        %v1580 = vadd.f32 %v1371, %v1579
        %1581 = vmatmul.f32.gmra.mxu0 %v879
        %v1582 = vpop.f32.mrf.mxu0
        %v1583 = vadd.f32 %v1374, %v1582
        %1584 = vmatmul.f32.gmra.mxu0 %v883
        %v1585 = vpop.f32.mrf.mxu0
        %v1586 = vadd.f32 %v1377, %v1585
        %1587 = vmatmul.f32.gmra.mxu0 %v887
        %v1588 = vpop.f32.mrf.mxu0
        %v1589 = vadd.f32 %v1380, %v1588
        %1590 = vmatmul.f32.gmra.mxu0 %v891
        %v1591 = vpop.f32.mrf.mxu0
        %v1592 = vadd.f32 %v1383, %v1591
        %1593 = vmatmul.f32.gmra.mxu0 %v895
        %v1594 = vpop.f32.mrf.mxu0
        %v1595 = vadd.f32 %v1386, %v1594
        %1596 = vmatmul.f32.gmra.mxu0 %v899
        %v1597 = vpop.f32.mrf.mxu0
        %v1598 = vadd.f32 %v1389, %v1597
        %1599 = vmatmul.f32.gmra.mxu0 %v903
        %v1600 = vpop.f32.mrf.mxu0
        %v1601 = vadd.f32 %v1392, %v1600
        %1602 = vmatmul.f32.gmra.mxu0 %v907
        %v1603 = vpop.f32.mrf.mxu0
        %v1604 = vadd.f32 %v1395, %v1603
        %1605 = vmatmul.f32.gmra.mxu0 %v911
        %v1606 = vpop.f32.mrf.mxu0
        %v1607 = vadd.f32 %v1398, %v1606
        %1608 = vmatmul.f32.gmra.mxu0 %v915
        %v1609 = vpop.f32.mrf.mxu0
        %v1610 = vadd.f32 %v1401, %v1609
        %1611 = vmatmul.f32.gmra.mxu0 %v919
        %v1612 = vpop.f32.mrf.mxu0
        %v1613 = vadd.f32 %v1404, %v1612
        %1614 = vmatmul.f32.gmra.mxu0 %v923
        %v1615 = vpop.f32.mrf.mxu0
        %v1616 = vadd.f32 %v1407, %v1615
        %1617 = vmatmul.f32.gmra.mxu0 %v927
        %v1618 = vpop.f32.mrf.mxu0
        %v1619 = vadd.f32 %v1410, %v1618
        %1620 = vmatmul.f32.gmra.mxu0 %v931
        %v1621 = vpop.f32.mrf.mxu0
        %v1622 = vadd.f32 %v1413, %v1621
        %1623 = vmatmul.f32.gmra.mxu0 %v935
        %v1624 = vpop.f32.mrf.mxu0
        %v1625 = vadd.f32 %v1416, %v1624
        %1626 = vmatmul.f32.gmra.mxu0 %v939
        %v1627 = vpop.f32.mrf.mxu0
        %v1628 = vadd.f32 %v1419, %v1627
        %1629 = vmatmul.f32.gmra.mxu0 %v943
        %v1630 = vpop.f32.mrf.mxu0
        %v1631 = vadd.f32 %v1422, %v1630
        %1632 = vmatmul.f32.gmra.mxu0 %v947
        %v1633 = vpop.f32.mrf.mxu0
        %v1634 = vadd.f32 %v1425, %v1633
        %1635 = vmatmul.f32.gmra.mxu0 %v951
        %v1636 = vpop.f32.mrf.mxu0
        %v1637 = vadd.f32 %v1428, %v1636
        %1638 = vmatmul.f32.gmra.mxu0 %v955
        %v1639 = vpop.f32.mrf.mxu0
        %v1640 = vadd.f32 %v1431, %v1639
        %1641 = vmatmul.f32.gmra.mxu0 %v959
        %v1642 = vpop.f32.mrf.mxu0
        %v1643 = vadd.f32 %v1434, %v1642
        %1644 = vmatmul.f32.gmra.mxu0 %v963
        %v1645 = vpop.f32.mrf.mxu0
        %v1646 = vadd.f32 %v1437, %v1645
        %1647 = vmatmul.f32.gmra.mxu0 %v967
        %v1648 = vpop.f32.mrf.mxu0
        %v1649 = vadd.f32 %v1440, %v1648
        %1650 = vmatmul.f32.gmra.mxu0 %v971
        %v1651 = vpop.f32.mrf.mxu0
        %v1652 = vadd.f32 %v1443, %v1651
        %1653 = vmatmul.f32.gmra.mxu0 %v975
        %v1654 = vpop.f32.mrf.mxu0
        %v1655 = vadd.f32 %v1446, %v1654
        %1656 = vmatmul.f32.gmra.mxu0 %v979
        %v1657 = vpop.f32.mrf.mxu0
        %v1658 = vadd.f32 %v1449, %v1657
        %1659 = vmatmul.f32.gmra.mxu0 %v983
        %v1660 = vpop.f32.mrf.mxu0
        %v1661 = vadd.f32 %v1452, %v1660
        %1662 = vmatmul.f32.gmra.mxu0 %v987
        %v1663 = vpop.f32.mrf.mxu0
        %v1664 = vadd.f32 %v1455, %v1663
        %1665 = vmatmul.f32.gmra.mxu0 %v991
        %v1666 = vpop.f32.mrf.mxu0
        %v1667 = vadd.f32 %v1458, %v1666
        %1668 = vmatmul.f32.gmra.mxu0 %v995
        %v1669 = vpop.f32.mrf.mxu0
        %v1670 = vadd.f32 %v1461, %v1669
        %1671 = vdwg.mxu0
        %1672 = vmatpush.msra.mxu0 %v1186
        %1673 = vmatpush.msra.mxu0 %v1182
        %1674 = vmatpush.msra.mxu0 %v1178
        %1675 = vmatpush.msra.mxu0 %v1174
        %1676 = vmatpush.msra.mxu0 %v1170
        %1677 = vmatpush.msra.mxu0 %v1166
        %1678 = vmatpush.msra.mxu0 %v1162
        %1679 = vmatpush.msra.mxu0 %v1158
        %1680 = vmatpush.msra.mxu0 %v1154
        %1681 = vmatpush.msra.mxu0 %v1150
        %1682 = vmatpush.msra.mxu0 %v1146
        %1683 = vmatpush.msra.mxu0 %v1142
        %1684 = vmatpush.msra.mxu0 %v1138
        %1685 = vmatpush.msra.mxu0 %v1134
        %1686 = vmatpush.msra.mxu0 %v1130
        %1687 = vmatpush.msra.mxu0 %v1126
        %1688 = vmatmul.f32.gmra.mxu0 %v744
        %v1689 = vpop.f32.mrf.mxu0
        %v1690 = vadd.f32 %v1481, %v1689
        %1691 = vmatmul.f32.gmra.mxu0 %v748
        %v1692 = vpop.f32.mrf.mxu0
        %v1693 = vadd.f32 %v1484, %v1692
        %1694 = vmatmul.f32.gmra.mxu0 %v752
        %v1695 = vpop.f32.mrf.mxu0
        %v1696 = vadd.f32 %v1487, %v1695
        %1697 = vmatmul.f32.gmra.mxu0 %v756
        %v1698 = vpop.f32.mrf.mxu0
        %v1699 = vadd.f32 %v1490, %v1698
        %1700 = vmatmul.f32.gmra.mxu0 %v760
        %v1701 = vpop.f32.mrf.mxu0
        %v1702 = vadd.f32 %v1493, %v1701
        %1703 = vmatmul.f32.gmra.mxu0 %v764
        %v1704 = vpop.f32.mrf.mxu0
        %v1705 = vadd.f32 %v1496, %v1704
        %1706 = vmatmul.f32.gmra.mxu0 %v768
        %v1707 = vpop.f32.mrf.mxu0
        %v1708 = vadd.f32 %v1499, %v1707
        %1709 = vmatmul.f32.gmra.mxu0 %v772
        %v1710 = vpop.f32.mrf.mxu0
        %v1711 = vadd.f32 %v1502, %v1710
        %1712 = vmatmul.f32.gmra.mxu0 %v776
        %v1713 = vpop.f32.mrf.mxu0
        %v1714 = vadd.f32 %v1505, %v1713
        %1715 = vmatmul.f32.gmra.mxu0 %v780
        %v1716 = vpop.f32.mrf.mxu0
        %v1717 = vadd.f32 %v1508, %v1716
        %1718 = vmatmul.f32.gmra.mxu0 %v784
        %v1719 = vpop.f32.mrf.mxu0
        %v1720 = vadd.f32 %v1511, %v1719
        %1721 = vmatmul.f32.gmra.mxu0 %v788
        %v1722 = vpop.f32.mrf.mxu0
        %v1723 = vadd.f32 %v1514, %v1722
        %1724 = vmatmul.f32.gmra.mxu0 %v792
        %v1725 = vpop.f32.mrf.mxu0
        %v1726 = vadd.f32 %v1517, %v1725
        %1727 = vmatmul.f32.gmra.mxu0 %v796
        %v1728 = vpop.f32.mrf.mxu0
        %v1729 = vadd.f32 %v1520, %v1728
        %1730 = vmatmul.f32.gmra.mxu0 %v800
        %v1731 = vpop.f32.mrf.mxu0
        %v1732 = vadd.f32 %v1523, %v1731
        %1733 = vmatmul.f32.gmra.mxu0 %v804
        %v1734 = vpop.f32.mrf.mxu0
        %v1735 = vadd.f32 %v1526, %v1734
        %1736 = vmatmul.f32.gmra.mxu0 %v808
        %v1737 = vpop.f32.mrf.mxu0
        %v1738 = vadd.f32 %v1529, %v1737
        %1739 = vmatmul.f32.gmra.mxu0 %v812
        %v1740 = vpop.f32.mrf.mxu0
        %v1741 = vadd.f32 %v1532, %v1740
        %1742 = vmatmul.f32.gmra.mxu0 %v816
        %v1743 = vpop.f32.mrf.mxu0
        %v1744 = vadd.f32 %v1535, %v1743
        %1745 = vmatmul.f32.gmra.mxu0 %v820
        %v1746 = vpop.f32.mrf.mxu0
        %v1747 = vadd.f32 %v1538, %v1746
        %1748 = vmatmul.f32.gmra.mxu0 %v824
        %v1749 = vpop.f32.mrf.mxu0
        %v1750 = vadd.f32 %v1541, %v1749
        %1751 = vmatmul.f32.gmra.mxu0 %v828
        %v1752 = vpop.f32.mrf.mxu0
        %v1753 = vadd.f32 %v1544, %v1752
        %1754 = vmatmul.f32.gmra.mxu0 %v832
        %v1755 = vpop.f32.mrf.mxu0
        %v1756 = vadd.f32 %v1547, %v1755
        %1757 = vmatmul.f32.gmra.mxu0 %v836
        %v1758 = vpop.f32.mrf.mxu0
        %v1759 = vadd.f32 %v1550, %v1758
        %1760 = vmatmul.f32.gmra.mxu0 %v840
        %v1761 = vpop.f32.mrf.mxu0
        %v1762 = vadd.f32 %v1553, %v1761
        %1763 = vmatmul.f32.gmra.mxu0 %v844
        %v1764 = vpop.f32.mrf.mxu0
        %v1765 = vadd.f32 %v1556, %v1764
        %1766 = vmatmul.f32.gmra.mxu0 %v848
        %v1767 = vpop.f32.mrf.mxu0
        %v1768 = vadd.f32 %v1559, %v1767
        %1769 = vmatmul.f32.gmra.mxu0 %v852
        %v1770 = vpop.f32.mrf.mxu0
        %v1771 = vadd.f32 %v1562, %v1770
        %1772 = vmatmul.f32.gmra.mxu0 %v856
        %v1773 = vpop.f32.mrf.mxu0
        %v1774 = vadd.f32 %v1565, %v1773
        %1775 = vmatmul.f32.gmra.mxu0 %v860
        %v1776 = vpop.f32.mrf.mxu0
        %v1777 = vadd.f32 %v1568, %v1776
        %1778 = vmatmul.f32.gmra.mxu0 %v864
        %v1779 = vpop.f32.mrf.mxu0
        %v1780 = vadd.f32 %v1571, %v1779
        %1781 = vmatmul.f32.gmra.mxu0 %v868
        %v1782 = vpop.f32.mrf.mxu0
        %v1783 = vadd.f32 %v1574, %v1782
        %1784 = vmatmul.f32.gmra.mxu0 %v872
        %v1785 = vpop.f32.mrf.mxu0
        %v1786 = vadd.f32 %v1577, %v1785
        %1787 = vmatmul.f32.gmra.mxu0 %v876
        %v1788 = vpop.f32.mrf.mxu0
        %v1789 = vadd.f32 %v1580, %v1788
        %1790 = vmatmul.f32.gmra.mxu0 %v880
        %v1791 = vpop.f32.mrf.mxu0
        %v1792 = vadd.f32 %v1583, %v1791
        %1793 = vmatmul.f32.gmra.mxu0 %v884
        %v1794 = vpop.f32.mrf.mxu0
        %v1795 = vadd.f32 %v1586, %v1794
        %1796 = vmatmul.f32.gmra.mxu0 %v888
        %v1797 = vpop.f32.mrf.mxu0
        %v1798 = vadd.f32 %v1589, %v1797
        %1799 = vmatmul.f32.gmra.mxu0 %v892
        %v1800 = vpop.f32.mrf.mxu0
        %v1801 = vadd.f32 %v1592, %v1800
        %1802 = vmatmul.f32.gmra.mxu0 %v896
        %v1803 = vpop.f32.mrf.mxu0
        %v1804 = vadd.f32 %v1595, %v1803
        %1805 = vmatmul.f32.gmra.mxu0 %v900
        %v1806 = vpop.f32.mrf.mxu0
        %v1807 = vadd.f32 %v1598, %v1806
        %1808 = vmatmul.f32.gmra.mxu0 %v904
        %v1809 = vpop.f32.mrf.mxu0
        %v1810 = vadd.f32 %v1601, %v1809
        %1811 = vmatmul.f32.gmra.mxu0 %v908
        %v1812 = vpop.f32.mrf.mxu0
        %v1813 = vadd.f32 %v1604, %v1812
        %1814 = vmatmul.f32.gmra.mxu0 %v912
        %v1815 = vpop.f32.mrf.mxu0
        %v1816 = vadd.f32 %v1607, %v1815
        %1817 = vmatmul.f32.gmra.mxu0 %v916
        %v1818 = vpop.f32.mrf.mxu0
        %v1819 = vadd.f32 %v1610, %v1818
        %1820 = vmatmul.f32.gmra.mxu0 %v920
        %v1821 = vpop.f32.mrf.mxu0
        %v1822 = vadd.f32 %v1613, %v1821
        %1823 = vmatmul.f32.gmra.mxu0 %v924
        %v1824 = vpop.f32.mrf.mxu0
        %v1825 = vadd.f32 %v1616, %v1824
        %1826 = vmatmul.f32.gmra.mxu0 %v928
        %v1827 = vpop.f32.mrf.mxu0
        %v1828 = vadd.f32 %v1619, %v1827
        %1829 = vmatmul.f32.gmra.mxu0 %v932
        %v1830 = vpop.f32.mrf.mxu0
        %v1831 = vadd.f32 %v1622, %v1830
        %1832 = vmatmul.f32.gmra.mxu0 %v936
        %v1833 = vpop.f32.mrf.mxu0
        %v1834 = vadd.f32 %v1625, %v1833
        %1835 = vmatmul.f32.gmra.mxu0 %v940
        %v1836 = vpop.f32.mrf.mxu0
        %v1837 = vadd.f32 %v1628, %v1836
        %1838 = vmatmul.f32.gmra.mxu0 %v944
        %v1839 = vpop.f32.mrf.mxu0
        %v1840 = vadd.f32 %v1631, %v1839
        %1841 = vmatmul.f32.gmra.mxu0 %v948
        %v1842 = vpop.f32.mrf.mxu0
        %v1843 = vadd.f32 %v1634, %v1842
        %1844 = vmatmul.f32.gmra.mxu0 %v952
        %v1845 = vpop.f32.mrf.mxu0
        %v1846 = vadd.f32 %v1637, %v1845
        %1847 = vmatmul.f32.gmra.mxu0 %v956
        %v1848 = vpop.f32.mrf.mxu0
        %v1849 = vadd.f32 %v1640, %v1848
        %1850 = vmatmul.f32.gmra.mxu0 %v960
        %v1851 = vpop.f32.mrf.mxu0
        %v1852 = vadd.f32 %v1643, %v1851
        %1853 = vmatmul.f32.gmra.mxu0 %v964
        %v1854 = vpop.f32.mrf.mxu0
        %v1855 = vadd.f32 %v1646, %v1854
        %1856 = vmatmul.f32.gmra.mxu0 %v968
        %v1857 = vpop.f32.mrf.mxu0
        %v1858 = vadd.f32 %v1649, %v1857
        %1859 = vmatmul.f32.gmra.mxu0 %v972
        %v1860 = vpop.f32.mrf.mxu0
        %v1861 = vadd.f32 %v1652, %v1860
        %1862 = vmatmul.f32.gmra.mxu0 %v976
        %v1863 = vpop.f32.mrf.mxu0
        %v1864 = vadd.f32 %v1655, %v1863
        %1865 = vmatmul.f32.gmra.mxu0 %v980
        %v1866 = vpop.f32.mrf.mxu0
        %v1867 = vadd.f32 %v1658, %v1866
        %1868 = vmatmul.f32.gmra.mxu0 %v984
        %v1869 = vpop.f32.mrf.mxu0
        %v1870 = vadd.f32 %v1661, %v1869
        %1871 = vmatmul.f32.gmra.mxu0 %v988
        %v1872 = vpop.f32.mrf.mxu0
        %v1873 = vadd.f32 %v1664, %v1872
        %1874 = vmatmul.f32.gmra.mxu0 %v992
        %v1875 = vpop.f32.mrf.mxu0
        %v1876 = vadd.f32 %v1667, %v1875
        %1877 = vmatmul.f32.gmra.mxu0 %v996
        %v1878 = vpop.f32.mrf.mxu0
        %v1879 = vadd.f32 %v1670, %v1878
        %1880 = vdwg.mxu0
        %1881 = vmatpush.msra.mxu0 %v1250
        %1882 = vmatpush.msra.mxu0 %v1246
        %1883 = vmatpush.msra.mxu0 %v1242
        %1884 = vmatpush.msra.mxu0 %v1238
        %1885 = vmatpush.msra.mxu0 %v1234
        %1886 = vmatpush.msra.mxu0 %v1230
        %1887 = vmatpush.msra.mxu0 %v1226
        %1888 = vmatpush.msra.mxu0 %v1222
        %1889 = vmatpush.msra.mxu0 %v1218
        %1890 = vmatpush.msra.mxu0 %v1214
        %1891 = vmatpush.msra.mxu0 %v1210
        %1892 = vmatpush.msra.mxu0 %v1206
        %1893 = vmatpush.msra.mxu0 %v1202
        %1894 = vmatpush.msra.mxu0 %v1198
        %1895 = vmatpush.msra.mxu0 %v1194
        %1896 = vmatpush.msra.mxu0 %v1190
        %1897 = vmatmul.f32.gmra.mxu0 %v745
        %v1898 = vpop.f32.mrf.mxu0
        %v1899 = vadd.f32 %v1690, %v1898
        %1900 = vmatmul.f32.gmra.mxu0 %v749
        %v1901 = vpop.f32.mrf.mxu0
        %v1902 = vadd.f32 %v1693, %v1901
        %1903 = vmatmul.f32.gmra.mxu0 %v753
        %v1904 = vpop.f32.mrf.mxu0
        %v1905 = vadd.f32 %v1696, %v1904
        %1906 = vmatmul.f32.gmra.mxu0 %v757
        %v1907 = vpop.f32.mrf.mxu0
        %v1908 = vadd.f32 %v1699, %v1907
        %1909 = vmatmul.f32.gmra.mxu0 %v761
        %v1910 = vpop.f32.mrf.mxu0
        %v1911 = vadd.f32 %v1702, %v1910
        %1912 = vmatmul.f32.gmra.mxu0 %v765
        %v1913 = vpop.f32.mrf.mxu0
        %v1914 = vadd.f32 %v1705, %v1913
        %1915 = vmatmul.f32.gmra.mxu0 %v769
        %v1916 = vpop.f32.mrf.mxu0
        %v1917 = vadd.f32 %v1708, %v1916
        %1918 = vmatmul.f32.gmra.mxu0 %v773
        %v1919 = vpop.f32.mrf.mxu0
        %v1920 = vadd.f32 %v1711, %v1919
        %1921 = vmatmul.f32.gmra.mxu0 %v777
        %v1922 = vpop.f32.mrf.mxu0
        %v1923 = vadd.f32 %v1714, %v1922
        %1924 = vmatmul.f32.gmra.mxu0 %v781
        %v1925 = vpop.f32.mrf.mxu0
        %v1926 = vadd.f32 %v1717, %v1925
        %1927 = vmatmul.f32.gmra.mxu0 %v785
        %v1928 = vpop.f32.mrf.mxu0
        %v1929 = vadd.f32 %v1720, %v1928
        %1930 = vmatmul.f32.gmra.mxu0 %v789
        %v1931 = vpop.f32.mrf.mxu0
        %v1932 = vadd.f32 %v1723, %v1931
        %1933 = vmatmul.f32.gmra.mxu0 %v793
        %v1934 = vpop.f32.mrf.mxu0
        %v1935 = vadd.f32 %v1726, %v1934
        %1936 = vmatmul.f32.gmra.mxu0 %v797
        %v1937 = vpop.f32.mrf.mxu0
        %v1938 = vadd.f32 %v1729, %v1937
        %1939 = vmatmul.f32.gmra.mxu0 %v801
        %v1940 = vpop.f32.mrf.mxu0
        %v1941 = vadd.f32 %v1732, %v1940
        %1942 = vmatmul.f32.gmra.mxu0 %v805
        %v1943 = vpop.f32.mrf.mxu0
        %v1944 = vadd.f32 %v1735, %v1943
        %1945 = vmatmul.f32.gmra.mxu0 %v809
        %v1946 = vpop.f32.mrf.mxu0
        %v1947 = vadd.f32 %v1738, %v1946
        %1948 = vmatmul.f32.gmra.mxu0 %v813
        %v1949 = vpop.f32.mrf.mxu0
        %v1950 = vadd.f32 %v1741, %v1949
        %1951 = vmatmul.f32.gmra.mxu0 %v817
        %v1952 = vpop.f32.mrf.mxu0
        %v1953 = vadd.f32 %v1744, %v1952
        %1954 = vmatmul.f32.gmra.mxu0 %v821
        %v1955 = vpop.f32.mrf.mxu0
        %v1956 = vadd.f32 %v1747, %v1955
        %1957 = vmatmul.f32.gmra.mxu0 %v825
        %v1958 = vpop.f32.mrf.mxu0
        %v1959 = vadd.f32 %v1750, %v1958
        %1960 = vmatmul.f32.gmra.mxu0 %v829
        %v1961 = vpop.f32.mrf.mxu0
        %v1962 = vadd.f32 %v1753, %v1961
        %1963 = vmatmul.f32.gmra.mxu0 %v833
        %v1964 = vpop.f32.mrf.mxu0
        %v1965 = vadd.f32 %v1756, %v1964
        %1966 = vmatmul.f32.gmra.mxu0 %v837
        %v1967 = vpop.f32.mrf.mxu0
        %v1968 = vadd.f32 %v1759, %v1967
        %1969 = vmatmul.f32.gmra.mxu0 %v841
        %v1970 = vpop.f32.mrf.mxu0
        %v1971 = vadd.f32 %v1762, %v1970
        %1972 = vmatmul.f32.gmra.mxu0 %v845
        %v1973 = vpop.f32.mrf.mxu0
        %v1974 = vadd.f32 %v1765, %v1973
        %1975 = vmatmul.f32.gmra.mxu0 %v849
        %v1976 = vpop.f32.mrf.mxu0
        %v1977 = vadd.f32 %v1768, %v1976
        %1978 = vmatmul.f32.gmra.mxu0 %v853
        %v1979 = vpop.f32.mrf.mxu0
        %v1980 = vadd.f32 %v1771, %v1979
        %1981 = vmatmul.f32.gmra.mxu0 %v857
        %v1982 = vpop.f32.mrf.mxu0
        %v1983 = vadd.f32 %v1774, %v1982
        %1984 = vmatmul.f32.gmra.mxu0 %v861
        %v1985 = vpop.f32.mrf.mxu0
        %v1986 = vadd.f32 %v1777, %v1985
        %1987 = vmatmul.f32.gmra.mxu0 %v865
        %v1988 = vpop.f32.mrf.mxu0
        %v1989 = vadd.f32 %v1780, %v1988
        %1990 = vmatmul.f32.gmra.mxu0 %v869
        %v1991 = vpop.f32.mrf.mxu0
        %v1992 = vadd.f32 %v1783, %v1991
        %1993 = vmatmul.f32.gmra.mxu0 %v873
        %v1994 = vpop.f32.mrf.mxu0
        %v1995 = vadd.f32 %v1786, %v1994
        %1996 = vmatmul.f32.gmra.mxu0 %v877
        %v1997 = vpop.f32.mrf.mxu0
        %v1998 = vadd.f32 %v1789, %v1997
        %1999 = vmatmul.f32.gmra.mxu0 %v881
        %v2000 = vpop.f32.mrf.mxu0
        %v2001 = vadd.f32 %v1792, %v2000
        %2002 = vmatmul.f32.gmra.mxu0 %v885
        %v2003 = vpop.f32.mrf.mxu0
        %v2004 = vadd.f32 %v1795, %v2003
        %2005 = vmatmul.f32.gmra.mxu0 %v889
        %v2006 = vpop.f32.mrf.mxu0
        %v2007 = vadd.f32 %v1798, %v2006
        %2008 = vmatmul.f32.gmra.mxu0 %v893
        %v2009 = vpop.f32.mrf.mxu0
        %v2010 = vadd.f32 %v1801, %v2009
        %2011 = vmatmul.f32.gmra.mxu0 %v897
        %v2012 = vpop.f32.mrf.mxu0
        %v2013 = vadd.f32 %v1804, %v2012
        %2014 = vmatmul.f32.gmra.mxu0 %v901
        %v2015 = vpop.f32.mrf.mxu0
        %v2016 = vadd.f32 %v1807, %v2015
        %2017 = vmatmul.f32.gmra.mxu0 %v905
        %v2018 = vpop.f32.mrf.mxu0
        %v2019 = vadd.f32 %v1810, %v2018
        %2020 = vmatmul.f32.gmra.mxu0 %v909
        %v2021 = vpop.f32.mrf.mxu0
        %v2022 = vadd.f32 %v1813, %v2021
        %2023 = vmatmul.f32.gmra.mxu0 %v913
        %v2024 = vpop.f32.mrf.mxu0
        %v2025 = vadd.f32 %v1816, %v2024
        %2026 = vmatmul.f32.gmra.mxu0 %v917
        %v2027 = vpop.f32.mrf.mxu0
        %v2028 = vadd.f32 %v1819, %v2027
        %2029 = vmatmul.f32.gmra.mxu0 %v921
        %v2030 = vpop.f32.mrf.mxu0
        %v2031 = vadd.f32 %v1822, %v2030
        %2032 = vmatmul.f32.gmra.mxu0 %v925
        %v2033 = vpop.f32.mrf.mxu0
        %v2034 = vadd.f32 %v1825, %v2033
        %2035 = vmatmul.f32.gmra.mxu0 %v929
        %v2036 = vpop.f32.mrf.mxu0
        %v2037 = vadd.f32 %v1828, %v2036
        %2038 = vmatmul.f32.gmra.mxu0 %v933
        %v2039 = vpop.f32.mrf.mxu0
        %v2040 = vadd.f32 %v1831, %v2039
        %2041 = vmatmul.f32.gmra.mxu0 %v937
        %v2042 = vpop.f32.mrf.mxu0
        %v2043 = vadd.f32 %v1834, %v2042
        %2044 = vmatmul.f32.gmra.mxu0 %v941
        %v2045 = vpop.f32.mrf.mxu0
        %v2046 = vadd.f32 %v1837, %v2045
        %2047 = vmatmul.f32.gmra.mxu0 %v945
        %v2048 = vpop.f32.mrf.mxu0
        %v2049 = vadd.f32 %v1840, %v2048
        %2050 = vmatmul.f32.gmra.mxu0 %v949
        %v2051 = vpop.f32.mrf.mxu0
        %v2052 = vadd.f32 %v1843, %v2051
        %2053 = vmatmul.f32.gmra.mxu0 %v953
        %v2054 = vpop.f32.mrf.mxu0
        %v2055 = vadd.f32 %v1846, %v2054
        %2056 = vmatmul.f32.gmra.mxu0 %v957
        %v2057 = vpop.f32.mrf.mxu0
        %v2058 = vadd.f32 %v1849, %v2057
        %2059 = vmatmul.f32.gmra.mxu0 %v961
        %v2060 = vpop.f32.mrf.mxu0
        %v2061 = vadd.f32 %v1852, %v2060
        %2062 = vmatmul.f32.gmra.mxu0 %v965
        %v2063 = vpop.f32.mrf.mxu0
        %v2064 = vadd.f32 %v1855, %v2063
        %2065 = vmatmul.f32.gmra.mxu0 %v969
        %v2066 = vpop.f32.mrf.mxu0
        %v2067 = vadd.f32 %v1858, %v2066
        %2068 = vmatmul.f32.gmra.mxu0 %v973
        %v2069 = vpop.f32.mrf.mxu0
        %v2070 = vadd.f32 %v1861, %v2069
        %2071 = vmatmul.f32.gmra.mxu0 %v977
        %v2072 = vpop.f32.mrf.mxu0
        %v2073 = vadd.f32 %v1864, %v2072
        %2074 = vmatmul.f32.gmra.mxu0 %v981
        %v2075 = vpop.f32.mrf.mxu0
        %v2076 = vadd.f32 %v1867, %v2075
        %2077 = vmatmul.f32.gmra.mxu0 %v985
        %v2078 = vpop.f32.mrf.mxu0
        %v2079 = vadd.f32 %v1870, %v2078
        %2080 = vmatmul.f32.gmra.mxu0 %v989
        %v2081 = vpop.f32.mrf.mxu0
        %v2082 = vadd.f32 %v1873, %v2081
        %2083 = vmatmul.f32.gmra.mxu0 %v993
        %v2084 = vpop.f32.mrf.mxu0
        %v2085 = vadd.f32 %v1876, %v2084
        %2086 = vmatmul.f32.gmra.mxu0 %v997
        %v2087 = vpop.f32.mrf.mxu0
        %v2088 = vadd.f32 %v1879, %v2087
        %2089 = vdwg.mxu0
        %2090 = vmatpush.msra.mxu0 %v1059
        %2091 = vmatpush.msra.mxu0 %v1055
        %2092 = vmatpush.msra.mxu0 %v1051
        %2093 = vmatpush.msra.mxu0 %v1047
        %2094 = vmatpush.msra.mxu0 %v1043
        %2095 = vmatpush.msra.mxu0 %v1039
        %2096 = vmatpush.msra.mxu0 %v1035
        %2097 = vmatpush.msra.mxu0 %v1031
        %2098 = vmatpush.msra.mxu0 %v1027
        %2099 = vmatpush.msra.mxu0 %v1023
        %2100 = vmatpush.msra.mxu0 %v1019
        %2101 = vmatpush.msra.mxu0 %v1015
        %2102 = vmatpush.msra.mxu0 %v1011
        %2103 = vmatpush.msra.mxu0 %v1007
        %2104 = vmatpush.msra.mxu0 %v1003
        %2105 = vmatpush.msra.mxu0 %v999
        %2106 = vmatmul.f32.gmra.mxu0 %v742
        %v2107 = vpop.f32.mrf.mxu0
        %v2108 = vadd.f32 0.0, %v2107
        %2109 = vmatmul.f32.gmra.mxu0 %v746
        %v2110 = vpop.f32.mrf.mxu0
        %v2111 = vadd.f32 0.0, %v2110
        %2112 = vmatmul.f32.gmra.mxu0 %v750
        %v2113 = vpop.f32.mrf.mxu0
        %v2114 = vadd.f32 0.0, %v2113
        %2115 = vmatmul.f32.gmra.mxu0 %v754
        %v2116 = vpop.f32.mrf.mxu0
        %v2117 = vadd.f32 0.0, %v2116
        %2118 = vmatmul.f32.gmra.mxu0 %v758
        %v2119 = vpop.f32.mrf.mxu0
        %v2120 = vadd.f32 0.0, %v2119
        %2121 = vmatmul.f32.gmra.mxu0 %v762
        %v2122 = vpop.f32.mrf.mxu0
        %v2123 = vadd.f32 0.0, %v2122
        %2124 = vmatmul.f32.gmra.mxu0 %v766
        %v2125 = vpop.f32.mrf.mxu0
        %v2126 = vadd.f32 0.0, %v2125
        %2127 = vmatmul.f32.gmra.mxu0 %v770
        %v2128 = vpop.f32.mrf.mxu0
        %v2129 = vadd.f32 0.0, %v2128
        %2130 = vmatmul.f32.gmra.mxu0 %v774
        %v2131 = vpop.f32.mrf.mxu0
        %v2132 = vadd.f32 0.0, %v2131
        %2133 = vmatmul.f32.gmra.mxu0 %v778
        %v2134 = vpop.f32.mrf.mxu0
        %v2135 = vadd.f32 0.0, %v2134
        %2136 = vmatmul.f32.gmra.mxu0 %v782
        %v2137 = vpop.f32.mrf.mxu0
        %v2138 = vadd.f32 0.0, %v2137
        %2139 = vmatmul.f32.gmra.mxu0 %v786
        %v2140 = vpop.f32.mrf.mxu0
        %v2141 = vadd.f32 0.0, %v2140
        %2142 = vmatmul.f32.gmra.mxu0 %v790
        %v2143 = vpop.f32.mrf.mxu0
        %v2144 = vadd.f32 0.0, %v2143
        %2145 = vmatmul.f32.gmra.mxu0 %v794
        %v2146 = vpop.f32.mrf.mxu0
        %v2147 = vadd.f32 0.0, %v2146
        %2148 = vmatmul.f32.gmra.mxu0 %v798
        %v2149 = vpop.f32.mrf.mxu0
        %v2150 = vadd.f32 0.0, %v2149
        %2151 = vmatmul.f32.gmra.mxu0 %v802
        %v2152 = vpop.f32.mrf.mxu0
        %v2153 = vadd.f32 0.0, %v2152
        %2154 = vmatmul.f32.gmra.mxu0 %v806
        %v2155 = vpop.f32.mrf.mxu0
        %v2156 = vadd.f32 0.0, %v2155
        %2157 = vmatmul.f32.gmra.mxu0 %v810
        %v2158 = vpop.f32.mrf.mxu0
        %v2159 = vadd.f32 0.0, %v2158
        %2160 = vmatmul.f32.gmra.mxu0 %v814
        %v2161 = vpop.f32.mrf.mxu0
        %v2162 = vadd.f32 0.0, %v2161
        %2163 = vmatmul.f32.gmra.mxu0 %v818
        %v2164 = vpop.f32.mrf.mxu0
        %v2165 = vadd.f32 0.0, %v2164
        %2166 = vmatmul.f32.gmra.mxu0 %v822
        %v2167 = vpop.f32.mrf.mxu0
        %v2168 = vadd.f32 0.0, %v2167
        %2169 = vmatmul.f32.gmra.mxu0 %v826
        %v2170 = vpop.f32.mrf.mxu0
        %v2171 = vadd.f32 0.0, %v2170
        %2172 = vmatmul.f32.gmra.mxu0 %v830
        %v2173 = vpop.f32.mrf.mxu0
        %v2174 = vadd.f32 0.0, %v2173
        %2175 = vmatmul.f32.gmra.mxu0 %v834
        %v2176 = vpop.f32.mrf.mxu0
        %v2177 = vadd.f32 0.0, %v2176
        %2178 = vmatmul.f32.gmra.mxu0 %v838
        %v2179 = vpop.f32.mrf.mxu0
        %v2180 = vadd.f32 0.0, %v2179
        %2181 = vmatmul.f32.gmra.mxu0 %v842
        %v2182 = vpop.f32.mrf.mxu0
        %v2183 = vadd.f32 0.0, %v2182
        %2184 = vmatmul.f32.gmra.mxu0 %v846
        %v2185 = vpop.f32.mrf.mxu0
        %v2186 = vadd.f32 0.0, %v2185
        %2187 = vmatmul.f32.gmra.mxu0 %v850
        %v2188 = vpop.f32.mrf.mxu0
        %v2189 = vadd.f32 0.0, %v2188
        %2190 = vmatmul.f32.gmra.mxu0 %v854
        %v2191 = vpop.f32.mrf.mxu0
        %v2192 = vadd.f32 0.0, %v2191
        %2193 = vmatmul.f32.gmra.mxu0 %v858
        %v2194 = vpop.f32.mrf.mxu0
        %v2195 = vadd.f32 0.0, %v2194
        %2196 = vmatmul.f32.gmra.mxu0 %v862
        %v2197 = vpop.f32.mrf.mxu0
        %v2198 = vadd.f32 0.0, %v2197
        %2199 = vmatmul.f32.gmra.mxu0 %v866
        %v2200 = vpop.f32.mrf.mxu0
        %v2201 = vadd.f32 0.0, %v2200
        %2202 = vmatmul.f32.gmra.mxu0 %v870
        %v2203 = vpop.f32.mrf.mxu0
        %v2204 = vadd.f32 0.0, %v2203
        %2205 = vmatmul.f32.gmra.mxu0 %v874
        %v2206 = vpop.f32.mrf.mxu0
        %v2207 = vadd.f32 0.0, %v2206
        %2208 = vmatmul.f32.gmra.mxu0 %v878
        %v2209 = vpop.f32.mrf.mxu0
        %v2210 = vadd.f32 0.0, %v2209
        %2211 = vmatmul.f32.gmra.mxu0 %v882
        %v2212 = vpop.f32.mrf.mxu0
        %v2213 = vadd.f32 0.0, %v2212
        %2214 = vmatmul.f32.gmra.mxu0 %v886
        %v2215 = vpop.f32.mrf.mxu0
        %v2216 = vadd.f32 0.0, %v2215
        %2217 = vmatmul.f32.gmra.mxu0 %v890
        %v2218 = vpop.f32.mrf.mxu0
        %v2219 = vadd.f32 0.0, %v2218
        %2220 = vmatmul.f32.gmra.mxu0 %v894
        %v2221 = vpop.f32.mrf.mxu0
        %v2222 = vadd.f32 0.0, %v2221
        %2223 = vmatmul.f32.gmra.mxu0 %v898
        %v2224 = vpop.f32.mrf.mxu0
        %v2225 = vadd.f32 0.0, %v2224
        %2226 = vmatmul.f32.gmra.mxu0 %v902
        %v2227 = vpop.f32.mrf.mxu0
        %v2228 = vadd.f32 0.0, %v2227
        %2229 = vmatmul.f32.gmra.mxu0 %v906
        %v2230 = vpop.f32.mrf.mxu0
        %v2231 = vadd.f32 0.0, %v2230
        %2232 = vmatmul.f32.gmra.mxu0 %v910
        %v2233 = vpop.f32.mrf.mxu0
        %v2234 = vadd.f32 0.0, %v2233
        %2235 = vmatmul.f32.gmra.mxu0 %v914
        %v2236 = vpop.f32.mrf.mxu0
        %v2237 = vadd.f32 0.0, %v2236
        %2238 = vmatmul.f32.gmra.mxu0 %v918
        %v2239 = vpop.f32.mrf.mxu0
        %v2240 = vadd.f32 0.0, %v2239
        %2241 = vmatmul.f32.gmra.mxu0 %v922
        %v2242 = vpop.f32.mrf.mxu0
        %v2243 = vadd.f32 0.0, %v2242
        %2244 = vmatmul.f32.gmra.mxu0 %v926
        %v2245 = vpop.f32.mrf.mxu0
        %v2246 = vadd.f32 0.0, %v2245
        %2247 = vmatmul.f32.gmra.mxu0 %v930
        %v2248 = vpop.f32.mrf.mxu0
        %v2249 = vadd.f32 0.0, %v2248
        %2250 = vmatmul.f32.gmra.mxu0 %v934
        %v2251 = vpop.f32.mrf.mxu0
        %v2252 = vadd.f32 0.0, %v2251
        %2253 = vmatmul.f32.gmra.mxu0 %v938
        %v2254 = vpop.f32.mrf.mxu0
        %v2255 = vadd.f32 0.0, %v2254
        %2256 = vmatmul.f32.gmra.mxu0 %v942
        %v2257 = vpop.f32.mrf.mxu0
        %v2258 = vadd.f32 0.0, %v2257
        %2259 = vmatmul.f32.gmra.mxu0 %v946
        %v2260 = vpop.f32.mrf.mxu0
        %v2261 = vadd.f32 0.0, %v2260
        %2262 = vmatmul.f32.gmra.mxu0 %v950
        %v2263 = vpop.f32.mrf.mxu0
        %v2264 = vadd.f32 0.0, %v2263
        %2265 = vmatmul.f32.gmra.mxu0 %v954
        %v2266 = vpop.f32.mrf.mxu0
        %v2267 = vadd.f32 0.0, %v2266
        %2268 = vmatmul.f32.gmra.mxu0 %v958
        %v2269 = vpop.f32.mrf.mxu0
        %v2270 = vadd.f32 0.0, %v2269
        %2271 = vmatmul.f32.gmra.mxu0 %v962
        %v2272 = vpop.f32.mrf.mxu0
        %v2273 = vadd.f32 0.0, %v2272
        %2274 = vmatmul.f32.gmra.mxu0 %v966
        %v2275 = vpop.f32.mrf.mxu0
        %v2276 = vadd.f32 0.0, %v2275
        %2277 = vmatmul.f32.gmra.mxu0 %v970
        %v2278 = vpop.f32.mrf.mxu0
        %v2279 = vadd.f32 0.0, %v2278
        %2280 = vmatmul.f32.gmra.mxu0 %v974
        %v2281 = vpop.f32.mrf.mxu0
        %v2282 = vadd.f32 0.0, %v2281
        %2283 = vmatmul.f32.gmra.mxu0 %v978
        %v2284 = vpop.f32.mrf.mxu0
        %v2285 = vadd.f32 0.0, %v2284
        %2286 = vmatmul.f32.gmra.mxu0 %v982
        %v2287 = vpop.f32.mrf.mxu0
        %v2288 = vadd.f32 0.0, %v2287
        %2289 = vmatmul.f32.gmra.mxu0 %v986
        %v2290 = vpop.f32.mrf.mxu0
        %v2291 = vadd.f32 0.0, %v2290
        %2292 = vmatmul.f32.gmra.mxu0 %v990
        %v2293 = vpop.f32.mrf.mxu0
        %v2294 = vadd.f32 0.0, %v2293
        %2295 = vmatmul.f32.gmra.mxu0 %v994
        %v2296 = vpop.f32.mrf.mxu0
        %v2297 = vadd.f32 0.0, %v2296
        %2298 = vdwg.mxu0
        %2299 = vmatpush.msra.mxu0 %v1123
        %2300 = vmatpush.msra.mxu0 %v1119
        %2301 = vmatpush.msra.mxu0 %v1115
        %2302 = vmatpush.msra.mxu0 %v1111
        %2303 = vmatpush.msra.mxu0 %v1107
        %2304 = vmatpush.msra.mxu0 %v1103
        %2305 = vmatpush.msra.mxu0 %v1099
        %2306 = vmatpush.msra.mxu0 %v1095
        %2307 = vmatpush.msra.mxu0 %v1091
        %2308 = vmatpush.msra.mxu0 %v1087
        %2309 = vmatpush.msra.mxu0 %v1083
        %2310 = vmatpush.msra.mxu0 %v1079
        %2311 = vmatpush.msra.mxu0 %v1075
        %2312 = vmatpush.msra.mxu0 %v1071
        %2313 = vmatpush.msra.mxu0 %v1067
        %2314 = vmatpush.msra.mxu0 %v1063
        %2315 = vmatmul.f32.gmra.mxu0 %v743
        %v2316 = vpop.f32.mrf.mxu0
        %v2317 = vadd.f32 %v2108, %v2316
        %2318 = vmatmul.f32.gmra.mxu0 %v747
        %v2319 = vpop.f32.mrf.mxu0
        %v2320 = vadd.f32 %v2111, %v2319
        %2321 = vmatmul.f32.gmra.mxu0 %v751
        %v2322 = vpop.f32.mrf.mxu0
        %v2323 = vadd.f32 %v2114, %v2322
        %2324 = vmatmul.f32.gmra.mxu0 %v755
        %v2325 = vpop.f32.mrf.mxu0
        %v2326 = vadd.f32 %v2117, %v2325
        %2327 = vmatmul.f32.gmra.mxu0 %v759
        %v2328 = vpop.f32.mrf.mxu0
        %v2329 = vadd.f32 %v2120, %v2328
        %2330 = vmatmul.f32.gmra.mxu0 %v763
        %v2331 = vpop.f32.mrf.mxu0
        %v2332 = vadd.f32 %v2123, %v2331
        %2333 = vmatmul.f32.gmra.mxu0 %v767
        %v2334 = vpop.f32.mrf.mxu0
        %v2335 = vadd.f32 %v2126, %v2334
        %2336 = vmatmul.f32.gmra.mxu0 %v771
        %v2337 = vpop.f32.mrf.mxu0
        %v2338 = vadd.f32 %v2129, %v2337
        %2339 = vmatmul.f32.gmra.mxu0 %v775
        %v2340 = vpop.f32.mrf.mxu0
        %v2341 = vadd.f32 %v2132, %v2340
        %2342 = vmatmul.f32.gmra.mxu0 %v779
        %v2343 = vpop.f32.mrf.mxu0
        %v2344 = vadd.f32 %v2135, %v2343
        %2345 = vmatmul.f32.gmra.mxu0 %v783
        %v2346 = vpop.f32.mrf.mxu0
        %v2347 = vadd.f32 %v2138, %v2346
        %2348 = vmatmul.f32.gmra.mxu0 %v787
        %v2349 = vpop.f32.mrf.mxu0
        %v2350 = vadd.f32 %v2141, %v2349
        %2351 = vmatmul.f32.gmra.mxu0 %v791
        %v2352 = vpop.f32.mrf.mxu0
        %v2353 = vadd.f32 %v2144, %v2352
        %2354 = vmatmul.f32.gmra.mxu0 %v795
        %v2355 = vpop.f32.mrf.mxu0
        %v2356 = vadd.f32 %v2147, %v2355
        %2357 = vmatmul.f32.gmra.mxu0 %v799
        %v2358 = vpop.f32.mrf.mxu0
        %v2359 = vadd.f32 %v2150, %v2358
        %2360 = vmatmul.f32.gmra.mxu0 %v803
        %v2361 = vpop.f32.mrf.mxu0
        %v2362 = vadd.f32 %v2153, %v2361
        %2363 = vmatmul.f32.gmra.mxu0 %v807
        %v2364 = vpop.f32.mrf.mxu0
        %v2365 = vadd.f32 %v2156, %v2364
        %2366 = vmatmul.f32.gmra.mxu0 %v811
        %v2367 = vpop.f32.mrf.mxu0
        %v2368 = vadd.f32 %v2159, %v2367
        %2369 = vmatmul.f32.gmra.mxu0 %v815
        %v2370 = vpop.f32.mrf.mxu0
        %v2371 = vadd.f32 %v2162, %v2370
        %2372 = vmatmul.f32.gmra.mxu0 %v819
        %v2373 = vpop.f32.mrf.mxu0
        %v2374 = vadd.f32 %v2165, %v2373
        %2375 = vmatmul.f32.gmra.mxu0 %v823
        %v2376 = vpop.f32.mrf.mxu0
        %v2377 = vadd.f32 %v2168, %v2376
        %2378 = vmatmul.f32.gmra.mxu0 %v827
        %v2379 = vpop.f32.mrf.mxu0
        %v2380 = vadd.f32 %v2171, %v2379
        %2381 = vmatmul.f32.gmra.mxu0 %v831
        %v2382 = vpop.f32.mrf.mxu0
        %v2383 = vadd.f32 %v2174, %v2382
        %2384 = vmatmul.f32.gmra.mxu0 %v835
        %v2385 = vpop.f32.mrf.mxu0
        %v2386 = vadd.f32 %v2177, %v2385
        %2387 = vmatmul.f32.gmra.mxu0 %v839
        %v2388 = vpop.f32.mrf.mxu0
        %v2389 = vadd.f32 %v2180, %v2388
        %2390 = vmatmul.f32.gmra.mxu0 %v843
        %v2391 = vpop.f32.mrf.mxu0
        %v2392 = vadd.f32 %v2183, %v2391
        %2393 = vmatmul.f32.gmra.mxu0 %v847
        %v2394 = vpop.f32.mrf.mxu0
        %v2395 = vadd.f32 %v2186, %v2394
        %2396 = vmatmul.f32.gmra.mxu0 %v851
        %v2397 = vpop.f32.mrf.mxu0
        %v2398 = vadd.f32 %v2189, %v2397
        %2399 = vmatmul.f32.gmra.mxu0 %v855
        %v2400 = vpop.f32.mrf.mxu0
        %v2401 = vadd.f32 %v2192, %v2400
        %2402 = vmatmul.f32.gmra.mxu0 %v859
        %v2403 = vpop.f32.mrf.mxu0
        %v2404 = vadd.f32 %v2195, %v2403
        %2405 = vmatmul.f32.gmra.mxu0 %v863
        %v2406 = vpop.f32.mrf.mxu0
        %v2407 = vadd.f32 %v2198, %v2406
        %2408 = vmatmul.f32.gmra.mxu0 %v867
        %v2409 = vpop.f32.mrf.mxu0
        %v2410 = vadd.f32 %v2201, %v2409
        %2411 = vmatmul.f32.gmra.mxu0 %v871
        %v2412 = vpop.f32.mrf.mxu0
        %v2413 = vadd.f32 %v2204, %v2412
        %2414 = vmatmul.f32.gmra.mxu0 %v875
        %v2415 = vpop.f32.mrf.mxu0
        %v2416 = vadd.f32 %v2207, %v2415
        %2417 = vmatmul.f32.gmra.mxu0 %v879
        %v2418 = vpop.f32.mrf.mxu0
        %v2419 = vadd.f32 %v2210, %v2418
        %2420 = vmatmul.f32.gmra.mxu0 %v883
        %v2421 = vpop.f32.mrf.mxu0
        %v2422 = vadd.f32 %v2213, %v2421
        %2423 = vmatmul.f32.gmra.mxu0 %v887
        %v2424 = vpop.f32.mrf.mxu0
        %v2425 = vadd.f32 %v2216, %v2424
        %2426 = vmatmul.f32.gmra.mxu0 %v891
        %v2427 = vpop.f32.mrf.mxu0
        %v2428 = vadd.f32 %v2219, %v2427
        %2429 = vmatmul.f32.gmra.mxu0 %v895
        %v2430 = vpop.f32.mrf.mxu0
        %v2431 = vadd.f32 %v2222, %v2430
        %2432 = vmatmul.f32.gmra.mxu0 %v899
        %v2433 = vpop.f32.mrf.mxu0
        %v2434 = vadd.f32 %v2225, %v2433
        %2435 = vmatmul.f32.gmra.mxu0 %v903
        %v2436 = vpop.f32.mrf.mxu0
        %v2437 = vadd.f32 %v2228, %v2436
        %2438 = vmatmul.f32.gmra.mxu0 %v907
        %v2439 = vpop.f32.mrf.mxu0
        %v2440 = vadd.f32 %v2231, %v2439
        %2441 = vmatmul.f32.gmra.mxu0 %v911
        %v2442 = vpop.f32.mrf.mxu0
        %v2443 = vadd.f32 %v2234, %v2442
        %2444 = vmatmul.f32.gmra.mxu0 %v915
        %v2445 = vpop.f32.mrf.mxu0
        %v2446 = vadd.f32 %v2237, %v2445
        %2447 = vmatmul.f32.gmra.mxu0 %v919
        %v2448 = vpop.f32.mrf.mxu0
        %v2449 = vadd.f32 %v2240, %v2448
        %2450 = vmatmul.f32.gmra.mxu0 %v923
        %v2451 = vpop.f32.mrf.mxu0
        %v2452 = vadd.f32 %v2243, %v2451
        %2453 = vmatmul.f32.gmra.mxu0 %v927
        %v2454 = vpop.f32.mrf.mxu0
        %v2455 = vadd.f32 %v2246, %v2454
        %2456 = vmatmul.f32.gmra.mxu0 %v931
        %v2457 = vpop.f32.mrf.mxu0
        %v2458 = vadd.f32 %v2249, %v2457
        %2459 = vmatmul.f32.gmra.mxu0 %v935
        %v2460 = vpop.f32.mrf.mxu0
        %v2461 = vadd.f32 %v2252, %v2460
        %2462 = vmatmul.f32.gmra.mxu0 %v939
        %v2463 = vpop.f32.mrf.mxu0
        %v2464 = vadd.f32 %v2255, %v2463
        %2465 = vmatmul.f32.gmra.mxu0 %v943
        %v2466 = vpop.f32.mrf.mxu0
        %v2467 = vadd.f32 %v2258, %v2466
        %2468 = vmatmul.f32.gmra.mxu0 %v947
        %v2469 = vpop.f32.mrf.mxu0
        %v2470 = vadd.f32 %v2261, %v2469
        %2471 = vmatmul.f32.gmra.mxu0 %v951
        %v2472 = vpop.f32.mrf.mxu0
        %v2473 = vadd.f32 %v2264, %v2472
        %2474 = vmatmul.f32.gmra.mxu0 %v955
        %v2475 = vpop.f32.mrf.mxu0
        %v2476 = vadd.f32 %v2267, %v2475
        %2477 = vmatmul.f32.gmra.mxu0 %v959
        %v2478 = vpop.f32.mrf.mxu0
        %v2479 = vadd.f32 %v2270, %v2478
        %2480 = vmatmul.f32.gmra.mxu0 %v963
        %v2481 = vpop.f32.mrf.mxu0
        %v2482 = vadd.f32 %v2273, %v2481
        %2483 = vmatmul.f32.gmra.mxu0 %v967
        %v2484 = vpop.f32.mrf.mxu0
        %v2485 = vadd.f32 %v2276, %v2484
        %2486 = vmatmul.f32.gmra.mxu0 %v971
        %v2487 = vpop.f32.mrf.mxu0
        %v2488 = vadd.f32 %v2279, %v2487
        %2489 = vmatmul.f32.gmra.mxu0 %v975
        %v2490 = vpop.f32.mrf.mxu0
        %v2491 = vadd.f32 %v2282, %v2490
        %2492 = vmatmul.f32.gmra.mxu0 %v979
        %v2493 = vpop.f32.mrf.mxu0
        %v2494 = vadd.f32 %v2285, %v2493
        %2495 = vmatmul.f32.gmra.mxu0 %v983
        %v2496 = vpop.f32.mrf.mxu0
        %v2497 = vadd.f32 %v2288, %v2496
        %2498 = vmatmul.f32.gmra.mxu0 %v987
        %v2499 = vpop.f32.mrf.mxu0
        %v2500 = vadd.f32 %v2291, %v2499
        %2501 = vmatmul.f32.gmra.mxu0 %v991
        %v2502 = vpop.f32.mrf.mxu0
        %v2503 = vadd.f32 %v2294, %v2502
        %2504 = vmatmul.f32.gmra.mxu0 %v995
        %v2505 = vpop.f32.mrf.mxu0
        %v2506 = vadd.f32 %v2297, %v2505
        %2507 = vdwg.mxu0
        %2508 = vmatpush.msra.mxu0 %v1187
        %2509 = vmatpush.msra.mxu0 %v1183
        %2510 = vmatpush.msra.mxu0 %v1179
        %2511 = vmatpush.msra.mxu0 %v1175
        %2512 = vmatpush.msra.mxu0 %v1171
        %2513 = vmatpush.msra.mxu0 %v1167
        %2514 = vmatpush.msra.mxu0 %v1163
        %2515 = vmatpush.msra.mxu0 %v1159
        %2516 = vmatpush.msra.mxu0 %v1155
        %2517 = vmatpush.msra.mxu0 %v1151
        %2518 = vmatpush.msra.mxu0 %v1147
        %2519 = vmatpush.msra.mxu0 %v1143
        %2520 = vmatpush.msra.mxu0 %v1139
        %2521 = vmatpush.msra.mxu0 %v1135
        %2522 = vmatpush.msra.mxu0 %v1131
        %2523 = vmatpush.msra.mxu0 %v1127
        %2524 = vmatmul.f32.gmra.mxu0 %v744
        %v2525 = vpop.f32.mrf.mxu0
        %v2526 = vadd.f32 %v2317, %v2525
        %2527 = vmatmul.f32.gmra.mxu0 %v748
        %v2528 = vpop.f32.mrf.mxu0
        %v2529 = vadd.f32 %v2320, %v2528
        %2530 = vmatmul.f32.gmra.mxu0 %v752
        %v2531 = vpop.f32.mrf.mxu0
        %v2532 = vadd.f32 %v2323, %v2531
        %2533 = vmatmul.f32.gmra.mxu0 %v756
        %v2534 = vpop.f32.mrf.mxu0
        %v2535 = vadd.f32 %v2326, %v2534
        %2536 = vmatmul.f32.gmra.mxu0 %v760
        %v2537 = vpop.f32.mrf.mxu0
        %v2538 = vadd.f32 %v2329, %v2537
        %2539 = vmatmul.f32.gmra.mxu0 %v764
        %v2540 = vpop.f32.mrf.mxu0
        %v2541 = vadd.f32 %v2332, %v2540
        %2542 = vmatmul.f32.gmra.mxu0 %v768
        %v2543 = vpop.f32.mrf.mxu0
        %v2544 = vadd.f32 %v2335, %v2543
        %2545 = vmatmul.f32.gmra.mxu0 %v772
        %v2546 = vpop.f32.mrf.mxu0
        %v2547 = vadd.f32 %v2338, %v2546
        %2548 = vmatmul.f32.gmra.mxu0 %v776
        %v2549 = vpop.f32.mrf.mxu0
        %v2550 = vadd.f32 %v2341, %v2549
        %2551 = vmatmul.f32.gmra.mxu0 %v780
        %v2552 = vpop.f32.mrf.mxu0
        %v2553 = vadd.f32 %v2344, %v2552
        %2554 = vmatmul.f32.gmra.mxu0 %v784
        %v2555 = vpop.f32.mrf.mxu0
        %v2556 = vadd.f32 %v2347, %v2555
        %2557 = vmatmul.f32.gmra.mxu0 %v788
        %v2558 = vpop.f32.mrf.mxu0
        %v2559 = vadd.f32 %v2350, %v2558
        %2560 = vmatmul.f32.gmra.mxu0 %v792
        %v2561 = vpop.f32.mrf.mxu0
        %v2562 = vadd.f32 %v2353, %v2561
        %2563 = vmatmul.f32.gmra.mxu0 %v796
        %v2564 = vpop.f32.mrf.mxu0
        %v2565 = vadd.f32 %v2356, %v2564
        %2566 = vmatmul.f32.gmra.mxu0 %v800
        %v2567 = vpop.f32.mrf.mxu0
        %v2568 = vadd.f32 %v2359, %v2567
        %2569 = vmatmul.f32.gmra.mxu0 %v804
        %v2570 = vpop.f32.mrf.mxu0
        %v2571 = vadd.f32 %v2362, %v2570
        %2572 = vmatmul.f32.gmra.mxu0 %v808
        %v2573 = vpop.f32.mrf.mxu0
        %v2574 = vadd.f32 %v2365, %v2573
        %2575 = vmatmul.f32.gmra.mxu0 %v812
        %v2576 = vpop.f32.mrf.mxu0
        %v2577 = vadd.f32 %v2368, %v2576
        %2578 = vmatmul.f32.gmra.mxu0 %v816
        %v2579 = vpop.f32.mrf.mxu0
        %v2580 = vadd.f32 %v2371, %v2579
        %2581 = vmatmul.f32.gmra.mxu0 %v820
        %v2582 = vpop.f32.mrf.mxu0
        %v2583 = vadd.f32 %v2374, %v2582
        %2584 = vmatmul.f32.gmra.mxu0 %v824
        %v2585 = vpop.f32.mrf.mxu0
        %v2586 = vadd.f32 %v2377, %v2585
        %2587 = vmatmul.f32.gmra.mxu0 %v828
        %v2588 = vpop.f32.mrf.mxu0
        %v2589 = vadd.f32 %v2380, %v2588
        %2590 = vmatmul.f32.gmra.mxu0 %v832
        %v2591 = vpop.f32.mrf.mxu0
        %v2592 = vadd.f32 %v2383, %v2591
        %2593 = vmatmul.f32.gmra.mxu0 %v836
        %v2594 = vpop.f32.mrf.mxu0
        %v2595 = vadd.f32 %v2386, %v2594
        %2596 = vmatmul.f32.gmra.mxu0 %v840
        %v2597 = vpop.f32.mrf.mxu0
        %v2598 = vadd.f32 %v2389, %v2597
        %2599 = vmatmul.f32.gmra.mxu0 %v844
        %v2600 = vpop.f32.mrf.mxu0
        %v2601 = vadd.f32 %v2392, %v2600
        %2602 = vmatmul.f32.gmra.mxu0 %v848
        %v2603 = vpop.f32.mrf.mxu0
        %v2604 = vadd.f32 %v2395, %v2603
        %2605 = vmatmul.f32.gmra.mxu0 %v852
        %v2606 = vpop.f32.mrf.mxu0
        %v2607 = vadd.f32 %v2398, %v2606
        %2608 = vmatmul.f32.gmra.mxu0 %v856
        %v2609 = vpop.f32.mrf.mxu0
        %v2610 = vadd.f32 %v2401, %v2609
        %2611 = vmatmul.f32.gmra.mxu0 %v860
        %v2612 = vpop.f32.mrf.mxu0
        %v2613 = vadd.f32 %v2404, %v2612
        %2614 = vmatmul.f32.gmra.mxu0 %v864
        %v2615 = vpop.f32.mrf.mxu0
        %v2616 = vadd.f32 %v2407, %v2615
        %2617 = vmatmul.f32.gmra.mxu0 %v868
        %v2618 = vpop.f32.mrf.mxu0
        %v2619 = vadd.f32 %v2410, %v2618
        %2620 = vmatmul.f32.gmra.mxu0 %v872
        %v2621 = vpop.f32.mrf.mxu0
        %v2622 = vadd.f32 %v2413, %v2621
        %2623 = vmatmul.f32.gmra.mxu0 %v876
        %v2624 = vpop.f32.mrf.mxu0
        %v2625 = vadd.f32 %v2416, %v2624
        %2626 = vmatmul.f32.gmra.mxu0 %v880
        %v2627 = vpop.f32.mrf.mxu0
        %v2628 = vadd.f32 %v2419, %v2627
        %2629 = vmatmul.f32.gmra.mxu0 %v884
        %v2630 = vpop.f32.mrf.mxu0
        %v2631 = vadd.f32 %v2422, %v2630
        %2632 = vmatmul.f32.gmra.mxu0 %v888
        %v2633 = vpop.f32.mrf.mxu0
        %v2634 = vadd.f32 %v2425, %v2633
        %2635 = vmatmul.f32.gmra.mxu0 %v892
        %v2636 = vpop.f32.mrf.mxu0
        %v2637 = vadd.f32 %v2428, %v2636
        %2638 = vmatmul.f32.gmra.mxu0 %v896
        %v2639 = vpop.f32.mrf.mxu0
        %v2640 = vadd.f32 %v2431, %v2639
        %2641 = vmatmul.f32.gmra.mxu0 %v900
        %v2642 = vpop.f32.mrf.mxu0
        %v2643 = vadd.f32 %v2434, %v2642
        %2644 = vmatmul.f32.gmra.mxu0 %v904
        %v2645 = vpop.f32.mrf.mxu0
        %v2646 = vadd.f32 %v2437, %v2645
        %2647 = vmatmul.f32.gmra.mxu0 %v908
        %v2648 = vpop.f32.mrf.mxu0
        %v2649 = vadd.f32 %v2440, %v2648
        %2650 = vmatmul.f32.gmra.mxu0 %v912
        %v2651 = vpop.f32.mrf.mxu0
        %v2652 = vadd.f32 %v2443, %v2651
        %2653 = vmatmul.f32.gmra.mxu0 %v916
        %v2654 = vpop.f32.mrf.mxu0
        %v2655 = vadd.f32 %v2446, %v2654
        %2656 = vmatmul.f32.gmra.mxu0 %v920
        %v2657 = vpop.f32.mrf.mxu0
        %v2658 = vadd.f32 %v2449, %v2657
        %2659 = vmatmul.f32.gmra.mxu0 %v924
        %v2660 = vpop.f32.mrf.mxu0
        %v2661 = vadd.f32 %v2452, %v2660
        %2662 = vmatmul.f32.gmra.mxu0 %v928
        %v2663 = vpop.f32.mrf.mxu0
        %v2664 = vadd.f32 %v2455, %v2663
        %2665 = vmatmul.f32.gmra.mxu0 %v932
        %v2666 = vpop.f32.mrf.mxu0
        %v2667 = vadd.f32 %v2458, %v2666
        %2668 = vmatmul.f32.gmra.mxu0 %v936
        %v2669 = vpop.f32.mrf.mxu0
        %v2670 = vadd.f32 %v2461, %v2669
        %2671 = vmatmul.f32.gmra.mxu0 %v940
        %v2672 = vpop.f32.mrf.mxu0
        %v2673 = vadd.f32 %v2464, %v2672
        %2674 = vmatmul.f32.gmra.mxu0 %v944
        %v2675 = vpop.f32.mrf.mxu0
        %v2676 = vadd.f32 %v2467, %v2675
        %2677 = vmatmul.f32.gmra.mxu0 %v948
        %v2678 = vpop.f32.mrf.mxu0
        %v2679 = vadd.f32 %v2470, %v2678
        %2680 = vmatmul.f32.gmra.mxu0 %v952
        %v2681 = vpop.f32.mrf.mxu0
        %v2682 = vadd.f32 %v2473, %v2681
        %2683 = vmatmul.f32.gmra.mxu0 %v956
        %v2684 = vpop.f32.mrf.mxu0
        %v2685 = vadd.f32 %v2476, %v2684
        %2686 = vmatmul.f32.gmra.mxu0 %v960
        %v2687 = vpop.f32.mrf.mxu0
        %v2688 = vadd.f32 %v2479, %v2687
        %2689 = vmatmul.f32.gmra.mxu0 %v964
        %v2690 = vpop.f32.mrf.mxu0
        %v2691 = vadd.f32 %v2482, %v2690
        %2692 = vmatmul.f32.gmra.mxu0 %v968
        %v2693 = vpop.f32.mrf.mxu0
        %v2694 = vadd.f32 %v2485, %v2693
        %2695 = vmatmul.f32.gmra.mxu0 %v972
        %v2696 = vpop.f32.mrf.mxu0
        %v2697 = vadd.f32 %v2488, %v2696
        %2698 = vmatmul.f32.gmra.mxu0 %v976
        %v2699 = vpop.f32.mrf.mxu0
        %v2700 = vadd.f32 %v2491, %v2699
        %2701 = vmatmul.f32.gmra.mxu0 %v980
        %v2702 = vpop.f32.mrf.mxu0
        %v2703 = vadd.f32 %v2494, %v2702
        %2704 = vmatmul.f32.gmra.mxu0 %v984
        %v2705 = vpop.f32.mrf.mxu0
        %v2706 = vadd.f32 %v2497, %v2705
        %2707 = vmatmul.f32.gmra.mxu0 %v988
        %v2708 = vpop.f32.mrf.mxu0
        %v2709 = vadd.f32 %v2500, %v2708
        %2710 = vmatmul.f32.gmra.mxu0 %v992
        %v2711 = vpop.f32.mrf.mxu0
        %v2712 = vadd.f32 %v2503, %v2711
        %2713 = vmatmul.f32.gmra.mxu0 %v996
        %v2714 = vpop.f32.mrf.mxu0
        %v2715 = vadd.f32 %v2506, %v2714
        %2716 = vdwg.mxu0
        %2717 = vmatpush.msra.mxu0 %v1251
        %2718 = vmatpush.msra.mxu0 %v1247
        %2719 = vmatpush.msra.mxu0 %v1243
        %2720 = vmatpush.msra.mxu0 %v1239
        %2721 = vmatpush.msra.mxu0 %v1235
        %2722 = vmatpush.msra.mxu0 %v1231
        %2723 = vmatpush.msra.mxu0 %v1227
        %2724 = vmatpush.msra.mxu0 %v1223
        %2725 = vmatpush.msra.mxu0 %v1219
        %2726 = vmatpush.msra.mxu0 %v1215
        %2727 = vmatpush.msra.mxu0 %v1211
        %2728 = vmatpush.msra.mxu0 %v1207
        %2729 = vmatpush.msra.mxu0 %v1203
        %2730 = vmatpush.msra.mxu0 %v1199
        %2731 = vmatpush.msra.mxu0 %v1195
        %2732 = vmatpush.msra.mxu0 %v1191
        %2733 = vmatmul.f32.gmra.mxu0 %v745
        %v2734 = vpop.f32.mrf.mxu0
        %v2735 = vadd.f32 %v2526, %v2734
        %2736 = vmatmul.f32.gmra.mxu0 %v749
        %v2737 = vpop.f32.mrf.mxu0
        %v2738 = vadd.f32 %v2529, %v2737
        %2739 = vmatmul.f32.gmra.mxu0 %v753
        %v2740 = vpop.f32.mrf.mxu0
        %v2741 = vadd.f32 %v2532, %v2740
        %2742 = vmatmul.f32.gmra.mxu0 %v757
        %v2743 = vpop.f32.mrf.mxu0
        %v2744 = vadd.f32 %v2535, %v2743
        %2745 = vmatmul.f32.gmra.mxu0 %v761
        %v2746 = vpop.f32.mrf.mxu0
        %v2747 = vadd.f32 %v2538, %v2746
        %2748 = vmatmul.f32.gmra.mxu0 %v765
        %v2749 = vpop.f32.mrf.mxu0
        %v2750 = vadd.f32 %v2541, %v2749
        %2751 = vmatmul.f32.gmra.mxu0 %v769
        %v2752 = vpop.f32.mrf.mxu0
        %v2753 = vadd.f32 %v2544, %v2752
        %2754 = vmatmul.f32.gmra.mxu0 %v773
        %v2755 = vpop.f32.mrf.mxu0
        %v2756 = vadd.f32 %v2547, %v2755
        %2757 = vmatmul.f32.gmra.mxu0 %v777
        %v2758 = vpop.f32.mrf.mxu0
        %v2759 = vadd.f32 %v2550, %v2758
        %2760 = vmatmul.f32.gmra.mxu0 %v781
        %v2761 = vpop.f32.mrf.mxu0
        %v2762 = vadd.f32 %v2553, %v2761
        %2763 = vmatmul.f32.gmra.mxu0 %v785
        %v2764 = vpop.f32.mrf.mxu0
        %v2765 = vadd.f32 %v2556, %v2764
        %2766 = vmatmul.f32.gmra.mxu0 %v789
        %v2767 = vpop.f32.mrf.mxu0
        %v2768 = vadd.f32 %v2559, %v2767
        %2769 = vmatmul.f32.gmra.mxu0 %v793
        %v2770 = vpop.f32.mrf.mxu0
        %v2771 = vadd.f32 %v2562, %v2770
        %2772 = vmatmul.f32.gmra.mxu0 %v797
        %v2773 = vpop.f32.mrf.mxu0
        %v2774 = vadd.f32 %v2565, %v2773
        %2775 = vmatmul.f32.gmra.mxu0 %v801
        %v2776 = vpop.f32.mrf.mxu0
        %v2777 = vadd.f32 %v2568, %v2776
        %2778 = vmatmul.f32.gmra.mxu0 %v805
        %v2779 = vpop.f32.mrf.mxu0
        %v2780 = vadd.f32 %v2571, %v2779
        %2781 = vmatmul.f32.gmra.mxu0 %v809
        %v2782 = vpop.f32.mrf.mxu0
        %v2783 = vadd.f32 %v2574, %v2782
        %2784 = vmatmul.f32.gmra.mxu0 %v813
        %v2785 = vpop.f32.mrf.mxu0
        %v2786 = vadd.f32 %v2577, %v2785
        %2787 = vmatmul.f32.gmra.mxu0 %v817
        %v2788 = vpop.f32.mrf.mxu0
        %v2789 = vadd.f32 %v2580, %v2788
        %2790 = vmatmul.f32.gmra.mxu0 %v821
        %v2791 = vpop.f32.mrf.mxu0
        %v2792 = vadd.f32 %v2583, %v2791
        %2793 = vmatmul.f32.gmra.mxu0 %v825
        %v2794 = vpop.f32.mrf.mxu0
        %v2795 = vadd.f32 %v2586, %v2794
        %2796 = vmatmul.f32.gmra.mxu0 %v829
        %v2797 = vpop.f32.mrf.mxu0
        %v2798 = vadd.f32 %v2589, %v2797
        %2799 = vmatmul.f32.gmra.mxu0 %v833
        %v2800 = vpop.f32.mrf.mxu0
        %v2801 = vadd.f32 %v2592, %v2800
        %2802 = vmatmul.f32.gmra.mxu0 %v837
        %v2803 = vpop.f32.mrf.mxu0
        %v2804 = vadd.f32 %v2595, %v2803
        %2805 = vmatmul.f32.gmra.mxu0 %v841
        %v2806 = vpop.f32.mrf.mxu0
        %v2807 = vadd.f32 %v2598, %v2806
        %2808 = vmatmul.f32.gmra.mxu0 %v845
        %v2809 = vpop.f32.mrf.mxu0
        %v2810 = vadd.f32 %v2601, %v2809
        %2811 = vmatmul.f32.gmra.mxu0 %v849
        %v2812 = vpop.f32.mrf.mxu0
        %v2813 = vadd.f32 %v2604, %v2812
        %2814 = vmatmul.f32.gmra.mxu0 %v853
        %v2815 = vpop.f32.mrf.mxu0
        %v2816 = vadd.f32 %v2607, %v2815
        %2817 = vmatmul.f32.gmra.mxu0 %v857
        %v2818 = vpop.f32.mrf.mxu0
        %v2819 = vadd.f32 %v2610, %v2818
        %2820 = vmatmul.f32.gmra.mxu0 %v861
        %v2821 = vpop.f32.mrf.mxu0
        %v2822 = vadd.f32 %v2613, %v2821
        %2823 = vmatmul.f32.gmra.mxu0 %v865
        %v2824 = vpop.f32.mrf.mxu0
        %v2825 = vadd.f32 %v2616, %v2824
        %2826 = vmatmul.f32.gmra.mxu0 %v869
        %v2827 = vpop.f32.mrf.mxu0
        %v2828 = vadd.f32 %v2619, %v2827
        %2829 = vmatmul.f32.gmra.mxu0 %v873
        %v2830 = vpop.f32.mrf.mxu0
        %v2831 = vadd.f32 %v2622, %v2830
        %2832 = vmatmul.f32.gmra.mxu0 %v877
        %v2833 = vpop.f32.mrf.mxu0
        %v2834 = vadd.f32 %v2625, %v2833
        %2835 = vmatmul.f32.gmra.mxu0 %v881
        %v2836 = vpop.f32.mrf.mxu0
        %v2837 = vadd.f32 %v2628, %v2836
        %2838 = vmatmul.f32.gmra.mxu0 %v885
        %v2839 = vpop.f32.mrf.mxu0
        %v2840 = vadd.f32 %v2631, %v2839
        %2841 = vmatmul.f32.gmra.mxu0 %v889
        %v2842 = vpop.f32.mrf.mxu0
        %v2843 = vadd.f32 %v2634, %v2842
        %2844 = vmatmul.f32.gmra.mxu0 %v893
        %v2845 = vpop.f32.mrf.mxu0
        %v2846 = vadd.f32 %v2637, %v2845
        %2847 = vmatmul.f32.gmra.mxu0 %v897
        %v2848 = vpop.f32.mrf.mxu0
        %v2849 = vadd.f32 %v2640, %v2848
        %2850 = vmatmul.f32.gmra.mxu0 %v901
        %v2851 = vpop.f32.mrf.mxu0
        %v2852 = vadd.f32 %v2643, %v2851
        %2853 = vmatmul.f32.gmra.mxu0 %v905
        %v2854 = vpop.f32.mrf.mxu0
        %v2855 = vadd.f32 %v2646, %v2854
        %2856 = vmatmul.f32.gmra.mxu0 %v909
        %v2857 = vpop.f32.mrf.mxu0
        %v2858 = vadd.f32 %v2649, %v2857
        %2859 = vmatmul.f32.gmra.mxu0 %v913
        %v2860 = vpop.f32.mrf.mxu0
        %v2861 = vadd.f32 %v2652, %v2860
        %2862 = vmatmul.f32.gmra.mxu0 %v917
        %v2863 = vpop.f32.mrf.mxu0
        %v2864 = vadd.f32 %v2655, %v2863
        %2865 = vmatmul.f32.gmra.mxu0 %v921
        %v2866 = vpop.f32.mrf.mxu0
        %v2867 = vadd.f32 %v2658, %v2866
        %2868 = vmatmul.f32.gmra.mxu0 %v925
        %v2869 = vpop.f32.mrf.mxu0
        %v2870 = vadd.f32 %v2661, %v2869
        %2871 = vmatmul.f32.gmra.mxu0 %v929
        %v2872 = vpop.f32.mrf.mxu0
        %v2873 = vadd.f32 %v2664, %v2872
        %2874 = vmatmul.f32.gmra.mxu0 %v933
        %v2875 = vpop.f32.mrf.mxu0
        %v2876 = vadd.f32 %v2667, %v2875
        %2877 = vmatmul.f32.gmra.mxu0 %v937
        %v2878 = vpop.f32.mrf.mxu0
        %v2879 = vadd.f32 %v2670, %v2878
        %2880 = vmatmul.f32.gmra.mxu0 %v941
        %v2881 = vpop.f32.mrf.mxu0
        %v2882 = vadd.f32 %v2673, %v2881
        %2883 = vmatmul.f32.gmra.mxu0 %v945
        %v2884 = vpop.f32.mrf.mxu0
        %v2885 = vadd.f32 %v2676, %v2884
        %2886 = vmatmul.f32.gmra.mxu0 %v949
        %v2887 = vpop.f32.mrf.mxu0
        %v2888 = vadd.f32 %v2679, %v2887
        %2889 = vmatmul.f32.gmra.mxu0 %v953
        %v2890 = vpop.f32.mrf.mxu0
        %v2891 = vadd.f32 %v2682, %v2890
        %2892 = vmatmul.f32.gmra.mxu0 %v957
        %v2893 = vpop.f32.mrf.mxu0
        %v2894 = vadd.f32 %v2685, %v2893
        %2895 = vmatmul.f32.gmra.mxu0 %v961
        %v2896 = vpop.f32.mrf.mxu0
        %v2897 = vadd.f32 %v2688, %v2896
        %2898 = vmatmul.f32.gmra.mxu0 %v965
        %v2899 = vpop.f32.mrf.mxu0
        %v2900 = vadd.f32 %v2691, %v2899
        %2901 = vmatmul.f32.gmra.mxu0 %v969
        %v2902 = vpop.f32.mrf.mxu0
        %v2903 = vadd.f32 %v2694, %v2902
        %2904 = vmatmul.f32.gmra.mxu0 %v973
        %v2905 = vpop.f32.mrf.mxu0
        %v2906 = vadd.f32 %v2697, %v2905
        %2907 = vmatmul.f32.gmra.mxu0 %v977
        %v2908 = vpop.f32.mrf.mxu0
        %v2909 = vadd.f32 %v2700, %v2908
        %2910 = vmatmul.f32.gmra.mxu0 %v981
        %v2911 = vpop.f32.mrf.mxu0
        %v2912 = vadd.f32 %v2703, %v2911
        %2913 = vmatmul.f32.gmra.mxu0 %v985
        %v2914 = vpop.f32.mrf.mxu0
        %v2915 = vadd.f32 %v2706, %v2914
        %2916 = vmatmul.f32.gmra.mxu0 %v989
        %v2917 = vpop.f32.mrf.mxu0
        %v2918 = vadd.f32 %v2709, %v2917
        %2919 = vmatmul.f32.gmra.mxu0 %v993
        %v2920 = vpop.f32.mrf.mxu0
        %v2921 = vadd.f32 %v2712, %v2920
        %2922 = vmatmul.f32.gmra.mxu0 %v997
        %v2923 = vpop.f32.mrf.mxu0
        %v2924 = vadd.f32 %v2715, %v2923
        %2925 = vdwg.mxu0
        %2926 = vmatpush.msra.mxu0 %v1060
        %2927 = vmatpush.msra.mxu0 %v1056
        %2928 = vmatpush.msra.mxu0 %v1052
        %2929 = vmatpush.msra.mxu0 %v1048
        %2930 = vmatpush.msra.mxu0 %v1044
        %2931 = vmatpush.msra.mxu0 %v1040
        %2932 = vmatpush.msra.mxu0 %v1036
        %2933 = vmatpush.msra.mxu0 %v1032
        %2934 = vmatpush.msra.mxu0 %v1028
        %2935 = vmatpush.msra.mxu0 %v1024
        %2936 = vmatpush.msra.mxu0 %v1020
        %2937 = vmatpush.msra.mxu0 %v1016
        %2938 = vmatpush.msra.mxu0 %v1012
        %2939 = vmatpush.msra.mxu0 %v1008
        %2940 = vmatpush.msra.mxu0 %v1004
        %2941 = vmatpush.msra.mxu0 %v1000
        %2942 = vmatmul.f32.gmra.mxu0 %v742
        %v2943 = vpop.f32.mrf.mxu0
        %v2944 = vadd.f32 0.0, %v2943
        %2945 = vmatmul.f32.gmra.mxu0 %v746
        %v2946 = vpop.f32.mrf.mxu0
        %v2947 = vadd.f32 0.0, %v2946
        %2948 = vmatmul.f32.gmra.mxu0 %v750
        %v2949 = vpop.f32.mrf.mxu0
        %v2950 = vadd.f32 0.0, %v2949
        %2951 = vmatmul.f32.gmra.mxu0 %v754
        %v2952 = vpop.f32.mrf.mxu0
        %v2953 = vadd.f32 0.0, %v2952
        %2954 = vmatmul.f32.gmra.mxu0 %v758
        %v2955 = vpop.f32.mrf.mxu0
        %v2956 = vadd.f32 0.0, %v2955
        %2957 = vmatmul.f32.gmra.mxu0 %v762
        %v2958 = vpop.f32.mrf.mxu0
        %v2959 = vadd.f32 0.0, %v2958
        %2960 = vmatmul.f32.gmra.mxu0 %v766
        %v2961 = vpop.f32.mrf.mxu0
        %v2962 = vadd.f32 0.0, %v2961
        %2963 = vmatmul.f32.gmra.mxu0 %v770
        %v2964 = vpop.f32.mrf.mxu0
        %v2965 = vadd.f32 0.0, %v2964
        %2966 = vmatmul.f32.gmra.mxu0 %v774
        %v2967 = vpop.f32.mrf.mxu0
        %v2968 = vadd.f32 0.0, %v2967
        %2969 = vmatmul.f32.gmra.mxu0 %v778
        %v2970 = vpop.f32.mrf.mxu0
        %v2971 = vadd.f32 0.0, %v2970
        %2972 = vmatmul.f32.gmra.mxu0 %v782
        %v2973 = vpop.f32.mrf.mxu0
        %v2974 = vadd.f32 0.0, %v2973
        %2975 = vmatmul.f32.gmra.mxu0 %v786
        %v2976 = vpop.f32.mrf.mxu0
        %v2977 = vadd.f32 0.0, %v2976
        %2978 = vmatmul.f32.gmra.mxu0 %v790
        %v2979 = vpop.f32.mrf.mxu0
        %v2980 = vadd.f32 0.0, %v2979
        %2981 = vmatmul.f32.gmra.mxu0 %v794
        %v2982 = vpop.f32.mrf.mxu0
        %v2983 = vadd.f32 0.0, %v2982
        %2984 = vmatmul.f32.gmra.mxu0 %v798
        %v2985 = vpop.f32.mrf.mxu0
        %v2986 = vadd.f32 0.0, %v2985
        %2987 = vmatmul.f32.gmra.mxu0 %v802
        %v2988 = vpop.f32.mrf.mxu0
        %v2989 = vadd.f32 0.0, %v2988
        %2990 = vmatmul.f32.gmra.mxu0 %v806
        %v2991 = vpop.f32.mrf.mxu0
        %v2992 = vadd.f32 0.0, %v2991
        %2993 = vmatmul.f32.gmra.mxu0 %v810
        %v2994 = vpop.f32.mrf.mxu0
        %v2995 = vadd.f32 0.0, %v2994
        %2996 = vmatmul.f32.gmra.mxu0 %v814
        %v2997 = vpop.f32.mrf.mxu0
        %v2998 = vadd.f32 0.0, %v2997
        %2999 = vmatmul.f32.gmra.mxu0 %v818
        %v3000 = vpop.f32.mrf.mxu0
        %v3001 = vadd.f32 0.0, %v3000
        %3002 = vmatmul.f32.gmra.mxu0 %v822
        %v3003 = vpop.f32.mrf.mxu0
        %v3004 = vadd.f32 0.0, %v3003
        %3005 = vmatmul.f32.gmra.mxu0 %v826
        %v3006 = vpop.f32.mrf.mxu0
        %v3007 = vadd.f32 0.0, %v3006
        %3008 = vmatmul.f32.gmra.mxu0 %v830
        %v3009 = vpop.f32.mrf.mxu0
        %v3010 = vadd.f32 0.0, %v3009
        %3011 = vmatmul.f32.gmra.mxu0 %v834
        %v3012 = vpop.f32.mrf.mxu0
        %v3013 = vadd.f32 0.0, %v3012
        %3014 = vmatmul.f32.gmra.mxu0 %v838
        %v3015 = vpop.f32.mrf.mxu0
        %v3016 = vadd.f32 0.0, %v3015
        %3017 = vmatmul.f32.gmra.mxu0 %v842
        %v3018 = vpop.f32.mrf.mxu0
        %v3019 = vadd.f32 0.0, %v3018
        %3020 = vmatmul.f32.gmra.mxu0 %v846
        %v3021 = vpop.f32.mrf.mxu0
        %v3022 = vadd.f32 0.0, %v3021
        %3023 = vmatmul.f32.gmra.mxu0 %v850
        %v3024 = vpop.f32.mrf.mxu0
        %v3025 = vadd.f32 0.0, %v3024
        %3026 = vmatmul.f32.gmra.mxu0 %v854
        %v3027 = vpop.f32.mrf.mxu0
        %v3028 = vadd.f32 0.0, %v3027
        %3029 = vmatmul.f32.gmra.mxu0 %v858
        %v3030 = vpop.f32.mrf.mxu0
        %v3031 = vadd.f32 0.0, %v3030
        %3032 = vmatmul.f32.gmra.mxu0 %v862
        %v3033 = vpop.f32.mrf.mxu0
        %v3034 = vadd.f32 0.0, %v3033
        %3035 = vmatmul.f32.gmra.mxu0 %v866
        %v3036 = vpop.f32.mrf.mxu0
        %v3037 = vadd.f32 0.0, %v3036
        %3038 = vmatmul.f32.gmra.mxu0 %v870
        %v3039 = vpop.f32.mrf.mxu0
        %v3040 = vadd.f32 0.0, %v3039
        %3041 = vmatmul.f32.gmra.mxu0 %v874
        %v3042 = vpop.f32.mrf.mxu0
        %v3043 = vadd.f32 0.0, %v3042
        %3044 = vmatmul.f32.gmra.mxu0 %v878
        %v3045 = vpop.f32.mrf.mxu0
        %v3046 = vadd.f32 0.0, %v3045
        %3047 = vmatmul.f32.gmra.mxu0 %v882
        %v3048 = vpop.f32.mrf.mxu0
        %v3049 = vadd.f32 0.0, %v3048
        %3050 = vmatmul.f32.gmra.mxu0 %v886
        %v3051 = vpop.f32.mrf.mxu0
        %v3052 = vadd.f32 0.0, %v3051
        %3053 = vmatmul.f32.gmra.mxu0 %v890
        %v3054 = vpop.f32.mrf.mxu0
        %v3055 = vadd.f32 0.0, %v3054
        %3056 = vmatmul.f32.gmra.mxu0 %v894
        %v3057 = vpop.f32.mrf.mxu0
        %v3058 = vadd.f32 0.0, %v3057
        %3059 = vmatmul.f32.gmra.mxu0 %v898
        %v3060 = vpop.f32.mrf.mxu0
        %v3061 = vadd.f32 0.0, %v3060
        %3062 = vmatmul.f32.gmra.mxu0 %v902
        %v3063 = vpop.f32.mrf.mxu0
        %v3064 = vadd.f32 0.0, %v3063
        %3065 = vmatmul.f32.gmra.mxu0 %v906
        %v3066 = vpop.f32.mrf.mxu0
        %v3067 = vadd.f32 0.0, %v3066
        %3068 = vmatmul.f32.gmra.mxu0 %v910
        %v3069 = vpop.f32.mrf.mxu0
        %v3070 = vadd.f32 0.0, %v3069
        %3071 = vmatmul.f32.gmra.mxu0 %v914
        %v3072 = vpop.f32.mrf.mxu0
        %v3073 = vadd.f32 0.0, %v3072
        %3074 = vmatmul.f32.gmra.mxu0 %v918
        %v3075 = vpop.f32.mrf.mxu0
        %v3076 = vadd.f32 0.0, %v3075
        %3077 = vmatmul.f32.gmra.mxu0 %v922
        %v3078 = vpop.f32.mrf.mxu0
        %v3079 = vadd.f32 0.0, %v3078
        %3080 = vmatmul.f32.gmra.mxu0 %v926
        %v3081 = vpop.f32.mrf.mxu0
        %v3082 = vadd.f32 0.0, %v3081
        %3083 = vmatmul.f32.gmra.mxu0 %v930
        %v3084 = vpop.f32.mrf.mxu0
        %v3085 = vadd.f32 0.0, %v3084
        %3086 = vmatmul.f32.gmra.mxu0 %v934
        %v3087 = vpop.f32.mrf.mxu0
        %v3088 = vadd.f32 0.0, %v3087
        %3089 = vmatmul.f32.gmra.mxu0 %v938
        %v3090 = vpop.f32.mrf.mxu0
        %v3091 = vadd.f32 0.0, %v3090
        %3092 = vmatmul.f32.gmra.mxu0 %v942
        %v3093 = vpop.f32.mrf.mxu0
        %v3094 = vadd.f32 0.0, %v3093
        %3095 = vmatmul.f32.gmra.mxu0 %v946
        %v3096 = vpop.f32.mrf.mxu0
        %v3097 = vadd.f32 0.0, %v3096
        %3098 = vmatmul.f32.gmra.mxu0 %v950
        %v3099 = vpop.f32.mrf.mxu0
        %v3100 = vadd.f32 0.0, %v3099
        %3101 = vmatmul.f32.gmra.mxu0 %v954
        %v3102 = vpop.f32.mrf.mxu0
        %v3103 = vadd.f32 0.0, %v3102
        %3104 = vmatmul.f32.gmra.mxu0 %v958
        %v3105 = vpop.f32.mrf.mxu0
        %v3106 = vadd.f32 0.0, %v3105
        %3107 = vmatmul.f32.gmra.mxu0 %v962
        %v3108 = vpop.f32.mrf.mxu0
        %v3109 = vadd.f32 0.0, %v3108
        %3110 = vmatmul.f32.gmra.mxu0 %v966
        %v3111 = vpop.f32.mrf.mxu0
        %v3112 = vadd.f32 0.0, %v3111
        %3113 = vmatmul.f32.gmra.mxu0 %v970
        %v3114 = vpop.f32.mrf.mxu0
        %v3115 = vadd.f32 0.0, %v3114
        %3116 = vmatmul.f32.gmra.mxu0 %v974
        %v3117 = vpop.f32.mrf.mxu0
        %v3118 = vadd.f32 0.0, %v3117
        %3119 = vmatmul.f32.gmra.mxu0 %v978
        %v3120 = vpop.f32.mrf.mxu0
        %v3121 = vadd.f32 0.0, %v3120
        %3122 = vmatmul.f32.gmra.mxu0 %v982
        %v3123 = vpop.f32.mrf.mxu0
        %v3124 = vadd.f32 0.0, %v3123
        %3125 = vmatmul.f32.gmra.mxu0 %v986
        %v3126 = vpop.f32.mrf.mxu0
        %v3127 = vadd.f32 0.0, %v3126
        %3128 = vmatmul.f32.gmra.mxu0 %v990
        %v3129 = vpop.f32.mrf.mxu0
        %v3130 = vadd.f32 0.0, %v3129
        %3131 = vmatmul.f32.gmra.mxu0 %v994
        %v3132 = vpop.f32.mrf.mxu0
        %v3133 = vadd.f32 0.0, %v3132
        %3134 = vdwg.mxu0
        %3135 = vmatpush.msra.mxu0 %v1124
        %3136 = vmatpush.msra.mxu0 %v1120
        %3137 = vmatpush.msra.mxu0 %v1116
        %3138 = vmatpush.msra.mxu0 %v1112
        %3139 = vmatpush.msra.mxu0 %v1108
        %3140 = vmatpush.msra.mxu0 %v1104
        %3141 = vmatpush.msra.mxu0 %v1100
        %3142 = vmatpush.msra.mxu0 %v1096
        %3143 = vmatpush.msra.mxu0 %v1092
        %3144 = vmatpush.msra.mxu0 %v1088
        %3145 = vmatpush.msra.mxu0 %v1084
        %3146 = vmatpush.msra.mxu0 %v1080
        %3147 = vmatpush.msra.mxu0 %v1076
        %3148 = vmatpush.msra.mxu0 %v1072
        %3149 = vmatpush.msra.mxu0 %v1068
        %3150 = vmatpush.msra.mxu0 %v1064
        %3151 = vmatmul.f32.gmra.mxu0 %v743
        %v3152 = vpop.f32.mrf.mxu0
        %v3153 = vadd.f32 %v2944, %v3152
        %3154 = vmatmul.f32.gmra.mxu0 %v747
        %v3155 = vpop.f32.mrf.mxu0
        %v3156 = vadd.f32 %v2947, %v3155
        %3157 = vmatmul.f32.gmra.mxu0 %v751
        %v3158 = vpop.f32.mrf.mxu0
        %v3159 = vadd.f32 %v2950, %v3158
        %3160 = vmatmul.f32.gmra.mxu0 %v755
        %v3161 = vpop.f32.mrf.mxu0
        %v3162 = vadd.f32 %v2953, %v3161
        %3163 = vmatmul.f32.gmra.mxu0 %v759
        %v3164 = vpop.f32.mrf.mxu0
        %v3165 = vadd.f32 %v2956, %v3164
        %3166 = vmatmul.f32.gmra.mxu0 %v763
        %v3167 = vpop.f32.mrf.mxu0
        %v3168 = vadd.f32 %v2959, %v3167
        %3169 = vmatmul.f32.gmra.mxu0 %v767
        %v3170 = vpop.f32.mrf.mxu0
        %v3171 = vadd.f32 %v2962, %v3170
        %3172 = vmatmul.f32.gmra.mxu0 %v771
        %v3173 = vpop.f32.mrf.mxu0
        %v3174 = vadd.f32 %v2965, %v3173
        %3175 = vmatmul.f32.gmra.mxu0 %v775
        %v3176 = vpop.f32.mrf.mxu0
        %v3177 = vadd.f32 %v2968, %v3176
        %3178 = vmatmul.f32.gmra.mxu0 %v779
        %v3179 = vpop.f32.mrf.mxu0
        %v3180 = vadd.f32 %v2971, %v3179
        %3181 = vmatmul.f32.gmra.mxu0 %v783
        %v3182 = vpop.f32.mrf.mxu0
        %v3183 = vadd.f32 %v2974, %v3182
        %3184 = vmatmul.f32.gmra.mxu0 %v787
        %v3185 = vpop.f32.mrf.mxu0
        %v3186 = vadd.f32 %v2977, %v3185
        %3187 = vmatmul.f32.gmra.mxu0 %v791
        %v3188 = vpop.f32.mrf.mxu0
        %v3189 = vadd.f32 %v2980, %v3188
        %3190 = vmatmul.f32.gmra.mxu0 %v795
        %v3191 = vpop.f32.mrf.mxu0
        %v3192 = vadd.f32 %v2983, %v3191
        %3193 = vmatmul.f32.gmra.mxu0 %v799
        %v3194 = vpop.f32.mrf.mxu0
        %v3195 = vadd.f32 %v2986, %v3194
        %3196 = vmatmul.f32.gmra.mxu0 %v803
        %v3197 = vpop.f32.mrf.mxu0
        %v3198 = vadd.f32 %v2989, %v3197
        %3199 = vmatmul.f32.gmra.mxu0 %v807
        %v3200 = vpop.f32.mrf.mxu0
        %v3201 = vadd.f32 %v2992, %v3200
        %3202 = vmatmul.f32.gmra.mxu0 %v811
        %v3203 = vpop.f32.mrf.mxu0
        %v3204 = vadd.f32 %v2995, %v3203
        %3205 = vmatmul.f32.gmra.mxu0 %v815
        %v3206 = vpop.f32.mrf.mxu0
        %v3207 = vadd.f32 %v2998, %v3206
        %3208 = vmatmul.f32.gmra.mxu0 %v819
        %v3209 = vpop.f32.mrf.mxu0
        %v3210 = vadd.f32 %v3001, %v3209
        %3211 = vmatmul.f32.gmra.mxu0 %v823
        %v3212 = vpop.f32.mrf.mxu0
        %v3213 = vadd.f32 %v3004, %v3212
        %3214 = vmatmul.f32.gmra.mxu0 %v827
        %v3215 = vpop.f32.mrf.mxu0
        %v3216 = vadd.f32 %v3007, %v3215
        %3217 = vmatmul.f32.gmra.mxu0 %v831
        %v3218 = vpop.f32.mrf.mxu0
        %v3219 = vadd.f32 %v3010, %v3218
        %3220 = vmatmul.f32.gmra.mxu0 %v835
        %v3221 = vpop.f32.mrf.mxu0
        %v3222 = vadd.f32 %v3013, %v3221
        %3223 = vmatmul.f32.gmra.mxu0 %v839
        %v3224 = vpop.f32.mrf.mxu0
        %v3225 = vadd.f32 %v3016, %v3224
        %3226 = vmatmul.f32.gmra.mxu0 %v843
        %v3227 = vpop.f32.mrf.mxu0
        %v3228 = vadd.f32 %v3019, %v3227
        %3229 = vmatmul.f32.gmra.mxu0 %v847
        %v3230 = vpop.f32.mrf.mxu0
        %v3231 = vadd.f32 %v3022, %v3230
        %3232 = vmatmul.f32.gmra.mxu0 %v851
        %v3233 = vpop.f32.mrf.mxu0
        %v3234 = vadd.f32 %v3025, %v3233
        %3235 = vmatmul.f32.gmra.mxu0 %v855
        %v3236 = vpop.f32.mrf.mxu0
        %v3237 = vadd.f32 %v3028, %v3236
        %3238 = vmatmul.f32.gmra.mxu0 %v859
        %v3239 = vpop.f32.mrf.mxu0
        %v3240 = vadd.f32 %v3031, %v3239
        %3241 = vmatmul.f32.gmra.mxu0 %v863
        %v3242 = vpop.f32.mrf.mxu0
        %v3243 = vadd.f32 %v3034, %v3242
        %3244 = vmatmul.f32.gmra.mxu0 %v867
        %v3245 = vpop.f32.mrf.mxu0
        %v3246 = vadd.f32 %v3037, %v3245
        %3247 = vmatmul.f32.gmra.mxu0 %v871
        %v3248 = vpop.f32.mrf.mxu0
        %v3249 = vadd.f32 %v3040, %v3248
        %3250 = vmatmul.f32.gmra.mxu0 %v875
        %v3251 = vpop.f32.mrf.mxu0
        %v3252 = vadd.f32 %v3043, %v3251
        %3253 = vmatmul.f32.gmra.mxu0 %v879
        %v3254 = vpop.f32.mrf.mxu0
        %v3255 = vadd.f32 %v3046, %v3254
        %3256 = vmatmul.f32.gmra.mxu0 %v883
        %v3257 = vpop.f32.mrf.mxu0
        %v3258 = vadd.f32 %v3049, %v3257
        %3259 = vmatmul.f32.gmra.mxu0 %v887
        %v3260 = vpop.f32.mrf.mxu0
        %v3261 = vadd.f32 %v3052, %v3260
        %3262 = vmatmul.f32.gmra.mxu0 %v891
        %v3263 = vpop.f32.mrf.mxu0
        %v3264 = vadd.f32 %v3055, %v3263
        %3265 = vmatmul.f32.gmra.mxu0 %v895
        %v3266 = vpop.f32.mrf.mxu0
        %v3267 = vadd.f32 %v3058, %v3266
        %3268 = vmatmul.f32.gmra.mxu0 %v899
        %v3269 = vpop.f32.mrf.mxu0
        %v3270 = vadd.f32 %v3061, %v3269
        %3271 = vmatmul.f32.gmra.mxu0 %v903
        %v3272 = vpop.f32.mrf.mxu0
        %v3273 = vadd.f32 %v3064, %v3272
        %3274 = vmatmul.f32.gmra.mxu0 %v907
        %v3275 = vpop.f32.mrf.mxu0
        %v3276 = vadd.f32 %v3067, %v3275
        %3277 = vmatmul.f32.gmra.mxu0 %v911
        %v3278 = vpop.f32.mrf.mxu0
        %v3279 = vadd.f32 %v3070, %v3278
        %3280 = vmatmul.f32.gmra.mxu0 %v915
        %v3281 = vpop.f32.mrf.mxu0
        %v3282 = vadd.f32 %v3073, %v3281
        %3283 = vmatmul.f32.gmra.mxu0 %v919
        %v3284 = vpop.f32.mrf.mxu0
        %v3285 = vadd.f32 %v3076, %v3284
        %3286 = vmatmul.f32.gmra.mxu0 %v923
        %v3287 = vpop.f32.mrf.mxu0
        %v3288 = vadd.f32 %v3079, %v3287
        %3289 = vmatmul.f32.gmra.mxu0 %v927
        %v3290 = vpop.f32.mrf.mxu0
        %v3291 = vadd.f32 %v3082, %v3290
        %3292 = vmatmul.f32.gmra.mxu0 %v931
        %v3293 = vpop.f32.mrf.mxu0
        %v3294 = vadd.f32 %v3085, %v3293
        %3295 = vmatmul.f32.gmra.mxu0 %v935
        %v3296 = vpop.f32.mrf.mxu0
        %v3297 = vadd.f32 %v3088, %v3296
        %3298 = vmatmul.f32.gmra.mxu0 %v939
        %v3299 = vpop.f32.mrf.mxu0
        %v3300 = vadd.f32 %v3091, %v3299
        %3301 = vmatmul.f32.gmra.mxu0 %v943
        %v3302 = vpop.f32.mrf.mxu0
        %v3303 = vadd.f32 %v3094, %v3302
        %3304 = vmatmul.f32.gmra.mxu0 %v947
        %v3305 = vpop.f32.mrf.mxu0
        %v3306 = vadd.f32 %v3097, %v3305
        %3307 = vmatmul.f32.gmra.mxu0 %v951
        %v3308 = vpop.f32.mrf.mxu0
        %v3309 = vadd.f32 %v3100, %v3308
        %3310 = vmatmul.f32.gmra.mxu0 %v955
        %v3311 = vpop.f32.mrf.mxu0
        %v3312 = vadd.f32 %v3103, %v3311
        %3313 = vmatmul.f32.gmra.mxu0 %v959
        %v3314 = vpop.f32.mrf.mxu0
        %v3315 = vadd.f32 %v3106, %v3314
        %3316 = vmatmul.f32.gmra.mxu0 %v963
        %v3317 = vpop.f32.mrf.mxu0
        %v3318 = vadd.f32 %v3109, %v3317
        %3319 = vmatmul.f32.gmra.mxu0 %v967
        %v3320 = vpop.f32.mrf.mxu0
        %v3321 = vadd.f32 %v3112, %v3320
        %3322 = vmatmul.f32.gmra.mxu0 %v971
        %v3323 = vpop.f32.mrf.mxu0
        %v3324 = vadd.f32 %v3115, %v3323
        %3325 = vmatmul.f32.gmra.mxu0 %v975
        %v3326 = vpop.f32.mrf.mxu0
        %v3327 = vadd.f32 %v3118, %v3326
        %3328 = vmatmul.f32.gmra.mxu0 %v979
        %v3329 = vpop.f32.mrf.mxu0
        %v3330 = vadd.f32 %v3121, %v3329
        %3331 = vmatmul.f32.gmra.mxu0 %v983
        %v3332 = vpop.f32.mrf.mxu0
        %v3333 = vadd.f32 %v3124, %v3332
        %3334 = vmatmul.f32.gmra.mxu0 %v987
        %v3335 = vpop.f32.mrf.mxu0
        %v3336 = vadd.f32 %v3127, %v3335
        %3337 = vmatmul.f32.gmra.mxu0 %v991
        %v3338 = vpop.f32.mrf.mxu0
        %v3339 = vadd.f32 %v3130, %v3338
        %3340 = vmatmul.f32.gmra.mxu0 %v995
        %v3341 = vpop.f32.mrf.mxu0
        %v3342 = vadd.f32 %v3133, %v3341
        %3343 = vdwg.mxu0
        %3344 = vmatpush.msra.mxu0 %v1188
        %3345 = vmatpush.msra.mxu0 %v1184
        %3346 = vmatpush.msra.mxu0 %v1180
        %3347 = vmatpush.msra.mxu0 %v1176
        %3348 = vmatpush.msra.mxu0 %v1172
        %3349 = vmatpush.msra.mxu0 %v1168
        %3350 = vmatpush.msra.mxu0 %v1164
        %3351 = vmatpush.msra.mxu0 %v1160
        %3352 = vmatpush.msra.mxu0 %v1156
        %3353 = vmatpush.msra.mxu0 %v1152
        %3354 = vmatpush.msra.mxu0 %v1148
        %3355 = vmatpush.msra.mxu0 %v1144
        %3356 = vmatpush.msra.mxu0 %v1140
        %3357 = vmatpush.msra.mxu0 %v1136
        %3358 = vmatpush.msra.mxu0 %v1132
        %3359 = vmatpush.msra.mxu0 %v1128
        %3360 = vmatmul.f32.gmra.mxu0 %v744
        %v3361 = vpop.f32.mrf.mxu0
        %v3362 = vadd.f32 %v3153, %v3361
        %3363 = vmatmul.f32.gmra.mxu0 %v748
        %v3364 = vpop.f32.mrf.mxu0
        %v3365 = vadd.f32 %v3156, %v3364
        %3366 = vmatmul.f32.gmra.mxu0 %v752
        %v3367 = vpop.f32.mrf.mxu0
        %v3368 = vadd.f32 %v3159, %v3367
        %3369 = vmatmul.f32.gmra.mxu0 %v756
        %v3370 = vpop.f32.mrf.mxu0
        %v3371 = vadd.f32 %v3162, %v3370
        %3372 = vmatmul.f32.gmra.mxu0 %v760
        %v3373 = vpop.f32.mrf.mxu0
        %v3374 = vadd.f32 %v3165, %v3373
        %3375 = vmatmul.f32.gmra.mxu0 %v764
        %v3376 = vpop.f32.mrf.mxu0
        %v3377 = vadd.f32 %v3168, %v3376
        %3378 = vmatmul.f32.gmra.mxu0 %v768
        %v3379 = vpop.f32.mrf.mxu0
        %v3380 = vadd.f32 %v3171, %v3379
        %3381 = vmatmul.f32.gmra.mxu0 %v772
        %v3382 = vpop.f32.mrf.mxu0
        %v3383 = vadd.f32 %v3174, %v3382
        %3384 = vmatmul.f32.gmra.mxu0 %v776
        %v3385 = vpop.f32.mrf.mxu0
        %v3386 = vadd.f32 %v3177, %v3385
        %3387 = vmatmul.f32.gmra.mxu0 %v780
        %v3388 = vpop.f32.mrf.mxu0
        %v3389 = vadd.f32 %v3180, %v3388
        %3390 = vmatmul.f32.gmra.mxu0 %v784
        %v3391 = vpop.f32.mrf.mxu0
        %v3392 = vadd.f32 %v3183, %v3391
        %3393 = vmatmul.f32.gmra.mxu0 %v788
        %v3394 = vpop.f32.mrf.mxu0
        %v3395 = vadd.f32 %v3186, %v3394
        %3396 = vmatmul.f32.gmra.mxu0 %v792
        %v3397 = vpop.f32.mrf.mxu0
        %v3398 = vadd.f32 %v3189, %v3397
        %3399 = vmatmul.f32.gmra.mxu0 %v796
        %v3400 = vpop.f32.mrf.mxu0
        %v3401 = vadd.f32 %v3192, %v3400
        %3402 = vmatmul.f32.gmra.mxu0 %v800
        %v3403 = vpop.f32.mrf.mxu0
        %v3404 = vadd.f32 %v3195, %v3403
        %3405 = vmatmul.f32.gmra.mxu0 %v804
        %v3406 = vpop.f32.mrf.mxu0
        %v3407 = vadd.f32 %v3198, %v3406
        %3408 = vmatmul.f32.gmra.mxu0 %v808
        %v3409 = vpop.f32.mrf.mxu0
        %v3410 = vadd.f32 %v3201, %v3409
        %3411 = vmatmul.f32.gmra.mxu0 %v812
        %v3412 = vpop.f32.mrf.mxu0
        %v3413 = vadd.f32 %v3204, %v3412
        %3414 = vmatmul.f32.gmra.mxu0 %v816
        %v3415 = vpop.f32.mrf.mxu0
        %v3416 = vadd.f32 %v3207, %v3415
        %3417 = vmatmul.f32.gmra.mxu0 %v820
        %v3418 = vpop.f32.mrf.mxu0
        %v3419 = vadd.f32 %v3210, %v3418
        %3420 = vmatmul.f32.gmra.mxu0 %v824
        %v3421 = vpop.f32.mrf.mxu0
        %v3422 = vadd.f32 %v3213, %v3421
        %3423 = vmatmul.f32.gmra.mxu0 %v828
        %v3424 = vpop.f32.mrf.mxu0
        %v3425 = vadd.f32 %v3216, %v3424
        %3426 = vmatmul.f32.gmra.mxu0 %v832
        %v3427 = vpop.f32.mrf.mxu0
        %v3428 = vadd.f32 %v3219, %v3427
        %3429 = vmatmul.f32.gmra.mxu0 %v836
        %v3430 = vpop.f32.mrf.mxu0
        %v3431 = vadd.f32 %v3222, %v3430
        %3432 = vmatmul.f32.gmra.mxu0 %v840
        %v3433 = vpop.f32.mrf.mxu0
        %v3434 = vadd.f32 %v3225, %v3433
        %3435 = vmatmul.f32.gmra.mxu0 %v844
        %v3436 = vpop.f32.mrf.mxu0
        %v3437 = vadd.f32 %v3228, %v3436
        %3438 = vmatmul.f32.gmra.mxu0 %v848
        %v3439 = vpop.f32.mrf.mxu0
        %v3440 = vadd.f32 %v3231, %v3439
        %3441 = vmatmul.f32.gmra.mxu0 %v852
        %v3442 = vpop.f32.mrf.mxu0
        %v3443 = vadd.f32 %v3234, %v3442
        %3444 = vmatmul.f32.gmra.mxu0 %v856
        %v3445 = vpop.f32.mrf.mxu0
        %v3446 = vadd.f32 %v3237, %v3445
        %3447 = vmatmul.f32.gmra.mxu0 %v860
        %v3448 = vpop.f32.mrf.mxu0
        %v3449 = vadd.f32 %v3240, %v3448
        %3450 = vmatmul.f32.gmra.mxu0 %v864
        %v3451 = vpop.f32.mrf.mxu0
        %v3452 = vadd.f32 %v3243, %v3451
        %3453 = vmatmul.f32.gmra.mxu0 %v868
        %v3454 = vpop.f32.mrf.mxu0
        %v3455 = vadd.f32 %v3246, %v3454
        %3456 = vmatmul.f32.gmra.mxu0 %v872
        %v3457 = vpop.f32.mrf.mxu0
        %v3458 = vadd.f32 %v3249, %v3457
        %3459 = vmatmul.f32.gmra.mxu0 %v876
        %v3460 = vpop.f32.mrf.mxu0
        %v3461 = vadd.f32 %v3252, %v3460
        %3462 = vmatmul.f32.gmra.mxu0 %v880
        %v3463 = vpop.f32.mrf.mxu0
        %v3464 = vadd.f32 %v3255, %v3463
        %3465 = vmatmul.f32.gmra.mxu0 %v884
        %v3466 = vpop.f32.mrf.mxu0
        %v3467 = vadd.f32 %v3258, %v3466
        %3468 = vmatmul.f32.gmra.mxu0 %v888
        %v3469 = vpop.f32.mrf.mxu0
        %v3470 = vadd.f32 %v3261, %v3469
        %3471 = vmatmul.f32.gmra.mxu0 %v892
        %v3472 = vpop.f32.mrf.mxu0
        %v3473 = vadd.f32 %v3264, %v3472
        %3474 = vmatmul.f32.gmra.mxu0 %v896
        %v3475 = vpop.f32.mrf.mxu0
        %v3476 = vadd.f32 %v3267, %v3475
        %3477 = vmatmul.f32.gmra.mxu0 %v900
        %v3478 = vpop.f32.mrf.mxu0
        %v3479 = vadd.f32 %v3270, %v3478
        %3480 = vmatmul.f32.gmra.mxu0 %v904
        %v3481 = vpop.f32.mrf.mxu0
        %v3482 = vadd.f32 %v3273, %v3481
        %3483 = vmatmul.f32.gmra.mxu0 %v908
        %v3484 = vpop.f32.mrf.mxu0
        %v3485 = vadd.f32 %v3276, %v3484
        %3486 = vmatmul.f32.gmra.mxu0 %v912
        %v3487 = vpop.f32.mrf.mxu0
        %v3488 = vadd.f32 %v3279, %v3487
        %3489 = vmatmul.f32.gmra.mxu0 %v916
        %v3490 = vpop.f32.mrf.mxu0
        %v3491 = vadd.f32 %v3282, %v3490
        %3492 = vmatmul.f32.gmra.mxu0 %v920
        %v3493 = vpop.f32.mrf.mxu0
        %v3494 = vadd.f32 %v3285, %v3493
        %3495 = vmatmul.f32.gmra.mxu0 %v924
        %v3496 = vpop.f32.mrf.mxu0
        %v3497 = vadd.f32 %v3288, %v3496
        %3498 = vmatmul.f32.gmra.mxu0 %v928
        %v3499 = vpop.f32.mrf.mxu0
        %v3500 = vadd.f32 %v3291, %v3499
        %3501 = vmatmul.f32.gmra.mxu0 %v932
        %v3502 = vpop.f32.mrf.mxu0
        %v3503 = vadd.f32 %v3294, %v3502
        %3504 = vmatmul.f32.gmra.mxu0 %v936
        %v3505 = vpop.f32.mrf.mxu0
        %v3506 = vadd.f32 %v3297, %v3505
        %3507 = vmatmul.f32.gmra.mxu0 %v940
        %v3508 = vpop.f32.mrf.mxu0
        %v3509 = vadd.f32 %v3300, %v3508
        %3510 = vmatmul.f32.gmra.mxu0 %v944
        %v3511 = vpop.f32.mrf.mxu0
        %v3512 = vadd.f32 %v3303, %v3511
        %3513 = vmatmul.f32.gmra.mxu0 %v948
        %v3514 = vpop.f32.mrf.mxu0
        %v3515 = vadd.f32 %v3306, %v3514
        %3516 = vmatmul.f32.gmra.mxu0 %v952
        %v3517 = vpop.f32.mrf.mxu0
        %v3518 = vadd.f32 %v3309, %v3517
        %3519 = vmatmul.f32.gmra.mxu0 %v956
        %v3520 = vpop.f32.mrf.mxu0
        %v3521 = vadd.f32 %v3312, %v3520
        %3522 = vmatmul.f32.gmra.mxu0 %v960
        %v3523 = vpop.f32.mrf.mxu0
        %v3524 = vadd.f32 %v3315, %v3523
        %3525 = vmatmul.f32.gmra.mxu0 %v964
        %v3526 = vpop.f32.mrf.mxu0
        %v3527 = vadd.f32 %v3318, %v3526
        %3528 = vmatmul.f32.gmra.mxu0 %v968
        %v3529 = vpop.f32.mrf.mxu0
        %v3530 = vadd.f32 %v3321, %v3529
        %3531 = vmatmul.f32.gmra.mxu0 %v972
        %v3532 = vpop.f32.mrf.mxu0
        %v3533 = vadd.f32 %v3324, %v3532
        %3534 = vmatmul.f32.gmra.mxu0 %v976
        %v3535 = vpop.f32.mrf.mxu0
        %v3536 = vadd.f32 %v3327, %v3535
        %3537 = vmatmul.f32.gmra.mxu0 %v980
        %v3538 = vpop.f32.mrf.mxu0
        %v3539 = vadd.f32 %v3330, %v3538
        %3540 = vmatmul.f32.gmra.mxu0 %v984
        %v3541 = vpop.f32.mrf.mxu0
        %v3542 = vadd.f32 %v3333, %v3541
        %3543 = vmatmul.f32.gmra.mxu0 %v988
        %v3544 = vpop.f32.mrf.mxu0
        %v3545 = vadd.f32 %v3336, %v3544
        %3546 = vmatmul.f32.gmra.mxu0 %v992
        %v3547 = vpop.f32.mrf.mxu0
        %v3548 = vadd.f32 %v3339, %v3547
        %3549 = vmatmul.f32.gmra.mxu0 %v996
        %v3550 = vpop.f32.mrf.mxu0
        %v3551 = vadd.f32 %v3342, %v3550
        %3552 = vdwg.mxu0
        %3553 = vmatpush.msra.mxu0 %v1252
        %3554 = vmatpush.msra.mxu0 %v1248
        %3555 = vmatpush.msra.mxu0 %v1244
        %3556 = vmatpush.msra.mxu0 %v1240
        %3557 = vmatpush.msra.mxu0 %v1236
        %3558 = vmatpush.msra.mxu0 %v1232
        %3559 = vmatpush.msra.mxu0 %v1228
        %3560 = vmatpush.msra.mxu0 %v1224
        %3561 = vmatpush.msra.mxu0 %v1220
        %3562 = vmatpush.msra.mxu0 %v1216
        %3563 = vmatpush.msra.mxu0 %v1212
        %3564 = vmatpush.msra.mxu0 %v1208
        %3565 = vmatpush.msra.mxu0 %v1204
        %3566 = vmatpush.msra.mxu0 %v1200
        %3567 = vmatpush.msra.mxu0 %v1196
        %3568 = vmatpush.msra.mxu0 %v1192
        %3569 = vmatmul.f32.gmra.mxu0 %v745
        %v3570 = vpop.f32.mrf.mxu0
        %v3571 = vadd.f32 %v3362, %v3570
        %3572 = vmatmul.f32.gmra.mxu0 %v749
        %v3573 = vpop.f32.mrf.mxu0
        %v3574 = vadd.f32 %v3365, %v3573
        %3575 = vmatmul.f32.gmra.mxu0 %v753
        %v3576 = vpop.f32.mrf.mxu0
        %v3577 = vadd.f32 %v3368, %v3576
        %3578 = vmatmul.f32.gmra.mxu0 %v757
        %v3579 = vpop.f32.mrf.mxu0
        %v3580 = vadd.f32 %v3371, %v3579
        %3581 = vmatmul.f32.gmra.mxu0 %v761
        %v3582 = vpop.f32.mrf.mxu0
        %v3583 = vadd.f32 %v3374, %v3582
        %3584 = vmatmul.f32.gmra.mxu0 %v765
        %v3585 = vpop.f32.mrf.mxu0
        %v3586 = vadd.f32 %v3377, %v3585
        %3587 = vmatmul.f32.gmra.mxu0 %v769
        %v3588 = vpop.f32.mrf.mxu0
        %v3589 = vadd.f32 %v3380, %v3588
        %3590 = vmatmul.f32.gmra.mxu0 %v773
        %v3591 = vpop.f32.mrf.mxu0
        %v3592 = vadd.f32 %v3383, %v3591
        %3593 = vmatmul.f32.gmra.mxu0 %v777
        %v3594 = vpop.f32.mrf.mxu0
        %v3595 = vadd.f32 %v3386, %v3594
        %3596 = vmatmul.f32.gmra.mxu0 %v781
        %v3597 = vpop.f32.mrf.mxu0
        %v3598 = vadd.f32 %v3389, %v3597
        %3599 = vmatmul.f32.gmra.mxu0 %v785
        %v3600 = vpop.f32.mrf.mxu0
        %v3601 = vadd.f32 %v3392, %v3600
        %3602 = vmatmul.f32.gmra.mxu0 %v789
        %v3603 = vpop.f32.mrf.mxu0
        %v3604 = vadd.f32 %v3395, %v3603
        %3605 = vmatmul.f32.gmra.mxu0 %v793
        %v3606 = vpop.f32.mrf.mxu0
        %v3607 = vadd.f32 %v3398, %v3606
        %3608 = vmatmul.f32.gmra.mxu0 %v797
        %v3609 = vpop.f32.mrf.mxu0
        %v3610 = vadd.f32 %v3401, %v3609
        %3611 = vmatmul.f32.gmra.mxu0 %v801
        %v3612 = vpop.f32.mrf.mxu0
        %v3613 = vadd.f32 %v3404, %v3612
        %3614 = vmatmul.f32.gmra.mxu0 %v805
        %v3615 = vpop.f32.mrf.mxu0
        %v3616 = vadd.f32 %v3407, %v3615
        %3617 = vmatmul.f32.gmra.mxu0 %v809
        %v3618 = vpop.f32.mrf.mxu0
        %v3619 = vadd.f32 %v3410, %v3618
        %3620 = vmatmul.f32.gmra.mxu0 %v813
        %v3621 = vpop.f32.mrf.mxu0
        %v3622 = vadd.f32 %v3413, %v3621
        %3623 = vmatmul.f32.gmra.mxu0 %v817
        %v3624 = vpop.f32.mrf.mxu0
        %v3625 = vadd.f32 %v3416, %v3624
        %3626 = vmatmul.f32.gmra.mxu0 %v821
        %v3627 = vpop.f32.mrf.mxu0
        %v3628 = vadd.f32 %v3419, %v3627
        %3629 = vmatmul.f32.gmra.mxu0 %v825
        %v3630 = vpop.f32.mrf.mxu0
        %v3631 = vadd.f32 %v3422, %v3630
        %3632 = vmatmul.f32.gmra.mxu0 %v829
        %v3633 = vpop.f32.mrf.mxu0
        %v3634 = vadd.f32 %v3425, %v3633
        %3635 = vmatmul.f32.gmra.mxu0 %v833
        %v3636 = vpop.f32.mrf.mxu0
        %v3637 = vadd.f32 %v3428, %v3636
        %3638 = vmatmul.f32.gmra.mxu0 %v837
        %v3639 = vpop.f32.mrf.mxu0
        %v3640 = vadd.f32 %v3431, %v3639
        %3641 = vmatmul.f32.gmra.mxu0 %v841
        %v3642 = vpop.f32.mrf.mxu0
        %v3643 = vadd.f32 %v3434, %v3642
        %3644 = vmatmul.f32.gmra.mxu0 %v845
        %v3645 = vpop.f32.mrf.mxu0
        %v3646 = vadd.f32 %v3437, %v3645
        %3647 = vmatmul.f32.gmra.mxu0 %v849
        %v3648 = vpop.f32.mrf.mxu0
        %v3649 = vadd.f32 %v3440, %v3648
        %3650 = vmatmul.f32.gmra.mxu0 %v853
        %v3651 = vpop.f32.mrf.mxu0
        %v3652 = vadd.f32 %v3443, %v3651
        %3653 = vmatmul.f32.gmra.mxu0 %v857
        %v3654 = vpop.f32.mrf.mxu0
        %v3655 = vadd.f32 %v3446, %v3654
        %3656 = vmatmul.f32.gmra.mxu0 %v861
        %v3657 = vpop.f32.mrf.mxu0
        %v3658 = vadd.f32 %v3449, %v3657
        %3659 = vmatmul.f32.gmra.mxu0 %v865
        %v3660 = vpop.f32.mrf.mxu0
        %v3661 = vadd.f32 %v3452, %v3660
        %3662 = vmatmul.f32.gmra.mxu0 %v869
        %v3663 = vpop.f32.mrf.mxu0
        %v3664 = vadd.f32 %v3455, %v3663
        %3665 = vmatmul.f32.gmra.mxu0 %v873
        %v3666 = vpop.f32.mrf.mxu0
        %v3667 = vadd.f32 %v3458, %v3666
        %3668 = vmatmul.f32.gmra.mxu0 %v877
        %v3669 = vpop.f32.mrf.mxu0
        %v3670 = vadd.f32 %v3461, %v3669
        %3671 = vmatmul.f32.gmra.mxu0 %v881
        %v3672 = vpop.f32.mrf.mxu0
        %v3673 = vadd.f32 %v3464, %v3672
        %3674 = vmatmul.f32.gmra.mxu0 %v885
        %v3675 = vpop.f32.mrf.mxu0
        %v3676 = vadd.f32 %v3467, %v3675
        %3677 = vmatmul.f32.gmra.mxu0 %v889
        %v3678 = vpop.f32.mrf.mxu0
        %v3679 = vadd.f32 %v3470, %v3678
        %3680 = vmatmul.f32.gmra.mxu0 %v893
        %v3681 = vpop.f32.mrf.mxu0
        %v3682 = vadd.f32 %v3473, %v3681
        %3683 = vmatmul.f32.gmra.mxu0 %v897
        %v3684 = vpop.f32.mrf.mxu0
        %v3685 = vadd.f32 %v3476, %v3684
        %3686 = vmatmul.f32.gmra.mxu0 %v901
        %v3687 = vpop.f32.mrf.mxu0
        %v3688 = vadd.f32 %v3479, %v3687
        %3689 = vmatmul.f32.gmra.mxu0 %v905
        %v3690 = vpop.f32.mrf.mxu0
        %v3691 = vadd.f32 %v3482, %v3690
        %3692 = vmatmul.f32.gmra.mxu0 %v909
        %v3693 = vpop.f32.mrf.mxu0
        %v3694 = vadd.f32 %v3485, %v3693
        %3695 = vmatmul.f32.gmra.mxu0 %v913
        %v3696 = vpop.f32.mrf.mxu0
        %v3697 = vadd.f32 %v3488, %v3696
        %3698 = vmatmul.f32.gmra.mxu0 %v917
        %v3699 = vpop.f32.mrf.mxu0
        %v3700 = vadd.f32 %v3491, %v3699
        %3701 = vmatmul.f32.gmra.mxu0 %v921
        %v3702 = vpop.f32.mrf.mxu0
        %v3703 = vadd.f32 %v3494, %v3702
        %3704 = vmatmul.f32.gmra.mxu0 %v925
        %v3705 = vpop.f32.mrf.mxu0
        %v3706 = vadd.f32 %v3497, %v3705
        %3707 = vmatmul.f32.gmra.mxu0 %v929
        %v3708 = vpop.f32.mrf.mxu0
        %v3709 = vadd.f32 %v3500, %v3708
        %3710 = vmatmul.f32.gmra.mxu0 %v933
        %v3711 = vpop.f32.mrf.mxu0
        %v3712 = vadd.f32 %v3503, %v3711
        %3713 = vmatmul.f32.gmra.mxu0 %v937
        %v3714 = vpop.f32.mrf.mxu0
        %v3715 = vadd.f32 %v3506, %v3714
        %3716 = vmatmul.f32.gmra.mxu0 %v941
        %v3717 = vpop.f32.mrf.mxu0
        %v3718 = vadd.f32 %v3509, %v3717
        %3719 = vmatmul.f32.gmra.mxu0 %v945
        %v3720 = vpop.f32.mrf.mxu0
        %v3721 = vadd.f32 %v3512, %v3720
        %3722 = vmatmul.f32.gmra.mxu0 %v949
        %v3723 = vpop.f32.mrf.mxu0
        %v3724 = vadd.f32 %v3515, %v3723
        %3725 = vmatmul.f32.gmra.mxu0 %v953
        %v3726 = vpop.f32.mrf.mxu0
        %v3727 = vadd.f32 %v3518, %v3726
        %3728 = vmatmul.f32.gmra.mxu0 %v957
        %v3729 = vpop.f32.mrf.mxu0
        %v3730 = vadd.f32 %v3521, %v3729
        %3731 = vmatmul.f32.gmra.mxu0 %v961
        %v3732 = vpop.f32.mrf.mxu0
        %v3733 = vadd.f32 %v3524, %v3732
        %3734 = vmatmul.f32.gmra.mxu0 %v965
        %v3735 = vpop.f32.mrf.mxu0
        %v3736 = vadd.f32 %v3527, %v3735
        %3737 = vmatmul.f32.gmra.mxu0 %v969
        %v3738 = vpop.f32.mrf.mxu0
        %v3739 = vadd.f32 %v3530, %v3738
        %3740 = vmatmul.f32.gmra.mxu0 %v973
        %v3741 = vpop.f32.mrf.mxu0
        %v3742 = vadd.f32 %v3533, %v3741
        %3743 = vmatmul.f32.gmra.mxu0 %v977
        %v3744 = vpop.f32.mrf.mxu0
        %v3745 = vadd.f32 %v3536, %v3744
        %3746 = vmatmul.f32.gmra.mxu0 %v981
        %v3747 = vpop.f32.mrf.mxu0
        %v3748 = vadd.f32 %v3539, %v3747
        %3749 = vmatmul.f32.gmra.mxu0 %v985
        %v3750 = vpop.f32.mrf.mxu0
        %v3751 = vadd.f32 %v3542, %v3750
        %3752 = vmatmul.f32.gmra.mxu0 %v989
        %v3753 = vpop.f32.mrf.mxu0
        %v3754 = vadd.f32 %v3545, %v3753
        %3755 = vmatmul.f32.gmra.mxu0 %v993
        %v3756 = vpop.f32.mrf.mxu0
        %v3757 = vadd.f32 %v3548, %v3756
        %3758 = vmatmul.f32.gmra.mxu0 %v997
        %v3759 = vpop.f32.mrf.mxu0
        %v3760 = vadd.f32 %v3551, %v3759
        %3761 = vdwg.mxu0
        %3762 = vmatpush.msra.mxu0 %v1061
        %3763 = vmatpush.msra.mxu0 %v1057
        %3764 = vmatpush.msra.mxu0 %v1053
        %3765 = vmatpush.msra.mxu0 %v1049
        %3766 = vmatpush.msra.mxu0 %v1045
        %3767 = vmatpush.msra.mxu0 %v1041
        %3768 = vmatpush.msra.mxu0 %v1037
        %3769 = vmatpush.msra.mxu0 %v1033
        %3770 = vmatpush.msra.mxu0 %v1029
        %3771 = vmatpush.msra.mxu0 %v1025
        %3772 = vmatpush.msra.mxu0 %v1021
        %3773 = vmatpush.msra.mxu0 %v1017
        %3774 = vmatpush.msra.mxu0 %v1013
        %3775 = vmatpush.msra.mxu0 %v1009
        %3776 = vmatpush.msra.mxu0 %v1005
        %3777 = vmatpush.msra.mxu0 %v1001
        %3778 = vmatmul.f32.gmra.mxu0 %v742
        %v3779 = vpop.f32.mrf.mxu0
        %v3780 = vadd.f32 0.0, %v3779
        %3781 = vmatmul.f32.gmra.mxu0 %v746
        %v3782 = vpop.f32.mrf.mxu0
        %v3783 = vadd.f32 0.0, %v3782
        %3784 = vmatmul.f32.gmra.mxu0 %v750
        %v3785 = vpop.f32.mrf.mxu0
        %v3786 = vadd.f32 0.0, %v3785
        %3787 = vmatmul.f32.gmra.mxu0 %v754
        %v3788 = vpop.f32.mrf.mxu0
        %v3789 = vadd.f32 0.0, %v3788
        %3790 = vmatmul.f32.gmra.mxu0 %v758
        %v3791 = vpop.f32.mrf.mxu0
        %v3792 = vadd.f32 0.0, %v3791
        %3793 = vmatmul.f32.gmra.mxu0 %v762
        %v3794 = vpop.f32.mrf.mxu0
        %v3795 = vadd.f32 0.0, %v3794
        %3796 = vmatmul.f32.gmra.mxu0 %v766
        %v3797 = vpop.f32.mrf.mxu0
        %v3798 = vadd.f32 0.0, %v3797
        %3799 = vmatmul.f32.gmra.mxu0 %v770
        %v3800 = vpop.f32.mrf.mxu0
        %v3801 = vadd.f32 0.0, %v3800
        %3802 = vmatmul.f32.gmra.mxu0 %v774
        %v3803 = vpop.f32.mrf.mxu0
        %v3804 = vadd.f32 0.0, %v3803
        %3805 = vmatmul.f32.gmra.mxu0 %v778
        %v3806 = vpop.f32.mrf.mxu0
        %v3807 = vadd.f32 0.0, %v3806
        %3808 = vmatmul.f32.gmra.mxu0 %v782
        %v3809 = vpop.f32.mrf.mxu0
        %v3810 = vadd.f32 0.0, %v3809
        %3811 = vmatmul.f32.gmra.mxu0 %v786
        %v3812 = vpop.f32.mrf.mxu0
        %v3813 = vadd.f32 0.0, %v3812
        %3814 = vmatmul.f32.gmra.mxu0 %v790
        %v3815 = vpop.f32.mrf.mxu0
        %v3816 = vadd.f32 0.0, %v3815
        %3817 = vmatmul.f32.gmra.mxu0 %v794
        %v3818 = vpop.f32.mrf.mxu0
        %v3819 = vadd.f32 0.0, %v3818
        %3820 = vmatmul.f32.gmra.mxu0 %v798
        %v3821 = vpop.f32.mrf.mxu0
        %v3822 = vadd.f32 0.0, %v3821
        %3823 = vmatmul.f32.gmra.mxu0 %v802
        %v3824 = vpop.f32.mrf.mxu0
        %v3825 = vadd.f32 0.0, %v3824
        %3826 = vmatmul.f32.gmra.mxu0 %v806
        %v3827 = vpop.f32.mrf.mxu0
        %v3828 = vadd.f32 0.0, %v3827
        %3829 = vmatmul.f32.gmra.mxu0 %v810
        %v3830 = vpop.f32.mrf.mxu0
        %v3831 = vadd.f32 0.0, %v3830
        %3832 = vmatmul.f32.gmra.mxu0 %v814
        %v3833 = vpop.f32.mrf.mxu0
        %v3834 = vadd.f32 0.0, %v3833
        %3835 = vmatmul.f32.gmra.mxu0 %v818
        %v3836 = vpop.f32.mrf.mxu0
        %v3837 = vadd.f32 0.0, %v3836
        %3838 = vmatmul.f32.gmra.mxu0 %v822
        %v3839 = vpop.f32.mrf.mxu0
        %v3840 = vadd.f32 0.0, %v3839
        %3841 = vmatmul.f32.gmra.mxu0 %v826
        %v3842 = vpop.f32.mrf.mxu0
        %v3843 = vadd.f32 0.0, %v3842
        %3844 = vmatmul.f32.gmra.mxu0 %v830
        %v3845 = vpop.f32.mrf.mxu0
        %v3846 = vadd.f32 0.0, %v3845
        %3847 = vmatmul.f32.gmra.mxu0 %v834
        %v3848 = vpop.f32.mrf.mxu0
        %v3849 = vadd.f32 0.0, %v3848
        %3850 = vmatmul.f32.gmra.mxu0 %v838
        %v3851 = vpop.f32.mrf.mxu0
        %v3852 = vadd.f32 0.0, %v3851
        %3853 = vmatmul.f32.gmra.mxu0 %v842
        %v3854 = vpop.f32.mrf.mxu0
        %v3855 = vadd.f32 0.0, %v3854
        %3856 = vmatmul.f32.gmra.mxu0 %v846
        %v3857 = vpop.f32.mrf.mxu0
        %v3858 = vadd.f32 0.0, %v3857
        %3859 = vmatmul.f32.gmra.mxu0 %v850
        %v3860 = vpop.f32.mrf.mxu0
        %v3861 = vadd.f32 0.0, %v3860
        %3862 = vmatmul.f32.gmra.mxu0 %v854
        %v3863 = vpop.f32.mrf.mxu0
        %v3864 = vadd.f32 0.0, %v3863
        %3865 = vmatmul.f32.gmra.mxu0 %v858
        %v3866 = vpop.f32.mrf.mxu0
        %v3867 = vadd.f32 0.0, %v3866
        %3868 = vmatmul.f32.gmra.mxu0 %v862
        %v3869 = vpop.f32.mrf.mxu0
        %v3870 = vadd.f32 0.0, %v3869
        %3871 = vmatmul.f32.gmra.mxu0 %v866
        %v3872 = vpop.f32.mrf.mxu0
        %v3873 = vadd.f32 0.0, %v3872
        %3874 = vmatmul.f32.gmra.mxu0 %v870
        %v3875 = vpop.f32.mrf.mxu0
        %v3876 = vadd.f32 0.0, %v3875
        %3877 = vmatmul.f32.gmra.mxu0 %v874
        %v3878 = vpop.f32.mrf.mxu0
        %v3879 = vadd.f32 0.0, %v3878
        %3880 = vmatmul.f32.gmra.mxu0 %v878
        %v3881 = vpop.f32.mrf.mxu0
        %v3882 = vadd.f32 0.0, %v3881
        %3883 = vmatmul.f32.gmra.mxu0 %v882
        %v3884 = vpop.f32.mrf.mxu0
        %v3885 = vadd.f32 0.0, %v3884
        %3886 = vmatmul.f32.gmra.mxu0 %v886
        %v3887 = vpop.f32.mrf.mxu0
        %v3888 = vadd.f32 0.0, %v3887
        %3889 = vmatmul.f32.gmra.mxu0 %v890
        %v3890 = vpop.f32.mrf.mxu0
        %v3891 = vadd.f32 0.0, %v3890
        %3892 = vmatmul.f32.gmra.mxu0 %v894
        %v3893 = vpop.f32.mrf.mxu0
        %v3894 = vadd.f32 0.0, %v3893
        %3895 = vmatmul.f32.gmra.mxu0 %v898
        %v3896 = vpop.f32.mrf.mxu0
        %v3897 = vadd.f32 0.0, %v3896
        %3898 = vmatmul.f32.gmra.mxu0 %v902
        %v3899 = vpop.f32.mrf.mxu0
        %v3900 = vadd.f32 0.0, %v3899
        %3901 = vmatmul.f32.gmra.mxu0 %v906
        %v3902 = vpop.f32.mrf.mxu0
        %v3903 = vadd.f32 0.0, %v3902
        %3904 = vmatmul.f32.gmra.mxu0 %v910
        %v3905 = vpop.f32.mrf.mxu0
        %v3906 = vadd.f32 0.0, %v3905
        %3907 = vmatmul.f32.gmra.mxu0 %v914
        %v3908 = vpop.f32.mrf.mxu0
        %v3909 = vadd.f32 0.0, %v3908
        %3910 = vmatmul.f32.gmra.mxu0 %v918
        %v3911 = vpop.f32.mrf.mxu0
        %v3912 = vadd.f32 0.0, %v3911
        %3913 = vmatmul.f32.gmra.mxu0 %v922
        %v3914 = vpop.f32.mrf.mxu0
        %v3915 = vadd.f32 0.0, %v3914
        %3916 = vmatmul.f32.gmra.mxu0 %v926
        %v3917 = vpop.f32.mrf.mxu0
        %v3918 = vadd.f32 0.0, %v3917
        %3919 = vmatmul.f32.gmra.mxu0 %v930
        %v3920 = vpop.f32.mrf.mxu0
        %v3921 = vadd.f32 0.0, %v3920
        %3922 = vmatmul.f32.gmra.mxu0 %v934
        %v3923 = vpop.f32.mrf.mxu0
        %v3924 = vadd.f32 0.0, %v3923
        %3925 = vmatmul.f32.gmra.mxu0 %v938
        %v3926 = vpop.f32.mrf.mxu0
        %v3927 = vadd.f32 0.0, %v3926
        %3928 = vmatmul.f32.gmra.mxu0 %v942
        %v3929 = vpop.f32.mrf.mxu0
        %v3930 = vadd.f32 0.0, %v3929
        %3931 = vmatmul.f32.gmra.mxu0 %v946
        %v3932 = vpop.f32.mrf.mxu0
        %v3933 = vadd.f32 0.0, %v3932
        %3934 = vmatmul.f32.gmra.mxu0 %v950
        %v3935 = vpop.f32.mrf.mxu0
        %v3936 = vadd.f32 0.0, %v3935
        %3937 = vmatmul.f32.gmra.mxu0 %v954
        %v3938 = vpop.f32.mrf.mxu0
        %v3939 = vadd.f32 0.0, %v3938
        %3940 = vmatmul.f32.gmra.mxu0 %v958
        %v3941 = vpop.f32.mrf.mxu0
        %v3942 = vadd.f32 0.0, %v3941
        %3943 = vmatmul.f32.gmra.mxu0 %v962
        %v3944 = vpop.f32.mrf.mxu0
        %v3945 = vadd.f32 0.0, %v3944
        %3946 = vmatmul.f32.gmra.mxu0 %v966
        %v3947 = vpop.f32.mrf.mxu0
        %v3948 = vadd.f32 0.0, %v3947
        %3949 = vmatmul.f32.gmra.mxu0 %v970
        %v3950 = vpop.f32.mrf.mxu0
        %v3951 = vadd.f32 0.0, %v3950
        %3952 = vmatmul.f32.gmra.mxu0 %v974
        %v3953 = vpop.f32.mrf.mxu0
        %v3954 = vadd.f32 0.0, %v3953
        %3955 = vmatmul.f32.gmra.mxu0 %v978
        %v3956 = vpop.f32.mrf.mxu0
        %v3957 = vadd.f32 0.0, %v3956
        %3958 = vmatmul.f32.gmra.mxu0 %v982
        %v3959 = vpop.f32.mrf.mxu0
        %v3960 = vadd.f32 0.0, %v3959
        %3961 = vmatmul.f32.gmra.mxu0 %v986
        %v3962 = vpop.f32.mrf.mxu0
        %v3963 = vadd.f32 0.0, %v3962
        %3964 = vmatmul.f32.gmra.mxu0 %v990
        %v3965 = vpop.f32.mrf.mxu0
        %v3966 = vadd.f32 0.0, %v3965
        %3967 = vmatmul.f32.gmra.mxu0 %v994
        %v3968 = vpop.f32.mrf.mxu0
        %v3969 = vadd.f32 0.0, %v3968
        %3970 = vdwg.mxu0
        %3971 = vmatpush.msra.mxu0 %v1125
        %3972 = vmatpush.msra.mxu0 %v1121
        %3973 = vmatpush.msra.mxu0 %v1117
        %3974 = vmatpush.msra.mxu0 %v1113
        %3975 = vmatpush.msra.mxu0 %v1109
        %3976 = vmatpush.msra.mxu0 %v1105
        %3977 = vmatpush.msra.mxu0 %v1101
        %3978 = vmatpush.msra.mxu0 %v1097
        %3979 = vmatpush.msra.mxu0 %v1093
        %3980 = vmatpush.msra.mxu0 %v1089
        %3981 = vmatpush.msra.mxu0 %v1085
        %3982 = vmatpush.msra.mxu0 %v1081
        %3983 = vmatpush.msra.mxu0 %v1077
        %3984 = vmatpush.msra.mxu0 %v1073
        %3985 = vmatpush.msra.mxu0 %v1069
        %3986 = vmatpush.msra.mxu0 %v1065
        %3987 = vmatmul.f32.gmra.mxu0 %v743
        %v3988 = vpop.f32.mrf.mxu0
        %v3989 = vadd.f32 %v3780, %v3988
        %3990 = vmatmul.f32.gmra.mxu0 %v747
        %v3991 = vpop.f32.mrf.mxu0
        %v3992 = vadd.f32 %v3783, %v3991
        %3993 = vmatmul.f32.gmra.mxu0 %v751
        %v3994 = vpop.f32.mrf.mxu0
        %v3995 = vadd.f32 %v3786, %v3994
        %3996 = vmatmul.f32.gmra.mxu0 %v755
        %v3997 = vpop.f32.mrf.mxu0
        %v3998 = vadd.f32 %v3789, %v3997
        %3999 = vmatmul.f32.gmra.mxu0 %v759
        %v4000 = vpop.f32.mrf.mxu0
        %v4001 = vadd.f32 %v3792, %v4000
        %4002 = vmatmul.f32.gmra.mxu0 %v763
        %v4003 = vpop.f32.mrf.mxu0
        %v4004 = vadd.f32 %v3795, %v4003
        %4005 = vmatmul.f32.gmra.mxu0 %v767
        %v4006 = vpop.f32.mrf.mxu0
        %v4007 = vadd.f32 %v3798, %v4006
        %4008 = vmatmul.f32.gmra.mxu0 %v771
        %v4009 = vpop.f32.mrf.mxu0
        %v4010 = vadd.f32 %v3801, %v4009
        %4011 = vmatmul.f32.gmra.mxu0 %v775
        %v4012 = vpop.f32.mrf.mxu0
        %v4013 = vadd.f32 %v3804, %v4012
        %4014 = vmatmul.f32.gmra.mxu0 %v779
        %v4015 = vpop.f32.mrf.mxu0
        %v4016 = vadd.f32 %v3807, %v4015
        %4017 = vmatmul.f32.gmra.mxu0 %v783
        %v4018 = vpop.f32.mrf.mxu0
        %v4019 = vadd.f32 %v3810, %v4018
        %4020 = vmatmul.f32.gmra.mxu0 %v787
        %v4021 = vpop.f32.mrf.mxu0
        %v4022 = vadd.f32 %v3813, %v4021
        %4023 = vmatmul.f32.gmra.mxu0 %v791
        %v4024 = vpop.f32.mrf.mxu0
        %v4025 = vadd.f32 %v3816, %v4024
        %4026 = vmatmul.f32.gmra.mxu0 %v795
        %v4027 = vpop.f32.mrf.mxu0
        %v4028 = vadd.f32 %v3819, %v4027
        %4029 = vmatmul.f32.gmra.mxu0 %v799
        %v4030 = vpop.f32.mrf.mxu0
        %v4031 = vadd.f32 %v3822, %v4030
        %4032 = vmatmul.f32.gmra.mxu0 %v803
        %v4033 = vpop.f32.mrf.mxu0
        %v4034 = vadd.f32 %v3825, %v4033
        %4035 = vmatmul.f32.gmra.mxu0 %v807
        %v4036 = vpop.f32.mrf.mxu0
        %v4037 = vadd.f32 %v3828, %v4036
        %4038 = vmatmul.f32.gmra.mxu0 %v811
        %v4039 = vpop.f32.mrf.mxu0
        %v4040 = vadd.f32 %v3831, %v4039
        %4041 = vmatmul.f32.gmra.mxu0 %v815
        %v4042 = vpop.f32.mrf.mxu0
        %v4043 = vadd.f32 %v3834, %v4042
        %4044 = vmatmul.f32.gmra.mxu0 %v819
        %v4045 = vpop.f32.mrf.mxu0
        %v4046 = vadd.f32 %v3837, %v4045
        %4047 = vmatmul.f32.gmra.mxu0 %v823
        %v4048 = vpop.f32.mrf.mxu0
        %v4049 = vadd.f32 %v3840, %v4048
        %4050 = vmatmul.f32.gmra.mxu0 %v827
        %v4051 = vpop.f32.mrf.mxu0
        %v4052 = vadd.f32 %v3843, %v4051
        %4053 = vmatmul.f32.gmra.mxu0 %v831
        %v4054 = vpop.f32.mrf.mxu0
        %v4055 = vadd.f32 %v3846, %v4054
        %4056 = vmatmul.f32.gmra.mxu0 %v835
        %v4057 = vpop.f32.mrf.mxu0
        %v4058 = vadd.f32 %v3849, %v4057
        %4059 = vmatmul.f32.gmra.mxu0 %v839
        %v4060 = vpop.f32.mrf.mxu0
        %v4061 = vadd.f32 %v3852, %v4060
        %4062 = vmatmul.f32.gmra.mxu0 %v843
        %v4063 = vpop.f32.mrf.mxu0
        %v4064 = vadd.f32 %v3855, %v4063
        %4065 = vmatmul.f32.gmra.mxu0 %v847
        %v4066 = vpop.f32.mrf.mxu0
        %v4067 = vadd.f32 %v3858, %v4066
        %4068 = vmatmul.f32.gmra.mxu0 %v851
        %v4069 = vpop.f32.mrf.mxu0
        %v4070 = vadd.f32 %v3861, %v4069
        %4071 = vmatmul.f32.gmra.mxu0 %v855
        %v4072 = vpop.f32.mrf.mxu0
        %v4073 = vadd.f32 %v3864, %v4072
        %4074 = vmatmul.f32.gmra.mxu0 %v859
        %v4075 = vpop.f32.mrf.mxu0
        %v4076 = vadd.f32 %v3867, %v4075
        %4077 = vmatmul.f32.gmra.mxu0 %v863
        %v4078 = vpop.f32.mrf.mxu0
        %v4079 = vadd.f32 %v3870, %v4078
        %4080 = vmatmul.f32.gmra.mxu0 %v867
        %v4081 = vpop.f32.mrf.mxu0
        %v4082 = vadd.f32 %v3873, %v4081
        %4083 = vmatmul.f32.gmra.mxu0 %v871
        %v4084 = vpop.f32.mrf.mxu0
        %v4085 = vadd.f32 %v3876, %v4084
        %4086 = vmatmul.f32.gmra.mxu0 %v875
        %v4087 = vpop.f32.mrf.mxu0
        %v4088 = vadd.f32 %v3879, %v4087
        %4089 = vmatmul.f32.gmra.mxu0 %v879
        %v4090 = vpop.f32.mrf.mxu0
        %v4091 = vadd.f32 %v3882, %v4090
        %4092 = vmatmul.f32.gmra.mxu0 %v883
        %v4093 = vpop.f32.mrf.mxu0
        %v4094 = vadd.f32 %v3885, %v4093
        %4095 = vmatmul.f32.gmra.mxu0 %v887
        %v4096 = vpop.f32.mrf.mxu0
        %v4097 = vadd.f32 %v3888, %v4096
        %4098 = vmatmul.f32.gmra.mxu0 %v891
        %v4099 = vpop.f32.mrf.mxu0
        %v4100 = vadd.f32 %v3891, %v4099
        %4101 = vmatmul.f32.gmra.mxu0 %v895
        %v4102 = vpop.f32.mrf.mxu0
        %v4103 = vadd.f32 %v3894, %v4102
        %4104 = vmatmul.f32.gmra.mxu0 %v899
        %v4105 = vpop.f32.mrf.mxu0
        %v4106 = vadd.f32 %v3897, %v4105
        %4107 = vmatmul.f32.gmra.mxu0 %v903
        %v4108 = vpop.f32.mrf.mxu0
        %v4109 = vadd.f32 %v3900, %v4108
        %4110 = vmatmul.f32.gmra.mxu0 %v907
        %v4111 = vpop.f32.mrf.mxu0
        %v4112 = vadd.f32 %v3903, %v4111
        %4113 = vmatmul.f32.gmra.mxu0 %v911
        %v4114 = vpop.f32.mrf.mxu0
        %v4115 = vadd.f32 %v3906, %v4114
        %4116 = vmatmul.f32.gmra.mxu0 %v915
        %v4117 = vpop.f32.mrf.mxu0
        %v4118 = vadd.f32 %v3909, %v4117
        %4119 = vmatmul.f32.gmra.mxu0 %v919
        %v4120 = vpop.f32.mrf.mxu0
        %v4121 = vadd.f32 %v3912, %v4120
        %4122 = vmatmul.f32.gmra.mxu0 %v923
        %v4123 = vpop.f32.mrf.mxu0
        %v4124 = vadd.f32 %v3915, %v4123
        %4125 = vmatmul.f32.gmra.mxu0 %v927
        %v4126 = vpop.f32.mrf.mxu0
        %v4127 = vadd.f32 %v3918, %v4126
        %4128 = vmatmul.f32.gmra.mxu0 %v931
        %v4129 = vpop.f32.mrf.mxu0
        %v4130 = vadd.f32 %v3921, %v4129
        %4131 = vmatmul.f32.gmra.mxu0 %v935
        %v4132 = vpop.f32.mrf.mxu0
        %v4133 = vadd.f32 %v3924, %v4132
        %4134 = vmatmul.f32.gmra.mxu0 %v939
        %v4135 = vpop.f32.mrf.mxu0
        %v4136 = vadd.f32 %v3927, %v4135
        %4137 = vmatmul.f32.gmra.mxu0 %v943
        %v4138 = vpop.f32.mrf.mxu0
        %v4139 = vadd.f32 %v3930, %v4138
        %4140 = vmatmul.f32.gmra.mxu0 %v947
        %v4141 = vpop.f32.mrf.mxu0
        %v4142 = vadd.f32 %v3933, %v4141
        %4143 = vmatmul.f32.gmra.mxu0 %v951
        %v4144 = vpop.f32.mrf.mxu0
        %v4145 = vadd.f32 %v3936, %v4144
        %4146 = vmatmul.f32.gmra.mxu0 %v955
        %v4147 = vpop.f32.mrf.mxu0
        %v4148 = vadd.f32 %v3939, %v4147
        %4149 = vmatmul.f32.gmra.mxu0 %v959
        %v4150 = vpop.f32.mrf.mxu0
        %v4151 = vadd.f32 %v3942, %v4150
        %4152 = vmatmul.f32.gmra.mxu0 %v963
        %v4153 = vpop.f32.mrf.mxu0
        %v4154 = vadd.f32 %v3945, %v4153
        %4155 = vmatmul.f32.gmra.mxu0 %v967
        %v4156 = vpop.f32.mrf.mxu0
        %v4157 = vadd.f32 %v3948, %v4156
        %4158 = vmatmul.f32.gmra.mxu0 %v971
        %v4159 = vpop.f32.mrf.mxu0
        %v4160 = vadd.f32 %v3951, %v4159
        %4161 = vmatmul.f32.gmra.mxu0 %v975
        %v4162 = vpop.f32.mrf.mxu0
        %v4163 = vadd.f32 %v3954, %v4162
        %4164 = vmatmul.f32.gmra.mxu0 %v979
        %v4165 = vpop.f32.mrf.mxu0
        %v4166 = vadd.f32 %v3957, %v4165
        %4167 = vmatmul.f32.gmra.mxu0 %v983
        %v4168 = vpop.f32.mrf.mxu0
        %v4169 = vadd.f32 %v3960, %v4168
        %4170 = vmatmul.f32.gmra.mxu0 %v987
        %v4171 = vpop.f32.mrf.mxu0
        %v4172 = vadd.f32 %v3963, %v4171
        %4173 = vmatmul.f32.gmra.mxu0 %v991
        %v4174 = vpop.f32.mrf.mxu0
        %v4175 = vadd.f32 %v3966, %v4174
        %4176 = vmatmul.f32.gmra.mxu0 %v995
        %v4177 = vpop.f32.mrf.mxu0
        %v4178 = vadd.f32 %v3969, %v4177
        %4179 = vdwg.mxu0
        %4180 = vmatpush.msra.mxu0 %v1189
        %4181 = vmatpush.msra.mxu0 %v1185
        %4182 = vmatpush.msra.mxu0 %v1181
        %4183 = vmatpush.msra.mxu0 %v1177
        %4184 = vmatpush.msra.mxu0 %v1173
        %4185 = vmatpush.msra.mxu0 %v1169
        %4186 = vmatpush.msra.mxu0 %v1165
        %4187 = vmatpush.msra.mxu0 %v1161
        %4188 = vmatpush.msra.mxu0 %v1157
        %4189 = vmatpush.msra.mxu0 %v1153
        %4190 = vmatpush.msra.mxu0 %v1149
        %4191 = vmatpush.msra.mxu0 %v1145
        %4192 = vmatpush.msra.mxu0 %v1141
        %4193 = vmatpush.msra.mxu0 %v1137
        %4194 = vmatpush.msra.mxu0 %v1133
        %4195 = vmatpush.msra.mxu0 %v1129
        %4196 = vmatmul.f32.gmra.mxu0 %v744
        %v4197 = vpop.f32.mrf.mxu0
        %v4198 = vadd.f32 %v3989, %v4197
        %4199 = vmatmul.f32.gmra.mxu0 %v748
        %v4200 = vpop.f32.mrf.mxu0
        %v4201 = vadd.f32 %v3992, %v4200
        %4202 = vmatmul.f32.gmra.mxu0 %v752
        %v4203 = vpop.f32.mrf.mxu0
        %v4204 = vadd.f32 %v3995, %v4203
        %4205 = vmatmul.f32.gmra.mxu0 %v756
        %v4206 = vpop.f32.mrf.mxu0
        %v4207 = vadd.f32 %v3998, %v4206
        %4208 = vmatmul.f32.gmra.mxu0 %v760
        %v4209 = vpop.f32.mrf.mxu0
        %v4210 = vadd.f32 %v4001, %v4209
        %4211 = vmatmul.f32.gmra.mxu0 %v764
        %v4212 = vpop.f32.mrf.mxu0
        %v4213 = vadd.f32 %v4004, %v4212
        %4214 = vmatmul.f32.gmra.mxu0 %v768
        %v4215 = vpop.f32.mrf.mxu0
        %v4216 = vadd.f32 %v4007, %v4215
        %4217 = vmatmul.f32.gmra.mxu0 %v772
        %v4218 = vpop.f32.mrf.mxu0
        %v4219 = vadd.f32 %v4010, %v4218
        %4220 = vmatmul.f32.gmra.mxu0 %v776
        %v4221 = vpop.f32.mrf.mxu0
        %v4222 = vadd.f32 %v4013, %v4221
        %4223 = vmatmul.f32.gmra.mxu0 %v780
        %v4224 = vpop.f32.mrf.mxu0
        %v4225 = vadd.f32 %v4016, %v4224
        %4226 = vmatmul.f32.gmra.mxu0 %v784
        %v4227 = vpop.f32.mrf.mxu0
        %v4228 = vadd.f32 %v4019, %v4227
        %4229 = vmatmul.f32.gmra.mxu0 %v788
        %v4230 = vpop.f32.mrf.mxu0
        %v4231 = vadd.f32 %v4022, %v4230
        %4232 = vmatmul.f32.gmra.mxu0 %v792
        %v4233 = vpop.f32.mrf.mxu0
        %v4234 = vadd.f32 %v4025, %v4233
        %4235 = vmatmul.f32.gmra.mxu0 %v796
        %v4236 = vpop.f32.mrf.mxu0
        %v4237 = vadd.f32 %v4028, %v4236
        %4238 = vmatmul.f32.gmra.mxu0 %v800
        %v4239 = vpop.f32.mrf.mxu0
        %v4240 = vadd.f32 %v4031, %v4239
        %4241 = vmatmul.f32.gmra.mxu0 %v804
        %v4242 = vpop.f32.mrf.mxu0
        %v4243 = vadd.f32 %v4034, %v4242
        %4244 = vmatmul.f32.gmra.mxu0 %v808
        %v4245 = vpop.f32.mrf.mxu0
        %v4246 = vadd.f32 %v4037, %v4245
        %4247 = vmatmul.f32.gmra.mxu0 %v812
        %v4248 = vpop.f32.mrf.mxu0
        %v4249 = vadd.f32 %v4040, %v4248
        %4250 = vmatmul.f32.gmra.mxu0 %v816
        %v4251 = vpop.f32.mrf.mxu0
        %v4252 = vadd.f32 %v4043, %v4251
        %4253 = vmatmul.f32.gmra.mxu0 %v820
        %v4254 = vpop.f32.mrf.mxu0
        %v4255 = vadd.f32 %v4046, %v4254
        %4256 = vmatmul.f32.gmra.mxu0 %v824
        %v4257 = vpop.f32.mrf.mxu0
        %v4258 = vadd.f32 %v4049, %v4257
        %4259 = vmatmul.f32.gmra.mxu0 %v828
        %v4260 = vpop.f32.mrf.mxu0
        %v4261 = vadd.f32 %v4052, %v4260
        %4262 = vmatmul.f32.gmra.mxu0 %v832
        %v4263 = vpop.f32.mrf.mxu0
        %v4264 = vadd.f32 %v4055, %v4263
        %4265 = vmatmul.f32.gmra.mxu0 %v836
        %v4266 = vpop.f32.mrf.mxu0
        %v4267 = vadd.f32 %v4058, %v4266
        %4268 = vmatmul.f32.gmra.mxu0 %v840
        %v4269 = vpop.f32.mrf.mxu0
        %v4270 = vadd.f32 %v4061, %v4269
        %4271 = vmatmul.f32.gmra.mxu0 %v844
        %v4272 = vpop.f32.mrf.mxu0
        %v4273 = vadd.f32 %v4064, %v4272
        %4274 = vmatmul.f32.gmra.mxu0 %v848
        %v4275 = vpop.f32.mrf.mxu0
        %v4276 = vadd.f32 %v4067, %v4275
        %4277 = vmatmul.f32.gmra.mxu0 %v852
        %v4278 = vpop.f32.mrf.mxu0
        %v4279 = vadd.f32 %v4070, %v4278
        %4280 = vmatmul.f32.gmra.mxu0 %v856
        %v4281 = vpop.f32.mrf.mxu0
        %v4282 = vadd.f32 %v4073, %v4281
        %4283 = vmatmul.f32.gmra.mxu0 %v860
        %v4284 = vpop.f32.mrf.mxu0
        %v4285 = vadd.f32 %v4076, %v4284
        %4286 = vmatmul.f32.gmra.mxu0 %v864
        %v4287 = vpop.f32.mrf.mxu0
        %v4288 = vadd.f32 %v4079, %v4287
        %4289 = vmatmul.f32.gmra.mxu0 %v868
        %v4290 = vpop.f32.mrf.mxu0
        %v4291 = vadd.f32 %v4082, %v4290
        %4292 = vmatmul.f32.gmra.mxu0 %v872
        %v4293 = vpop.f32.mrf.mxu0
        %v4294 = vadd.f32 %v4085, %v4293
        %4295 = vmatmul.f32.gmra.mxu0 %v876
        %v4296 = vpop.f32.mrf.mxu0
        %v4297 = vadd.f32 %v4088, %v4296
        %4298 = vmatmul.f32.gmra.mxu0 %v880
        %v4299 = vpop.f32.mrf.mxu0
        %v4300 = vadd.f32 %v4091, %v4299
        %4301 = vmatmul.f32.gmra.mxu0 %v884
        %v4302 = vpop.f32.mrf.mxu0
        %v4303 = vadd.f32 %v4094, %v4302
        %4304 = vmatmul.f32.gmra.mxu0 %v888
        %v4305 = vpop.f32.mrf.mxu0
        %v4306 = vadd.f32 %v4097, %v4305
        %4307 = vmatmul.f32.gmra.mxu0 %v892
        %v4308 = vpop.f32.mrf.mxu0
        %v4309 = vadd.f32 %v4100, %v4308
        %4310 = vmatmul.f32.gmra.mxu0 %v896
        %v4311 = vpop.f32.mrf.mxu0
        %v4312 = vadd.f32 %v4103, %v4311
        %4313 = vmatmul.f32.gmra.mxu0 %v900
        %v4314 = vpop.f32.mrf.mxu0
        %v4315 = vadd.f32 %v4106, %v4314
        %4316 = vmatmul.f32.gmra.mxu0 %v904
        %v4317 = vpop.f32.mrf.mxu0
        %v4318 = vadd.f32 %v4109, %v4317
        %4319 = vmatmul.f32.gmra.mxu0 %v908
        %v4320 = vpop.f32.mrf.mxu0
        %v4321 = vadd.f32 %v4112, %v4320
        %4322 = vmatmul.f32.gmra.mxu0 %v912
        %v4323 = vpop.f32.mrf.mxu0
        %v4324 = vadd.f32 %v4115, %v4323
        %4325 = vmatmul.f32.gmra.mxu0 %v916
        %v4326 = vpop.f32.mrf.mxu0
        %v4327 = vadd.f32 %v4118, %v4326
        %4328 = vmatmul.f32.gmra.mxu0 %v920
        %v4329 = vpop.f32.mrf.mxu0
        %v4330 = vadd.f32 %v4121, %v4329
        %4331 = vmatmul.f32.gmra.mxu0 %v924
        %v4332 = vpop.f32.mrf.mxu0
        %v4333 = vadd.f32 %v4124, %v4332
        %4334 = vmatmul.f32.gmra.mxu0 %v928
        %v4335 = vpop.f32.mrf.mxu0
        %v4336 = vadd.f32 %v4127, %v4335
        %4337 = vmatmul.f32.gmra.mxu0 %v932
        %v4338 = vpop.f32.mrf.mxu0
        %v4339 = vadd.f32 %v4130, %v4338
        %4340 = vmatmul.f32.gmra.mxu0 %v936
        %v4341 = vpop.f32.mrf.mxu0
        %v4342 = vadd.f32 %v4133, %v4341
        %4343 = vmatmul.f32.gmra.mxu0 %v940
        %v4344 = vpop.f32.mrf.mxu0
        %v4345 = vadd.f32 %v4136, %v4344
        %4346 = vmatmul.f32.gmra.mxu0 %v944
        %v4347 = vpop.f32.mrf.mxu0
        %v4348 = vadd.f32 %v4139, %v4347
        %4349 = vmatmul.f32.gmra.mxu0 %v948
        %v4350 = vpop.f32.mrf.mxu0
        %v4351 = vadd.f32 %v4142, %v4350
        %4352 = vmatmul.f32.gmra.mxu0 %v952
        %v4353 = vpop.f32.mrf.mxu0
        %v4354 = vadd.f32 %v4145, %v4353
        %4355 = vmatmul.f32.gmra.mxu0 %v956
        %v4356 = vpop.f32.mrf.mxu0
        %v4357 = vadd.f32 %v4148, %v4356
        %4358 = vmatmul.f32.gmra.mxu0 %v960
        %v4359 = vpop.f32.mrf.mxu0
        %v4360 = vadd.f32 %v4151, %v4359
        %4361 = vmatmul.f32.gmra.mxu0 %v964
        %v4362 = vpop.f32.mrf.mxu0
        %v4363 = vadd.f32 %v4154, %v4362
        %4364 = vmatmul.f32.gmra.mxu0 %v968
        %v4365 = vpop.f32.mrf.mxu0
        %v4366 = vadd.f32 %v4157, %v4365
        %4367 = vmatmul.f32.gmra.mxu0 %v972
        %v4368 = vpop.f32.mrf.mxu0
        %v4369 = vadd.f32 %v4160, %v4368
        %4370 = vmatmul.f32.gmra.mxu0 %v976
        %v4371 = vpop.f32.mrf.mxu0
        %v4372 = vadd.f32 %v4163, %v4371
        %4373 = vmatmul.f32.gmra.mxu0 %v980
        %v4374 = vpop.f32.mrf.mxu0
        %v4375 = vadd.f32 %v4166, %v4374
        %4376 = vmatmul.f32.gmra.mxu0 %v984
        %v4377 = vpop.f32.mrf.mxu0
        %v4378 = vadd.f32 %v4169, %v4377
        %4379 = vmatmul.f32.gmra.mxu0 %v988
        %v4380 = vpop.f32.mrf.mxu0
        %v4381 = vadd.f32 %v4172, %v4380
        %4382 = vmatmul.f32.gmra.mxu0 %v992
        %v4383 = vpop.f32.mrf.mxu0
        %v4384 = vadd.f32 %v4175, %v4383
        %4385 = vmatmul.f32.gmra.mxu0 %v996
        %v4386 = vpop.f32.mrf.mxu0
        %v4387 = vadd.f32 %v4178, %v4386
        %4388 = vdwg.mxu0
        %4389 = vmatpush.msra.mxu0 %v1253
        %4390 = vmatpush.msra.mxu0 %v1249
        %4391 = vmatpush.msra.mxu0 %v1245
        %4392 = vmatpush.msra.mxu0 %v1241
        %4393 = vmatpush.msra.mxu0 %v1237
        %4394 = vmatpush.msra.mxu0 %v1233
        %4395 = vmatpush.msra.mxu0 %v1229
        %4396 = vmatpush.msra.mxu0 %v1225
        %4397 = vmatpush.msra.mxu0 %v1221
        %4398 = vmatpush.msra.mxu0 %v1217
        %4399 = vmatpush.msra.mxu0 %v1213
        %4400 = vmatpush.msra.mxu0 %v1209
        %4401 = vmatpush.msra.mxu0 %v1205
        %4402 = vmatpush.msra.mxu0 %v1201
        %4403 = vmatpush.msra.mxu0 %v1197
        %4404 = vmatpush.msra.mxu0 %v1193
        %4405 = vmatmul.f32.gmra.mxu0 %v745
        %v4406 = vpop.f32.mrf.mxu0
        %v4407 = vadd.f32 %v4198, %v4406
        %4408 = vmatmul.f32.gmra.mxu0 %v749
        %v4409 = vpop.f32.mrf.mxu0
        %v4410 = vadd.f32 %v4201, %v4409
        %4411 = vmatmul.f32.gmra.mxu0 %v753
        %v4412 = vpop.f32.mrf.mxu0
        %v4413 = vadd.f32 %v4204, %v4412
        %4414 = vmatmul.f32.gmra.mxu0 %v757
        %v4415 = vpop.f32.mrf.mxu0
        %v4416 = vadd.f32 %v4207, %v4415
        %4417 = vmatmul.f32.gmra.mxu0 %v761
        %v4418 = vpop.f32.mrf.mxu0
        %v4419 = vadd.f32 %v4210, %v4418
        %4420 = vmatmul.f32.gmra.mxu0 %v765
        %v4421 = vpop.f32.mrf.mxu0
        %v4422 = vadd.f32 %v4213, %v4421
        %4423 = vmatmul.f32.gmra.mxu0 %v769
        %v4424 = vpop.f32.mrf.mxu0
        %v4425 = vadd.f32 %v4216, %v4424
        %4426 = vmatmul.f32.gmra.mxu0 %v773
        %v4427 = vpop.f32.mrf.mxu0
        %v4428 = vadd.f32 %v4219, %v4427
        %4429 = vmatmul.f32.gmra.mxu0 %v777
        %v4430 = vpop.f32.mrf.mxu0
        %v4431 = vadd.f32 %v4222, %v4430
        %4432 = vmatmul.f32.gmra.mxu0 %v781
        %v4433 = vpop.f32.mrf.mxu0
        %v4434 = vadd.f32 %v4225, %v4433
        %4435 = vmatmul.f32.gmra.mxu0 %v785
        %v4436 = vpop.f32.mrf.mxu0
        %v4437 = vadd.f32 %v4228, %v4436
        %4438 = vmatmul.f32.gmra.mxu0 %v789
        %v4439 = vpop.f32.mrf.mxu0
        %v4440 = vadd.f32 %v4231, %v4439
        %4441 = vmatmul.f32.gmra.mxu0 %v793
        %v4442 = vpop.f32.mrf.mxu0
        %v4443 = vadd.f32 %v4234, %v4442
        %4444 = vmatmul.f32.gmra.mxu0 %v797
        %v4445 = vpop.f32.mrf.mxu0
        %v4446 = vadd.f32 %v4237, %v4445
        %4447 = vmatmul.f32.gmra.mxu0 %v801
        %v4448 = vpop.f32.mrf.mxu0
        %v4449 = vadd.f32 %v4240, %v4448
        %4450 = vmatmul.f32.gmra.mxu0 %v805
        %v4451 = vpop.f32.mrf.mxu0
        %v4452 = vadd.f32 %v4243, %v4451
        %4453 = vmatmul.f32.gmra.mxu0 %v809
        %v4454 = vpop.f32.mrf.mxu0
        %v4455 = vadd.f32 %v4246, %v4454
        %4456 = vmatmul.f32.gmra.mxu0 %v813
        %v4457 = vpop.f32.mrf.mxu0
        %v4458 = vadd.f32 %v4249, %v4457
        %4459 = vmatmul.f32.gmra.mxu0 %v817
        %v4460 = vpop.f32.mrf.mxu0
        %v4461 = vadd.f32 %v4252, %v4460
        %4462 = vmatmul.f32.gmra.mxu0 %v821
        %v4463 = vpop.f32.mrf.mxu0
        %v4464 = vadd.f32 %v4255, %v4463
        %4465 = vmatmul.f32.gmra.mxu0 %v825
        %v4466 = vpop.f32.mrf.mxu0
        %v4467 = vadd.f32 %v4258, %v4466
        %4468 = vmatmul.f32.gmra.mxu0 %v829
        %v4469 = vpop.f32.mrf.mxu0
        %v4470 = vadd.f32 %v4261, %v4469
        %4471 = vmatmul.f32.gmra.mxu0 %v833
        %v4472 = vpop.f32.mrf.mxu0
        %v4473 = vadd.f32 %v4264, %v4472
        %4474 = vmatmul.f32.gmra.mxu0 %v837
        %v4475 = vpop.f32.mrf.mxu0
        %v4476 = vadd.f32 %v4267, %v4475
        %4477 = vmatmul.f32.gmra.mxu0 %v841
        %v4478 = vpop.f32.mrf.mxu0
        %v4479 = vadd.f32 %v4270, %v4478
        %4480 = vmatmul.f32.gmra.mxu0 %v845
        %v4481 = vpop.f32.mrf.mxu0
        %v4482 = vadd.f32 %v4273, %v4481
        %4483 = vmatmul.f32.gmra.mxu0 %v849
        %v4484 = vpop.f32.mrf.mxu0
        %v4485 = vadd.f32 %v4276, %v4484
        %4486 = vmatmul.f32.gmra.mxu0 %v853
        %v4487 = vpop.f32.mrf.mxu0
        %v4488 = vadd.f32 %v4279, %v4487
        %4489 = vmatmul.f32.gmra.mxu0 %v857
        %v4490 = vpop.f32.mrf.mxu0
        %v4491 = vadd.f32 %v4282, %v4490
        %4492 = vmatmul.f32.gmra.mxu0 %v861
        %v4493 = vpop.f32.mrf.mxu0
        %v4494 = vadd.f32 %v4285, %v4493
        %4495 = vmatmul.f32.gmra.mxu0 %v865
        %v4496 = vpop.f32.mrf.mxu0
        %v4497 = vadd.f32 %v4288, %v4496
        %4498 = vmatmul.f32.gmra.mxu0 %v869
        %v4499 = vpop.f32.mrf.mxu0
        %v4500 = vadd.f32 %v4291, %v4499
        %4501 = vmatmul.f32.gmra.mxu0 %v873
        %v4502 = vpop.f32.mrf.mxu0
        %v4503 = vadd.f32 %v4294, %v4502
        %4504 = vmatmul.f32.gmra.mxu0 %v877
        %v4505 = vpop.f32.mrf.mxu0
        %v4506 = vadd.f32 %v4297, %v4505
        %4507 = vmatmul.f32.gmra.mxu0 %v881
        %v4508 = vpop.f32.mrf.mxu0
        %v4509 = vadd.f32 %v4300, %v4508
        %4510 = vmatmul.f32.gmra.mxu0 %v885
        %v4511 = vpop.f32.mrf.mxu0
        %v4512 = vadd.f32 %v4303, %v4511
        %4513 = vmatmul.f32.gmra.mxu0 %v889
        %v4514 = vpop.f32.mrf.mxu0
        %v4515 = vadd.f32 %v4306, %v4514
        %4516 = vmatmul.f32.gmra.mxu0 %v893
        %v4517 = vpop.f32.mrf.mxu0
        %v4518 = vadd.f32 %v4309, %v4517
        %4519 = vmatmul.f32.gmra.mxu0 %v897
        %v4520 = vpop.f32.mrf.mxu0
        %v4521 = vadd.f32 %v4312, %v4520
        %4522 = vmatmul.f32.gmra.mxu0 %v901
        %v4523 = vpop.f32.mrf.mxu0
        %v4524 = vadd.f32 %v4315, %v4523
        %4525 = vmatmul.f32.gmra.mxu0 %v905
        %v4526 = vpop.f32.mrf.mxu0
        %v4527 = vadd.f32 %v4318, %v4526
        %4528 = vmatmul.f32.gmra.mxu0 %v909
        %v4529 = vpop.f32.mrf.mxu0
        %v4530 = vadd.f32 %v4321, %v4529
        %4531 = vmatmul.f32.gmra.mxu0 %v913
        %v4532 = vpop.f32.mrf.mxu0
        %v4533 = vadd.f32 %v4324, %v4532
        %4534 = vmatmul.f32.gmra.mxu0 %v917
        %v4535 = vpop.f32.mrf.mxu0
        %v4536 = vadd.f32 %v4327, %v4535
        %4537 = vmatmul.f32.gmra.mxu0 %v921
        %v4538 = vpop.f32.mrf.mxu0
        %v4539 = vadd.f32 %v4330, %v4538
        %4540 = vmatmul.f32.gmra.mxu0 %v925
        %v4541 = vpop.f32.mrf.mxu0
        %v4542 = vadd.f32 %v4333, %v4541
        %4543 = vmatmul.f32.gmra.mxu0 %v929
        %v4544 = vpop.f32.mrf.mxu0
        %v4545 = vadd.f32 %v4336, %v4544
        %4546 = vmatmul.f32.gmra.mxu0 %v933
        %v4547 = vpop.f32.mrf.mxu0
        %v4548 = vadd.f32 %v4339, %v4547
        %4549 = vmatmul.f32.gmra.mxu0 %v937
        %v4550 = vpop.f32.mrf.mxu0
        %v4551 = vadd.f32 %v4342, %v4550
        %4552 = vmatmul.f32.gmra.mxu0 %v941
        %v4553 = vpop.f32.mrf.mxu0
        %v4554 = vadd.f32 %v4345, %v4553
        %4555 = vmatmul.f32.gmra.mxu0 %v945
        %v4556 = vpop.f32.mrf.mxu0
        %v4557 = vadd.f32 %v4348, %v4556
        %4558 = vmatmul.f32.gmra.mxu0 %v949
        %v4559 = vpop.f32.mrf.mxu0
        %v4560 = vadd.f32 %v4351, %v4559
        %4561 = vmatmul.f32.gmra.mxu0 %v953
        %v4562 = vpop.f32.mrf.mxu0
        %v4563 = vadd.f32 %v4354, %v4562
        %4564 = vmatmul.f32.gmra.mxu0 %v957
        %v4565 = vpop.f32.mrf.mxu0
        %v4566 = vadd.f32 %v4357, %v4565
        %4567 = vmatmul.f32.gmra.mxu0 %v961
        %v4568 = vpop.f32.mrf.mxu0
        %v4569 = vadd.f32 %v4360, %v4568
        %4570 = vmatmul.f32.gmra.mxu0 %v965
        %v4571 = vpop.f32.mrf.mxu0
        %v4572 = vadd.f32 %v4363, %v4571
        %4573 = vmatmul.f32.gmra.mxu0 %v969
        %v4574 = vpop.f32.mrf.mxu0
        %v4575 = vadd.f32 %v4366, %v4574
        %4576 = vmatmul.f32.gmra.mxu0 %v973
        %v4577 = vpop.f32.mrf.mxu0
        %v4578 = vadd.f32 %v4369, %v4577
        %4579 = vmatmul.f32.gmra.mxu0 %v977
        %v4580 = vpop.f32.mrf.mxu0
        %v4581 = vadd.f32 %v4372, %v4580
        %4582 = vmatmul.f32.gmra.mxu0 %v981
        %v4583 = vpop.f32.mrf.mxu0
        %v4584 = vadd.f32 %v4375, %v4583
        %4585 = vmatmul.f32.gmra.mxu0 %v985
        %v4586 = vpop.f32.mrf.mxu0
        %v4587 = vadd.f32 %v4378, %v4586
        %4588 = vmatmul.f32.gmra.mxu0 %v989
        %v4589 = vpop.f32.mrf.mxu0
        %v4590 = vadd.f32 %v4381, %v4589
        %4591 = vmatmul.f32.gmra.mxu0 %v993
        %v4592 = vpop.f32.mrf.mxu0
        %v4593 = vadd.f32 %v4384, %v4592
        %4594 = vmatmul.f32.gmra.mxu0 %v997
        %v4595 = vpop.f32.mrf.mxu0
        %v4596 = vadd.f32 %v4387, %v4595
        %4597 = vdwg.mxu0
        %v4598 = vadd.f32 %v486, %v1899
        %v4599 = vadd.f32 %v487, %v2735
        %v4600 = vadd.f32 %v488, %v3571
        %v4601 = vadd.f32 %v489, %v4407
        %v4602 = vadd.f32 %v490, %v1902
        %v4603 = vadd.f32 %v491, %v2738
        %v4604 = vadd.f32 %v492, %v3574
        %v4605 = vadd.f32 %v493, %v4410
        %v4606 = vadd.f32 %v494, %v1905
        %v4607 = vadd.f32 %v495, %v2741
        %v4608 = vadd.f32 %v496, %v3577
        %v4609 = vadd.f32 %v497, %v4413
        %v4610 = vadd.f32 %v498, %v1908
        %v4611 = vadd.f32 %v499, %v2744
        %v4612 = vadd.f32 %v500, %v3580
        %v4613 = vadd.f32 %v501, %v4416
        %v4614 = vadd.f32 %v502, %v1911
        %v4615 = vadd.f32 %v503, %v2747
        %v4616 = vadd.f32 %v504, %v3583
        %v4617 = vadd.f32 %v505, %v4419
        %v4618 = vadd.f32 %v506, %v1914
        %v4619 = vadd.f32 %v507, %v2750
        %v4620 = vadd.f32 %v508, %v3586
        %v4621 = vadd.f32 %v509, %v4422
        %v4622 = vadd.f32 %v510, %v1917
        %v4623 = vadd.f32 %v511, %v2753
        %v4624 = vadd.f32 %v512, %v3589
        %v4625 = vadd.f32 %v513, %v4425
        %v4626 = vadd.f32 %v514, %v1920
        %v4627 = vadd.f32 %v515, %v2756
        %v4628 = vadd.f32 %v516, %v3592
        %v4629 = vadd.f32 %v517, %v4428
        %v4630 = vadd.f32 %v518, %v1923
        %v4631 = vadd.f32 %v519, %v2759
        %v4632 = vadd.f32 %v520, %v3595
        %v4633 = vadd.f32 %v521, %v4431
        %v4634 = vadd.f32 %v522, %v1926
        %v4635 = vadd.f32 %v523, %v2762
        %v4636 = vadd.f32 %v524, %v3598
        %v4637 = vadd.f32 %v525, %v4434
        %v4638 = vadd.f32 %v526, %v1929
        %v4639 = vadd.f32 %v527, %v2765
        %v4640 = vadd.f32 %v528, %v3601
        %v4641 = vadd.f32 %v529, %v4437
        %v4642 = vadd.f32 %v530, %v1932
        %v4643 = vadd.f32 %v531, %v2768
        %v4644 = vadd.f32 %v532, %v3604
        %v4645 = vadd.f32 %v533, %v4440
        %v4646 = vadd.f32 %v534, %v1935
        %v4647 = vadd.f32 %v535, %v2771
        %v4648 = vadd.f32 %v536, %v3607
        %v4649 = vadd.f32 %v537, %v4443
        %v4650 = vadd.f32 %v538, %v1938
        %v4651 = vadd.f32 %v539, %v2774
        %v4652 = vadd.f32 %v540, %v3610
        %v4653 = vadd.f32 %v541, %v4446
        %v4654 = vadd.f32 %v542, %v1941
        %v4655 = vadd.f32 %v543, %v2777
        %v4656 = vadd.f32 %v544, %v3613
        %v4657 = vadd.f32 %v545, %v4449
        %v4658 = vadd.f32 %v546, %v1944
        %v4659 = vadd.f32 %v547, %v2780
        %v4660 = vadd.f32 %v548, %v3616
        %v4661 = vadd.f32 %v549, %v4452
        %v4662 = vadd.f32 %v550, %v1947
        %v4663 = vadd.f32 %v551, %v2783
        %v4664 = vadd.f32 %v552, %v3619
        %v4665 = vadd.f32 %v553, %v4455
        %v4666 = vadd.f32 %v554, %v1950
        %v4667 = vadd.f32 %v555, %v2786
        %v4668 = vadd.f32 %v556, %v3622
        %v4669 = vadd.f32 %v557, %v4458
        %v4670 = vadd.f32 %v558, %v1953
        %v4671 = vadd.f32 %v559, %v2789
        %v4672 = vadd.f32 %v560, %v3625
        %v4673 = vadd.f32 %v561, %v4461
        %v4674 = vadd.f32 %v562, %v1956
        %v4675 = vadd.f32 %v563, %v2792
        %v4676 = vadd.f32 %v564, %v3628
        %v4677 = vadd.f32 %v565, %v4464
        %v4678 = vadd.f32 %v566, %v1959
        %v4679 = vadd.f32 %v567, %v2795
        %v4680 = vadd.f32 %v568, %v3631
        %v4681 = vadd.f32 %v569, %v4467
        %v4682 = vadd.f32 %v570, %v1962
        %v4683 = vadd.f32 %v571, %v2798
        %v4684 = vadd.f32 %v572, %v3634
        %v4685 = vadd.f32 %v573, %v4470
        %v4686 = vadd.f32 %v574, %v1965
        %v4687 = vadd.f32 %v575, %v2801
        %v4688 = vadd.f32 %v576, %v3637
        %v4689 = vadd.f32 %v577, %v4473
        %v4690 = vadd.f32 %v578, %v1968
        %v4691 = vadd.f32 %v579, %v2804
        %v4692 = vadd.f32 %v580, %v3640
        %v4693 = vadd.f32 %v581, %v4476
        %v4694 = vadd.f32 %v582, %v1971
        %v4695 = vadd.f32 %v583, %v2807
        %v4696 = vadd.f32 %v584, %v3643
        %v4697 = vadd.f32 %v585, %v4479
        %v4698 = vadd.f32 %v586, %v1974
        %v4699 = vadd.f32 %v587, %v2810
        %v4700 = vadd.f32 %v588, %v3646
        %v4701 = vadd.f32 %v589, %v4482
        %v4702 = vadd.f32 %v590, %v1977
        %v4703 = vadd.f32 %v591, %v2813
        %v4704 = vadd.f32 %v592, %v3649
        %v4705 = vadd.f32 %v593, %v4485
        %v4706 = vadd.f32 %v594, %v1980
        %v4707 = vadd.f32 %v595, %v2816
        %v4708 = vadd.f32 %v596, %v3652
        %v4709 = vadd.f32 %v597, %v4488
        %v4710 = vadd.f32 %v598, %v1983
        %v4711 = vadd.f32 %v599, %v2819
        %v4712 = vadd.f32 %v600, %v3655
        %v4713 = vadd.f32 %v601, %v4491
        %v4714 = vadd.f32 %v602, %v1986
        %v4715 = vadd.f32 %v603, %v2822
        %v4716 = vadd.f32 %v604, %v3658
        %v4717 = vadd.f32 %v605, %v4494
        %v4718 = vadd.f32 %v606, %v1989
        %v4719 = vadd.f32 %v607, %v2825
        %v4720 = vadd.f32 %v608, %v3661
        %v4721 = vadd.f32 %v609, %v4497
        %v4722 = vadd.f32 %v610, %v1992
        %v4723 = vadd.f32 %v611, %v2828
        %v4724 = vadd.f32 %v612, %v3664
        %v4725 = vadd.f32 %v613, %v4500
        %v4726 = vadd.f32 %v614, %v1995
        %v4727 = vadd.f32 %v615, %v2831
        %v4728 = vadd.f32 %v616, %v3667
        %v4729 = vadd.f32 %v617, %v4503
        %v4730 = vadd.f32 %v618, %v1998
        %v4731 = vadd.f32 %v619, %v2834
        %v4732 = vadd.f32 %v620, %v3670
        %v4733 = vadd.f32 %v621, %v4506
        %v4734 = vadd.f32 %v622, %v2001
        %v4735 = vadd.f32 %v623, %v2837
        %v4736 = vadd.f32 %v624, %v3673
        %v4737 = vadd.f32 %v625, %v4509
        %v4738 = vadd.f32 %v626, %v2004
        %v4739 = vadd.f32 %v627, %v2840
        %v4740 = vadd.f32 %v628, %v3676
        %v4741 = vadd.f32 %v629, %v4512
        %v4742 = vadd.f32 %v630, %v2007
        %v4743 = vadd.f32 %v631, %v2843
        %v4744 = vadd.f32 %v632, %v3679
        %v4745 = vadd.f32 %v633, %v4515
        %v4746 = vadd.f32 %v634, %v2010
        %v4747 = vadd.f32 %v635, %v2846
        %v4748 = vadd.f32 %v636, %v3682
        %v4749 = vadd.f32 %v637, %v4518
        %v4750 = vadd.f32 %v638, %v2013
        %v4751 = vadd.f32 %v639, %v2849
        %v4752 = vadd.f32 %v640, %v3685
        %v4753 = vadd.f32 %v641, %v4521
        %v4754 = vadd.f32 %v642, %v2016
        %v4755 = vadd.f32 %v643, %v2852
        %v4756 = vadd.f32 %v644, %v3688
        %v4757 = vadd.f32 %v645, %v4524
        %v4758 = vadd.f32 %v646, %v2019
        %v4759 = vadd.f32 %v647, %v2855
        %v4760 = vadd.f32 %v648, %v3691
        %v4761 = vadd.f32 %v649, %v4527
        %v4762 = vadd.f32 %v650, %v2022
        %v4763 = vadd.f32 %v651, %v2858
        %v4764 = vadd.f32 %v652, %v3694
        %v4765 = vadd.f32 %v653, %v4530
        %v4766 = vadd.f32 %v654, %v2025
        %v4767 = vadd.f32 %v655, %v2861
        %v4768 = vadd.f32 %v656, %v3697
        %v4769 = vadd.f32 %v657, %v4533
        %v4770 = vadd.f32 %v658, %v2028
        %v4771 = vadd.f32 %v659, %v2864
        %v4772 = vadd.f32 %v660, %v3700
        %v4773 = vadd.f32 %v661, %v4536
        %v4774 = vadd.f32 %v662, %v2031
        %v4775 = vadd.f32 %v663, %v2867
        %v4776 = vadd.f32 %v664, %v3703
        %v4777 = vadd.f32 %v665, %v4539
        %v4778 = vadd.f32 %v666, %v2034
        %v4779 = vadd.f32 %v667, %v2870
        %v4780 = vadd.f32 %v668, %v3706
        %v4781 = vadd.f32 %v669, %v4542
        %v4782 = vadd.f32 %v670, %v2037
        %v4783 = vadd.f32 %v671, %v2873
        %v4784 = vadd.f32 %v672, %v3709
        %v4785 = vadd.f32 %v673, %v4545
        %v4786 = vadd.f32 %v674, %v2040
        %v4787 = vadd.f32 %v675, %v2876
        %v4788 = vadd.f32 %v676, %v3712
        %v4789 = vadd.f32 %v677, %v4548
        %v4790 = vadd.f32 %v678, %v2043
        %v4791 = vadd.f32 %v679, %v2879
        %v4792 = vadd.f32 %v680, %v3715
        %v4793 = vadd.f32 %v681, %v4551
        %v4794 = vadd.f32 %v682, %v2046
        %v4795 = vadd.f32 %v683, %v2882
        %v4796 = vadd.f32 %v684, %v3718
        %v4797 = vadd.f32 %v685, %v4554
        %v4798 = vadd.f32 %v686, %v2049
        %v4799 = vadd.f32 %v687, %v2885
        %v4800 = vadd.f32 %v688, %v3721
        %v4801 = vadd.f32 %v689, %v4557
        %v4802 = vadd.f32 %v690, %v2052
        %v4803 = vadd.f32 %v691, %v2888
        %v4804 = vadd.f32 %v692, %v3724
        %v4805 = vadd.f32 %v693, %v4560
        %v4806 = vadd.f32 %v694, %v2055
        %v4807 = vadd.f32 %v695, %v2891
        %v4808 = vadd.f32 %v696, %v3727
        %v4809 = vadd.f32 %v697, %v4563
        %v4810 = vadd.f32 %v698, %v2058
        %v4811 = vadd.f32 %v699, %v2894
        %v4812 = vadd.f32 %v700, %v3730
        %v4813 = vadd.f32 %v701, %v4566
        %v4814 = vadd.f32 %v702, %v2061
        %v4815 = vadd.f32 %v703, %v2897
        %v4816 = vadd.f32 %v704, %v3733
        %v4817 = vadd.f32 %v705, %v4569
        %v4818 = vadd.f32 %v706, %v2064
        %v4819 = vadd.f32 %v707, %v2900
        %v4820 = vadd.f32 %v708, %v3736
        %v4821 = vadd.f32 %v709, %v4572
        %v4822 = vadd.f32 %v710, %v2067
        %v4823 = vadd.f32 %v711, %v2903
        %v4824 = vadd.f32 %v712, %v3739
        %v4825 = vadd.f32 %v713, %v4575
        %v4826 = vadd.f32 %v714, %v2070
        %v4827 = vadd.f32 %v715, %v2906
        %v4828 = vadd.f32 %v716, %v3742
        %v4829 = vadd.f32 %v717, %v4578
        %v4830 = vadd.f32 %v718, %v2073
        %v4831 = vadd.f32 %v719, %v2909
        %v4832 = vadd.f32 %v720, %v3745
        %v4833 = vadd.f32 %v721, %v4581
        %v4834 = vadd.f32 %v722, %v2076
        %v4835 = vadd.f32 %v723, %v2912
        %v4836 = vadd.f32 %v724, %v3748
        %v4837 = vadd.f32 %v725, %v4584
        %v4838 = vadd.f32 %v726, %v2079
        %v4839 = vadd.f32 %v727, %v2915
        %v4840 = vadd.f32 %v728, %v3751
        %v4841 = vadd.f32 %v729, %v4587
        %v4842 = vadd.f32 %v730, %v2082
        %v4843 = vadd.f32 %v731, %v2918
        %v4844 = vadd.f32 %v732, %v3754
        %v4845 = vadd.f32 %v733, %v4590
        %v4846 = vadd.f32 %v734, %v2085
        %v4847 = vadd.f32 %v735, %v2921
        %v4848 = vadd.f32 %v736, %v3757
        %v4849 = vadd.f32 %v737, %v4593
        %v4850 = vadd.f32 %v738, %v2088
        %v4851 = vadd.f32 %v739, %v2924
        %v4852 = vadd.f32 %v740, %v3760
        %v4853 = vadd.f32 %v741, %v4596
        %4854 = vst [vmem:[#allocation2] sm:$0xff] %v4598
        %4855 = vst [vmem:[#allocation2 + $0x8] sm:$0xff] %v4599
        %4856 = vst [vmem:[#allocation2 + $0x10] sm:$0xff] %v4600
        %4857 = vst [vmem:[#allocation2 + $0x18] sm:$0xff] %v4601
        %4858 = vst [vmem:[#allocation2 + $0x20] sm:$0xff] %v4602
        %4859 = vst [vmem:[#allocation2 + $0x28] sm:$0xff] %v4603
        %4860 = vst [vmem:[#allocation2 + $0x30] sm:$0xff] %v4604
        %4861 = vst [vmem:[#allocation2 + $0x38] sm:$0xff] %v4605
        %4862 = vst [vmem:[#allocation2 + $0x40] sm:$0xff] %v4606
        %4863 = vst [vmem:[#allocation2 + $0x48] sm:$0xff] %v4607
        %4864 = vst [vmem:[#allocation2 + $0x50] sm:$0xff] %v4608
        %4865 = vst [vmem:[#allocation2 + $0x58] sm:$0xff] %v4609
        %4866 = vst [vmem:[#allocation2 + $0x60] sm:$0xff] %v4610
        %4867 = vst [vmem:[#allocation2 + $0x68] sm:$0xff] %v4611
        %4868 = vst [vmem:[#allocation2 + $0x70] sm:$0xff] %v4612
        %4869 = vst [vmem:[#allocation2 + $0x78] sm:$0xff] %v4613
        %4870 = vst [vmem:[#allocation2 + $0x80] sm:$0xff] %v4614
        %4871 = vst [vmem:[#allocation2 + $0x88] sm:$0xff] %v4615
        %4872 = vst [vmem:[#allocation2 + $0x90] sm:$0xff] %v4616
        %4873 = vst [vmem:[#allocation2 + $0x98] sm:$0xff] %v4617
        %4874 = vst [vmem:[#allocation2 + $0xa0] sm:$0xff] %v4618
        %4875 = vst [vmem:[#allocation2 + $0xa8] sm:$0xff] %v4619
        %4876 = vst [vmem:[#allocation2 + $0xb0] sm:$0xff] %v4620
        %4877 = vst [vmem:[#allocation2 + $0xb8] sm:$0xff] %v4621
        %4878 = vst [vmem:[#allocation2 + $0xc0] sm:$0xff] %v4622
        %4879 = vst [vmem:[#allocation2 + $0xc8] sm:$0xff] %v4623
        %4880 = vst [vmem:[#allocation2 + $0xd0] sm:$0xff] %v4624
        %4881 = vst [vmem:[#allocation2 + $0xd8] sm:$0xff] %v4625
        %4882 = vst [vmem:[#allocation2 + $0xe0] sm:$0xff] %v4626
        %4883 = vst [vmem:[#allocation2 + $0xe8] sm:$0xff] %v4627
        %4884 = vst [vmem:[#allocation2 + $0xf0] sm:$0xff] %v4628
        %4885 = vst [vmem:[#allocation2 + $0xf8] sm:$0xff] %v4629
        %4886 = vst [vmem:[#allocation2 + $0x100] sm:$0xff] %v4630
        %4887 = vst [vmem:[#allocation2 + $0x108] sm:$0xff] %v4631
        %4888 = vst [vmem:[#allocation2 + $0x110] sm:$0xff] %v4632
        %4889 = vst [vmem:[#allocation2 + $0x118] sm:$0xff] %v4633
        %4890 = vst [vmem:[#allocation2 + $0x120] sm:$0xff] %v4634
        %4891 = vst [vmem:[#allocation2 + $0x128] sm:$0xff] %v4635
        %4892 = vst [vmem:[#allocation2 + $0x130] sm:$0xff] %v4636
        %4893 = vst [vmem:[#allocation2 + $0x138] sm:$0xff] %v4637
        %4894 = vst [vmem:[#allocation2 + $0x140] sm:$0xff] %v4638
        %4895 = vst [vmem:[#allocation2 + $0x148] sm:$0xff] %v4639
        %4896 = vst [vmem:[#allocation2 + $0x150] sm:$0xff] %v4640
        %4897 = vst [vmem:[#allocation2 + $0x158] sm:$0xff] %v4641
        %4898 = vst [vmem:[#allocation2 + $0x160] sm:$0xff] %v4642
        %4899 = vst [vmem:[#allocation2 + $0x168] sm:$0xff] %v4643
        %4900 = vst [vmem:[#allocation2 + $0x170] sm:$0xff] %v4644
        %4901 = vst [vmem:[#allocation2 + $0x178] sm:$0xff] %v4645
        %4902 = vst [vmem:[#allocation2 + $0x180] sm:$0xff] %v4646
        %4903 = vst [vmem:[#allocation2 + $0x188] sm:$0xff] %v4647
        %4904 = vst [vmem:[#allocation2 + $0x190] sm:$0xff] %v4648
        %4905 = vst [vmem:[#allocation2 + $0x198] sm:$0xff] %v4649
        %4906 = vst [vmem:[#allocation2 + $0x1a0] sm:$0xff] %v4650
        %4907 = vst [vmem:[#allocation2 + $0x1a8] sm:$0xff] %v4651
        %4908 = vst [vmem:[#allocation2 + $0x1b0] sm:$0xff] %v4652
        %4909 = vst [vmem:[#allocation2 + $0x1b8] sm:$0xff] %v4653
        %4910 = vst [vmem:[#allocation2 + $0x1c0] sm:$0xff] %v4654
        %4911 = vst [vmem:[#allocation2 + $0x1c8] sm:$0xff] %v4655
        %4912 = vst [vmem:[#allocation2 + $0x1d0] sm:$0xff] %v4656
        %4913 = vst [vmem:[#allocation2 + $0x1d8] sm:$0xff] %v4657
        %4914 = vst [vmem:[#allocation2 + $0x1e0] sm:$0xff] %v4658
        %4915 = vst [vmem:[#allocation2 + $0x1e8] sm:$0xff] %v4659
        %4916 = vst [vmem:[#allocation2 + $0x1f0] sm:$0xff] %v4660
        %4917 = vst [vmem:[#allocation2 + $0x1f8] sm:$0xff] %v4661
        %4918 = vst [vmem:[#allocation2 + $0x200] sm:$0xff] %v4662
        %4919 = vst [vmem:[#allocation2 + $0x208] sm:$0xff] %v4663
        %4920 = vst [vmem:[#allocation2 + $0x210] sm:$0xff] %v4664
        %4921 = vst [vmem:[#allocation2 + $0x218] sm:$0xff] %v4665
        %4922 = vst [vmem:[#allocation2 + $0x220] sm:$0xff] %v4666
        %4923 = vst [vmem:[#allocation2 + $0x228] sm:$0xff] %v4667
        %4924 = vst [vmem:[#allocation2 + $0x230] sm:$0xff] %v4668
        %4925 = vst [vmem:[#allocation2 + $0x238] sm:$0xff] %v4669
        %4926 = vst [vmem:[#allocation2 + $0x240] sm:$0xff] %v4670
        %4927 = vst [vmem:[#allocation2 + $0x248] sm:$0xff] %v4671
        %4928 = vst [vmem:[#allocation2 + $0x250] sm:$0xff] %v4672
        %4929 = vst [vmem:[#allocation2 + $0x258] sm:$0xff] %v4673
        %4930 = vst [vmem:[#allocation2 + $0x260] sm:$0xff] %v4674
        %4931 = vst [vmem:[#allocation2 + $0x268] sm:$0xff] %v4675
        %4932 = vst [vmem:[#allocation2 + $0x270] sm:$0xff] %v4676
        %4933 = vst [vmem:[#allocation2 + $0x278] sm:$0xff] %v4677
        %4934 = vst [vmem:[#allocation2 + $0x280] sm:$0xff] %v4678
        %4935 = vst [vmem:[#allocation2 + $0x288] sm:$0xff] %v4679
        %4936 = vst [vmem:[#allocation2 + $0x290] sm:$0xff] %v4680
        %4937 = vst [vmem:[#allocation2 + $0x298] sm:$0xff] %v4681
        %4938 = vst [vmem:[#allocation2 + $0x2a0] sm:$0xff] %v4682
        %4939 = vst [vmem:[#allocation2 + $0x2a8] sm:$0xff] %v4683
        %4940 = vst [vmem:[#allocation2 + $0x2b0] sm:$0xff] %v4684
        %4941 = vst [vmem:[#allocation2 + $0x2b8] sm:$0xff] %v4685
        %4942 = vst [vmem:[#allocation2 + $0x2c0] sm:$0xff] %v4686
        %4943 = vst [vmem:[#allocation2 + $0x2c8] sm:$0xff] %v4687
        %4944 = vst [vmem:[#allocation2 + $0x2d0] sm:$0xff] %v4688
        %4945 = vst [vmem:[#allocation2 + $0x2d8] sm:$0xff] %v4689
        %4946 = vst [vmem:[#allocation2 + $0x2e0] sm:$0xff] %v4690
        %4947 = vst [vmem:[#allocation2 + $0x2e8] sm:$0xff] %v4691
        %4948 = vst [vmem:[#allocation2 + $0x2f0] sm:$0xff] %v4692
        %4949 = vst [vmem:[#allocation2 + $0x2f8] sm:$0xff] %v4693
        %4950 = vst [vmem:[#allocation2 + $0x300] sm:$0xff] %v4694
        %4951 = vst [vmem:[#allocation2 + $0x308] sm:$0xff] %v4695
        %4952 = vst [vmem:[#allocation2 + $0x310] sm:$0xff] %v4696
        %4953 = vst [vmem:[#allocation2 + $0x318] sm:$0xff] %v4697
        %4954 = vst [vmem:[#allocation2 + $0x320] sm:$0xff] %v4698
        %4955 = vst [vmem:[#allocation2 + $0x328] sm:$0xff] %v4699
        %4956 = vst [vmem:[#allocation2 + $0x330] sm:$0xff] %v4700
        %4957 = vst [vmem:[#allocation2 + $0x338] sm:$0xff] %v4701
        %4958 = vst [vmem:[#allocation2 + $0x340] sm:$0xff] %v4702
        %4959 = vst [vmem:[#allocation2 + $0x348] sm:$0xff] %v4703
        %4960 = vst [vmem:[#allocation2 + $0x350] sm:$0xff] %v4704
        %4961 = vst [vmem:[#allocation2 + $0x358] sm:$0xff] %v4705
        %4962 = vst [vmem:[#allocation2 + $0x360] sm:$0xff] %v4706
        %4963 = vst [vmem:[#allocation2 + $0x368] sm:$0xff] %v4707
        %4964 = vst [vmem:[#allocation2 + $0x370] sm:$0xff] %v4708
        %4965 = vst [vmem:[#allocation2 + $0x378] sm:$0xff] %v4709
        %4966 = vst [vmem:[#allocation2 + $0x380] sm:$0xff] %v4710
        %4967 = vst [vmem:[#allocation2 + $0x388] sm:$0xff] %v4711
        %4968 = vst [vmem:[#allocation2 + $0x390] sm:$0xff] %v4712
        %4969 = vst [vmem:[#allocation2 + $0x398] sm:$0xff] %v4713
        %4970 = vst [vmem:[#allocation2 + $0x3a0] sm:$0xff] %v4714
        %4971 = vst [vmem:[#allocation2 + $0x3a8] sm:$0xff] %v4715
        %4972 = vst [vmem:[#allocation2 + $0x3b0] sm:$0xff] %v4716
        %4973 = vst [vmem:[#allocation2 + $0x3b8] sm:$0xff] %v4717
        %4974 = vst [vmem:[#allocation2 + $0x3c0] sm:$0xff] %v4718
        %4975 = vst [vmem:[#allocation2 + $0x3c8] sm:$0xff] %v4719
        %4976 = vst [vmem:[#allocation2 + $0x3d0] sm:$0xff] %v4720
        %4977 = vst [vmem:[#allocation2 + $0x3d8] sm:$0xff] %v4721
        %4978 = vst [vmem:[#allocation2 + $0x3e0] sm:$0xff] %v4722
        %4979 = vst [vmem:[#allocation2 + $0x3e8] sm:$0xff] %v4723
        %4980 = vst [vmem:[#allocation2 + $0x3f0] sm:$0xff] %v4724
        %4981 = vst [vmem:[#allocation2 + $0x3f8] sm:$0xff] %v4725
        %4982 = vst [vmem:[#allocation2 + $0x400] sm:$0xff] %v4726
        %4983 = vst [vmem:[#allocation2 + $0x408] sm:$0xff] %v4727
        %4984 = vst [vmem:[#allocation2 + $0x410] sm:$0xff] %v4728
        %4985 = vst [vmem:[#allocation2 + $0x418] sm:$0xff] %v4729
        %4986 = vst [vmem:[#allocation2 + $0x420] sm:$0xff] %v4730
        %4987 = vst [vmem:[#allocation2 + $0x428] sm:$0xff] %v4731
        %4988 = vst [vmem:[#allocation2 + $0x430] sm:$0xff] %v4732
        %4989 = vst [vmem:[#allocation2 + $0x438] sm:$0xff] %v4733
        %4990 = vst [vmem:[#allocation2 + $0x440] sm:$0xff] %v4734
        %4991 = vst [vmem:[#allocation2 + $0x448] sm:$0xff] %v4735
        %4992 = vst [vmem:[#allocation2 + $0x450] sm:$0xff] %v4736
        %4993 = vst [vmem:[#allocation2 + $0x458] sm:$0xff] %v4737
        %4994 = vst [vmem:[#allocation2 + $0x460] sm:$0xff] %v4738
        %4995 = vst [vmem:[#allocation2 + $0x468] sm:$0xff] %v4739
        %4996 = vst [vmem:[#allocation2 + $0x470] sm:$0xff] %v4740
        %4997 = vst [vmem:[#allocation2 + $0x478] sm:$0xff] %v4741
        %4998 = vst [vmem:[#allocation2 + $0x480] sm:$0xff] %v4742
        %4999 = vst [vmem:[#allocation2 + $0x488] sm:$0xff] %v4743
        %5000 = vst [vmem:[#allocation2 + $0x490] sm:$0xff] %v4744
        %5001 = vst [vmem:[#allocation2 + $0x498] sm:$0xff] %v4745
        %5002 = vst [vmem:[#allocation2 + $0x4a0] sm:$0xff] %v4746
        %5003 = vst [vmem:[#allocation2 + $0x4a8] sm:$0xff] %v4747
        %5004 = vst [vmem:[#allocation2 + $0x4b0] sm:$0xff] %v4748
        %5005 = vst [vmem:[#allocation2 + $0x4b8] sm:$0xff] %v4749
        %5006 = vst [vmem:[#allocation2 + $0x4c0] sm:$0xff] %v4750
        %5007 = vst [vmem:[#allocation2 + $0x4c8] sm:$0xff] %v4751
        %5008 = vst [vmem:[#allocation2 + $0x4d0] sm:$0xff] %v4752
        %5009 = vst [vmem:[#allocation2 + $0x4d8] sm:$0xff] %v4753
        %5010 = vst [vmem:[#allocation2 + $0x4e0] sm:$0xff] %v4754
        %5011 = vst [vmem:[#allocation2 + $0x4e8] sm:$0xff] %v4755
        %5012 = vst [vmem:[#allocation2 + $0x4f0] sm:$0xff] %v4756
        %5013 = vst [vmem:[#allocation2 + $0x4f8] sm:$0xff] %v4757
        %5014 = vst [vmem:[#allocation2 + $0x500] sm:$0xff] %v4758
        %5015 = vst [vmem:[#allocation2 + $0x508] sm:$0xff] %v4759
        %5016 = vst [vmem:[#allocation2 + $0x510] sm:$0xff] %v4760
        %5017 = vst [vmem:[#allocation2 + $0x518] sm:$0xff] %v4761
        %5018 = vst [vmem:[#allocation2 + $0x520] sm:$0xff] %v4762
        %5019 = vst [vmem:[#allocation2 + $0x528] sm:$0xff] %v4763
        %5020 = vst [vmem:[#allocation2 + $0x530] sm:$0xff] %v4764
        %5021 = vst [vmem:[#allocation2 + $0x538] sm:$0xff] %v4765
        %5022 = vst [vmem:[#allocation2 + $0x540] sm:$0xff] %v4766
        %5023 = vst [vmem:[#allocation2 + $0x548] sm:$0xff] %v4767
        %5024 = vst [vmem:[#allocation2 + $0x550] sm:$0xff] %v4768
        %5025 = vst [vmem:[#allocation2 + $0x558] sm:$0xff] %v4769
        %5026 = vst [vmem:[#allocation2 + $0x560] sm:$0xff] %v4770
        %5027 = vst [vmem:[#allocation2 + $0x568] sm:$0xff] %v4771
        %5028 = vst [vmem:[#allocation2 + $0x570] sm:$0xff] %v4772
        %5029 = vst [vmem:[#allocation2 + $0x578] sm:$0xff] %v4773
        %5030 = vst [vmem:[#allocation2 + $0x580] sm:$0xff] %v4774
        %5031 = vst [vmem:[#allocation2 + $0x588] sm:$0xff] %v4775
        %5032 = vst [vmem:[#allocation2 + $0x590] sm:$0xff] %v4776
        %5033 = vst [vmem:[#allocation2 + $0x598] sm:$0xff] %v4777
        %5034 = vst [vmem:[#allocation2 + $0x5a0] sm:$0xff] %v4778
        %5035 = vst [vmem:[#allocation2 + $0x5a8] sm:$0xff] %v4779
        %5036 = vst [vmem:[#allocation2 + $0x5b0] sm:$0xff] %v4780
        %5037 = vst [vmem:[#allocation2 + $0x5b8] sm:$0xff] %v4781
        %5038 = vst [vmem:[#allocation2 + $0x5c0] sm:$0xff] %v4782
        %5039 = vst [vmem:[#allocation2 + $0x5c8] sm:$0xff] %v4783
        %5040 = vst [vmem:[#allocation2 + $0x5d0] sm:$0xff] %v4784
        %5041 = vst [vmem:[#allocation2 + $0x5d8] sm:$0xff] %v4785
        %5042 = vst [vmem:[#allocation2 + $0x5e0] sm:$0xff] %v4786
        %5043 = vst [vmem:[#allocation2 + $0x5e8] sm:$0xff] %v4787
        %5044 = vst [vmem:[#allocation2 + $0x5f0] sm:$0xff] %v4788
        %5045 = vst [vmem:[#allocation2 + $0x5f8] sm:$0xff] %v4789
        %5046 = vst [vmem:[#allocation2 + $0x600] sm:$0xff] %v4790
        %5047 = vst [vmem:[#allocation2 + $0x608] sm:$0xff] %v4791
        %5048 = vst [vmem:[#allocation2 + $0x610] sm:$0xff] %v4792
        %5049 = vst [vmem:[#allocation2 + $0x618] sm:$0xff] %v4793
        %5050 = vst [vmem:[#allocation2 + $0x620] sm:$0xff] %v4794
        %5051 = vst [vmem:[#allocation2 + $0x628] sm:$0xff] %v4795
        %5052 = vst [vmem:[#allocation2 + $0x630] sm:$0xff] %v4796
        %5053 = vst [vmem:[#allocation2 + $0x638] sm:$0xff] %v4797
        %5054 = vst [vmem:[#allocation2 + $0x640] sm:$0xff] %v4798
        %5055 = vst [vmem:[#allocation2 + $0x648] sm:$0xff] %v4799
        %5056 = vst [vmem:[#allocation2 + $0x650] sm:$0xff] %v4800
        %5057 = vst [vmem:[#allocation2 + $0x658] sm:$0xff] %v4801
        %5058 = vst [vmem:[#allocation2 + $0x660] sm:$0xff] %v4802
        %5059 = vst [vmem:[#allocation2 + $0x668] sm:$0xff] %v4803
        %5060 = vst [vmem:[#allocation2 + $0x670] sm:$0xff] %v4804
        %5061 = vst [vmem:[#allocation2 + $0x678] sm:$0xff] %v4805
        %5062 = vst [vmem:[#allocation2 + $0x680] sm:$0xff] %v4806
        %5063 = vst [vmem:[#allocation2 + $0x688] sm:$0xff] %v4807
        %5064 = vst [vmem:[#allocation2 + $0x690] sm:$0xff] %v4808
        %5065 = vst [vmem:[#allocation2 + $0x698] sm:$0xff] %v4809
        %5066 = vst [vmem:[#allocation2 + $0x6a0] sm:$0xff] %v4810
        %5067 = vst [vmem:[#allocation2 + $0x6a8] sm:$0xff] %v4811
        %5068 = vst [vmem:[#allocation2 + $0x6b0] sm:$0xff] %v4812
        %5069 = vst [vmem:[#allocation2 + $0x6b8] sm:$0xff] %v4813
        %5070 = vst [vmem:[#allocation2 + $0x6c0] sm:$0xff] %v4814
        %5071 = vst [vmem:[#allocation2 + $0x6c8] sm:$0xff] %v4815
        %5072 = vst [vmem:[#allocation2 + $0x6d0] sm:$0xff] %v4816
        %5073 = vst [vmem:[#allocation2 + $0x6d8] sm:$0xff] %v4817
        %5074 = vst [vmem:[#allocation2 + $0x6e0] sm:$0xff] %v4818
        %5075 = vst [vmem:[#allocation2 + $0x6e8] sm:$0xff] %v4819
        %5076 = vst [vmem:[#allocation2 + $0x6f0] sm:$0xff] %v4820
        %5077 = vst [vmem:[#allocation2 + $0x6f8] sm:$0xff] %v4821
        %5078 = vst [vmem:[#allocation2 + $0x700] sm:$0xff] %v4822
        %5079 = vst [vmem:[#allocation2 + $0x708] sm:$0xff] %v4823
        %5080 = vst [vmem:[#allocation2 + $0x710] sm:$0xff] %v4824
        %5081 = vst [vmem:[#allocation2 + $0x718] sm:$0xff] %v4825
        %5082 = vst [vmem:[#allocation2 + $0x720] sm:$0xff] %v4826
        %5083 = vst [vmem:[#allocation2 + $0x728] sm:$0xff] %v4827
        %5084 = vst [vmem:[#allocation2 + $0x730] sm:$0xff] %v4828
        %5085 = vst [vmem:[#allocation2 + $0x738] sm:$0xff] %v4829
        %5086 = vst [vmem:[#allocation2 + $0x740] sm:$0xff] %v4830
        %5087 = vst [vmem:[#allocation2 + $0x748] sm:$0xff] %v4831
        %5088 = vst [vmem:[#allocation2 + $0x750] sm:$0xff] %v4832
        %5089 = vst [vmem:[#allocation2 + $0x758] sm:$0xff] %v4833
        %5090 = vst [vmem:[#allocation2 + $0x760] sm:$0xff] %v4834
        %5091 = vst [vmem:[#allocation2 + $0x768] sm:$0xff] %v4835
        %5092 = vst [vmem:[#allocation2 + $0x770] sm:$0xff] %v4836
        %5093 = vst [vmem:[#allocation2 + $0x778] sm:$0xff] %v4837
        %5094 = vst [vmem:[#allocation2 + $0x780] sm:$0xff] %v4838
        %5095 = vst [vmem:[#allocation2 + $0x788] sm:$0xff] %v4839
        %5096 = vst [vmem:[#allocation2 + $0x790] sm:$0xff] %v4840
        %5097 = vst [vmem:[#allocation2 + $0x798] sm:$0xff] %v4841
        %5098 = vst [vmem:[#allocation2 + $0x7a0] sm:$0xff] %v4842
        %5099 = vst [vmem:[#allocation2 + $0x7a8] sm:$0xff] %v4843
        %5100 = vst [vmem:[#allocation2 + $0x7b0] sm:$0xff] %v4844
        %5101 = vst [vmem:[#allocation2 + $0x7b8] sm:$0xff] %v4845
        %5102 = vst [vmem:[#allocation2 + $0x7c0] sm:$0xff] %v4846
        %5103 = vst [vmem:[#allocation2 + $0x7c8] sm:$0xff] %v4847
        %5104 = vst [vmem:[#allocation2 + $0x7d0] sm:$0xff] %v4848
        %5105 = vst [vmem:[#allocation2 + $0x7d8] sm:$0xff] %v4849
        %5106 = vst [vmem:[#allocation2 + $0x7e0] sm:$0xff] %v4850
        %5107 = vst [vmem:[#allocation2 + $0x7e8] sm:$0xff] %v4851
        %5108 = vst [vmem:[#allocation2 + $0x7f0] sm:$0xff] %v4852
        %5109 = vst [vmem:[#allocation2 + $0x7f8] sm:$0xff] %v4853
        // Predicated region
        $region41: #{tpu_custom_call.1} parent=27 // pred_check
          %p5110 = pneg %p226
        $region42: #{tpu_custom_call.1} parent=27 // pred_check_branch
          %5112 = sbr.rel (%p5110) target = $region44
        $region43: #{tpu_custom_call.1} parent=27 // pred_region
          %v5113 = vld [vmem:[#allocation2] sm:$0xff]
          %v5114 = vld [vmem:[#allocation2 + $0x8] sm:$0xff]
          %v5115 = vld [vmem:[#allocation2 + $0x10] sm:$0xff]
          %v5116 = vld [vmem:[#allocation2 + $0x18] sm:$0xff]
          %v5117 = vld [vmem:[#allocation2 + $0x20] sm:$0xff]
          %v5118 = vld [vmem:[#allocation2 + $0x28] sm:$0xff]
          %v5119 = vld [vmem:[#allocation2 + $0x30] sm:$0xff]
          %v5120 = vld [vmem:[#allocation2 + $0x38] sm:$0xff]
          %v5121 = vld [vmem:[#allocation2 + $0x40] sm:$0xff]
          %v5122 = vld [vmem:[#allocation2 + $0x48] sm:$0xff]
          %v5123 = vld [vmem:[#allocation2 + $0x50] sm:$0xff]
          %v5124 = vld [vmem:[#allocation2 + $0x58] sm:$0xff]
          %v5125 = vld [vmem:[#allocation2 + $0x60] sm:$0xff]
          %v5126 = vld [vmem:[#allocation2 + $0x68] sm:$0xff]
          %v5127 = vld [vmem:[#allocation2 + $0x70] sm:$0xff]
          %v5128 = vld [vmem:[#allocation2 + $0x78] sm:$0xff]
          %v5129 = vld [vmem:[#allocation2 + $0x80] sm:$0xff]
          %v5130 = vld [vmem:[#allocation2 + $0x88] sm:$0xff]
          %v5131 = vld [vmem:[#allocation2 + $0x90] sm:$0xff]
          %v5132 = vld [vmem:[#allocation2 + $0x98] sm:$0xff]
          %v5133 = vld [vmem:[#allocation2 + $0xa0] sm:$0xff]
          %v5134 = vld [vmem:[#allocation2 + $0xa8] sm:$0xff]
          %v5135 = vld [vmem:[#allocation2 + $0xb0] sm:$0xff]
          %v5136 = vld [vmem:[#allocation2 + $0xb8] sm:$0xff]
          %v5137 = vld [vmem:[#allocation2 + $0xc0] sm:$0xff]
          %v5138 = vld [vmem:[#allocation2 + $0xc8] sm:$0xff]
          %v5139 = vld [vmem:[#allocation2 + $0xd0] sm:$0xff]
          %v5140 = vld [vmem:[#allocation2 + $0xd8] sm:$0xff]
          %v5141 = vld [vmem:[#allocation2 + $0xe0] sm:$0xff]
          %v5142 = vld [vmem:[#allocation2 + $0xe8] sm:$0xff]
          %v5143 = vld [vmem:[#allocation2 + $0xf0] sm:$0xff]
          %v5144 = vld [vmem:[#allocation2 + $0xf8] sm:$0xff]
          %v5145 = vld [vmem:[#allocation2 + $0x100] sm:$0xff]
          %v5146 = vld [vmem:[#allocation2 + $0x108] sm:$0xff]
          %v5147 = vld [vmem:[#allocation2 + $0x110] sm:$0xff]
          %v5148 = vld [vmem:[#allocation2 + $0x118] sm:$0xff]
          %v5149 = vld [vmem:[#allocation2 + $0x120] sm:$0xff]
          %v5150 = vld [vmem:[#allocation2 + $0x128] sm:$0xff]
          %v5151 = vld [vmem:[#allocation2 + $0x130] sm:$0xff]
          %v5152 = vld [vmem:[#allocation2 + $0x138] sm:$0xff]
          %v5153 = vld [vmem:[#allocation2 + $0x140] sm:$0xff]
          %v5154 = vld [vmem:[#allocation2 + $0x148] sm:$0xff]
          %v5155 = vld [vmem:[#allocation2 + $0x150] sm:$0xff]
          %v5156 = vld [vmem:[#allocation2 + $0x158] sm:$0xff]
          %v5157 = vld [vmem:[#allocation2 + $0x160] sm:$0xff]
          %v5158 = vld [vmem:[#allocation2 + $0x168] sm:$0xff]
          %v5159 = vld [vmem:[#allocation2 + $0x170] sm:$0xff]
          %v5160 = vld [vmem:[#allocation2 + $0x178] sm:$0xff]
          %v5161 = vld [vmem:[#allocation2 + $0x180] sm:$0xff]
          %v5162 = vld [vmem:[#allocation2 + $0x188] sm:$0xff]
          %v5163 = vld [vmem:[#allocation2 + $0x190] sm:$0xff]
          %v5164 = vld [vmem:[#allocation2 + $0x198] sm:$0xff]
          %v5165 = vld [vmem:[#allocation2 + $0x1a0] sm:$0xff]
          %v5166 = vld [vmem:[#allocation2 + $0x1a8] sm:$0xff]
          %v5167 = vld [vmem:[#allocation2 + $0x1b0] sm:$0xff]
          %v5168 = vld [vmem:[#allocation2 + $0x1b8] sm:$0xff]
          %v5169 = vld [vmem:[#allocation2 + $0x1c0] sm:$0xff]
          %v5170 = vld [vmem:[#allocation2 + $0x1c8] sm:$0xff]
          %v5171 = vld [vmem:[#allocation2 + $0x1d0] sm:$0xff]
          %v5172 = vld [vmem:[#allocation2 + $0x1d8] sm:$0xff]
          %v5173 = vld [vmem:[#allocation2 + $0x1e0] sm:$0xff]
          %v5174 = vld [vmem:[#allocation2 + $0x1e8] sm:$0xff]
          %v5175 = vld [vmem:[#allocation2 + $0x1f0] sm:$0xff]
          %v5176 = vld [vmem:[#allocation2 + $0x1f8] sm:$0xff]
          %v5177 = vld [vmem:[#allocation2 + $0x200] sm:$0xff]
          %v5178 = vld [vmem:[#allocation2 + $0x208] sm:$0xff]
          %v5179 = vld [vmem:[#allocation2 + $0x210] sm:$0xff]
          %v5180 = vld [vmem:[#allocation2 + $0x218] sm:$0xff]
          %v5181 = vld [vmem:[#allocation2 + $0x220] sm:$0xff]
          %v5182 = vld [vmem:[#allocation2 + $0x228] sm:$0xff]
          %v5183 = vld [vmem:[#allocation2 + $0x230] sm:$0xff]
          %v5184 = vld [vmem:[#allocation2 + $0x238] sm:$0xff]
          %v5185 = vld [vmem:[#allocation2 + $0x240] sm:$0xff]
          %v5186 = vld [vmem:[#allocation2 + $0x248] sm:$0xff]
          %v5187 = vld [vmem:[#allocation2 + $0x250] sm:$0xff]
          %v5188 = vld [vmem:[#allocation2 + $0x258] sm:$0xff]
          %v5189 = vld [vmem:[#allocation2 + $0x260] sm:$0xff]
          %v5190 = vld [vmem:[#allocation2 + $0x268] sm:$0xff]
          %v5191 = vld [vmem:[#allocation2 + $0x270] sm:$0xff]
          %v5192 = vld [vmem:[#allocation2 + $0x278] sm:$0xff]
          %v5193 = vld [vmem:[#allocation2 + $0x280] sm:$0xff]
          %v5194 = vld [vmem:[#allocation2 + $0x288] sm:$0xff]
          %v5195 = vld [vmem:[#allocation2 + $0x290] sm:$0xff]
          %v5196 = vld [vmem:[#allocation2 + $0x298] sm:$0xff]
          %v5197 = vld [vmem:[#allocation2 + $0x2a0] sm:$0xff]
          %v5198 = vld [vmem:[#allocation2 + $0x2a8] sm:$0xff]
          %v5199 = vld [vmem:[#allocation2 + $0x2b0] sm:$0xff]
          %v5200 = vld [vmem:[#allocation2 + $0x2b8] sm:$0xff]
          %v5201 = vld [vmem:[#allocation2 + $0x2c0] sm:$0xff]
          %v5202 = vld [vmem:[#allocation2 + $0x2c8] sm:$0xff]
          %v5203 = vld [vmem:[#allocation2 + $0x2d0] sm:$0xff]
          %v5204 = vld [vmem:[#allocation2 + $0x2d8] sm:$0xff]
          %v5205 = vld [vmem:[#allocation2 + $0x2e0] sm:$0xff]
          %v5206 = vld [vmem:[#allocation2 + $0x2e8] sm:$0xff]
          %v5207 = vld [vmem:[#allocation2 + $0x2f0] sm:$0xff]
          %v5208 = vld [vmem:[#allocation2 + $0x2f8] sm:$0xff]
          %v5209 = vld [vmem:[#allocation2 + $0x300] sm:$0xff]
          %v5210 = vld [vmem:[#allocation2 + $0x308] sm:$0xff]
          %v5211 = vld [vmem:[#allocation2 + $0x310] sm:$0xff]
          %v5212 = vld [vmem:[#allocation2 + $0x318] sm:$0xff]
          %v5213 = vld [vmem:[#allocation2 + $0x320] sm:$0xff]
          %v5214 = vld [vmem:[#allocation2 + $0x328] sm:$0xff]
          %v5215 = vld [vmem:[#allocation2 + $0x330] sm:$0xff]
          %v5216 = vld [vmem:[#allocation2 + $0x338] sm:$0xff]
          %v5217 = vld [vmem:[#allocation2 + $0x340] sm:$0xff]
          %v5218 = vld [vmem:[#allocation2 + $0x348] sm:$0xff]
          %v5219 = vld [vmem:[#allocation2 + $0x350] sm:$0xff]
          %v5220 = vld [vmem:[#allocation2 + $0x358] sm:$0xff]
          %v5221 = vld [vmem:[#allocation2 + $0x360] sm:$0xff]
          %v5222 = vld [vmem:[#allocation2 + $0x368] sm:$0xff]
          %v5223 = vld [vmem:[#allocation2 + $0x370] sm:$0xff]
          %v5224 = vld [vmem:[#allocation2 + $0x378] sm:$0xff]
          %v5225 = vld [vmem:[#allocation2 + $0x380] sm:$0xff]
          %v5226 = vld [vmem:[#allocation2 + $0x388] sm:$0xff]
          %v5227 = vld [vmem:[#allocation2 + $0x390] sm:$0xff]
          %v5228 = vld [vmem:[#allocation2 + $0x398] sm:$0xff]
          %v5229 = vld [vmem:[#allocation2 + $0x3a0] sm:$0xff]
          %v5230 = vld [vmem:[#allocation2 + $0x3a8] sm:$0xff]
          %v5231 = vld [vmem:[#allocation2 + $0x3b0] sm:$0xff]
          %v5232 = vld [vmem:[#allocation2 + $0x3b8] sm:$0xff]
          %v5233 = vld [vmem:[#allocation2 + $0x3c0] sm:$0xff]
          %v5234 = vld [vmem:[#allocation2 + $0x3c8] sm:$0xff]
          %v5235 = vld [vmem:[#allocation2 + $0x3d0] sm:$0xff]
          %v5236 = vld [vmem:[#allocation2 + $0x3d8] sm:$0xff]
          %v5237 = vld [vmem:[#allocation2 + $0x3e0] sm:$0xff]
          %v5238 = vld [vmem:[#allocation2 + $0x3e8] sm:$0xff]
          %v5239 = vld [vmem:[#allocation2 + $0x3f0] sm:$0xff]
          %v5240 = vld [vmem:[#allocation2 + $0x3f8] sm:$0xff]
          %v5241 = vld [vmem:[#allocation2 + $0x400] sm:$0xff]
          %v5242 = vld [vmem:[#allocation2 + $0x408] sm:$0xff]
          %v5243 = vld [vmem:[#allocation2 + $0x410] sm:$0xff]
          %v5244 = vld [vmem:[#allocation2 + $0x418] sm:$0xff]
          %v5245 = vld [vmem:[#allocation2 + $0x420] sm:$0xff]
          %v5246 = vld [vmem:[#allocation2 + $0x428] sm:$0xff]
          %v5247 = vld [vmem:[#allocation2 + $0x430] sm:$0xff]
          %v5248 = vld [vmem:[#allocation2 + $0x438] sm:$0xff]
          %v5249 = vld [vmem:[#allocation2 + $0x440] sm:$0xff]
          %v5250 = vld [vmem:[#allocation2 + $0x448] sm:$0xff]
          %v5251 = vld [vmem:[#allocation2 + $0x450] sm:$0xff]
          %v5252 = vld [vmem:[#allocation2 + $0x458] sm:$0xff]
          %v5253 = vld [vmem:[#allocation2 + $0x460] sm:$0xff]
          %v5254 = vld [vmem:[#allocation2 + $0x468] sm:$0xff]
          %v5255 = vld [vmem:[#allocation2 + $0x470] sm:$0xff]
          %v5256 = vld [vmem:[#allocation2 + $0x478] sm:$0xff]
          %v5257 = vld [vmem:[#allocation2 + $0x480] sm:$0xff]
          %v5258 = vld [vmem:[#allocation2 + $0x488] sm:$0xff]
          %v5259 = vld [vmem:[#allocation2 + $0x490] sm:$0xff]
          %v5260 = vld [vmem:[#allocation2 + $0x498] sm:$0xff]
          %v5261 = vld [vmem:[#allocation2 + $0x4a0] sm:$0xff]
          %v5262 = vld [vmem:[#allocation2 + $0x4a8] sm:$0xff]
          %v5263 = vld [vmem:[#allocation2 + $0x4b0] sm:$0xff]
          %v5264 = vld [vmem:[#allocation2 + $0x4b8] sm:$0xff]
          %v5265 = vld [vmem:[#allocation2 + $0x4c0] sm:$0xff]
          %v5266 = vld [vmem:[#allocation2 + $0x4c8] sm:$0xff]
          %v5267 = vld [vmem:[#allocation2 + $0x4d0] sm:$0xff]
          %v5268 = vld [vmem:[#allocation2 + $0x4d8] sm:$0xff]
          %v5269 = vld [vmem:[#allocation2 + $0x4e0] sm:$0xff]
          %v5270 = vld [vmem:[#allocation2 + $0x4e8] sm:$0xff]
          %v5271 = vld [vmem:[#allocation2 + $0x4f0] sm:$0xff]
          %v5272 = vld [vmem:[#allocation2 + $0x4f8] sm:$0xff]
          %v5273 = vld [vmem:[#allocation2 + $0x500] sm:$0xff]
          %v5274 = vld [vmem:[#allocation2 + $0x508] sm:$0xff]
          %v5275 = vld [vmem:[#allocation2 + $0x510] sm:$0xff]
          %v5276 = vld [vmem:[#allocation2 + $0x518] sm:$0xff]
          %v5277 = vld [vmem:[#allocation2 + $0x520] sm:$0xff]
          %v5278 = vld [vmem:[#allocation2 + $0x528] sm:$0xff]
          %v5279 = vld [vmem:[#allocation2 + $0x530] sm:$0xff]
          %v5280 = vld [vmem:[#allocation2 + $0x538] sm:$0xff]
          %v5281 = vld [vmem:[#allocation2 + $0x540] sm:$0xff]
          %v5282 = vld [vmem:[#allocation2 + $0x548] sm:$0xff]
          %v5283 = vld [vmem:[#allocation2 + $0x550] sm:$0xff]
          %v5284 = vld [vmem:[#allocation2 + $0x558] sm:$0xff]
          %v5285 = vld [vmem:[#allocation2 + $0x560] sm:$0xff]
          %v5286 = vld [vmem:[#allocation2 + $0x568] sm:$0xff]
          %v5287 = vld [vmem:[#allocation2 + $0x570] sm:$0xff]
          %v5288 = vld [vmem:[#allocation2 + $0x578] sm:$0xff]
          %v5289 = vld [vmem:[#allocation2 + $0x580] sm:$0xff]
          %v5290 = vld [vmem:[#allocation2 + $0x588] sm:$0xff]
          %v5291 = vld [vmem:[#allocation2 + $0x590] sm:$0xff]
          %v5292 = vld [vmem:[#allocation2 + $0x598] sm:$0xff]
          %v5293 = vld [vmem:[#allocation2 + $0x5a0] sm:$0xff]
          %v5294 = vld [vmem:[#allocation2 + $0x5a8] sm:$0xff]
          %v5295 = vld [vmem:[#allocation2 + $0x5b0] sm:$0xff]
          %v5296 = vld [vmem:[#allocation2 + $0x5b8] sm:$0xff]
          %v5297 = vld [vmem:[#allocation2 + $0x5c0] sm:$0xff]
          %v5298 = vld [vmem:[#allocation2 + $0x5c8] sm:$0xff]
          %v5299 = vld [vmem:[#allocation2 + $0x5d0] sm:$0xff]
          %v5300 = vld [vmem:[#allocation2 + $0x5d8] sm:$0xff]
          %v5301 = vld [vmem:[#allocation2 + $0x5e0] sm:$0xff]
          %v5302 = vld [vmem:[#allocation2 + $0x5e8] sm:$0xff]
          %v5303 = vld [vmem:[#allocation2 + $0x5f0] sm:$0xff]
          %v5304 = vld [vmem:[#allocation2 + $0x5f8] sm:$0xff]
          %v5305 = vld [vmem:[#allocation2 + $0x600] sm:$0xff]
          %v5306 = vld [vmem:[#allocation2 + $0x608] sm:$0xff]
          %v5307 = vld [vmem:[#allocation2 + $0x610] sm:$0xff]
          %v5308 = vld [vmem:[#allocation2 + $0x618] sm:$0xff]
          %v5309 = vld [vmem:[#allocation2 + $0x620] sm:$0xff]
          %v5310 = vld [vmem:[#allocation2 + $0x628] sm:$0xff]
          %v5311 = vld [vmem:[#allocation2 + $0x630] sm:$0xff]
          %v5312 = vld [vmem:[#allocation2 + $0x638] sm:$0xff]
          %v5313 = vld [vmem:[#allocation2 + $0x640] sm:$0xff]
          %v5314 = vld [vmem:[#allocation2 + $0x648] sm:$0xff]
          %v5315 = vld [vmem:[#allocation2 + $0x650] sm:$0xff]
          %v5316 = vld [vmem:[#allocation2 + $0x658] sm:$0xff]
          %v5317 = vld [vmem:[#allocation2 + $0x660] sm:$0xff]
          %v5318 = vld [vmem:[#allocation2 + $0x668] sm:$0xff]
          %v5319 = vld [vmem:[#allocation2 + $0x670] sm:$0xff]
          %v5320 = vld [vmem:[#allocation2 + $0x678] sm:$0xff]
          %v5321 = vld [vmem:[#allocation2 + $0x680] sm:$0xff]
          %v5322 = vld [vmem:[#allocation2 + $0x688] sm:$0xff]
          %v5323 = vld [vmem:[#allocation2 + $0x690] sm:$0xff]
          %v5324 = vld [vmem:[#allocation2 + $0x698] sm:$0xff]
          %v5325 = vld [vmem:[#allocation2 + $0x6a0] sm:$0xff]
          %v5326 = vld [vmem:[#allocation2 + $0x6a8] sm:$0xff]
          %v5327 = vld [vmem:[#allocation2 + $0x6b0] sm:$0xff]
          %v5328 = vld [vmem:[#allocation2 + $0x6b8] sm:$0xff]
          %v5329 = vld [vmem:[#allocation2 + $0x6c0] sm:$0xff]
          %v5330 = vld [vmem:[#allocation2 + $0x6c8] sm:$0xff]
          %v5331 = vld [vmem:[#allocation2 + $0x6d0] sm:$0xff]
          %v5332 = vld [vmem:[#allocation2 + $0x6d8] sm:$0xff]
          %v5333 = vld [vmem:[#allocation2 + $0x6e0] sm:$0xff]
          %v5334 = vld [vmem:[#allocation2 + $0x6e8] sm:$0xff]
          %v5335 = vld [vmem:[#allocation2 + $0x6f0] sm:$0xff]
          %v5336 = vld [vmem:[#allocation2 + $0x6f8] sm:$0xff]
          %v5337 = vld [vmem:[#allocation2 + $0x700] sm:$0xff]
          %v5338 = vld [vmem:[#allocation2 + $0x708] sm:$0xff]
          %v5339 = vld [vmem:[#allocation2 + $0x710] sm:$0xff]
          %v5340 = vld [vmem:[#allocation2 + $0x718] sm:$0xff]
          %v5341 = vld [vmem:[#allocation2 + $0x720] sm:$0xff]
          %v5342 = vld [vmem:[#allocation2 + $0x728] sm:$0xff]
          %v5343 = vld [vmem:[#allocation2 + $0x730] sm:$0xff]
          %v5344 = vld [vmem:[#allocation2 + $0x738] sm:$0xff]
          %v5345 = vld [vmem:[#allocation2 + $0x740] sm:$0xff]
          %v5346 = vld [vmem:[#allocation2 + $0x748] sm:$0xff]
          %v5347 = vld [vmem:[#allocation2 + $0x750] sm:$0xff]
          %v5348 = vld [vmem:[#allocation2 + $0x758] sm:$0xff]
          %v5349 = vld [vmem:[#allocation2 + $0x760] sm:$0xff]
          %v5350 = vld [vmem:[#allocation2 + $0x768] sm:$0xff]
          %v5351 = vld [vmem:[#allocation2 + $0x770] sm:$0xff]
          %v5352 = vld [vmem:[#allocation2 + $0x778] sm:$0xff]
          %v5353 = vld [vmem:[#allocation2 + $0x780] sm:$0xff]
          %v5354 = vld [vmem:[#allocation2 + $0x788] sm:$0xff]
          %v5355 = vld [vmem:[#allocation2 + $0x790] sm:$0xff]
          %v5356 = vld [vmem:[#allocation2 + $0x798] sm:$0xff]
          %v5357 = vld [vmem:[#allocation2 + $0x7a0] sm:$0xff]
          %v5358 = vld [vmem:[#allocation2 + $0x7a8] sm:$0xff]
          %v5359 = vld [vmem:[#allocation2 + $0x7b0] sm:$0xff]
          %v5360 = vld [vmem:[#allocation2 + $0x7b8] sm:$0xff]
          %v5361 = vld [vmem:[#allocation2 + $0x7c0] sm:$0xff]
          %v5362 = vld [vmem:[#allocation2 + $0x7c8] sm:$0xff]
          %v5363 = vld [vmem:[#allocation2 + $0x7d0] sm:$0xff]
          %v5364 = vld [vmem:[#allocation2 + $0x7d8] sm:$0xff]
          %v5365 = vld [vmem:[#allocation2 + $0x7e0] sm:$0xff]
          %v5366 = vld [vmem:[#allocation2 + $0x7e8] sm:$0xff]
          %v5367 = vld [vmem:[#allocation2 + $0x7f0] sm:$0xff]
          %v5368 = vld [vmem:[#allocation2 + $0x7f8] sm:$0xff]
          %5369 = vst [vmem:[%s219] sm:$0xff] %v5113
          %5370 = vst [vmem:[%s219 + $0x8] sm:$0xff] %v5114
          %5371 = vst [vmem:[%s219 + $0x10] sm:$0xff] %v5115
          %5372 = vst [vmem:[%s219 + $0x18] sm:$0xff] %v5116
          %5373 = vst [vmem:[%s219 + $0x20] sm:$0xff] %v5117
          %5374 = vst [vmem:[%s219 + $0x28] sm:$0xff] %v5118
          %5375 = vst [vmem:[%s219 + $0x30] sm:$0xff] %v5119
          %5376 = vst [vmem:[%s219 + $0x38] sm:$0xff] %v5120
          %5377 = vst [vmem:[%s219 + $0x40] sm:$0xff] %v5121
          %5378 = vst [vmem:[%s219 + $0x48] sm:$0xff] %v5122
          %5379 = vst [vmem:[%s219 + $0x50] sm:$0xff] %v5123
          %5380 = vst [vmem:[%s219 + $0x58] sm:$0xff] %v5124
          %5381 = vst [vmem:[%s219 + $0x60] sm:$0xff] %v5125
          %5382 = vst [vmem:[%s219 + $0x68] sm:$0xff] %v5126
          %5383 = vst [vmem:[%s219 + $0x70] sm:$0xff] %v5127
          %5384 = vst [vmem:[%s219 + $0x78] sm:$0xff] %v5128
          %5385 = vst [vmem:[%s219 + $0x80] sm:$0xff] %v5129
          %5386 = vst [vmem:[%s219 + $0x88] sm:$0xff] %v5130
          %5387 = vst [vmem:[%s219 + $0x90] sm:$0xff] %v5131
          %5388 = vst [vmem:[%s219 + $0x98] sm:$0xff] %v5132
          %5389 = vst [vmem:[%s219 + $0xa0] sm:$0xff] %v5133
          %5390 = vst [vmem:[%s219 + $0xa8] sm:$0xff] %v5134
          %5391 = vst [vmem:[%s219 + $0xb0] sm:$0xff] %v5135
          %5392 = vst [vmem:[%s219 + $0xb8] sm:$0xff] %v5136
          %5393 = vst [vmem:[%s219 + $0xc0] sm:$0xff] %v5137
          %5394 = vst [vmem:[%s219 + $0xc8] sm:$0xff] %v5138
          %5395 = vst [vmem:[%s219 + $0xd0] sm:$0xff] %v5139
          %5396 = vst [vmem:[%s219 + $0xd8] sm:$0xff] %v5140
          %5397 = vst [vmem:[%s219 + $0xe0] sm:$0xff] %v5141
          %5398 = vst [vmem:[%s219 + $0xe8] sm:$0xff] %v5142
          %5399 = vst [vmem:[%s219 + $0xf0] sm:$0xff] %v5143
          %5400 = vst [vmem:[%s219 + $0xf8] sm:$0xff] %v5144
          %5401 = vst [vmem:[%s219 + $0x100] sm:$0xff] %v5145
          %5402 = vst [vmem:[%s219 + $0x108] sm:$0xff] %v5146
          %5403 = vst [vmem:[%s219 + $0x110] sm:$0xff] %v5147
          %5404 = vst [vmem:[%s219 + $0x118] sm:$0xff] %v5148
          %5405 = vst [vmem:[%s219 + $0x120] sm:$0xff] %v5149
          %5406 = vst [vmem:[%s219 + $0x128] sm:$0xff] %v5150
          %5407 = vst [vmem:[%s219 + $0x130] sm:$0xff] %v5151
          %5408 = vst [vmem:[%s219 + $0x138] sm:$0xff] %v5152
          %5409 = vst [vmem:[%s219 + $0x140] sm:$0xff] %v5153
          %5410 = vst [vmem:[%s219 + $0x148] sm:$0xff] %v5154
          %5411 = vst [vmem:[%s219 + $0x150] sm:$0xff] %v5155
          %5412 = vst [vmem:[%s219 + $0x158] sm:$0xff] %v5156
          %5413 = vst [vmem:[%s219 + $0x160] sm:$0xff] %v5157
          %5414 = vst [vmem:[%s219 + $0x168] sm:$0xff] %v5158
          %5415 = vst [vmem:[%s219 + $0x170] sm:$0xff] %v5159
          %5416 = vst [vmem:[%s219 + $0x178] sm:$0xff] %v5160
          %5417 = vst [vmem:[%s219 + $0x180] sm:$0xff] %v5161
          %5418 = vst [vmem:[%s219 + $0x188] sm:$0xff] %v5162
          %5419 = vst [vmem:[%s219 + $0x190] sm:$0xff] %v5163
          %5420 = vst [vmem:[%s219 + $0x198] sm:$0xff] %v5164
          %5421 = vst [vmem:[%s219 + $0x1a0] sm:$0xff] %v5165
          %5422 = vst [vmem:[%s219 + $0x1a8] sm:$0xff] %v5166
          %5423 = vst [vmem:[%s219 + $0x1b0] sm:$0xff] %v5167
          %5424 = vst [vmem:[%s219 + $0x1b8] sm:$0xff] %v5168
          %5425 = vst [vmem:[%s219 + $0x1c0] sm:$0xff] %v5169
          %5426 = vst [vmem:[%s219 + $0x1c8] sm:$0xff] %v5170
          %5427 = vst [vmem:[%s219 + $0x1d0] sm:$0xff] %v5171
          %5428 = vst [vmem:[%s219 + $0x1d8] sm:$0xff] %v5172
          %5429 = vst [vmem:[%s219 + $0x1e0] sm:$0xff] %v5173
          %5430 = vst [vmem:[%s219 + $0x1e8] sm:$0xff] %v5174
          %5431 = vst [vmem:[%s219 + $0x1f0] sm:$0xff] %v5175
          %5432 = vst [vmem:[%s219 + $0x1f8] sm:$0xff] %v5176
          %5433 = vst [vmem:[%s219 + $0x200] sm:$0xff] %v5177
          %5434 = vst [vmem:[%s219 + $0x208] sm:$0xff] %v5178
          %5435 = vst [vmem:[%s219 + $0x210] sm:$0xff] %v5179
          %5436 = vst [vmem:[%s219 + $0x218] sm:$0xff] %v5180
          %5437 = vst [vmem:[%s219 + $0x220] sm:$0xff] %v5181
          %5438 = vst [vmem:[%s219 + $0x228] sm:$0xff] %v5182
          %5439 = vst [vmem:[%s219 + $0x230] sm:$0xff] %v5183
          %5440 = vst [vmem:[%s219 + $0x238] sm:$0xff] %v5184
          %5441 = vst [vmem:[%s219 + $0x240] sm:$0xff] %v5185
          %5442 = vst [vmem:[%s219 + $0x248] sm:$0xff] %v5186
          %5443 = vst [vmem:[%s219 + $0x250] sm:$0xff] %v5187
          %5444 = vst [vmem:[%s219 + $0x258] sm:$0xff] %v5188
          %5445 = vst [vmem:[%s219 + $0x260] sm:$0xff] %v5189
          %5446 = vst [vmem:[%s219 + $0x268] sm:$0xff] %v5190
          %5447 = vst [vmem:[%s219 + $0x270] sm:$0xff] %v5191
          %5448 = vst [vmem:[%s219 + $0x278] sm:$0xff] %v5192
          %5449 = vst [vmem:[%s219 + $0x280] sm:$0xff] %v5193
          %5450 = vst [vmem:[%s219 + $0x288] sm:$0xff] %v5194
          %5451 = vst [vmem:[%s219 + $0x290] sm:$0xff] %v5195
          %5452 = vst [vmem:[%s219 + $0x298] sm:$0xff] %v5196
          %5453 = vst [vmem:[%s219 + $0x2a0] sm:$0xff] %v5197
          %5454 = vst [vmem:[%s219 + $0x2a8] sm:$0xff] %v5198
          %5455 = vst [vmem:[%s219 + $0x2b0] sm:$0xff] %v5199
          %5456 = vst [vmem:[%s219 + $0x2b8] sm:$0xff] %v5200
          %5457 = vst [vmem:[%s219 + $0x2c0] sm:$0xff] %v5201
          %5458 = vst [vmem:[%s219 + $0x2c8] sm:$0xff] %v5202
          %5459 = vst [vmem:[%s219 + $0x2d0] sm:$0xff] %v5203
          %5460 = vst [vmem:[%s219 + $0x2d8] sm:$0xff] %v5204
          %5461 = vst [vmem:[%s219 + $0x2e0] sm:$0xff] %v5205
          %5462 = vst [vmem:[%s219 + $0x2e8] sm:$0xff] %v5206
          %5463 = vst [vmem:[%s219 + $0x2f0] sm:$0xff] %v5207
          %5464 = vst [vmem:[%s219 + $0x2f8] sm:$0xff] %v5208
          %5465 = vst [vmem:[%s219 + $0x300] sm:$0xff] %v5209
          %5466 = vst [vmem:[%s219 + $0x308] sm:$0xff] %v5210
          %5467 = vst [vmem:[%s219 + $0x310] sm:$0xff] %v5211
          %5468 = vst [vmem:[%s219 + $0x318] sm:$0xff] %v5212
          %5469 = vst [vmem:[%s219 + $0x320] sm:$0xff] %v5213
          %5470 = vst [vmem:[%s219 + $0x328] sm:$0xff] %v5214
          %5471 = vst [vmem:[%s219 + $0x330] sm:$0xff] %v5215
          %5472 = vst [vmem:[%s219 + $0x338] sm:$0xff] %v5216
          %5473 = vst [vmem:[%s219 + $0x340] sm:$0xff] %v5217
          %5474 = vst [vmem:[%s219 + $0x348] sm:$0xff] %v5218
          %5475 = vst [vmem:[%s219 + $0x350] sm:$0xff] %v5219
          %5476 = vst [vmem:[%s219 + $0x358] sm:$0xff] %v5220
          %5477 = vst [vmem:[%s219 + $0x360] sm:$0xff] %v5221
          %5478 = vst [vmem:[%s219 + $0x368] sm:$0xff] %v5222
          %5479 = vst [vmem:[%s219 + $0x370] sm:$0xff] %v5223
          %5480 = vst [vmem:[%s219 + $0x378] sm:$0xff] %v5224
          %5481 = vst [vmem:[%s219 + $0x380] sm:$0xff] %v5225
          %5482 = vst [vmem:[%s219 + $0x388] sm:$0xff] %v5226
          %5483 = vst [vmem:[%s219 + $0x390] sm:$0xff] %v5227
          %5484 = vst [vmem:[%s219 + $0x398] sm:$0xff] %v5228
          %5485 = vst [vmem:[%s219 + $0x3a0] sm:$0xff] %v5229
          %5486 = vst [vmem:[%s219 + $0x3a8] sm:$0xff] %v5230
          %5487 = vst [vmem:[%s219 + $0x3b0] sm:$0xff] %v5231
          %5488 = vst [vmem:[%s219 + $0x3b8] sm:$0xff] %v5232
          %5489 = vst [vmem:[%s219 + $0x3c0] sm:$0xff] %v5233
          %5490 = vst [vmem:[%s219 + $0x3c8] sm:$0xff] %v5234
          %5491 = vst [vmem:[%s219 + $0x3d0] sm:$0xff] %v5235
          %5492 = vst [vmem:[%s219 + $0x3d8] sm:$0xff] %v5236
          %5493 = vst [vmem:[%s219 + $0x3e0] sm:$0xff] %v5237
          %5494 = vst [vmem:[%s219 + $0x3e8] sm:$0xff] %v5238
          %5495 = vst [vmem:[%s219 + $0x3f0] sm:$0xff] %v5239
          %5496 = vst [vmem:[%s219 + $0x3f8] sm:$0xff] %v5240
          %5497 = vst [vmem:[%s219 + $0x400] sm:$0xff] %v5241
          %5498 = vst [vmem:[%s219 + $0x408] sm:$0xff] %v5242
          %5499 = vst [vmem:[%s219 + $0x410] sm:$0xff] %v5243
          %5500 = vst [vmem:[%s219 + $0x418] sm:$0xff] %v5244
          %5501 = vst [vmem:[%s219 + $0x420] sm:$0xff] %v5245
          %5502 = vst [vmem:[%s219 + $0x428] sm:$0xff] %v5246
          %5503 = vst [vmem:[%s219 + $0x430] sm:$0xff] %v5247
          %5504 = vst [vmem:[%s219 + $0x438] sm:$0xff] %v5248
          %5505 = vst [vmem:[%s219 + $0x440] sm:$0xff] %v5249
          %5506 = vst [vmem:[%s219 + $0x448] sm:$0xff] %v5250
          %5507 = vst [vmem:[%s219 + $0x450] sm:$0xff] %v5251
          %5508 = vst [vmem:[%s219 + $0x458] sm:$0xff] %v5252
          %5509 = vst [vmem:[%s219 + $0x460] sm:$0xff] %v5253
          %5510 = vst [vmem:[%s219 + $0x468] sm:$0xff] %v5254
          %5511 = vst [vmem:[%s219 + $0x470] sm:$0xff] %v5255
          %5512 = vst [vmem:[%s219 + $0x478] sm:$0xff] %v5256
          %5513 = vst [vmem:[%s219 + $0x480] sm:$0xff] %v5257
          %5514 = vst [vmem:[%s219 + $0x488] sm:$0xff] %v5258
          %5515 = vst [vmem:[%s219 + $0x490] sm:$0xff] %v5259
          %5516 = vst [vmem:[%s219 + $0x498] sm:$0xff] %v5260
          %5517 = vst [vmem:[%s219 + $0x4a0] sm:$0xff] %v5261
          %5518 = vst [vmem:[%s219 + $0x4a8] sm:$0xff] %v5262
          %5519 = vst [vmem:[%s219 + $0x4b0] sm:$0xff] %v5263
          %5520 = vst [vmem:[%s219 + $0x4b8] sm:$0xff] %v5264
          %5521 = vst [vmem:[%s219 + $0x4c0] sm:$0xff] %v5265
          %5522 = vst [vmem:[%s219 + $0x4c8] sm:$0xff] %v5266
          %5523 = vst [vmem:[%s219 + $0x4d0] sm:$0xff] %v5267
          %5524 = vst [vmem:[%s219 + $0x4d8] sm:$0xff] %v5268
          %5525 = vst [vmem:[%s219 + $0x4e0] sm:$0xff] %v5269
          %5526 = vst [vmem:[%s219 + $0x4e8] sm:$0xff] %v5270
          %5527 = vst [vmem:[%s219 + $0x4f0] sm:$0xff] %v5271
          %5528 = vst [vmem:[%s219 + $0x4f8] sm:$0xff] %v5272
          %5529 = vst [vmem:[%s219 + $0x500] sm:$0xff] %v5273
          %5530 = vst [vmem:[%s219 + $0x508] sm:$0xff] %v5274
          %5531 = vst [vmem:[%s219 + $0x510] sm:$0xff] %v5275
          %5532 = vst [vmem:[%s219 + $0x518] sm:$0xff] %v5276
          %5533 = vst [vmem:[%s219 + $0x520] sm:$0xff] %v5277
          %5534 = vst [vmem:[%s219 + $0x528] sm:$0xff] %v5278
          %5535 = vst [vmem:[%s219 + $0x530] sm:$0xff] %v5279
          %5536 = vst [vmem:[%s219 + $0x538] sm:$0xff] %v5280
          %5537 = vst [vmem:[%s219 + $0x540] sm:$0xff] %v5281
          %5538 = vst [vmem:[%s219 + $0x548] sm:$0xff] %v5282
          %5539 = vst [vmem:[%s219 + $0x550] sm:$0xff] %v5283
          %5540 = vst [vmem:[%s219 + $0x558] sm:$0xff] %v5284
          %5541 = vst [vmem:[%s219 + $0x560] sm:$0xff] %v5285
          %5542 = vst [vmem:[%s219 + $0x568] sm:$0xff] %v5286
          %5543 = vst [vmem:[%s219 + $0x570] sm:$0xff] %v5287
          %5544 = vst [vmem:[%s219 + $0x578] sm:$0xff] %v5288
          %5545 = vst [vmem:[%s219 + $0x580] sm:$0xff] %v5289
          %5546 = vst [vmem:[%s219 + $0x588] sm:$0xff] %v5290
          %5547 = vst [vmem:[%s219 + $0x590] sm:$0xff] %v5291
          %5548 = vst [vmem:[%s219 + $0x598] sm:$0xff] %v5292
          %5549 = vst [vmem:[%s219 + $0x5a0] sm:$0xff] %v5293
          %5550 = vst [vmem:[%s219 + $0x5a8] sm:$0xff] %v5294
          %5551 = vst [vmem:[%s219 + $0x5b0] sm:$0xff] %v5295
          %5552 = vst [vmem:[%s219 + $0x5b8] sm:$0xff] %v5296
          %5553 = vst [vmem:[%s219 + $0x5c0] sm:$0xff] %v5297
          %5554 = vst [vmem:[%s219 + $0x5c8] sm:$0xff] %v5298
          %5555 = vst [vmem:[%s219 + $0x5d0] sm:$0xff] %v5299
          %5556 = vst [vmem:[%s219 + $0x5d8] sm:$0xff] %v5300
          %5557 = vst [vmem:[%s219 + $0x5e0] sm:$0xff] %v5301
          %5558 = vst [vmem:[%s219 + $0x5e8] sm:$0xff] %v5302
          %5559 = vst [vmem:[%s219 + $0x5f0] sm:$0xff] %v5303
          %5560 = vst [vmem:[%s219 + $0x5f8] sm:$0xff] %v5304
          %5561 = vst [vmem:[%s219 + $0x600] sm:$0xff] %v5305
          %5562 = vst [vmem:[%s219 + $0x608] sm:$0xff] %v5306
          %5563 = vst [vmem:[%s219 + $0x610] sm:$0xff] %v5307
          %5564 = vst [vmem:[%s219 + $0x618] sm:$0xff] %v5308
          %5565 = vst [vmem:[%s219 + $0x620] sm:$0xff] %v5309
          %5566 = vst [vmem:[%s219 + $0x628] sm:$0xff] %v5310
          %5567 = vst [vmem:[%s219 + $0x630] sm:$0xff] %v5311
          %5568 = vst [vmem:[%s219 + $0x638] sm:$0xff] %v5312
          %5569 = vst [vmem:[%s219 + $0x640] sm:$0xff] %v5313
          %5570 = vst [vmem:[%s219 + $0x648] sm:$0xff] %v5314
          %5571 = vst [vmem:[%s219 + $0x650] sm:$0xff] %v5315
          %5572 = vst [vmem:[%s219 + $0x658] sm:$0xff] %v5316
          %5573 = vst [vmem:[%s219 + $0x660] sm:$0xff] %v5317
          %5574 = vst [vmem:[%s219 + $0x668] sm:$0xff] %v5318
          %5575 = vst [vmem:[%s219 + $0x670] sm:$0xff] %v5319
          %5576 = vst [vmem:[%s219 + $0x678] sm:$0xff] %v5320
          %5577 = vst [vmem:[%s219 + $0x680] sm:$0xff] %v5321
          %5578 = vst [vmem:[%s219 + $0x688] sm:$0xff] %v5322
          %5579 = vst [vmem:[%s219 + $0x690] sm:$0xff] %v5323
          %5580 = vst [vmem:[%s219 + $0x698] sm:$0xff] %v5324
          %5581 = vst [vmem:[%s219 + $0x6a0] sm:$0xff] %v5325
          %5582 = vst [vmem:[%s219 + $0x6a8] sm:$0xff] %v5326
          %5583 = vst [vmem:[%s219 + $0x6b0] sm:$0xff] %v5327
          %5584 = vst [vmem:[%s219 + $0x6b8] sm:$0xff] %v5328
          %5585 = vst [vmem:[%s219 + $0x6c0] sm:$0xff] %v5329
          %5586 = vst [vmem:[%s219 + $0x6c8] sm:$0xff] %v5330
          %5587 = vst [vmem:[%s219 + $0x6d0] sm:$0xff] %v5331
          %5588 = vst [vmem:[%s219 + $0x6d8] sm:$0xff] %v5332
          %5589 = vst [vmem:[%s219 + $0x6e0] sm:$0xff] %v5333
          %5590 = vst [vmem:[%s219 + $0x6e8] sm:$0xff] %v5334
          %5591 = vst [vmem:[%s219 + $0x6f0] sm:$0xff] %v5335
          %5592 = vst [vmem:[%s219 + $0x6f8] sm:$0xff] %v5336
          %5593 = vst [vmem:[%s219 + $0x700] sm:$0xff] %v5337
          %5594 = vst [vmem:[%s219 + $0x708] sm:$0xff] %v5338
          %5595 = vst [vmem:[%s219 + $0x710] sm:$0xff] %v5339
          %5596 = vst [vmem:[%s219 + $0x718] sm:$0xff] %v5340
          %5597 = vst [vmem:[%s219 + $0x720] sm:$0xff] %v5341
          %5598 = vst [vmem:[%s219 + $0x728] sm:$0xff] %v5342
          %5599 = vst [vmem:[%s219 + $0x730] sm:$0xff] %v5343
          %5600 = vst [vmem:[%s219 + $0x738] sm:$0xff] %v5344
          %5601 = vst [vmem:[%s219 + $0x740] sm:$0xff] %v5345
          %5602 = vst [vmem:[%s219 + $0x748] sm:$0xff] %v5346
          %5603 = vst [vmem:[%s219 + $0x750] sm:$0xff] %v5347
          %5604 = vst [vmem:[%s219 + $0x758] sm:$0xff] %v5348
          %5605 = vst [vmem:[%s219 + $0x760] sm:$0xff] %v5349
          %5606 = vst [vmem:[%s219 + $0x768] sm:$0xff] %v5350
          %5607 = vst [vmem:[%s219 + $0x770] sm:$0xff] %v5351
          %5608 = vst [vmem:[%s219 + $0x778] sm:$0xff] %v5352
          %5609 = vst [vmem:[%s219 + $0x780] sm:$0xff] %v5353
          %5610 = vst [vmem:[%s219 + $0x788] sm:$0xff] %v5354
          %5611 = vst [vmem:[%s219 + $0x790] sm:$0xff] %v5355
          %5612 = vst [vmem:[%s219 + $0x798] sm:$0xff] %v5356
          %5613 = vst [vmem:[%s219 + $0x7a0] sm:$0xff] %v5357
          %5614 = vst [vmem:[%s219 + $0x7a8] sm:$0xff] %v5358
          %5615 = vst [vmem:[%s219 + $0x7b0] sm:$0xff] %v5359
          %5616 = vst [vmem:[%s219 + $0x7b8] sm:$0xff] %v5360
          %5617 = vst [vmem:[%s219 + $0x7c0] sm:$0xff] %v5361
          %5618 = vst [vmem:[%s219 + $0x7c8] sm:$0xff] %v5362
          %5619 = vst [vmem:[%s219 + $0x7d0] sm:$0xff] %v5363
          %5620 = vst [vmem:[%s219 + $0x7d8] sm:$0xff] %v5364
          %5621 = vst [vmem:[%s219 + $0x7e0] sm:$0xff] %v5365
          %5622 = vst [vmem:[%s219 + $0x7e8] sm:$0xff] %v5366
          %5623 = vst [vmem:[%s219 + $0x7f0] sm:$0xff] %v5367
          %5624 = vst [vmem:[%s219 + $0x7f8] sm:$0xff] %v5368
        $region44: #{tpu_custom_call.1} parent=27 // pred_fallthru
          _
        %s5625 = sand.u32 %s105, 1
        %s5626 = scalar_lea.sflag [#allocation5], %s5625
        %s5627 = sand.u32 %s105, 1
        %s5628 = smul.addr %s5627, 2048
        %s5629 = scalar_lea.vmem [#allocation8], %s5628
        // Predicated region
        $region45: #{tpu_custom_call.1} parent=27 // pred_check
          %p5630 = pneg %p115
        $region46: #{tpu_custom_call.1} parent=27 // pred_check_branch
          %5632 = sbr.rel (%p5630) target = $region48
        $region47: #{tpu_custom_call.1} parent=27 // pred_region
          %s5633 = smul.u32 64, %s25
          %s5634 = smul.u32 4, %s26
          %5636 = vsyncadd %s5626, 0
          %s5637 = smul.addr %s5633, 8
          %s5638 = sadd.s32 %s5634, %s5637
          %s5639 = smul.addr %s5638, 8
          %s5640 = scalar_lea.hbm %s2, %s5639
          %s5641 = sshll.u32 %s5629, 4
          %s5642 = int_to_ptr.vmem [resolvable:$true] %s5641
          %s5643 = sshll.u32 %s5640, 4
          %s5644 = int_to_ptr.hbm [resolvable:$true] %s5643
          %5649 = dma.vmem_to_hbm [thread:$0]  %s5642, 32768, %s5644, %s5626, 512, 1024, 32
        $region48: #{tpu_custom_call.1} parent=27 // pred_fallthru
          _
      $region28: #{tpu_custom_call.1} parent=5 // pred_fallthru
        _
      %p5650 = scmp.le.s32.totalorder 2, %s15
      // Predicated region
      $region49: #{tpu_custom_call.1} parent=5 // pred_check
        %p5651 = pneg %p5650
      $region50: #{tpu_custom_call.1} parent=5 // pred_check_branch
        %5653 = sbr.rel (%p5651) target = $region52
      $region51: #{tpu_custom_call.1} parent=5 // pred_region
        %s5654 = ssub.s32 %s15, 2
        // Predicated region
        $region53: #{tpu_custom_call.1} parent=51 // pred_check
          %p5655 = pneg %p121
        $region54: #{tpu_custom_call.1} parent=51 // pred_check_branch
          %5657 = sbr.rel (%p5655) target = $region56
        $region55: #{tpu_custom_call.1} parent=51 // pred_region
          %s5658 = sand.u32 %s106, 1
          %s5659 = scalar_lea.sflag [#allocation5], %s5658
          %s5660 = sand.u32 %s106, 1
          %s5661 = smul.addr %s5660, 2048
          %s5662 = scalar_lea.vmem [#allocation8], %s5661
          %5664 = dma.done %s5659, 32768
        $region56: #{tpu_custom_call.1} parent=51 // pred_fallthru
          _
      $region52: #{tpu_custom_call.1} parent=5 // pred_fallthru
        _
    $region6: #{tpu_custom_call.1} parent=1 // loop_footer
      %s19 = sadd.s32 1, %s15
    $region7: #{tpu_custom_call.1} parent=1 // loop_footer_branch
      %14 = sbr.rel target = $region3
    $region8: #{tpu_custom_call.1} parent=1 // loop_exit
      _
    %5665 = vsyncpa [#allocation4], 1
    %s5666 = scalar_lea.sflag [#allocation4], 1
    %5667 = vsyncpa %s5666, 1
    %5668 = vsyncpa [#allocation7], 1
    %s5669 = scalar_lea.sflag [#allocation7], 1
    %5670 = vsyncpa %s5669, 1
    %5671 = vsyncpa [#allocation5], 1
    %s5672 = scalar_lea.sflag [#allocation5], 1
    %5673 = vsyncpa %s5672, 1

</llo_original>
